<compile_context>
chip_gen: v6e
topology: v6e:2x2x1
jax: 0.10.0
libtpu: 0.0.40
codegen_flags: <defaults>
</compile_context>

<pallas_src>
import functools

import jax
import jax.numpy as jnp
from jax.experimental import pallas as pl
from jax.experimental.pallas import tpu as pltpu


_TAPS = tuple((dy, dx) for dy in range(3) for dx in range(3))


def _conv_block_kernel(H, W, x_ref, w1_ref, s1_ref, t1_ref, w2_ref, s2_ref, t2_ref,
                       o_ref, pad1_ref, pad2_ref):
    """Fused conv3x3+BN+ReLU (x2) for one batch element.

    x_ref    : (1, H, W, C_in)     NHWC input tile
    w1_ref   : (9, C_in,  C1)      one (C_in, C_out) matmul operand per 3x3 tap
    w2_ref   : (9, C1,    C2)
    s1/t1    : (1, C1)             folded BN scale / shift for stage 1
    s2/t2    : (C2, 1)             folded BN scale / shift for stage 2 (post-transpose)
    o_ref    : (1, C2, H*W)        lane-dense output (spatial on the 128-lane axis)
    pad1/2   : VMEM scratch holding the zero-padded activations.
    """
    C_in = x_ref.shape[-1]
    C1 = w1_ref.shape[-1]
    C2 = w2_ref.shape[-1]

    # ---- stage 1: conv3x3 -> folded BN -> ReLU -------------------------------
    pad1_ref[...] = jnp.zeros((H + 2, W + 2, C_in), jnp.float32)
    pad1_ref[1:H + 1, 1:W + 1, :] = x_ref[0]
    acc1 = None
    for t, (dy, dx) in enumerate(_TAPS):
        xs = pad1_ref[dy:dy + H, dx:dx + W, :].reshape(H * W, C_in)
        c = jnp.dot(xs, w1_ref[t], preferred_element_type=jnp.float32)
        acc1 = c if acc1 is None else acc1 + c
    h1 = jnp.maximum(acc1 * s1_ref[...] + t1_ref[...], 0.0)          # (H*W, C1)

    # ---- stage 2: conv3x3 -> folded BN -> ReLU -------------------------------
    pad2_ref[...] = jnp.zeros((H + 2, W + 2, C1), jnp.float32)
    pad2_ref[1:H + 1, 1:W + 1, :] = h1.reshape(H, W, C1)
    acc2 = None
    for t, (dy, dx) in enumerate(_TAPS):
        xs = pad2_ref[dy:dy + H, dx:dx + W, :].reshape(H * W, C1)
        c = jnp.dot(xs, w2_ref[t], preferred_element_type=jnp.float32)
        acc2 = c if acc2 is None else acc2 + c

    # Transpose once so the elementwise epilogue and the store are lane-dense.
    acc2_t = acc2.T                                                   # (C2, H*W)
    o_ref[0] = jnp.maximum(acc2_t * s2_ref[...] + t2_ref[...], 0.0)


def conv_block_forward(x_nchw, params, eps=1e-5):
    """x_nchw: (B, C_in, H, W) float32 -> (B, C_out, H, W) float32 (NCHW, like PyTorch)."""
    B, C_in, H, W = x_nchw.shape
    w1, w2 = params['conv1_w'], params['conv2_w']                     # PyTorch (O, I, 3, 3)
    C1, C2 = w1.shape[0], w2.shape[0]

    # Fold conv bias + BatchNorm (running stats) into per-channel scale & shift:
    #   BN(conv(x) + b) = conv(x) * s + (b - mean) * s + beta,   s = gamma / sqrt(var + eps)
    s1 = params['bn1_gamma'] * jax.lax.rsqrt(params['bn1_var'] + eps)
    t1 = params['bn1_beta'] + (params['conv1_b'] - params['bn1_mean']) * s1
    s2 = params['bn2_gamma'] * jax.lax.rsqrt(params['bn2_var'] + eps)
    t2 = params['bn2_beta'] + (params['conv2_b'] - params['bn2_mean']) * s2

    # (O, I, kh, kw) -> (9, I, O): tap t = kh*3 + kw is a ready (C_in, C_out) matmul operand.
    w1_t = jnp.transpose(w1, (2, 3, 1, 0)).reshape(9, C_in, C1)
    w2_t = jnp.transpose(w2, (2, 3, 1, 0)).reshape(9, C1, C2)

    # Single remaining wrapper transpose: channels must be minor for the matmul taps.
    x_nhwc = jnp.transpose(x_nchw, (0, 2, 3, 1)).astype(jnp.float32)

    out = pl.pallas_call(
        functools.partial(_conv_block_kernel, H, W),
        out_shape=jax.ShapeDtypeStruct((B, C2, H * W), jnp.float32),
        grid_spec=pltpu.PrefetchScalarGridSpec(
            num_scalar_prefetch=0,
            grid=(B,),
            in_specs=[
                pl.BlockSpec((1, H, W, C_in), lambda b: (b, 0, 0, 0)),
                pl.BlockSpec((9, C_in, C1), lambda b: (0, 0, 0)),
                pl.BlockSpec((1, C1), lambda b: (0, 0)),
                pl.BlockSpec((1, C1), lambda b: (0, 0)),
                pl.BlockSpec((9, C1, C2), lambda b: (0, 0, 0)),
                pl.BlockSpec((C2, 1), lambda b: (0, 0)),
                pl.BlockSpec((C2, 1), lambda b: (0, 0)),
            ],
            out_specs=pl.BlockSpec((1, C2, H * W), lambda b: (b, 0, 0)),
            scratch_shapes=[
                pltpu.VMEM((H + 2, W + 2, C_in), jnp.float32),
                pltpu.VMEM((H + 2, W + 2, C1), jnp.float32),
            ],
        ),
        compiler_params=pltpu.CompilerParams(
            dimension_semantics=("parallel",)),
    )(x_nhwc, w1_t, s1.reshape(1, C1), t1.reshape(1, C1),
      w2_t, s2.reshape(C2, 1), t2.reshape(C2, 1))

    # (B, C_out, H*W) -> (B, C_out, H, W): pure reshape, no transpose needed.
    return out.reshape(B, C2, H, W)


def _reference_conv_block(x, params, eps=1e-5):
    """Plain-JAX reference (inference-mode BN), used for a numerical self-check."""
    def stage(h, w, b, gamma, beta, mean, var):
        y = jax.lax.conv_general_dilated(
            h, w, window_strides=(1, 1), padding=((1, 1), (1, 1)),
            dimension_numbers=('NCHW', 'OIHW', 'NCHW'))
        y = y + b.reshape(1, -1, 1, 1)
        y = (y - mean.reshape(1, -1, 1, 1)) * jax.lax.rsqrt(var.reshape(1, -1, 1, 1) + eps)
        return jnp.maximum(y * gamma.reshape(1, -1, 1, 1) + beta.reshape(1, -1, 1, 1), 0.0)

    h = stage(x, params['conv1_w'], params['conv1_b'], params['bn1_gamma'],
              params['bn1_beta'], params['bn1_mean'], params['bn1_var'])
    return stage(h, params['conv2_w'], params['conv2_b'], params['bn2_gamma'],
                 params['bn2_beta'], params['bn2_mean'], params['bn2_var'])


if __name__ == "__main__":
    B, C_IN, C_OUT, H, W = 2, 4, 8, 16, 16          # conv_block(ch_in=4, ch_out=8)

    keys = jax.random.split(jax.random.PRNGKey(0), 13)
    params = dict(
        conv1_w=0.1 * jax.random.normal(keys[0], (C_OUT, C_IN, 3, 3), jnp.float32),
        conv1_b=0.1 * jax.random.normal(keys[1], (C_OUT,), jnp.float32),
        bn1_gamma=0.5 + jax.random.uniform(keys[2], (C_OUT,), jnp.float32),
        bn1_beta=0.1 * jax.random.normal(keys[3], (C_OUT,), jnp.float32),
        bn1_mean=0.1 * jax.random.normal(keys[4], (C_OUT,), jnp.float32),
        bn1_var=0.5 + jax.random.uniform(keys[5], (C_OUT,), jnp.float32),
        conv2_w=0.1 * jax.random.normal(keys[6], (C_OUT, C_OUT, 3, 3), jnp.float32),
        conv2_b=0.1 * jax.random.normal(keys[7], (C_OUT,), jnp.float32),
        bn2_gamma=0.5 + jax.random.uniform(keys[8], (C_OUT,), jnp.float32),
        bn2_beta=0.1 * jax.random.normal(keys[9], (C_OUT,), jnp.float32),
        bn2_mean=0.1 * jax.random.normal(keys[10], (C_OUT,), jnp.float32),
        bn2_var=0.5 + jax.random.uniform(keys[11], (C_OUT,), jnp.float32),
    )
    x = jax.random.normal(keys[12], (B, C_IN, H, W), jnp.float32)

    fwd = jax.jit(conv_block_forward)
    out = jax.block_until_ready(fwd(x, params))
    assert out.shape == (B, C_OUT, H, W), out.shape

    ref = _reference_conv_block(x, params)
    max_err = float(jnp.max(jnp.abs(out - ref)))
    assert max_err < 2e-2, f"max abs err vs reference: {max_err}"
    print("KERNEL_OK")
</pallas_src>

<mosaic_0001>
module attributes {stable_mosaic.version = 11 : i64} {
  func.func @_conv_block_kernel(%arg0: i32, %arg1: memref<1x16x16x4xf32, #tpu.memory_space<vmem>>, %arg2: memref<9x4x8xf32, #tpu.memory_space<vmem>>, %arg3: memref<1x8xf32, #tpu.memory_space<vmem>>, %arg4: memref<1x8xf32, #tpu.memory_space<vmem>>, %arg5: memref<9x8x8xf32, #tpu.memory_space<vmem>>, %arg6: memref<8x1xf32, #tpu.memory_space<vmem>>, %arg7: memref<8x1xf32, #tpu.memory_space<vmem>>, %arg8: memref<1x8x256xf32, #tpu.memory_space<vmem>>, %arg9: memref<18x18x4xf32, #tpu.memory_space<vmem>>, %arg10: memref<18x18x8xf32, #tpu.memory_space<vmem>>) attributes {dimension_semantics = [#tpu.dimension_semantics<parallel>], iteration_bounds = array<i64: 2>, scalar_prefetch = 0 : i64, scratch_operands = 2 : i64, tpu.core_type = #tpu.core_type<tc>, window_params = [{transform_indices = @transform_0, window_bounds = array<i64: 1, 16, 16, 4>}, {pipeline_mode = #tpu.pipeline_mode<synchronous>, transform_indices = @transform_1, window_bounds = array<i64: 9, 4, 8>}, {pipeline_mode = #tpu.pipeline_mode<synchronous>, transform_indices = @transform_2, window_bounds = array<i64: 1, 8>}, {pipeline_mode = #tpu.pipeline_mode<synchronous>, transform_indices = @transform_3, window_bounds = array<i64: 1, 8>}, {pipeline_mode = #tpu.pipeline_mode<synchronous>, transform_indices = @transform_4, window_bounds = array<i64: 9, 8, 8>}, {pipeline_mode = #tpu.pipeline_mode<synchronous>, transform_indices = @transform_5, window_bounds = array<i64: 8, 1>}, {pipeline_mode = #tpu.pipeline_mode<synchronous>, transform_indices = @transform_6, window_bounds = array<i64: 8, 1>}, {transform_indices = @transform_7, window_bounds = array<i64: 1, 8, 256>}]} {
    %cst = arith.constant 0.000000e+00 : f32
    %0 = vector.broadcast %cst : f32 to vector<18x18x4xf32>
    %c0 = arith.constant 0 : index
    %c0_0 = arith.constant 0 : index
    %c0_1 = arith.constant 0 : index
    %1 = vector.load %arg9[%c0, %c0_0, %c0_1] : memref<18x18x4xf32, #tpu.memory_space<vmem>>, vector<18x18x4xf32>
    tpu.vector_store %arg9[%c0, %c0_0, %c0_1], %0 {strides = array<i32>} : memref<18x18x4xf32, #tpu.memory_space<vmem>>, vector<18x18x4xf32>,
    %c0_2 = arith.constant 0 : index
    %c0_3 = arith.constant 0 : index
    %c0_4 = arith.constant 0 : index
    %c0_5 = arith.constant 0 : index
    %2 = vector.load %arg1[%c0_2, %c0_3, %c0_4, %c0_5] : memref<1x16x16x4xf32, #tpu.memory_space<vmem>>, vector<1x16x16x4xf32>
    %3 = vector.shape_cast %2 : vector<1x16x16x4xf32> to vector<16x16x4xf32>
    %c1 = arith.constant 1 : index
    %c1_6 = arith.constant 1 : index
    %c0_7 = arith.constant 0 : index
    %4 = vector.load %arg9[%c1, %c1_6, %c0_7] : memref<18x18x4xf32, #tpu.memory_space<vmem>>, vector<16x16x4xf32>
    tpu.vector_store %arg9[%c1, %c1_6, %c0_7], %3 {strides = array<i32>} : memref<18x18x4xf32, #tpu.memory_space<vmem>>, vector<16x16x4xf32>,
    %c0_8 = arith.constant 0 : index
    %c0_9 = arith.constant 0 : index
    %c0_10 = arith.constant 0 : index
    %5 = vector.load %arg9[%c0_8, %c0_9, %c0_10] : memref<18x18x4xf32, #tpu.memory_space<vmem>>, vector<16x16x4xf32>
    %6 = vector.shape_cast %5 : vector<16x16x4xf32> to vector<256x4xf32>
    %c0_11 = arith.constant 0 : index
    %c0_12 = arith.constant 0 : index
    %c0_13 = arith.constant 0 : index
    %7 = vector.load %arg2[%c0_11, %c0_12, %c0_13] : memref<9x4x8xf32, #tpu.memory_space<vmem>>, vector<1x4x8xf32>
    %8 = vector.shape_cast %7 : vector<1x4x8xf32> to vector<4x8xf32>
    %cst_14 = arith.constant dense<0.000000e+00> : vector<256x8xf32>
    %9 = tpu.matmul %6, %8, %cst_14 {dimension_numbers = #tpu.dot_dimension_numbers<[1], [0], [0], [1], [0, 0, 1, 1], [], []>} : vector<256x4xf32>, vector<4x8xf32>, vector<256x8xf32> -> vector<256x8xf32>
    %c0_15 = arith.constant 0 : index
    %c1_16 = arith.constant 1 : index
    %c0_17 = arith.constant 0 : index
    %10 = vector.load %arg9[%c0_15, %c1_16, %c0_17] : memref<18x18x4xf32, #tpu.memory_space<vmem>>, vector<16x16x4xf32>
    %11 = vector.shape_cast %10 : vector<16x16x4xf32> to vector<256x4xf32>
    %c1_18 = arith.constant 1 : index
    %c0_19 = arith.constant 0 : index
    %c0_20 = arith.constant 0 : index
    %12 = vector.load %arg2[%c1_18, %c0_19, %c0_20] : memref<9x4x8xf32, #tpu.memory_space<vmem>>, vector<1x4x8xf32>
    %13 = vector.shape_cast %12 : vector<1x4x8xf32> to vector<4x8xf32>
    %cst_21 = arith.constant dense<0.000000e+00> : vector<256x8xf32>
    %14 = tpu.matmul %11, %13, %cst_21 {dimension_numbers = #tpu.dot_dimension_numbers<[1], [0], [0], [1], [0, 0, 1, 1], [], []>} : vector<256x4xf32>, vector<4x8xf32>, vector<256x8xf32> -> vector<256x8xf32>
    %15 = arith.addf %9, %14 : vector<256x8xf32>
    %c0_22 = arith.constant 0 : index
    %c2 = arith.constant 2 : index
    %c0_23 = arith.constant 0 : index
    %16 = vector.load %arg9[%c0_22, %c2, %c0_23] : memref<18x18x4xf32, #tpu.memory_space<vmem>>, vector<16x16x4xf32>
    %17 = vector.shape_cast %16 : vector<16x16x4xf32> to vector<256x4xf32>
    %c2_24 = arith.constant 2 : index
    %c0_25 = arith.constant 0 : index
    %c0_26 = arith.constant 0 : index
    %18 = vector.load %arg2[%c2_24, %c0_25, %c0_26] : memref<9x4x8xf32, #tpu.memory_space<vmem>>, vector<1x4x8xf32>
    %19 = vector.shape_cast %18 : vector<1x4x8xf32> to vector<4x8xf32>
    %cst_27 = arith.constant dense<0.000000e+00> : vector<256x8xf32>
    %20 = tpu.matmul %17, %19, %cst_27 {dimension_numbers = #tpu.dot_dimension_numbers<[1], [0], [0], [1], [0, 0, 1, 1], [], []>} : vector<256x4xf32>, vector<4x8xf32>, vector<256x8xf32> -> vector<256x8xf32>
    %21 = arith.addf %15, %20 : vector<256x8xf32>
    %c1_28 = arith.constant 1 : index
    %c0_29 = arith.constant 0 : index
    %c0_30 = arith.constant 0 : index
    %22 = vector.load %arg9[%c1_28, %c0_29, %c0_30] : memref<18x18x4xf32, #tpu.memory_space<vmem>>, vector<16x16x4xf32>
    %23 = vector.shape_cast %22 : vector<16x16x4xf32> to vector<256x4xf32>
    %c3 = arith.constant 3 : index
    %c0_31 = arith.constant 0 : index
    %c0_32 = arith.constant 0 : index
    %24 = vector.load %arg2[%c3, %c0_31, %c0_32] : memref<9x4x8xf32, #tpu.memory_space<vmem>>, vector<1x4x8xf32>
    %25 = vector.shape_cast %24 : vector<1x4x8xf32> to vector<4x8xf32>
    %cst_33 = arith.constant dense<0.000000e+00> : vector<256x8xf32>
    %26 = tpu.matmul %23, %25, %cst_33 {dimension_numbers = #tpu.dot_dimension_numbers<[1], [0], [0], [1], [0, 0, 1, 1], [], []>} : vector<256x4xf32>, vector<4x8xf32>, vector<256x8xf32> -> vector<256x8xf32>
    %27 = arith.addf %21, %26 : vector<256x8xf32>
    %c1_34 = arith.constant 1 : index
    %c1_35 = arith.constant 1 : index
    %c0_36 = arith.constant 0 : index
    %28 = vector.load %arg9[%c1_34, %c1_35, %c0_36] : memref<18x18x4xf32, #tpu.memory_space<vmem>>, vector<16x16x4xf32>
    %29 = vector.shape_cast %28 : vector<16x16x4xf32> to vector<256x4xf32>
    %c4 = arith.constant 4 : index
    %c0_37 = arith.constant 0 : index
    %c0_38 = arith.constant 0 : index
    %30 = vector.load %arg2[%c4, %c0_37, %c0_38] : memref<9x4x8xf32, #tpu.memory_space<vmem>>, vector<1x4x8xf32>
    %31 = vector.shape_cast %30 : vector<1x4x8xf32> to vector<4x8xf32>
    %cst_39 = arith.constant dense<0.000000e+00> : vector<256x8xf32>
    %32 = tpu.matmul %29, %31, %cst_39 {dimension_numbers = #tpu.dot_dimension_numbers<[1], [0], [0], [1], [0, 0, 1, 1], [], []>} : vector<256x4xf32>, vector<4x8xf32>, vector<256x8xf32> -> vector<256x8xf32>
    %33 = arith.addf %27, %32 : vector<256x8xf32>
    %c1_40 = arith.constant 1 : index
    %c2_41 = arith.constant 2 : index
    %c0_42 = arith.constant 0 : index
    %34 = vector.load %arg9[%c1_40, %c2_41, %c0_42] : memref<18x18x4xf32, #tpu.memory_space<vmem>>, vector<16x16x4xf32>
    %35 = vector.shape_cast %34 : vector<16x16x4xf32> to vector<256x4xf32>
    %c5 = arith.constant 5 : index
    %c0_43 = arith.constant 0 : index
    %c0_44 = arith.constant 0 : index
    %36 = vector.load %arg2[%c5, %c0_43, %c0_44] : memref<9x4x8xf32, #tpu.memory_space<vmem>>, vector<1x4x8xf32>
    %37 = vector.shape_cast %36 : vector<1x4x8xf32> to vector<4x8xf32>
    %cst_45 = arith.constant dense<0.000000e+00> : vector<256x8xf32>
    %38 = tpu.matmul %35, %37, %cst_45 {dimension_numbers = #tpu.dot_dimension_numbers<[1], [0], [0], [1], [0, 0, 1, 1], [], []>} : vector<256x4xf32>, vector<4x8xf32>, vector<256x8xf32> -> vector<256x8xf32>
    %39 = arith.addf %33, %38 : vector<256x8xf32>
    %c2_46 = arith.constant 2 : index
    %c0_47 = arith.constant 0 : index
    %c0_48 = arith.constant 0 : index
    %40 = vector.load %arg9[%c2_46, %c0_47, %c0_48] : memref<18x18x4xf32, #tpu.memory_space<vmem>>, vector<16x16x4xf32>
    %41 = vector.shape_cast %40 : vector<16x16x4xf32> to vector<256x4xf32>
    %c6 = arith.constant 6 : index
    %c0_49 = arith.constant 0 : index
    %c0_50 = arith.constant 0 : index
    %42 = vector.load %arg2[%c6, %c0_49, %c0_50] : memref<9x4x8xf32, #tpu.memory_space<vmem>>, vector<1x4x8xf32>
    %43 = vector.shape_cast %42 : vector<1x4x8xf32> to vector<4x8xf32>
    %cst_51 = arith.constant dense<0.000000e+00> : vector<256x8xf32>
    %44 = tpu.matmul %41, %43, %cst_51 {dimension_numbers = #tpu.dot_dimension_numbers<[1], [0], [0], [1], [0, 0, 1, 1], [], []>} : vector<256x4xf32>, vector<4x8xf32>, vector<256x8xf32> -> vector<256x8xf32>
    %45 = arith.addf %39, %44 : vector<256x8xf32>
    %c2_52 = arith.constant 2 : index
    %c1_53 = arith.constant 1 : index
    %c0_54 = arith.constant 0 : index
    %46 = vector.load %arg9[%c2_52, %c1_53, %c0_54] : memref<18x18x4xf32, #tpu.memory_space<vmem>>, vector<16x16x4xf32>
    %47 = vector.shape_cast %46 : vector<16x16x4xf32> to vector<256x4xf32>
    %c7 = arith.constant 7 : index
    %c0_55 = arith.constant 0 : index
    %c0_56 = arith.constant 0 : index
    %48 = vector.load %arg2[%c7, %c0_55, %c0_56] : memref<9x4x8xf32, #tpu.memory_space<vmem>>, vector<1x4x8xf32>
    %49 = vector.shape_cast %48 : vector<1x4x8xf32> to vector<4x8xf32>
    %cst_57 = arith.constant dense<0.000000e+00> : vector<256x8xf32>
    %50 = tpu.matmul %47, %49, %cst_57 {dimension_numbers = #tpu.dot_dimension_numbers<[1], [0], [0], [1], [0, 0, 1, 1], [], []>} : vector<256x4xf32>, vector<4x8xf32>, vector<256x8xf32> -> vector<256x8xf32>
    %51 = arith.addf %45, %50 : vector<256x8xf32>
    %c2_58 = arith.constant 2 : index
    %c2_59 = arith.constant 2 : index
    %c0_60 = arith.constant 0 : index
    %52 = vector.load %arg9[%c2_58, %c2_59, %c0_60] : memref<18x18x4xf32, #tpu.memory_space<vmem>>, vector<16x16x4xf32>
    %53 = vector.shape_cast %52 : vector<16x16x4xf32> to vector<256x4xf32>
    %c8 = arith.constant 8 : index
    %c0_61 = arith.constant 0 : index
    %c0_62 = arith.constant 0 : index
    %54 = vector.load %arg2[%c8, %c0_61, %c0_62] : memref<9x4x8xf32, #tpu.memory_space<vmem>>, vector<1x4x8xf32>
    %55 = vector.shape_cast %54 : vector<1x4x8xf32> to vector<4x8xf32>
    %cst_63 = arith.constant dense<0.000000e+00> : vector<256x8xf32>
    %56 = tpu.matmul %53, %55, %cst_63 {dimension_numbers = #tpu.dot_dimension_numbers<[1], [0], [0], [1], [0, 0, 1, 1], [], []>} : vector<256x4xf32>, vector<4x8xf32>, vector<256x8xf32> -> vector<256x8xf32>
    %57 = arith.addf %51, %56 : vector<256x8xf32>
    %c0_64 = arith.constant 0 : index
    %c0_65 = arith.constant 0 : index
    %58 = vector.load %arg3[%c0_64, %c0_65] : memref<1x8xf32, #tpu.memory_space<vmem>>, vector<1x8xf32>
    %59 = vector.broadcast %58 : vector<1x8xf32> to vector<256x8xf32>
    %60 = arith.mulf %57, %59 : vector<256x8xf32>
    %c0_66 = arith.constant 0 : index
    %c0_67 = arith.constant 0 : index
    %61 = vector.load %arg4[%c0_66, %c0_67] : memref<1x8xf32, #tpu.memory_space<vmem>>, vector<1x8xf32>
    %62 = vector.broadcast %61 : vector<1x8xf32> to vector<256x8xf32>
    %63 = arith.addf %60, %62 : vector<256x8xf32>
    %cst_68 = arith.constant 0.000000e+00 : f32
    %64 = vector.broadcast %cst_68 : f32 to vector<256x8xf32>
    %65 = arith.maximumf %63, %64 : vector<256x8xf32>
    %cst_69 = arith.constant 0.000000e+00 : f32
    %66 = vector.broadcast %cst_69 : f32 to vector<18x18x8xf32>
    %c0_70 = arith.constant 0 : index
    %c0_71 = arith.constant 0 : index
    %c0_72 = arith.constant 0 : index
    %67 = vector.load %arg10[%c0_70, %c0_71, %c0_72] : memref<18x18x8xf32, #tpu.memory_space<vmem>>, vector<18x18x8xf32>
    tpu.vector_store %arg10[%c0_70, %c0_71, %c0_72], %66 {strides = array<i32>} : memref<18x18x8xf32, #tpu.memory_space<vmem>>, vector<18x18x8xf32>,
    %68 = vector.shape_cast %65 : vector<256x8xf32> to vector<16x16x8xf32>
    %c1_73 = arith.constant 1 : index
    %c1_74 = arith.constant 1 : index
    %c0_75 = arith.constant 0 : index
    %69 = vector.load %arg10[%c1_73, %c1_74, %c0_75] : memref<18x18x8xf32, #tpu.memory_space<vmem>>, vector<16x16x8xf32>
    tpu.vector_store %arg10[%c1_73, %c1_74, %c0_75], %68 {strides = array<i32>} : memref<18x18x8xf32, #tpu.memory_space<vmem>>, vector<16x16x8xf32>,
    %c0_76 = arith.constant 0 : index
    %c0_77 = arith.constant 0 : index
    %c0_78 = arith.constant 0 : index
    %70 = vector.load %arg10[%c0_76, %c0_77, %c0_78] : memref<18x18x8xf32, #tpu.memory_space<vmem>>, vector<16x16x8xf32>
    %71 = vector.shape_cast %70 : vector<16x16x8xf32> to vector<256x8xf32>
    %c0_79 = arith.constant 0 : index
    %c0_80 = arith.constant 0 : index
    %c0_81 = arith.constant 0 : index
    %72 = vector.load %arg5[%c0_79, %c0_80, %c0_81] : memref<9x8x8xf32, #tpu.memory_space<vmem>>, vector<1x8x8xf32>
    %73 = vector.shape_cast %72 : vector<1x8x8xf32> to vector<8x8xf32>
    %cst_82 = arith.constant dense<0.000000e+00> : vector<256x8xf32>
    %74 = tpu.matmul %71, %73, %cst_82 {dimension_numbers = #tpu.dot_dimension_numbers<[1], [0], [0], [1], [0, 0, 1, 1], [], []>} : vector<256x8xf32>, vector<8x8xf32>, vector<256x8xf32> -> vector<256x8xf32>
    %c0_83 = arith.constant 0 : index
    %c1_84 = arith.constant 1 : index
    %c0_85 = arith.constant 0 : index
    %75 = vector.load %arg10[%c0_83, %c1_84, %c0_85] : memref<18x18x8xf32, #tpu.memory_space<vmem>>, vector<16x16x8xf32>
    %76 = vector.shape_cast %75 : vector<16x16x8xf32> to vector<256x8xf32>
    %c1_86 = arith.constant 1 : index
    %c0_87 = arith.constant 0 : index
    %c0_88 = arith.constant 0 : index
    %77 = vector.load %arg5[%c1_86, %c0_87, %c0_88] : memref<9x8x8xf32, #tpu.memory_space<vmem>>, vector<1x8x8xf32>
    %78 = vector.shape_cast %77 : vector<1x8x8xf32> to vector<8x8xf32>
    %cst_89 = arith.constant dense<0.000000e+00> : vector<256x8xf32>
    %79 = tpu.matmul %76, %78, %cst_89 {dimension_numbers = #tpu.dot_dimension_numbers<[1], [0], [0], [1], [0, 0, 1, 1], [], []>} : vector<256x8xf32>, vector<8x8xf32>, vector<256x8xf32> -> vector<256x8xf32>
    %80 = arith.addf %74, %79 : vector<256x8xf32>
    %c0_90 = arith.constant 0 : index
    %c2_91 = arith.constant 2 : index
    %c0_92 = arith.constant 0 : index
    %81 = vector.load %arg10[%c0_90, %c2_91, %c0_92] : memref<18x18x8xf32, #tpu.memory_space<vmem>>, vector<16x16x8xf32>
    %82 = vector.shape_cast %81 : vector<16x16x8xf32> to vector<256x8xf32>
    %c2_93 = arith.constant 2 : index
    %c0_94 = arith.constant 0 : index
    %c0_95 = arith.constant 0 : index
    %83 = vector.load %arg5[%c2_93, %c0_94, %c0_95] : memref<9x8x8xf32, #tpu.memory_space<vmem>>, vector<1x8x8xf32>
    %84 = vector.shape_cast %83 : vector<1x8x8xf32> to vector<8x8xf32>
    %cst_96 = arith.constant dense<0.000000e+00> : vector<256x8xf32>
    %85 = tpu.matmul %82, %84, %cst_96 {dimension_numbers = #tpu.dot_dimension_numbers<[1], [0], [0], [1], [0, 0, 1, 1], [], []>} : vector<256x8xf32>, vector<8x8xf32>, vector<256x8xf32> -> vector<256x8xf32>
    %86 = arith.addf %80, %85 : vector<256x8xf32>
    %c1_97 = arith.constant 1 : index
    %c0_98 = arith.constant 0 : index
    %c0_99 = arith.constant 0 : index
    %87 = vector.load %arg10[%c1_97, %c0_98, %c0_99] : memref<18x18x8xf32, #tpu.memory_space<vmem>>, vector<16x16x8xf32>
    %88 = vector.shape_cast %87 : vector<16x16x8xf32> to vector<256x8xf32>
    %c3_100 = arith.constant 3 : index
    %c0_101 = arith.constant 0 : index
    %c0_102 = arith.constant 0 : index
    %89 = vector.load %arg5[%c3_100, %c0_101, %c0_102] : memref<9x8x8xf32, #tpu.memory_space<vmem>>, vector<1x8x8xf32>
    %90 = vector.shape_cast %89 : vector<1x8x8xf32> to vector<8x8xf32>
    %cst_103 = arith.constant dense<0.000000e+00> : vector<256x8xf32>
    %91 = tpu.matmul %88, %90, %cst_103 {dimension_numbers = #tpu.dot_dimension_numbers<[1], [0], [0], [1], [0, 0, 1, 1], [], []>} : vector<256x8xf32>, vector<8x8xf32>, vector<256x8xf32> -> vector<256x8xf32>
    %92 = arith.addf %86, %91 : vector<256x8xf32>
    %c1_104 = arith.constant 1 : index
    %c1_105 = arith.constant 1 : index
    %c0_106 = arith.constant 0 : index
    %93 = vector.load %arg10[%c1_104, %c1_105, %c0_106] : memref<18x18x8xf32, #tpu.memory_space<vmem>>, vector<16x16x8xf32>
    %94 = vector.shape_cast %93 : vector<16x16x8xf32> to vector<256x8xf32>
    %c4_107 = arith.constant 4 : index
    %c0_108 = arith.constant 0 : index
    %c0_109 = arith.constant 0 : index
    %95 = vector.load %arg5[%c4_107, %c0_108, %c0_109] : memref<9x8x8xf32, #tpu.memory_space<vmem>>, vector<1x8x8xf32>
    %96 = vector.shape_cast %95 : vector<1x8x8xf32> to vector<8x8xf32>
    %cst_110 = arith.constant dense<0.000000e+00> : vector<256x8xf32>
    %97 = tpu.matmul %94, %96, %cst_110 {dimension_numbers = #tpu.dot_dimension_numbers<[1], [0], [0], [1], [0, 0, 1, 1], [], []>} : vector<256x8xf32>, vector<8x8xf32>, vector<256x8xf32> -> vector<256x8xf32>
    %98 = arith.addf %92, %97 : vector<256x8xf32>
    %c1_111 = arith.constant 1 : index
    %c2_112 = arith.constant 2 : index
    %c0_113 = arith.constant 0 : index
    %99 = vector.load %arg10[%c1_111, %c2_112, %c0_113] : memref<18x18x8xf32, #tpu.memory_space<vmem>>, vector<16x16x8xf32>
    %100 = vector.shape_cast %99 : vector<16x16x8xf32> to vector<256x8xf32>
    %c5_114 = arith.constant 5 : index
    %c0_115 = arith.constant 0 : index
    %c0_116 = arith.constant 0 : index
    %101 = vector.load %arg5[%c5_114, %c0_115, %c0_116] : memref<9x8x8xf32, #tpu.memory_space<vmem>>, vector<1x8x8xf32>
    %102 = vector.shape_cast %101 : vector<1x8x8xf32> to vector<8x8xf32>
    %cst_117 = arith.constant dense<0.000000e+00> : vector<256x8xf32>
    %103 = tpu.matmul %100, %102, %cst_117 {dimension_numbers = #tpu.dot_dimension_numbers<[1], [0], [0], [1], [0, 0, 1, 1], [], []>} : vector<256x8xf32>, vector<8x8xf32>, vector<256x8xf32> -> vector<256x8xf32>
    %104 = arith.addf %98, %103 : vector<256x8xf32>
    %c2_118 = arith.constant 2 : index
    %c0_119 = arith.constant 0 : index
    %c0_120 = arith.constant 0 : index
    %105 = vector.load %arg10[%c2_118, %c0_119, %c0_120] : memref<18x18x8xf32, #tpu.memory_space<vmem>>, vector<16x16x8xf32>
    %106 = vector.shape_cast %105 : vector<16x16x8xf32> to vector<256x8xf32>
    %c6_121 = arith.constant 6 : index
    %c0_122 = arith.constant 0 : index
    %c0_123 = arith.constant 0 : index
    %107 = vector.load %arg5[%c6_121, %c0_122, %c0_123] : memref<9x8x8xf32, #tpu.memory_space<vmem>>, vector<1x8x8xf32>
    %108 = vector.shape_cast %107 : vector<1x8x8xf32> to vector<8x8xf32>
    %cst_124 = arith.constant dense<0.000000e+00> : vector<256x8xf32>
    %109 = tpu.matmul %106, %108, %cst_124 {dimension_numbers = #tpu.dot_dimension_numbers<[1], [0], [0], [1], [0, 0, 1, 1], [], []>} : vector<256x8xf32>, vector<8x8xf32>, vector<256x8xf32> -> vector<256x8xf32>
    %110 = arith.addf %104, %109 : vector<256x8xf32>
    %c2_125 = arith.constant 2 : index
    %c1_126 = arith.constant 1 : index
    %c0_127 = arith.constant 0 : index
    %111 = vector.load %arg10[%c2_125, %c1_126, %c0_127] : memref<18x18x8xf32, #tpu.memory_space<vmem>>, vector<16x16x8xf32>
    %112 = vector.shape_cast %111 : vector<16x16x8xf32> to vector<256x8xf32>
    %c7_128 = arith.constant 7 : index
    %c0_129 = arith.constant 0 : index
    %c0_130 = arith.constant 0 : index
    %113 = vector.load %arg5[%c7_128, %c0_129, %c0_130] : memref<9x8x8xf32, #tpu.memory_space<vmem>>, vector<1x8x8xf32>
    %114 = vector.shape_cast %113 : vector<1x8x8xf32> to vector<8x8xf32>
    %cst_131 = arith.constant dense<0.000000e+00> : vector<256x8xf32>
    %115 = tpu.matmul %112, %114, %cst_131 {dimension_numbers = #tpu.dot_dimension_numbers<[1], [0], [0], [1], [0, 0, 1, 1], [], []>} : vector<256x8xf32>, vector<8x8xf32>, vector<256x8xf32> -> vector<256x8xf32>
    %116 = arith.addf %110, %115 : vector<256x8xf32>
    %c2_132 = arith.constant 2 : index
    %c2_133 = arith.constant 2 : index
    %c0_134 = arith.constant 0 : index
    %117 = vector.load %arg10[%c2_132, %c2_133, %c0_134] : memref<18x18x8xf32, #tpu.memory_space<vmem>>, vector<16x16x8xf32>
    %118 = vector.shape_cast %117 : vector<16x16x8xf32> to vector<256x8xf32>
    %c8_135 = arith.constant 8 : index
    %c0_136 = arith.constant 0 : index
    %c0_137 = arith.constant 0 : index
    %119 = vector.load %arg5[%c8_135, %c0_136, %c0_137] : memref<9x8x8xf32, #tpu.memory_space<vmem>>, vector<1x8x8xf32>
    %120 = vector.shape_cast %119 : vector<1x8x8xf32> to vector<8x8xf32>
    %cst_138 = arith.constant dense<0.000000e+00> : vector<256x8xf32>
    %121 = tpu.matmul %118, %120, %cst_138 {dimension_numbers = #tpu.dot_dimension_numbers<[1], [0], [0], [1], [0, 0, 1, 1], [], []>} : vector<256x8xf32>, vector<8x8xf32>, vector<256x8xf32> -> vector<256x8xf32>
    %122 = arith.addf %116, %121 : vector<256x8xf32>
    %123 = tpu.transpose %122, [1, 0] : vector<256x8xf32> -> vector<8x256xf32>
    %c0_139 = arith.constant 0 : index
    %c0_140 = arith.constant 0 : index
    %124 = vector.load %arg6[%c0_139, %c0_140] : memref<8x1xf32, #tpu.memory_space<vmem>>, vector<8x1xf32>
    %125 = vector.broadcast %124 : vector<8x1xf32> to vector<8x256xf32>
    %126 = arith.mulf %123, %125 : vector<8x256xf32>
    %c0_141 = arith.constant 0 : index
    %c0_142 = arith.constant 0 : index
    %127 = vector.load %arg7[%c0_141, %c0_142] : memref<8x1xf32, #tpu.memory_space<vmem>>, vector<8x1xf32>
    %128 = vector.broadcast %127 : vector<8x1xf32> to vector<8x256xf32>
    %129 = arith.addf %126, %128 : vector<8x256xf32>
    %cst_143 = arith.constant 0.000000e+00 : f32
    %130 = vector.broadcast %cst_143 : f32 to vector<8x256xf32>
    %131 = arith.maximumf %129, %130 : vector<8x256xf32>
    %c0_144 = arith.constant 0 : index
    %c0_145 = arith.constant 0 : index
    %c0_146 = arith.constant 0 : index
    %132 = vector.load %arg8[%c0_144, %c0_145, %c0_146] : memref<1x8x256xf32, #tpu.memory_space<vmem>>, vector<1x8x256xf32>
    %133 = vector.shape_cast %132 : vector<1x8x256xf32> to vector<8x256xf32>
    %134 = vector.shape_cast %131 : vector<8x256xf32> to vector<1x8x256xf32>
    tpu.vector_store %arg8[%c0_144, %c0_145, %c0_146], %134 {strides = array<i32>} : memref<1x8x256xf32, #tpu.memory_space<vmem>>, vector<1x8x256xf32>,
    return
  }
  func.func @transform_0(%arg0: i32) -> (i32, i32, i32, i32) {
    %c0_i32 = arith.constant 0 : i32
    %c0_i32_0 = arith.constant 0 : i32
    %c0_i32_1 = arith.constant 0 : i32
    %c0_i32_2 = arith.constant 0 : i32
    return %arg0, %c0_i32, %c0_i32_0, %c0_i32_1 : i32, i32, i32, i32
  }
  func.func @transform_1(%arg0: i32) -> (i32, i32, i32) {
    %c0_i32 = arith.constant 0 : i32
    %c0_i32_0 = arith.constant 0 : i32
    %c0_i32_1 = arith.constant 0 : i32
    %c0_i32_2 = arith.constant 0 : i32
    return %c0_i32, %c0_i32_0, %c0_i32_1 : i32, i32, i32
  }
  func.func @transform_2(%arg0: i32) -> (i32, i32) {
    %c0_i32 = arith.constant 0 : i32
    %c0_i32_0 = arith.constant 0 : i32
    %c0_i32_1 = arith.constant 0 : i32
    return %c0_i32, %c0_i32_0 : i32, i32
  }
  func.func @transform_3(%arg0: i32) -> (i32, i32) {
    %c0_i32 = arith.constant 0 : i32
    %c0_i32_0 = arith.constant 0 : i32
    %c0_i32_1 = arith.constant 0 : i32
    return %c0_i32, %c0_i32_0 : i32, i32
  }
  func.func @transform_4(%arg0: i32) -> (i32, i32, i32) {
    %c0_i32 = arith.constant 0 : i32
    %c0_i32_0 = arith.constant 0 : i32
    %c0_i32_1 = arith.constant 0 : i32
    %c0_i32_2 = arith.constant 0 : i32
    return %c0_i32, %c0_i32_0, %c0_i32_1 : i32, i32, i32
  }
  func.func @transform_5(%arg0: i32) -> (i32, i32) {
    %c0_i32 = arith.constant 0 : i32
    %c0_i32_0 = arith.constant 0 : i32
    %c0_i32_1 = arith.constant 0 : i32
    return %c0_i32, %c0_i32_0 : i32, i32
  }
  func.func @transform_6(%arg0: i32) -> (i32, i32) {
    %c0_i32 = arith.constant 0 : i32
    %c0_i32_0 = arith.constant 0 : i32
    %c0_i32_1 = arith.constant 0 : i32
    return %c0_i32, %c0_i32_0 : i32, i32
  }
  func.func @transform_7(%arg0: i32) -> (i32, i32, i32) {
    %c0_i32 = arith.constant 0 : i32
    %c0_i32_0 = arith.constant 0 : i32
    %c0_i32_1 = arith.constant 0 : i32
    return %arg0, %c0_i32, %c0_i32_0 : i32, i32, i32
  }
}

</mosaic_0001>

<llo_original>
// kernel: conv_block_forward.1
$region0: #{conv_block_forward.1}
  #allocation0 [shape = 'u32[]', space=smem, size = 0x4, offset = 0x4, fixed_abs, tag = 'smem constant byte address 0x4 - core index']
  #allocation1 [shape = 'u32[144,128]{1,0:T(1,128)}', space=vmem, size = 0x12000, scoped, tag = 'internal scratch']
  #allocation2 [shape = 'f32[18,18,4]{2,1,0:T(8,128)}', space=vmem, size = 0x36000, scoped, tag = 'scratch operand']
  #allocation3 [shape = 'f32[18,18,8]{2,1,0:T(8,128)}', space=vmem, size = 0x36000, scoped, tag = 'scratch operand']
  %s0 = inlined_call_operand.vmem [shape: f32[2,16,16,4], index: 0, kind: input, shape index: {}]
  %s1 = inlined_call_operand.vmem [shape: f32[9,4,8], index: 1, kind: input, shape index: {}]
  %s2 = inlined_call_operand.vmem [shape: f32[1,8], index: 2, kind: input, shape index: {}]
  %s3 = inlined_call_operand.vmem [shape: f32[1,8], index: 3, kind: input, shape index: {}]
  %s4 = inlined_call_operand.vmem [shape: f32[9,8,8], index: 4, kind: input, shape index: {}]
  %s5 = inlined_call_operand.vmem [shape: f32[8,1], index: 5, kind: input, shape index: {}]
  %s6 = inlined_call_operand.vmem [shape: f32[8,1], index: 6, kind: input, shape index: {}]
  %s7 = inlined_call_operand.vmem [shape: f32[2,8,256], index: 7, kind: output, shape index: {}]
  %s8 = sld [smem:[#allocation0]]
  $region61: #{conv_block_forward.1} parent=0
    _
  %s10 = ssub.s32 1, %s8
  %s11 = scalar_select 0, %s10, %s8
  loop: start=0, step=1, limit=4
  $region2: #{conv_block_forward.1} parent=0 // loop_pre_header
    _
  $region3: #{conv_block_forward.1} parent=0 // loop_header
    %s13 = sphi 0, %s17
    %p14 = scmp.ge.s32.totalorder %s13, 4
    %s23 = sphi 0, %s25
    %s26 = sphi 0, %s23
    %s27 = sphi 0, %s26
    %s43 = sphi 0, %s27
    %s47 = sphi 0, %s47
    %s49 = sphi 0, %s47
    %s50 = sphi 0, %s49
    %s64 = sphi 0, %s50
    %s68 = sphi 0, %s68
    %s70 = sphi 0, %s68
    %s71 = sphi 0, %s70
    %s85 = sphi 0, %s71
    %s89 = sphi 0, %s89
    %s91 = sphi 0, %s89
    %s92 = sphi 0, %s91
    %s106 = sphi 0, %s92
    %s110 = sphi 0, %s110
    %s112 = sphi 0, %s110
    %s113 = sphi 0, %s112
    %s127 = sphi 0, %s113
    %s131 = sphi 0, %s131
    %s133 = sphi 0, %s131
    %s134 = sphi 0, %s133
    %s148 = sphi 0, %s134
    %s152 = sphi 0, %s152
    %s154 = sphi 0, %s152
    %s155 = sphi 0, %s154
    %s169 = sphi 0, %s155
    %s175 = sphi 0, %s177
    %s178 = sphi 0, %s175
    %s179 = sphi 0, %s178
    %s195 = sphi 0, %s179
  $region4: #{conv_block_forward.1} parent=0 // loop_header_branch
    %16 = sbr.rel (%p14) target = $region8
  $region5: #{conv_block_forward.1} parent=0 // loop_body
    %s18 = ssub.s32 %s13, 1
    %s19 = ssub.s32 %s13, 2
    %s20 = sadd.s32 %s13, 1
    %s21 = ssub.s32 %s13, %s20
    %p22 = scmp.eq.s32.totalorder %s21, 0
    %s24 = sadd.s32 %s23, 1
    %s25 = scalar_select %p22, %s23, %s24
    %p28 = pneg %p22
    %p29 = scmp.eq.s32.totalorder %s13, 1
    %p30 = por %p28, %p29
    %p31 = scmp.ne.s32.totalorder %s23, %s26
    %p32 = scmp.eq.s32.totalorder %s13, 0
    %p33 = por %p31, %p32
    %p34 = scmp.ne.s32.totalorder %s23, %s26
    %p35 = scmp.eq.s32.totalorder %s18, 1
    %p36 = por %p34, %p35
    %p37 = scmp.ne.s32.totalorder %s26, %s27
    %p38 = scmp.eq.s32.totalorder %s18, 0
    %p39 = por %p37, %p38
    %p40 = scmp.ne.s32.totalorder %s26, %s27
    %p41 = scmp.eq.s32.totalorder %s19, 1
    %p42 = por %p40, %p41
    %p44 = scmp.ne.s32.totalorder %s27, %s43
    %p45 = scmp.eq.s32.totalorder %s19, 0
    %p46 = por %p44, %p45
    %s48 = sadd.s32 %s47, 1
    %p51 = scmp.eq.s32.totalorder %s13, 1
    %p52 = scmp.ne.s32.totalorder %s47, %s49
    %p53 = scmp.eq.s32.totalorder %s13, 0
    %p54 = por %p52, %p53
    %p55 = scmp.ne.s32.totalorder %s47, %s49
    %p56 = scmp.eq.s32.totalorder %s18, 1
    %p57 = por %p55, %p56
    %p58 = scmp.ne.s32.totalorder %s49, %s50
    %p59 = scmp.eq.s32.totalorder %s18, 0
    %p60 = por %p58, %p59
    %p61 = scmp.ne.s32.totalorder %s49, %s50
    %p62 = scmp.eq.s32.totalorder %s19, 1
    %p63 = por %p61, %p62
    %p65 = scmp.ne.s32.totalorder %s50, %s64
    %p66 = scmp.eq.s32.totalorder %s19, 0
    %p67 = por %p65, %p66
    %s69 = sadd.s32 %s68, 1
    %p72 = scmp.eq.s32.totalorder %s13, 1
    %p73 = scmp.ne.s32.totalorder %s68, %s70
    %p74 = scmp.eq.s32.totalorder %s13, 0
    %p75 = por %p73, %p74
    %p76 = scmp.ne.s32.totalorder %s68, %s70
    %p77 = scmp.eq.s32.totalorder %s18, 1
    %p78 = por %p76, %p77
    %p79 = scmp.ne.s32.totalorder %s70, %s71
    %p80 = scmp.eq.s32.totalorder %s18, 0
    %p81 = por %p79, %p80
    %p82 = scmp.ne.s32.totalorder %s70, %s71
    %p83 = scmp.eq.s32.totalorder %s19, 1
    %p84 = por %p82, %p83
    %p86 = scmp.ne.s32.totalorder %s71, %s85
    %p87 = scmp.eq.s32.totalorder %s19, 0
    %p88 = por %p86, %p87
    %s90 = sadd.s32 %s89, 1
    %p93 = scmp.eq.s32.totalorder %s13, 1
    %p94 = scmp.ne.s32.totalorder %s89, %s91
    %p95 = scmp.eq.s32.totalorder %s13, 0
    %p96 = por %p94, %p95
    %p97 = scmp.ne.s32.totalorder %s89, %s91
    %p98 = scmp.eq.s32.totalorder %s18, 1
    %p99 = por %p97, %p98
    %p100 = scmp.ne.s32.totalorder %s91, %s92
    %p101 = scmp.eq.s32.totalorder %s18, 0
    %p102 = por %p100, %p101
    %p103 = scmp.ne.s32.totalorder %s91, %s92
    %p104 = scmp.eq.s32.totalorder %s19, 1
    %p105 = por %p103, %p104
    %p107 = scmp.ne.s32.totalorder %s92, %s106
    %p108 = scmp.eq.s32.totalorder %s19, 0
    %p109 = por %p107, %p108
    %s111 = sadd.s32 %s110, 1
    %p114 = scmp.eq.s32.totalorder %s13, 1
    %p115 = scmp.ne.s32.totalorder %s110, %s112
    %p116 = scmp.eq.s32.totalorder %s13, 0
    %p117 = por %p115, %p116
    %p118 = scmp.ne.s32.totalorder %s110, %s112
    %p119 = scmp.eq.s32.totalorder %s18, 1
    %p120 = por %p118, %p119
    %p121 = scmp.ne.s32.totalorder %s112, %s113
    %p122 = scmp.eq.s32.totalorder %s18, 0
    %p123 = por %p121, %p122
    %p124 = scmp.ne.s32.totalorder %s112, %s113
    %p125 = scmp.eq.s32.totalorder %s19, 1
    %p126 = por %p124, %p125
    %p128 = scmp.ne.s32.totalorder %s113, %s127
    %p129 = scmp.eq.s32.totalorder %s19, 0
    %p130 = por %p128, %p129
    %s132 = sadd.s32 %s131, 1
    %p135 = scmp.eq.s32.totalorder %s13, 1
    %p136 = scmp.ne.s32.totalorder %s131, %s133
    %p137 = scmp.eq.s32.totalorder %s13, 0
    %p138 = por %p136, %p137
    %p139 = scmp.ne.s32.totalorder %s131, %s133
    %p140 = scmp.eq.s32.totalorder %s18, 1
    %p141 = por %p139, %p140
    %p142 = scmp.ne.s32.totalorder %s133, %s134
    %p143 = scmp.eq.s32.totalorder %s18, 0
    %p144 = por %p142, %p143
    %p145 = scmp.ne.s32.totalorder %s133, %s134
    %p146 = scmp.eq.s32.totalorder %s19, 1
    %p147 = por %p145, %p146
    %p149 = scmp.ne.s32.totalorder %s134, %s148
    %p150 = scmp.eq.s32.totalorder %s19, 0
    %p151 = por %p149, %p150
    %s153 = sadd.s32 %s152, 1
    %p156 = scmp.eq.s32.totalorder %s13, 1
    %p157 = scmp.ne.s32.totalorder %s152, %s154
    %p158 = scmp.eq.s32.totalorder %s13, 0
    %p159 = por %p157, %p158
    %p160 = scmp.ne.s32.totalorder %s152, %s154
    %p161 = scmp.eq.s32.totalorder %s18, 1
    %p162 = por %p160, %p161
    %p163 = scmp.ne.s32.totalorder %s154, %s155
    %p164 = scmp.eq.s32.totalorder %s18, 0
    %p165 = por %p163, %p164
    %p166 = scmp.ne.s32.totalorder %s154, %s155
    %p167 = scmp.eq.s32.totalorder %s19, 1
    %p168 = por %p166, %p167
    %p170 = scmp.ne.s32.totalorder %s155, %s169
    %p171 = scmp.eq.s32.totalorder %s19, 0
    %p172 = por %p170, %p171
    %s173 = ssub.s32 %s13, %s20
    %p174 = scmp.eq.s32.totalorder %s173, 0
    %s176 = sadd.s32 %s175, 1
    %s177 = scalar_select %p174, %s175, %s176
    %p180 = pneg %p174
    %p181 = scmp.eq.s32.totalorder %s13, 1
    %p182 = por %p180, %p181
    %p183 = scmp.ne.s32.totalorder %s175, %s178
    %p184 = scmp.eq.s32.totalorder %s13, 0
    %p185 = por %p183, %p184
    %p186 = scmp.ne.s32.totalorder %s175, %s178
    %p187 = scmp.eq.s32.totalorder %s18, 1
    %p188 = por %p186, %p187
    %p189 = scmp.ne.s32.totalorder %s178, %s179
    %p190 = scmp.eq.s32.totalorder %s18, 0
    %p191 = por %p189, %p190
    %p192 = scmp.ne.s32.totalorder %s178, %s179
    %p193 = scmp.eq.s32.totalorder %s19, 1
    %p194 = por %p192, %p193
    %p196 = scmp.ne.s32.totalorder %s179, %s195
    %p197 = scmp.eq.s32.totalorder %s19, 0
    %p198 = por %p196, %p197
    %p199 = scmp.le.s32.totalorder 1, %s13
    %p200 = scmp.lt.s32.totalorder %s13, 3
    %p201 = pnand %p199, %p200
    %p202 = pneg %p201
    // Predicated region
    $region9: #{conv_block_forward.1} parent=5 // pred_check
      _
    $region10: #{conv_block_forward.1} parent=5 // pred_check_branch
      %204 = sbr.rel (%p201) target = $region12
    $region11: #{conv_block_forward.1} parent=5 // pred_region
      %s205 = ssub.s32 %s13, 1
      // Predicated region
      $region13: #{conv_block_forward.1} parent=11 // pred_check
        %p206 = pneg %p60
      $region14: #{conv_block_forward.1} parent=11 // pred_check_branch
        %208 = sbr.rel (%p206) target = $region16
      $region15: #{conv_block_forward.1} parent=11 // pred_region
        _
      $region16: #{conv_block_forward.1} parent=11 // pred_fallthru
        _
      // Predicated region
      $region17: #{conv_block_forward.1} parent=11 // pred_check
        %p209 = pneg %p81
      $region18: #{conv_block_forward.1} parent=11 // pred_check_branch
        %211 = sbr.rel (%p209) target = $region20
      $region19: #{conv_block_forward.1} parent=11 // pred_region
        _
      $region20: #{conv_block_forward.1} parent=11 // pred_fallthru
        _
      // Predicated region
      $region21: #{conv_block_forward.1} parent=11 // pred_check
        %p212 = pneg %p102
      $region22: #{conv_block_forward.1} parent=11 // pred_check_branch
        %214 = sbr.rel (%p212) target = $region24
      $region23: #{conv_block_forward.1} parent=11 // pred_region
        _
      $region24: #{conv_block_forward.1} parent=11 // pred_fallthru
        _
      // Predicated region
      $region25: #{conv_block_forward.1} parent=11 // pred_check
        %p215 = pneg %p123
      $region26: #{conv_block_forward.1} parent=11 // pred_check_branch
        %217 = sbr.rel (%p215) target = $region28
      $region27: #{conv_block_forward.1} parent=11 // pred_region
        _
      $region28: #{conv_block_forward.1} parent=11 // pred_fallthru
        _
      // Predicated region
      $region29: #{conv_block_forward.1} parent=11 // pred_check
        %p218 = pneg %p144
      $region30: #{conv_block_forward.1} parent=11 // pred_check_branch
        %220 = sbr.rel (%p218) target = $region32
      $region31: #{conv_block_forward.1} parent=11 // pred_region
        _
      $region32: #{conv_block_forward.1} parent=11 // pred_fallthru
        _
      // Predicated region
      $region33: #{conv_block_forward.1} parent=11 // pred_check
        %p221 = pneg %p165
      $region34: #{conv_block_forward.1} parent=11 // pred_check_branch
        %223 = sbr.rel (%p221) target = $region36
      $region35: #{conv_block_forward.1} parent=11 // pred_region
        _
      $region36: #{conv_block_forward.1} parent=11 // pred_fallthru
        _
    $region12: #{conv_block_forward.1} parent=5 // pred_fallthru
      _
    %p224 = scmp.lt.s32.totalorder %s13, 2
    // Predicated region
    $region37: #{conv_block_forward.1} parent=5 // pred_check
      %p225 = pneg %p224
    $region38: #{conv_block_forward.1} parent=5 // pred_check_branch
      %227 = sbr.rel (%p225) target = $region40
    $region39: #{conv_block_forward.1} parent=5 // pred_region
      // Predicated region
      $region41: #{conv_block_forward.1} parent=39 // pred_check
        %p228 = pneg %p33
      $region42: #{conv_block_forward.1} parent=39 // pred_check_branch
        %230 = sbr.rel (%p228) target = $region44
      $region43: #{conv_block_forward.1} parent=39 // pred_region
        %p231 = scmp.lt.s32.totalorder %s13, 1
        %s232 = scalar_select %p231, %s13, 1
        %s233 = smul.addr %s232, 32
        %s234 = smul.addr %s233, 8
        %s235 = scalar_lea.vmem %s0, %s234
      $region44: #{conv_block_forward.1} parent=39 // pred_fallthru
        _
    $region40: #{conv_block_forward.1} parent=5 // pred_fallthru
      _
    %p236 = scmp.le.s32.totalorder 1, %s13
    %p237 = scmp.lt.s32.totalorder %s13, 3
    %p238 = pnand %p236, %p237
    %p239 = pneg %p238
    // Predicated region
    $region45: #{conv_block_forward.1} parent=5 // pred_check
      _
    $region46: #{conv_block_forward.1} parent=5 // pred_check_branch
      %241 = sbr.rel (%p238) target = $region48
    $region47: #{conv_block_forward.1} parent=5 // pred_region
      %s242 = ssub.s32 %s13, 1
      %p243 = scmp.lt.s32.totalorder %s18, 1
      %s244 = scalar_select %p243, %s18, 1
      %s245 = smul.addr %s244, 32
      %s246 = smul.addr %s245, 8
      %s247 = scalar_lea.vmem %s0, %s246
      %p248 = pneg %p39
      %p249 = pneg %p36
      %p250 = pneg %p60
      %p251 = pneg %p57
      %p252 = pneg %p81
      %p253 = pneg %p78
      %p254 = pneg %p102
      %p255 = pneg %p99
      %p256 = pneg %p123
      %p257 = pneg %p120
      %p258 = pneg %p144
      %p259 = pneg %p141
      %p260 = pneg %p165
      %p261 = pneg %p162
      %p262 = pneg %p191
      %p263 = pneg %p188
      %p264 = scmp.lt.s32.totalorder %s18, 1
      %s265 = scalar_select %p264, %s18, 1
      %s266 = smul.addr %s265, 2
      %s267 = smul.addr %s266, 8
      %s268 = scalar_lea.vmem %s7, %s267
      %p269 = scmp.lt.s32.totalorder %s18, 1
      %s270 = scalar_select %p269, %s18, 1
      %s271 = smul.addr %s270, 32
      %s272 = smul.addr %s271, 8
      %s273 = scalar_lea.vmem %s0, %s272
      %p274 = scmp.lt.s32.totalorder %s18, 1
      %s275 = scalar_select %p274, %s18, 1
      %s276 = smul.addr %s275, 2
      %s277 = smul.addr %s276, 8
      %s278 = scalar_lea.vmem %s7, %s277
      %vm279 = vcmask 31744
      %280 = vst.msk [vmem:[#allocation2] sm:$0xff] %vm279, 0.0
      %281 = vst.msk [vmem:[#allocation2 + $0x8] sm:$0xff] %vm279, 0.0
      %vm282 = vcmask 25600
      %283 = vst.msk [vmem:[#allocation2 + $0x10] sm:$0x3] %vm282, 0.0
      %284 = vst.msk [vmem:[#allocation2 + $0x18] sm:$0xff] %vm279, 0.0
      %285 = vst.msk [vmem:[#allocation2 + $0x20] sm:$0xff] %vm279, 0.0
      %286 = vst.msk [vmem:[#allocation2 + $0x28] sm:$0x3] %vm282, 0.0
      %287 = vst.msk [vmem:[#allocation2 + $0x30] sm:$0xff] %vm279, 0.0
      %288 = vst.msk [vmem:[#allocation2 + $0x38] sm:$0xff] %vm279, 0.0
      %289 = vst.msk [vmem:[#allocation2 + $0x40] sm:$0x3] %vm282, 0.0
      %290 = vst.msk [vmem:[#allocation2 + $0x48] sm:$0xff] %vm279, 0.0
      %291 = vst.msk [vmem:[#allocation2 + $0x50] sm:$0xff] %vm279, 0.0
      %292 = vst.msk [vmem:[#allocation2 + $0x58] sm:$0x3] %vm282, 0.0
      %293 = vst.msk [vmem:[#allocation2 + $0x60] sm:$0xff] %vm279, 0.0
      %294 = vst.msk [vmem:[#allocation2 + $0x68] sm:$0xff] %vm279, 0.0
      %295 = vst.msk [vmem:[#allocation2 + $0x70] sm:$0x3] %vm282, 0.0
      %296 = vst.msk [vmem:[#allocation2 + $0x78] sm:$0xff] %vm279, 0.0
      %297 = vst.msk [vmem:[#allocation2 + $0x80] sm:$0xff] %vm279, 0.0
      %298 = vst.msk [vmem:[#allocation2 + $0x88] sm:$0x3] %vm282, 0.0
      %299 = vst.msk [vmem:[#allocation2 + $0x90] sm:$0xff] %vm279, 0.0
      %300 = vst.msk [vmem:[#allocation2 + $0x98] sm:$0xff] %vm279, 0.0
      %301 = vst.msk [vmem:[#allocation2 + $0xa0] sm:$0x3] %vm282, 0.0
      %302 = vst.msk [vmem:[#allocation2 + $0xa8] sm:$0xff] %vm279, 0.0
      %303 = vst.msk [vmem:[#allocation2 + $0xb0] sm:$0xff] %vm279, 0.0
      %304 = vst.msk [vmem:[#allocation2 + $0xb8] sm:$0x3] %vm282, 0.0
      %305 = vst.msk [vmem:[#allocation2 + $0xc0] sm:$0xff] %vm279, 0.0
      %306 = vst.msk [vmem:[#allocation2 + $0xc8] sm:$0xff] %vm279, 0.0
      %307 = vst.msk [vmem:[#allocation2 + $0xd0] sm:$0x3] %vm282, 0.0
      %308 = vst.msk [vmem:[#allocation2 + $0xd8] sm:$0xff] %vm279, 0.0
      %309 = vst.msk [vmem:[#allocation2 + $0xe0] sm:$0xff] %vm279, 0.0
      %310 = vst.msk [vmem:[#allocation2 + $0xe8] sm:$0x3] %vm282, 0.0
      %311 = vst.msk [vmem:[#allocation2 + $0xf0] sm:$0xff] %vm279, 0.0
      %312 = vst.msk [vmem:[#allocation2 + $0xf8] sm:$0xff] %vm279, 0.0
      %313 = vst.msk [vmem:[#allocation2 + $0x100] sm:$0x3] %vm282, 0.0
      %314 = vst.msk [vmem:[#allocation2 + $0x108] sm:$0xff] %vm279, 0.0
      %315 = vst.msk [vmem:[#allocation2 + $0x110] sm:$0xff] %vm279, 0.0
      %316 = vst.msk [vmem:[#allocation2 + $0x118] sm:$0x3] %vm282, 0.0
      %317 = vst.msk [vmem:[#allocation2 + $0x120] sm:$0xff] %vm279, 0.0
      %318 = vst.msk [vmem:[#allocation2 + $0x128] sm:$0xff] %vm279, 0.0
      %319 = vst.msk [vmem:[#allocation2 + $0x130] sm:$0x3] %vm282, 0.0
      %320 = vst.msk [vmem:[#allocation2 + $0x138] sm:$0xff] %vm279, 0.0
      %321 = vst.msk [vmem:[#allocation2 + $0x140] sm:$0xff] %vm279, 0.0
      %322 = vst.msk [vmem:[#allocation2 + $0x148] sm:$0x3] %vm282, 0.0
      %323 = vst.msk [vmem:[#allocation2 + $0x150] sm:$0xff] %vm279, 0.0
      %324 = vst.msk [vmem:[#allocation2 + $0x158] sm:$0xff] %vm279, 0.0
      %325 = vst.msk [vmem:[#allocation2 + $0x160] sm:$0x3] %vm282, 0.0
      %326 = vst.msk [vmem:[#allocation2 + $0x168] sm:$0xff] %vm279, 0.0
      %327 = vst.msk [vmem:[#allocation2 + $0x170] sm:$0xff] %vm279, 0.0
      %328 = vst.msk [vmem:[#allocation2 + $0x178] sm:$0x3] %vm282, 0.0
      %329 = vst.msk [vmem:[#allocation2 + $0x180] sm:$0xff] %vm279, 0.0
      %330 = vst.msk [vmem:[#allocation2 + $0x188] sm:$0xff] %vm279, 0.0
      %331 = vst.msk [vmem:[#allocation2 + $0x190] sm:$0x3] %vm282, 0.0
      %332 = vst.msk [vmem:[#allocation2 + $0x198] sm:$0xff] %vm279, 0.0
      %333 = vst.msk [vmem:[#allocation2 + $0x1a0] sm:$0xff] %vm279, 0.0
      %334 = vst.msk [vmem:[#allocation2 + $0x1a8] sm:$0x3] %vm282, 0.0
      %v335 = vld [vmem:[%s273] sm:$0xff]
      %v336 = vld [vmem:[%s273 + $0x8] sm:$0xff]
      %v337 = vld [vmem:[%s273 + $0x10] sm:$0xff]
      %v338 = vld [vmem:[%s273 + $0x18] sm:$0xff]
      %v339 = vld [vmem:[%s273 + $0x20] sm:$0xff]
      %v340 = vld [vmem:[%s273 + $0x28] sm:$0xff]
      %v341 = vld [vmem:[%s273 + $0x30] sm:$0xff]
      %v342 = vld [vmem:[%s273 + $0x38] sm:$0xff]
      %v343 = vld [vmem:[%s273 + $0x40] sm:$0xff]
      %v344 = vld [vmem:[%s273 + $0x48] sm:$0xff]
      %v345 = vld [vmem:[%s273 + $0x50] sm:$0xff]
      %v346 = vld [vmem:[%s273 + $0x58] sm:$0xff]
      %v347 = vld [vmem:[%s273 + $0x60] sm:$0xff]
      %v348 = vld [vmem:[%s273 + $0x68] sm:$0xff]
      %v349 = vld [vmem:[%s273 + $0x70] sm:$0xff]
      %v350 = vld [vmem:[%s273 + $0x78] sm:$0xff]
      %v351 = vld [vmem:[%s273 + $0x80] sm:$0xff]
      %v352 = vld [vmem:[%s273 + $0x88] sm:$0xff]
      %v353 = vld [vmem:[%s273 + $0x90] sm:$0xff]
      %v354 = vld [vmem:[%s273 + $0x98] sm:$0xff]
      %v355 = vld [vmem:[%s273 + $0xa0] sm:$0xff]
      %v356 = vld [vmem:[%s273 + $0xa8] sm:$0xff]
      %v357 = vld [vmem:[%s273 + $0xb0] sm:$0xff]
      %v358 = vld [vmem:[%s273 + $0xb8] sm:$0xff]
      %v359 = vld [vmem:[%s273 + $0xc0] sm:$0xff]
      %v360 = vld [vmem:[%s273 + $0xc8] sm:$0xff]
      %v361 = vld [vmem:[%s273 + $0xd0] sm:$0xff]
      %v362 = vld [vmem:[%s273 + $0xd8] sm:$0xff]
      %v363 = vld [vmem:[%s273 + $0xe0] sm:$0xff]
      %v364 = vld [vmem:[%s273 + $0xe8] sm:$0xff]
      %v365 = vld [vmem:[%s273 + $0xf0] sm:$0xff]
      %v366 = vld [vmem:[%s273 + $0xf8] sm:$0xff]
      %s367 = scalar_lea.vmem [#allocation2], 24
      %368 = vst.msk [vmem:[%s367 + $0x1] sm:$0xff] %vm279, %v335
      %369 = vst.msk [vmem:[%s367 + $0x9] sm:$0xff] %vm279, %v336
      %370 = vst.msk [vmem:[%s367 + $0x19] sm:$0xff] %vm279, %v337
      %371 = vst.msk [vmem:[%s367 + $0x21] sm:$0xff] %vm279, %v338
      %372 = vst.msk [vmem:[%s367 + $0x31] sm:$0xff] %vm279, %v339
      %373 = vst.msk [vmem:[%s367 + $0x39] sm:$0xff] %vm279, %v340
      %374 = vst.msk [vmem:[%s367 + $0x49] sm:$0xff] %vm279, %v341
      %375 = vst.msk [vmem:[%s367 + $0x51] sm:$0xff] %vm279, %v342
      %376 = vst.msk [vmem:[%s367 + $0x61] sm:$0xff] %vm279, %v343
      %377 = vst.msk [vmem:[%s367 + $0x69] sm:$0xff] %vm279, %v344
      %378 = vst.msk [vmem:[%s367 + $0x79] sm:$0xff] %vm279, %v345
      %379 = vst.msk [vmem:[%s367 + $0x81] sm:$0xff] %vm279, %v346
      %380 = vst.msk [vmem:[%s367 + $0x91] sm:$0xff] %vm279, %v347
      %381 = vst.msk [vmem:[%s367 + $0x99] sm:$0xff] %vm279, %v348
      %382 = vst.msk [vmem:[%s367 + $0xa9] sm:$0xff] %vm279, %v349
      %383 = vst.msk [vmem:[%s367 + $0xb1] sm:$0xff] %vm279, %v350
      %384 = vst.msk [vmem:[%s367 + $0xc1] sm:$0xff] %vm279, %v351
      %385 = vst.msk [vmem:[%s367 + $0xc9] sm:$0xff] %vm279, %v352
      %386 = vst.msk [vmem:[%s367 + $0xd9] sm:$0xff] %vm279, %v353
      %387 = vst.msk [vmem:[%s367 + $0xe1] sm:$0xff] %vm279, %v354
      %388 = vst.msk [vmem:[%s367 + $0xf1] sm:$0xff] %vm279, %v355
      %389 = vst.msk [vmem:[%s367 + $0xf9] sm:$0xff] %vm279, %v356
      %390 = vst.msk [vmem:[%s367 + $0x109] sm:$0xff] %vm279, %v357
      %391 = vst.msk [vmem:[%s367 + $0x111] sm:$0xff] %vm279, %v358
      %392 = vst.msk [vmem:[%s367 + $0x121] sm:$0xff] %vm279, %v359
      %393 = vst.msk [vmem:[%s367 + $0x129] sm:$0xff] %vm279, %v360
      %394 = vst.msk [vmem:[%s367 + $0x139] sm:$0xff] %vm279, %v361
      %395 = vst.msk [vmem:[%s367 + $0x141] sm:$0xff] %vm279, %v362
      %396 = vst.msk [vmem:[%s367 + $0x151] sm:$0xff] %vm279, %v363
      %397 = vst.msk [vmem:[%s367 + $0x159] sm:$0xff] %vm279, %v364
      %398 = vst.msk [vmem:[%s367 + $0x169] sm:$0xff] %vm279, %v365
      %399 = vst.msk [vmem:[%s367 + $0x171] sm:$0xff] %vm279, %v366
      %v400 = vld [vmem:[#allocation2] sm:$0xff]
      %v401 = vld [vmem:[#allocation2 + $0x8] sm:$0xff]
      %v402 = vld [vmem:[#allocation2 + $0x18] sm:$0xff]
      %v403 = vld [vmem:[#allocation2 + $0x20] sm:$0xff]
      %v404 = vld [vmem:[#allocation2 + $0x30] sm:$0xff]
      %v405 = vld [vmem:[#allocation2 + $0x38] sm:$0xff]
      %v406 = vld [vmem:[#allocation2 + $0x48] sm:$0xff]
      %v407 = vld [vmem:[#allocation2 + $0x50] sm:$0xff]
      %v408 = vld [vmem:[#allocation2 + $0x60] sm:$0xff]
      %v409 = vld [vmem:[#allocation2 + $0x68] sm:$0xff]
      %v410 = vld [vmem:[#allocation2 + $0x78] sm:$0xff]
      %v411 = vld [vmem:[#allocation2 + $0x80] sm:$0xff]
      %v412 = vld [vmem:[#allocation2 + $0x90] sm:$0xff]
      %v413 = vld [vmem:[#allocation2 + $0x98] sm:$0xff]
      %v414 = vld [vmem:[#allocation2 + $0xa8] sm:$0xff]
      %v415 = vld [vmem:[#allocation2 + $0xb0] sm:$0xff]
      %v416 = vld [vmem:[#allocation2 + $0xc0] sm:$0xff]
      %v417 = vld [vmem:[#allocation2 + $0xc8] sm:$0xff]
      %v418 = vld [vmem:[#allocation2 + $0xd8] sm:$0xff]
      %v419 = vld [vmem:[#allocation2 + $0xe0] sm:$0xff]
      %v420 = vld [vmem:[#allocation2 + $0xf0] sm:$0xff]
      %v421 = vld [vmem:[#allocation2 + $0xf8] sm:$0xff]
      %v422 = vld [vmem:[#allocation2 + $0x108] sm:$0xff]
      %v423 = vld [vmem:[#allocation2 + $0x110] sm:$0xff]
      %v424 = vld [vmem:[#allocation2 + $0x120] sm:$0xff]
      %v425 = vld [vmem:[#allocation2 + $0x128] sm:$0xff]
      %v426 = vld [vmem:[#allocation2 + $0x138] sm:$0xff]
      %v427 = vld [vmem:[#allocation2 + $0x140] sm:$0xff]
      %v428 = vld [vmem:[#allocation2 + $0x150] sm:$0xff]
      %v429 = vld [vmem:[#allocation2 + $0x158] sm:$0xff]
      %v430 = vld [vmem:[#allocation2 + $0x168] sm:$0xff]
      %v431 = vld [vmem:[#allocation2 + $0x170] sm:$0xff]
      %v432 = vld [vmem:[%s1] sm:$0xf]
      %v433 = vld [vmem:[#allocation2 + $0x1] sm:$0xff]
      %v434 = vld [vmem:[#allocation2 + $0x9] sm:$0xff]
      %v435 = vld [vmem:[#allocation2 + $0x19] sm:$0xff]
      %v436 = vld [vmem:[#allocation2 + $0x21] sm:$0xff]
      %v437 = vld [vmem:[#allocation2 + $0x31] sm:$0xff]
      %v438 = vld [vmem:[#allocation2 + $0x39] sm:$0xff]
      %v439 = vld [vmem:[#allocation2 + $0x49] sm:$0xff]
      %v440 = vld [vmem:[#allocation2 + $0x51] sm:$0xff]
      %v441 = vld [vmem:[#allocation2 + $0x61] sm:$0xff]
      %v442 = vld [vmem:[#allocation2 + $0x69] sm:$0xff]
      %v443 = vld [vmem:[#allocation2 + $0x79] sm:$0xff]
      %v444 = vld [vmem:[#allocation2 + $0x81] sm:$0xff]
      %v445 = vld [vmem:[#allocation2 + $0x91] sm:$0xff]
      %v446 = vld [vmem:[#allocation2 + $0x99] sm:$0xff]
      %v447 = vld [vmem:[#allocation2 + $0xa9] sm:$0xff]
      %v448 = vld [vmem:[#allocation2 + $0xb1] sm:$0xff]
      %v449 = vld [vmem:[#allocation2 + $0xc1] sm:$0xff]
      %v450 = vld [vmem:[#allocation2 + $0xc9] sm:$0xff]
      %v451 = vld [vmem:[#allocation2 + $0xd9] sm:$0xff]
      %v452 = vld [vmem:[#allocation2 + $0xe1] sm:$0xff]
      %v453 = vld [vmem:[#allocation2 + $0xf1] sm:$0xff]
      %v454 = vld [vmem:[#allocation2 + $0xf9] sm:$0xff]
      %v455 = vld [vmem:[#allocation2 + $0x109] sm:$0xff]
      %v456 = vld [vmem:[#allocation2 + $0x111] sm:$0xff]
      %v457 = vld [vmem:[#allocation2 + $0x121] sm:$0xff]
      %v458 = vld [vmem:[#allocation2 + $0x129] sm:$0xff]
      %v459 = vld [vmem:[#allocation2 + $0x139] sm:$0xff]
      %v460 = vld [vmem:[#allocation2 + $0x141] sm:$0xff]
      %v461 = vld [vmem:[#allocation2 + $0x151] sm:$0xff]
      %v462 = vld [vmem:[#allocation2 + $0x159] sm:$0xff]
      %v463 = vld [vmem:[#allocation2 + $0x169] sm:$0xff]
      %v464 = vld [vmem:[#allocation2 + $0x171] sm:$0xff]
      %s465 = scalar_lea.vmem %s1, 4
      %v466 = vld [vmem:[%s465] sm:$0xf]
      %v468 = vsel %vm279, %v433, 0
      %v471 = vsel %vm279, %v434, 0
      %v474 = vsel %vm279, %v435, 0
      %v477 = vsel %vm279, %v436, 0
      %v480 = vsel %vm279, %v437, 0
      %v483 = vsel %vm279, %v438, 0
      %v486 = vsel %vm279, %v439, 0
      %v489 = vsel %vm279, %v440, 0
      %v492 = vsel %vm279, %v441, 0
      %v495 = vsel %vm279, %v442, 0
      %v498 = vsel %vm279, %v443, 0
      %v501 = vsel %vm279, %v444, 0
      %v504 = vsel %vm279, %v445, 0
      %v507 = vsel %vm279, %v446, 0
      %v510 = vsel %vm279, %v447, 0
      %v513 = vsel %vm279, %v448, 0
      %v516 = vsel %vm279, %v449, 0
      %v519 = vsel %vm279, %v450, 0
      %v522 = vsel %vm279, %v451, 0
      %v525 = vsel %vm279, %v452, 0
      %v528 = vsel %vm279, %v453, 0
      %v531 = vsel %vm279, %v454, 0
      %v534 = vsel %vm279, %v455, 0
      %v537 = vsel %vm279, %v456, 0
      %v540 = vsel %vm279, %v457, 0
      %v543 = vsel %vm279, %v458, 0
      %v546 = vsel %vm279, %v459, 0
      %v549 = vsel %vm279, %v460, 0
      %v552 = vsel %vm279, %v461, 0
      %v555 = vsel %vm279, %v462, 0
      %v558 = vsel %vm279, %v463, 0
      %v561 = vsel %vm279, %v464, 0
      %vm563 = vcmask 1043456
      %v565 = vsel %vm563, %v466, 0
      %567 = vmatprep.subr.mxu0 0.0
      %568 = vmatpush1.msra.mxu0 0.0
      %569 = vmatprep.subr.mxu0 0.0
      %570 = vmatpush1.msra.mxu0 0.0
      %571 = vmatprep.subr.mxu0 0.0
      %572 = vmatpush1.msra.mxu0 0.0
      %573 = vmatprep.subr.mxu0 0.0
      %574 = vmatpush1.msra.mxu0 0.0
      %575 = vmatprep.subr.mxu0 0.0
      %576 = vmatpush1.msra.mxu0 0.0
      %577 = vmatprep.subr.mxu0 0.0
      %578 = vmatpush1.msra.mxu0 0.0
      %579 = vmatprep.subr.mxu0 0.0
      %580 = vmatpush1.msra.mxu0 0.0
      %581 = vmatprep.subr.mxu0 0.0
      %582 = vmatpush1.msra.mxu0 0.0
      %583 = vmatprep.subr.mxu0 0.0
      %584 = vmatpush1.msra.mxu0 0.0
      %585 = vmatprep.subr.mxu0 0.0
      %586 = vmatpush1.msra.mxu0 0.0
      %587 = vmatprep.subr.mxu0 0.0
      %588 = vmatpush1.msra.mxu0 0.0
      %589 = vmatprep.subr.mxu0 0.0
      %590 = vmatpush1.msra.mxu0 0.0
      %591 = vmatprep.subr.mxu0 0.0
      %592 = vmatpush1.msra.mxu0 0.0
      %593 = vmatprep.subr.mxu0 0.0
      %594 = vmatpush1.msra.mxu0 0.0
      %595 = vmatprep.subr.mxu0 0.0
      %596 = vmatpush1.msra.mxu0 0.0
      %597 = vmatprep.subr.mxu0 0.0
      %598 = vmatpush1.msra.mxu0 %v565
      %599 = vmatprep.subr.mxu0 0.0
      %600 = vmatpush2.msra.mxu0 0.0
      %601 = vmatprep.subr.mxu0 0.0
      %602 = vmatpush2.msra.mxu0 0.0
      %603 = vmatprep.subr.mxu0 0.0
      %604 = vmatpush2.msra.mxu0 0.0
      %605 = vmatprep.subr.mxu0 0.0
      %606 = vmatpush2.msra.mxu0 0.0
      %607 = vmatprep.subr.mxu0 0.0
      %608 = vmatpush2.msra.mxu0 0.0
      %609 = vmatprep.subr.mxu0 0.0
      %610 = vmatpush2.msra.mxu0 0.0
      %611 = vmatprep.subr.mxu0 0.0
      %612 = vmatpush2.msra.mxu0 0.0
      %613 = vmatprep.subr.mxu0 0.0
      %614 = vmatpush2.msra.mxu0 0.0
      %615 = vmatprep.subr.mxu0 0.0
      %616 = vmatpush2.msra.mxu0 0.0
      %617 = vmatprep.subr.mxu0 0.0
      %618 = vmatpush2.msra.mxu0 0.0
      %619 = vmatprep.subr.mxu0 0.0
      %620 = vmatpush2.msra.mxu0 0.0
      %621 = vmatprep.subr.mxu0 0.0
      %622 = vmatpush2.msra.mxu0 0.0
      %623 = vmatprep.subr.mxu0 0.0
      %624 = vmatpush2.msra.mxu0 0.0
      %625 = vmatprep.subr.mxu0 0.0
      %626 = vmatpush2.msra.mxu0 0.0
      %627 = vmatprep.subr.mxu0 0.0
      %628 = vmatpush2.msra.mxu0 0.0
      %629 = vmatprep.subr.mxu0 0.0
      %630 = vmatpush2.msra.mxu0 0.0
      %631 = vmatprep.mubr.f32.mxu0 0.0
      %632 = vmatmul.mubr.f32.gmra.mxu0 %v468
      %v633 = vpop.f32.mrf.mxu0
      %v634 = vadd.f32 0.0, %v633
      %v635 = vpop.f32.mrf.mxu0
      %636 = vmatprep.mubr.f32.mxu0 0.0
      %637 = vmatmul.mubr.f32.gmra.mxu0 %v471
      %v638 = vpop.f32.mrf.mxu0
      %v639 = vadd.f32 0.0, %v638
      %v640 = vpop.f32.mrf.mxu0
      %641 = vmatprep.mubr.f32.mxu0 0.0
      %642 = vmatmul.mubr.f32.gmra.mxu0 %v474
      %v643 = vpop.f32.mrf.mxu0
      %v644 = vadd.f32 0.0, %v643
      %v645 = vpop.f32.mrf.mxu0
      %646 = vmatprep.mubr.f32.mxu0 0.0
      %647 = vmatmul.mubr.f32.gmra.mxu0 %v477
      %v648 = vpop.f32.mrf.mxu0
      %v649 = vadd.f32 0.0, %v648
      %v650 = vpop.f32.mrf.mxu0
      %651 = vmatprep.mubr.f32.mxu0 0.0
      %652 = vmatmul.mubr.f32.gmra.mxu0 %v480
      %v653 = vpop.f32.mrf.mxu0
      %v654 = vadd.f32 0.0, %v653
      %v655 = vpop.f32.mrf.mxu0
      %656 = vmatprep.mubr.f32.mxu0 0.0
      %657 = vmatmul.mubr.f32.gmra.mxu0 %v483
      %v658 = vpop.f32.mrf.mxu0
      %v659 = vadd.f32 0.0, %v658
      %v660 = vpop.f32.mrf.mxu0
      %661 = vmatprep.mubr.f32.mxu0 0.0
      %662 = vmatmul.mubr.f32.gmra.mxu0 %v486
      %v663 = vpop.f32.mrf.mxu0
      %v664 = vadd.f32 0.0, %v663
      %v665 = vpop.f32.mrf.mxu0
      %666 = vmatprep.mubr.f32.mxu0 0.0
      %667 = vmatmul.mubr.f32.gmra.mxu0 %v489
      %v668 = vpop.f32.mrf.mxu0
      %v669 = vadd.f32 0.0, %v668
      %v670 = vpop.f32.mrf.mxu0
      %671 = vmatprep.mubr.f32.mxu0 0.0
      %672 = vmatmul.mubr.f32.gmra.mxu0 %v492
      %v673 = vpop.f32.mrf.mxu0
      %v674 = vadd.f32 0.0, %v673
      %v675 = vpop.f32.mrf.mxu0
      %676 = vmatprep.mubr.f32.mxu0 0.0
      %677 = vmatmul.mubr.f32.gmra.mxu0 %v495
      %v678 = vpop.f32.mrf.mxu0
      %v679 = vadd.f32 0.0, %v678
      %v680 = vpop.f32.mrf.mxu0
      %681 = vmatprep.mubr.f32.mxu0 0.0
      %682 = vmatmul.mubr.f32.gmra.mxu0 %v498
      %v683 = vpop.f32.mrf.mxu0
      %v684 = vadd.f32 0.0, %v683
      %v685 = vpop.f32.mrf.mxu0
      %686 = vmatprep.mubr.f32.mxu0 0.0
      %687 = vmatmul.mubr.f32.gmra.mxu0 %v501
      %v688 = vpop.f32.mrf.mxu0
      %v689 = vadd.f32 0.0, %v688
      %v690 = vpop.f32.mrf.mxu0
      %691 = vmatprep.mubr.f32.mxu0 0.0
      %692 = vmatmul.mubr.f32.gmra.mxu0 %v504
      %v693 = vpop.f32.mrf.mxu0
      %v694 = vadd.f32 0.0, %v693
      %v695 = vpop.f32.mrf.mxu0
      %696 = vmatprep.mubr.f32.mxu0 0.0
      %697 = vmatmul.mubr.f32.gmra.mxu0 %v507
      %v698 = vpop.f32.mrf.mxu0
      %v699 = vadd.f32 0.0, %v698
      %v700 = vpop.f32.mrf.mxu0
      %701 = vmatprep.mubr.f32.mxu0 0.0
      %702 = vmatmul.mubr.f32.gmra.mxu0 %v510
      %v703 = vpop.f32.mrf.mxu0
      %v704 = vadd.f32 0.0, %v703
      %v705 = vpop.f32.mrf.mxu0
      %706 = vmatprep.mubr.f32.mxu0 0.0
      %707 = vmatmul.mubr.f32.gmra.mxu0 %v513
      %v708 = vpop.f32.mrf.mxu0
      %v709 = vadd.f32 0.0, %v708
      %v710 = vpop.f32.mrf.mxu0
      %711 = vmatprep.mubr.f32.mxu0 0.0
      %712 = vmatmul.mubr.f32.gmra.mxu0 %v516
      %v713 = vpop.f32.mrf.mxu0
      %v714 = vadd.f32 0.0, %v713
      %v715 = vpop.f32.mrf.mxu0
      %716 = vmatprep.mubr.f32.mxu0 0.0
      %717 = vmatmul.mubr.f32.gmra.mxu0 %v519
      %v718 = vpop.f32.mrf.mxu0
      %v719 = vadd.f32 0.0, %v718
      %v720 = vpop.f32.mrf.mxu0
      %721 = vmatprep.mubr.f32.mxu0 0.0
      %722 = vmatmul.mubr.f32.gmra.mxu0 %v522
      %v723 = vpop.f32.mrf.mxu0
      %v724 = vadd.f32 0.0, %v723
      %v725 = vpop.f32.mrf.mxu0
      %726 = vmatprep.mubr.f32.mxu0 0.0
      %727 = vmatmul.mubr.f32.gmra.mxu0 %v525
      %v728 = vpop.f32.mrf.mxu0
      %v729 = vadd.f32 0.0, %v728
      %v730 = vpop.f32.mrf.mxu0
      %731 = vmatprep.mubr.f32.mxu0 0.0
      %732 = vmatmul.mubr.f32.gmra.mxu0 %v528
      %v733 = vpop.f32.mrf.mxu0
      %v734 = vadd.f32 0.0, %v733
      %v735 = vpop.f32.mrf.mxu0
      %736 = vmatprep.mubr.f32.mxu0 0.0
      %737 = vmatmul.mubr.f32.gmra.mxu0 %v531
      %v738 = vpop.f32.mrf.mxu0
      %v739 = vadd.f32 0.0, %v738
      %v740 = vpop.f32.mrf.mxu0
      %741 = vmatprep.mubr.f32.mxu0 0.0
      %742 = vmatmul.mubr.f32.gmra.mxu0 %v534
      %v743 = vpop.f32.mrf.mxu0
      %v744 = vadd.f32 0.0, %v743
      %v745 = vpop.f32.mrf.mxu0
      %746 = vmatprep.mubr.f32.mxu0 0.0
      %747 = vmatmul.mubr.f32.gmra.mxu0 %v537
      %v748 = vpop.f32.mrf.mxu0
      %v749 = vadd.f32 0.0, %v748
      %v750 = vpop.f32.mrf.mxu0
      %751 = vmatprep.mubr.f32.mxu0 0.0
      %752 = vmatmul.mubr.f32.gmra.mxu0 %v540
      %v753 = vpop.f32.mrf.mxu0
      %v754 = vadd.f32 0.0, %v753
      %v755 = vpop.f32.mrf.mxu0
      %756 = vmatprep.mubr.f32.mxu0 0.0
      %757 = vmatmul.mubr.f32.gmra.mxu0 %v543
      %v758 = vpop.f32.mrf.mxu0
      %v759 = vadd.f32 0.0, %v758
      %v760 = vpop.f32.mrf.mxu0
      %761 = vmatprep.mubr.f32.mxu0 0.0
      %762 = vmatmul.mubr.f32.gmra.mxu0 %v546
      %v763 = vpop.f32.mrf.mxu0
      %v764 = vadd.f32 0.0, %v763
      %v765 = vpop.f32.mrf.mxu0
      %766 = vmatprep.mubr.f32.mxu0 0.0
      %767 = vmatmul.mubr.f32.gmra.mxu0 %v549
      %v768 = vpop.f32.mrf.mxu0
      %v769 = vadd.f32 0.0, %v768
      %v770 = vpop.f32.mrf.mxu0
      %771 = vmatprep.mubr.f32.mxu0 0.0
      %772 = vmatmul.mubr.f32.gmra.mxu0 %v552
      %v773 = vpop.f32.mrf.mxu0
      %v774 = vadd.f32 0.0, %v773
      %v775 = vpop.f32.mrf.mxu0
      %776 = vmatprep.mubr.f32.mxu0 0.0
      %777 = vmatmul.mubr.f32.gmra.mxu0 %v555
      %v778 = vpop.f32.mrf.mxu0
      %v779 = vadd.f32 0.0, %v778
      %v780 = vpop.f32.mrf.mxu0
      %781 = vmatprep.mubr.f32.mxu0 0.0
      %782 = vmatmul.mubr.f32.gmra.mxu0 %v558
      %v783 = vpop.f32.mrf.mxu0
      %v784 = vadd.f32 0.0, %v783
      %v785 = vpop.f32.mrf.mxu0
      %786 = vmatprep.mubr.f32.mxu0 0.0
      %787 = vmatmul.mubr.f32.gmra.mxu0 %v561
      %v788 = vpop.f32.mrf.mxu0
      %v789 = vadd.f32 0.0, %v788
      %v790 = vpop.f32.mrf.mxu0
      %791 = vdwg.mxu0
      %v793 = vsel %vm279, %v400, 0
      %v796 = vsel %vm279, %v401, 0
      %v799 = vsel %vm279, %v402, 0
      %v802 = vsel %vm279, %v403, 0
      %v805 = vsel %vm279, %v404, 0
      %v808 = vsel %vm279, %v405, 0
      %v811 = vsel %vm279, %v406, 0
      %v814 = vsel %vm279, %v407, 0
      %v817 = vsel %vm279, %v408, 0
      %v820 = vsel %vm279, %v409, 0
      %v823 = vsel %vm279, %v410, 0
      %v826 = vsel %vm279, %v411, 0
      %v829 = vsel %vm279, %v412, 0
      %v832 = vsel %vm279, %v413, 0
      %v835 = vsel %vm279, %v414, 0
      %v838 = vsel %vm279, %v415, 0
      %v841 = vsel %vm279, %v416, 0
      %v844 = vsel %vm279, %v417, 0
      %v847 = vsel %vm279, %v418, 0
      %v850 = vsel %vm279, %v419, 0
      %v853 = vsel %vm279, %v420, 0
      %v856 = vsel %vm279, %v421, 0
      %v859 = vsel %vm279, %v422, 0
      %v862 = vsel %vm279, %v423, 0
      %v865 = vsel %vm279, %v424, 0
      %v868 = vsel %vm279, %v425, 0
      %v871 = vsel %vm279, %v426, 0
      %v874 = vsel %vm279, %v427, 0
      %v877 = vsel %vm279, %v428, 0
      %v880 = vsel %vm279, %v429, 0
      %v883 = vsel %vm279, %v430, 0
      %v886 = vsel %vm279, %v431, 0
      %v889 = vsel %vm563, %v432, 0
      %891 = vmatprep.subr.mxu0 0.0
      %892 = vmatpush1.msra.mxu0 0.0
      %893 = vmatprep.subr.mxu0 0.0
      %894 = vmatpush1.msra.mxu0 0.0
      %895 = vmatprep.subr.mxu0 0.0
      %896 = vmatpush1.msra.mxu0 0.0
      %897 = vmatprep.subr.mxu0 0.0
      %898 = vmatpush1.msra.mxu0 0.0
      %899 = vmatprep.subr.mxu0 0.0
      %900 = vmatpush1.msra.mxu0 0.0
      %901 = vmatprep.subr.mxu0 0.0
      %902 = vmatpush1.msra.mxu0 0.0
      %903 = vmatprep.subr.mxu0 0.0
      %904 = vmatpush1.msra.mxu0 0.0
      %905 = vmatprep.subr.mxu0 0.0
      %906 = vmatpush1.msra.mxu0 0.0
      %907 = vmatprep.subr.mxu0 0.0
      %908 = vmatpush1.msra.mxu0 0.0
      %909 = vmatprep.subr.mxu0 0.0
      %910 = vmatpush1.msra.mxu0 0.0
      %911 = vmatprep.subr.mxu0 0.0
      %912 = vmatpush1.msra.mxu0 0.0
      %913 = vmatprep.subr.mxu0 0.0
      %914 = vmatpush1.msra.mxu0 0.0
      %915 = vmatprep.subr.mxu0 0.0
      %916 = vmatpush1.msra.mxu0 0.0
      %917 = vmatprep.subr.mxu0 0.0
      %918 = vmatpush1.msra.mxu0 0.0
      %919 = vmatprep.subr.mxu0 0.0
      %920 = vmatpush1.msra.mxu0 0.0
      %921 = vmatprep.subr.mxu0 0.0
      %922 = vmatpush1.msra.mxu0 %v889
      %923 = vmatprep.subr.mxu0 0.0
      %924 = vmatpush2.msra.mxu0 0.0
      %925 = vmatprep.subr.mxu0 0.0
      %926 = vmatpush2.msra.mxu0 0.0
      %927 = vmatprep.subr.mxu0 0.0
      %928 = vmatpush2.msra.mxu0 0.0
      %929 = vmatprep.subr.mxu0 0.0
      %930 = vmatpush2.msra.mxu0 0.0
      %931 = vmatprep.subr.mxu0 0.0
      %932 = vmatpush2.msra.mxu0 0.0
      %933 = vmatprep.subr.mxu0 0.0
      %934 = vmatpush2.msra.mxu0 0.0
      %935 = vmatprep.subr.mxu0 0.0
      %936 = vmatpush2.msra.mxu0 0.0
      %937 = vmatprep.subr.mxu0 0.0
      %938 = vmatpush2.msra.mxu0 0.0
      %939 = vmatprep.subr.mxu0 0.0
      %940 = vmatpush2.msra.mxu0 0.0
      %941 = vmatprep.subr.mxu0 0.0
      %942 = vmatpush2.msra.mxu0 0.0
      %943 = vmatprep.subr.mxu0 0.0
      %944 = vmatpush2.msra.mxu0 0.0
      %945 = vmatprep.subr.mxu0 0.0
      %946 = vmatpush2.msra.mxu0 0.0
      %947 = vmatprep.subr.mxu0 0.0
      %948 = vmatpush2.msra.mxu0 0.0
      %949 = vmatprep.subr.mxu0 0.0
      %950 = vmatpush2.msra.mxu0 0.0
      %951 = vmatprep.subr.mxu0 0.0
      %952 = vmatpush2.msra.mxu0 0.0
      %953 = vmatprep.subr.mxu0 0.0
      %954 = vmatpush2.msra.mxu0 0.0
      %955 = vmatprep.mubr.f32.mxu0 0.0
      %956 = vmatmul.mubr.f32.gmra.mxu0 %v793
      %v957 = vpop.f32.mrf.mxu0
      %v958 = vadd.f32 %v634, %v957
      %v959 = vpop.f32.mrf.mxu0
      %960 = vmatprep.mubr.f32.mxu0 0.0
      %961 = vmatmul.mubr.f32.gmra.mxu0 %v796
      %v962 = vpop.f32.mrf.mxu0
      %v963 = vadd.f32 %v639, %v962
      %v964 = vpop.f32.mrf.mxu0
      %965 = vmatprep.mubr.f32.mxu0 0.0
      %966 = vmatmul.mubr.f32.gmra.mxu0 %v799
      %v967 = vpop.f32.mrf.mxu0
      %v968 = vadd.f32 %v644, %v967
      %v969 = vpop.f32.mrf.mxu0
      %970 = vmatprep.mubr.f32.mxu0 0.0
      %971 = vmatmul.mubr.f32.gmra.mxu0 %v802
      %v972 = vpop.f32.mrf.mxu0
      %v973 = vadd.f32 %v649, %v972
      %v974 = vpop.f32.mrf.mxu0
      %975 = vmatprep.mubr.f32.mxu0 0.0
      %976 = vmatmul.mubr.f32.gmra.mxu0 %v805
      %v977 = vpop.f32.mrf.mxu0
      %v978 = vadd.f32 %v654, %v977
      %v979 = vpop.f32.mrf.mxu0
      %980 = vmatprep.mubr.f32.mxu0 0.0
      %981 = vmatmul.mubr.f32.gmra.mxu0 %v808
      %v982 = vpop.f32.mrf.mxu0
      %v983 = vadd.f32 %v659, %v982
      %v984 = vpop.f32.mrf.mxu0
      %985 = vmatprep.mubr.f32.mxu0 0.0
      %986 = vmatmul.mubr.f32.gmra.mxu0 %v811
      %v987 = vpop.f32.mrf.mxu0
      %v988 = vadd.f32 %v664, %v987
      %v989 = vpop.f32.mrf.mxu0
      %990 = vmatprep.mubr.f32.mxu0 0.0
      %991 = vmatmul.mubr.f32.gmra.mxu0 %v814
      %v992 = vpop.f32.mrf.mxu0
      %v993 = vadd.f32 %v669, %v992
      %v994 = vpop.f32.mrf.mxu0
      %995 = vmatprep.mubr.f32.mxu0 0.0
      %996 = vmatmul.mubr.f32.gmra.mxu0 %v817
      %v997 = vpop.f32.mrf.mxu0
      %v998 = vadd.f32 %v674, %v997
      %v999 = vpop.f32.mrf.mxu0
      %1000 = vmatprep.mubr.f32.mxu0 0.0
      %1001 = vmatmul.mubr.f32.gmra.mxu0 %v820
      %v1002 = vpop.f32.mrf.mxu0
      %v1003 = vadd.f32 %v679, %v1002
      %v1004 = vpop.f32.mrf.mxu0
      %1005 = vmatprep.mubr.f32.mxu0 0.0
      %1006 = vmatmul.mubr.f32.gmra.mxu0 %v823
      %v1007 = vpop.f32.mrf.mxu0
      %v1008 = vadd.f32 %v684, %v1007
      %v1009 = vpop.f32.mrf.mxu0
      %1010 = vmatprep.mubr.f32.mxu0 0.0
      %1011 = vmatmul.mubr.f32.gmra.mxu0 %v826
      %v1012 = vpop.f32.mrf.mxu0
      %v1013 = vadd.f32 %v689, %v1012
      %v1014 = vpop.f32.mrf.mxu0
      %1015 = vmatprep.mubr.f32.mxu0 0.0
      %1016 = vmatmul.mubr.f32.gmra.mxu0 %v829
      %v1017 = vpop.f32.mrf.mxu0
      %v1018 = vadd.f32 %v694, %v1017
      %v1019 = vpop.f32.mrf.mxu0
      %1020 = vmatprep.mubr.f32.mxu0 0.0
      %1021 = vmatmul.mubr.f32.gmra.mxu0 %v832
      %v1022 = vpop.f32.mrf.mxu0
      %v1023 = vadd.f32 %v699, %v1022
      %v1024 = vpop.f32.mrf.mxu0
      %1025 = vmatprep.mubr.f32.mxu0 0.0
      %1026 = vmatmul.mubr.f32.gmra.mxu0 %v835
      %v1027 = vpop.f32.mrf.mxu0
      %v1028 = vadd.f32 %v704, %v1027
      %v1029 = vpop.f32.mrf.mxu0
      %1030 = vmatprep.mubr.f32.mxu0 0.0
      %1031 = vmatmul.mubr.f32.gmra.mxu0 %v838
      %v1032 = vpop.f32.mrf.mxu0
      %v1033 = vadd.f32 %v709, %v1032
      %v1034 = vpop.f32.mrf.mxu0
      %1035 = vmatprep.mubr.f32.mxu0 0.0
      %1036 = vmatmul.mubr.f32.gmra.mxu0 %v841
      %v1037 = vpop.f32.mrf.mxu0
      %v1038 = vadd.f32 %v714, %v1037
      %v1039 = vpop.f32.mrf.mxu0
      %1040 = vmatprep.mubr.f32.mxu0 0.0
      %1041 = vmatmul.mubr.f32.gmra.mxu0 %v844
      %v1042 = vpop.f32.mrf.mxu0
      %v1043 = vadd.f32 %v719, %v1042
      %v1044 = vpop.f32.mrf.mxu0
      %1045 = vmatprep.mubr.f32.mxu0 0.0
      %1046 = vmatmul.mubr.f32.gmra.mxu0 %v847
      %v1047 = vpop.f32.mrf.mxu0
      %v1048 = vadd.f32 %v724, %v1047
      %v1049 = vpop.f32.mrf.mxu0
      %1050 = vmatprep.mubr.f32.mxu0 0.0
      %1051 = vmatmul.mubr.f32.gmra.mxu0 %v850
      %v1052 = vpop.f32.mrf.mxu0
      %v1053 = vadd.f32 %v729, %v1052
      %v1054 = vpop.f32.mrf.mxu0
      %1055 = vmatprep.mubr.f32.mxu0 0.0
      %1056 = vmatmul.mubr.f32.gmra.mxu0 %v853
      %v1057 = vpop.f32.mrf.mxu0
      %v1058 = vadd.f32 %v734, %v1057
      %v1059 = vpop.f32.mrf.mxu0
      %1060 = vmatprep.mubr.f32.mxu0 0.0
      %1061 = vmatmul.mubr.f32.gmra.mxu0 %v856
      %v1062 = vpop.f32.mrf.mxu0
      %v1063 = vadd.f32 %v739, %v1062
      %v1064 = vpop.f32.mrf.mxu0
      %1065 = vmatprep.mubr.f32.mxu0 0.0
      %1066 = vmatmul.mubr.f32.gmra.mxu0 %v859
      %v1067 = vpop.f32.mrf.mxu0
      %v1068 = vadd.f32 %v744, %v1067
      %v1069 = vpop.f32.mrf.mxu0
      %1070 = vmatprep.mubr.f32.mxu0 0.0
      %1071 = vmatmul.mubr.f32.gmra.mxu0 %v862
      %v1072 = vpop.f32.mrf.mxu0
      %v1073 = vadd.f32 %v749, %v1072
      %v1074 = vpop.f32.mrf.mxu0
      %1075 = vmatprep.mubr.f32.mxu0 0.0
      %1076 = vmatmul.mubr.f32.gmra.mxu0 %v865
      %v1077 = vpop.f32.mrf.mxu0
      %v1078 = vadd.f32 %v754, %v1077
      %v1079 = vpop.f32.mrf.mxu0
      %1080 = vmatprep.mubr.f32.mxu0 0.0
      %1081 = vmatmul.mubr.f32.gmra.mxu0 %v868
      %v1082 = vpop.f32.mrf.mxu0
      %v1083 = vadd.f32 %v759, %v1082
      %v1084 = vpop.f32.mrf.mxu0
      %1085 = vmatprep.mubr.f32.mxu0 0.0
      %1086 = vmatmul.mubr.f32.gmra.mxu0 %v871
      %v1087 = vpop.f32.mrf.mxu0
      %v1088 = vadd.f32 %v764, %v1087
      %v1089 = vpop.f32.mrf.mxu0
      %1090 = vmatprep.mubr.f32.mxu0 0.0
      %1091 = vmatmul.mubr.f32.gmra.mxu0 %v874
      %v1092 = vpop.f32.mrf.mxu0
      %v1093 = vadd.f32 %v769, %v1092
      %v1094 = vpop.f32.mrf.mxu0
      %1095 = vmatprep.mubr.f32.mxu0 0.0
      %1096 = vmatmul.mubr.f32.gmra.mxu0 %v877
      %v1097 = vpop.f32.mrf.mxu0
      %v1098 = vadd.f32 %v774, %v1097
      %v1099 = vpop.f32.mrf.mxu0
      %1100 = vmatprep.mubr.f32.mxu0 0.0
      %1101 = vmatmul.mubr.f32.gmra.mxu0 %v880
      %v1102 = vpop.f32.mrf.mxu0
      %v1103 = vadd.f32 %v779, %v1102
      %v1104 = vpop.f32.mrf.mxu0
      %1105 = vmatprep.mubr.f32.mxu0 0.0
      %1106 = vmatmul.mubr.f32.gmra.mxu0 %v883
      %v1107 = vpop.f32.mrf.mxu0
      %v1108 = vadd.f32 %v784, %v1107
      %v1109 = vpop.f32.mrf.mxu0
      %1110 = vmatprep.mubr.f32.mxu0 0.0
      %1111 = vmatmul.mubr.f32.gmra.mxu0 %v886
      %v1112 = vpop.f32.mrf.mxu0
      %v1113 = vadd.f32 %v789, %v1112
      %v1114 = vpop.f32.mrf.mxu0
      %1115 = vdwg.mxu0
      %v1116 = vld [vmem:[#allocation2 + $0x2] sm:$0xff]
      %v1117 = vld [vmem:[#allocation2 + $0xa] sm:$0xff]
      %v1118 = vld [vmem:[#allocation2 + $0x1a] sm:$0xff]
      %v1119 = vld [vmem:[#allocation2 + $0x22] sm:$0xff]
      %v1120 = vld [vmem:[#allocation2 + $0x32] sm:$0xff]
      %v1121 = vld [vmem:[#allocation2 + $0x3a] sm:$0xff]
      %v1122 = vld [vmem:[#allocation2 + $0x4a] sm:$0xff]
      %v1123 = vld [vmem:[#allocation2 + $0x52] sm:$0xff]
      %v1124 = vld [vmem:[#allocation2 + $0x62] sm:$0xff]
      %v1125 = vld [vmem:[#allocation2 + $0x6a] sm:$0xff]
      %v1126 = vld [vmem:[#allocation2 + $0x7a] sm:$0xff]
      %v1127 = vld [vmem:[#allocation2 + $0x82] sm:$0xff]
      %v1128 = vld [vmem:[#allocation2 + $0x92] sm:$0xff]
      %v1129 = vld [vmem:[#allocation2 + $0x9a] sm:$0xff]
      %v1130 = vld [vmem:[#allocation2 + $0xaa] sm:$0xff]
      %v1131 = vld [vmem:[#allocation2 + $0xb2] sm:$0xff]
      %v1132 = vld [vmem:[#allocation2 + $0xc2] sm:$0xff]
      %v1133 = vld [vmem:[#allocation2 + $0xca] sm:$0xff]
      %v1134 = vld [vmem:[#allocation2 + $0xda] sm:$0xff]
      %v1135 = vld [vmem:[#allocation2 + $0xe2] sm:$0xff]
      %v1136 = vld [vmem:[#allocation2 + $0xf2] sm:$0xff]
      %v1137 = vld [vmem:[#allocation2 + $0xfa] sm:$0xff]
      %v1138 = vld [vmem:[#allocation2 + $0x10a] sm:$0xff]
      %v1139 = vld [vmem:[#allocation2 + $0x112] sm:$0xff]
      %v1140 = vld [vmem:[#allocation2 + $0x122] sm:$0xff]
      %v1141 = vld [vmem:[#allocation2 + $0x12a] sm:$0xff]
      %v1142 = vld [vmem:[#allocation2 + $0x13a] sm:$0xff]
      %v1143 = vld [vmem:[#allocation2 + $0x142] sm:$0xff]
      %v1144 = vld [vmem:[#allocation2 + $0x152] sm:$0xff]
      %v1145 = vld [vmem:[#allocation2 + $0x15a] sm:$0xff]
      %v1146 = vld [vmem:[#allocation2 + $0x16a] sm:$0xff]
      %v1147 = vld [vmem:[#allocation2 + $0x172] sm:$0xff]
      %s1148 = scalar_lea.vmem %s1, 8
      %v1149 = vld [vmem:[%s1148] sm:$0xf]
      %v1151 = vsel %vm279, %v1116, 0
      %v1154 = vsel %vm279, %v1117, 0
      %v1157 = vsel %vm279, %v1118, 0
      %v1160 = vsel %vm279, %v1119, 0
      %v1163 = vsel %vm279, %v1120, 0
      %v1166 = vsel %vm279, %v1121, 0
      %v1169 = vsel %vm279, %v1122, 0
      %v1172 = vsel %vm279, %v1123, 0
      %v1175 = vsel %vm279, %v1124, 0
      %v1178 = vsel %vm279, %v1125, 0
      %v1181 = vsel %vm279, %v1126, 0
      %v1184 = vsel %vm279, %v1127, 0
      %v1187 = vsel %vm279, %v1128, 0
      %v1190 = vsel %vm279, %v1129, 0
      %v1193 = vsel %vm279, %v1130, 0
      %v1196 = vsel %vm279, %v1131, 0
      %v1199 = vsel %vm279, %v1132, 0
      %v1202 = vsel %vm279, %v1133, 0
      %v1205 = vsel %vm279, %v1134, 0
      %v1208 = vsel %vm279, %v1135, 0
      %v1211 = vsel %vm279, %v1136, 0
      %v1214 = vsel %vm279, %v1137, 0
      %v1217 = vsel %vm279, %v1138, 0
      %v1220 = vsel %vm279, %v1139, 0
      %v1223 = vsel %vm279, %v1140, 0
      %v1226 = vsel %vm279, %v1141, 0
      %v1229 = vsel %vm279, %v1142, 0
      %v1232 = vsel %vm279, %v1143, 0
      %v1235 = vsel %vm279, %v1144, 0
      %v1238 = vsel %vm279, %v1145, 0
      %v1241 = vsel %vm279, %v1146, 0
      %v1244 = vsel %vm279, %v1147, 0
      %v1247 = vsel %vm563, %v1149, 0
      %1249 = vmatprep.subr.mxu0 0.0
      %1250 = vmatpush1.msra.mxu0 0.0
      %1251 = vmatprep.subr.mxu0 0.0
      %1252 = vmatpush1.msra.mxu0 0.0
      %1253 = vmatprep.subr.mxu0 0.0
      %1254 = vmatpush1.msra.mxu0 0.0
      %1255 = vmatprep.subr.mxu0 0.0
      %1256 = vmatpush1.msra.mxu0 0.0
      %1257 = vmatprep.subr.mxu0 0.0
      %1258 = vmatpush1.msra.mxu0 0.0
      %1259 = vmatprep.subr.mxu0 0.0
      %1260 = vmatpush1.msra.mxu0 0.0
      %1261 = vmatprep.subr.mxu0 0.0
      %1262 = vmatpush1.msra.mxu0 0.0
      %1263 = vmatprep.subr.mxu0 0.0
      %1264 = vmatpush1.msra.mxu0 0.0
      %1265 = vmatprep.subr.mxu0 0.0
      %1266 = vmatpush1.msra.mxu0 0.0
      %1267 = vmatprep.subr.mxu0 0.0
      %1268 = vmatpush1.msra.mxu0 0.0
      %1269 = vmatprep.subr.mxu0 0.0
      %1270 = vmatpush1.msra.mxu0 0.0
      %1271 = vmatprep.subr.mxu0 0.0
      %1272 = vmatpush1.msra.mxu0 0.0
      %1273 = vmatprep.subr.mxu0 0.0
      %1274 = vmatpush1.msra.mxu0 0.0
      %1275 = vmatprep.subr.mxu0 0.0
      %1276 = vmatpush1.msra.mxu0 0.0
      %1277 = vmatprep.subr.mxu0 0.0
      %1278 = vmatpush1.msra.mxu0 0.0
      %1279 = vmatprep.subr.mxu0 0.0
      %1280 = vmatpush1.msra.mxu0 %v1247
      %1281 = vmatprep.subr.mxu0 0.0
      %1282 = vmatpush2.msra.mxu0 0.0
      %1283 = vmatprep.subr.mxu0 0.0
      %1284 = vmatpush2.msra.mxu0 0.0
      %1285 = vmatprep.subr.mxu0 0.0
      %1286 = vmatpush2.msra.mxu0 0.0
      %1287 = vmatprep.subr.mxu0 0.0
      %1288 = vmatpush2.msra.mxu0 0.0
      %1289 = vmatprep.subr.mxu0 0.0
      %1290 = vmatpush2.msra.mxu0 0.0
      %1291 = vmatprep.subr.mxu0 0.0
      %1292 = vmatpush2.msra.mxu0 0.0
      %1293 = vmatprep.subr.mxu0 0.0
      %1294 = vmatpush2.msra.mxu0 0.0
      %1295 = vmatprep.subr.mxu0 0.0
      %1296 = vmatpush2.msra.mxu0 0.0
      %1297 = vmatprep.subr.mxu0 0.0
      %1298 = vmatpush2.msra.mxu0 0.0
      %1299 = vmatprep.subr.mxu0 0.0
      %1300 = vmatpush2.msra.mxu0 0.0
      %1301 = vmatprep.subr.mxu0 0.0
      %1302 = vmatpush2.msra.mxu0 0.0
      %1303 = vmatprep.subr.mxu0 0.0
      %1304 = vmatpush2.msra.mxu0 0.0
      %1305 = vmatprep.subr.mxu0 0.0
      %1306 = vmatpush2.msra.mxu0 0.0
      %1307 = vmatprep.subr.mxu0 0.0
      %1308 = vmatpush2.msra.mxu0 0.0
      %1309 = vmatprep.subr.mxu0 0.0
      %1310 = vmatpush2.msra.mxu0 0.0
      %1311 = vmatprep.subr.mxu0 0.0
      %1312 = vmatpush2.msra.mxu0 0.0
      %1313 = vmatprep.mubr.f32.mxu0 0.0
      %1314 = vmatmul.mubr.f32.gmra.mxu0 %v1151
      %v1315 = vpop.f32.mrf.mxu0
      %v1316 = vadd.f32 0.0, %v1315
      %v1317 = vpop.f32.mrf.mxu0
      %1318 = vmatprep.mubr.f32.mxu0 0.0
      %1319 = vmatmul.mubr.f32.gmra.mxu0 %v1154
      %v1320 = vpop.f32.mrf.mxu0
      %v1321 = vadd.f32 0.0, %v1320
      %v1322 = vpop.f32.mrf.mxu0
      %1323 = vmatprep.mubr.f32.mxu0 0.0
      %1324 = vmatmul.mubr.f32.gmra.mxu0 %v1157
      %v1325 = vpop.f32.mrf.mxu0
      %v1326 = vadd.f32 0.0, %v1325
      %v1327 = vpop.f32.mrf.mxu0
      %1328 = vmatprep.mubr.f32.mxu0 0.0
      %1329 = vmatmul.mubr.f32.gmra.mxu0 %v1160
      %v1330 = vpop.f32.mrf.mxu0
      %v1331 = vadd.f32 0.0, %v1330
      %v1332 = vpop.f32.mrf.mxu0
      %1333 = vmatprep.mubr.f32.mxu0 0.0
      %1334 = vmatmul.mubr.f32.gmra.mxu0 %v1163
      %v1335 = vpop.f32.mrf.mxu0
      %v1336 = vadd.f32 0.0, %v1335
      %v1337 = vpop.f32.mrf.mxu0
      %1338 = vmatprep.mubr.f32.mxu0 0.0
      %1339 = vmatmul.mubr.f32.gmra.mxu0 %v1166
      %v1340 = vpop.f32.mrf.mxu0
      %v1341 = vadd.f32 0.0, %v1340
      %v1342 = vpop.f32.mrf.mxu0
      %1343 = vmatprep.mubr.f32.mxu0 0.0
      %1344 = vmatmul.mubr.f32.gmra.mxu0 %v1169
      %v1345 = vpop.f32.mrf.mxu0
      %v1346 = vadd.f32 0.0, %v1345
      %v1347 = vpop.f32.mrf.mxu0
      %1348 = vmatprep.mubr.f32.mxu0 0.0
      %1349 = vmatmul.mubr.f32.gmra.mxu0 %v1172
      %v1350 = vpop.f32.mrf.mxu0
      %v1351 = vadd.f32 0.0, %v1350
      %v1352 = vpop.f32.mrf.mxu0
      %1353 = vmatprep.mubr.f32.mxu0 0.0
      %1354 = vmatmul.mubr.f32.gmra.mxu0 %v1175
      %v1355 = vpop.f32.mrf.mxu0
      %v1356 = vadd.f32 0.0, %v1355
      %v1357 = vpop.f32.mrf.mxu0
      %1358 = vmatprep.mubr.f32.mxu0 0.0
      %1359 = vmatmul.mubr.f32.gmra.mxu0 %v1178
      %v1360 = vpop.f32.mrf.mxu0
      %v1361 = vadd.f32 0.0, %v1360
      %v1362 = vpop.f32.mrf.mxu0
      %1363 = vmatprep.mubr.f32.mxu0 0.0
      %1364 = vmatmul.mubr.f32.gmra.mxu0 %v1181
      %v1365 = vpop.f32.mrf.mxu0
      %v1366 = vadd.f32 0.0, %v1365
      %v1367 = vpop.f32.mrf.mxu0
      %1368 = vmatprep.mubr.f32.mxu0 0.0
      %1369 = vmatmul.mubr.f32.gmra.mxu0 %v1184
      %v1370 = vpop.f32.mrf.mxu0
      %v1371 = vadd.f32 0.0, %v1370
      %v1372 = vpop.f32.mrf.mxu0
      %1373 = vmatprep.mubr.f32.mxu0 0.0
      %1374 = vmatmul.mubr.f32.gmra.mxu0 %v1187
      %v1375 = vpop.f32.mrf.mxu0
      %v1376 = vadd.f32 0.0, %v1375
      %v1377 = vpop.f32.mrf.mxu0
      %1378 = vmatprep.mubr.f32.mxu0 0.0
      %1379 = vmatmul.mubr.f32.gmra.mxu0 %v1190
      %v1380 = vpop.f32.mrf.mxu0
      %v1381 = vadd.f32 0.0, %v1380
      %v1382 = vpop.f32.mrf.mxu0
      %1383 = vmatprep.mubr.f32.mxu0 0.0
      %1384 = vmatmul.mubr.f32.gmra.mxu0 %v1193
      %v1385 = vpop.f32.mrf.mxu0
      %v1386 = vadd.f32 0.0, %v1385
      %v1387 = vpop.f32.mrf.mxu0
      %1388 = vmatprep.mubr.f32.mxu0 0.0
      %1389 = vmatmul.mubr.f32.gmra.mxu0 %v1196
      %v1390 = vpop.f32.mrf.mxu0
      %v1391 = vadd.f32 0.0, %v1390
      %v1392 = vpop.f32.mrf.mxu0
      %1393 = vmatprep.mubr.f32.mxu0 0.0
      %1394 = vmatmul.mubr.f32.gmra.mxu0 %v1199
      %v1395 = vpop.f32.mrf.mxu0
      %v1396 = vadd.f32 0.0, %v1395
      %v1397 = vpop.f32.mrf.mxu0
      %1398 = vmatprep.mubr.f32.mxu0 0.0
      %1399 = vmatmul.mubr.f32.gmra.mxu0 %v1202
      %v1400 = vpop.f32.mrf.mxu0
      %v1401 = vadd.f32 0.0, %v1400
      %v1402 = vpop.f32.mrf.mxu0
      %1403 = vmatprep.mubr.f32.mxu0 0.0
      %1404 = vmatmul.mubr.f32.gmra.mxu0 %v1205
      %v1405 = vpop.f32.mrf.mxu0
      %v1406 = vadd.f32 0.0, %v1405
      %v1407 = vpop.f32.mrf.mxu0
      %1408 = vmatprep.mubr.f32.mxu0 0.0
      %1409 = vmatmul.mubr.f32.gmra.mxu0 %v1208
      %v1410 = vpop.f32.mrf.mxu0
      %v1411 = vadd.f32 0.0, %v1410
      %v1412 = vpop.f32.mrf.mxu0
      %1413 = vmatprep.mubr.f32.mxu0 0.0
      %1414 = vmatmul.mubr.f32.gmra.mxu0 %v1211
      %v1415 = vpop.f32.mrf.mxu0
      %v1416 = vadd.f32 0.0, %v1415
      %v1417 = vpop.f32.mrf.mxu0
      %1418 = vmatprep.mubr.f32.mxu0 0.0
      %1419 = vmatmul.mubr.f32.gmra.mxu0 %v1214
      %v1420 = vpop.f32.mrf.mxu0
      %v1421 = vadd.f32 0.0, %v1420
      %v1422 = vpop.f32.mrf.mxu0
      %1423 = vmatprep.mubr.f32.mxu0 0.0
      %1424 = vmatmul.mubr.f32.gmra.mxu0 %v1217
      %v1425 = vpop.f32.mrf.mxu0
      %v1426 = vadd.f32 0.0, %v1425
      %v1427 = vpop.f32.mrf.mxu0
      %1428 = vmatprep.mubr.f32.mxu0 0.0
      %1429 = vmatmul.mubr.f32.gmra.mxu0 %v1220
      %v1430 = vpop.f32.mrf.mxu0
      %v1431 = vadd.f32 0.0, %v1430
      %v1432 = vpop.f32.mrf.mxu0
      %1433 = vmatprep.mubr.f32.mxu0 0.0
      %1434 = vmatmul.mubr.f32.gmra.mxu0 %v1223
      %v1435 = vpop.f32.mrf.mxu0
      %v1436 = vadd.f32 0.0, %v1435
      %v1437 = vpop.f32.mrf.mxu0
      %1438 = vmatprep.mubr.f32.mxu0 0.0
      %1439 = vmatmul.mubr.f32.gmra.mxu0 %v1226
      %v1440 = vpop.f32.mrf.mxu0
      %v1441 = vadd.f32 0.0, %v1440
      %v1442 = vpop.f32.mrf.mxu0
      %1443 = vmatprep.mubr.f32.mxu0 0.0
      %1444 = vmatmul.mubr.f32.gmra.mxu0 %v1229
      %v1445 = vpop.f32.mrf.mxu0
      %v1446 = vadd.f32 0.0, %v1445
      %v1447 = vpop.f32.mrf.mxu0
      %1448 = vmatprep.mubr.f32.mxu0 0.0
      %1449 = vmatmul.mubr.f32.gmra.mxu0 %v1232
      %v1450 = vpop.f32.mrf.mxu0
      %v1451 = vadd.f32 0.0, %v1450
      %v1452 = vpop.f32.mrf.mxu0
      %1453 = vmatprep.mubr.f32.mxu0 0.0
      %1454 = vmatmul.mubr.f32.gmra.mxu0 %v1235
      %v1455 = vpop.f32.mrf.mxu0
      %v1456 = vadd.f32 0.0, %v1455
      %v1457 = vpop.f32.mrf.mxu0
      %1458 = vmatprep.mubr.f32.mxu0 0.0
      %1459 = vmatmul.mubr.f32.gmra.mxu0 %v1238
      %v1460 = vpop.f32.mrf.mxu0
      %v1461 = vadd.f32 0.0, %v1460
      %v1462 = vpop.f32.mrf.mxu0
      %1463 = vmatprep.mubr.f32.mxu0 0.0
      %1464 = vmatmul.mubr.f32.gmra.mxu0 %v1241
      %v1465 = vpop.f32.mrf.mxu0
      %v1466 = vadd.f32 0.0, %v1465
      %v1467 = vpop.f32.mrf.mxu0
      %1468 = vmatprep.mubr.f32.mxu0 0.0
      %1469 = vmatmul.mubr.f32.gmra.mxu0 %v1244
      %v1470 = vpop.f32.mrf.mxu0
      %v1471 = vadd.f32 0.0, %v1470
      %v1472 = vpop.f32.mrf.mxu0
      %1473 = vdwg.mxu0
      %v1474 = vadd.f32 %v958, %v1316
      %v1475 = vadd.f32 %v963, %v1321
      %v1476 = vadd.f32 %v968, %v1326
      %v1477 = vadd.f32 %v973, %v1331
      %v1478 = vadd.f32 %v978, %v1336
      %v1479 = vadd.f32 %v983, %v1341
      %v1480 = vadd.f32 %v988, %v1346
      %v1481 = vadd.f32 %v993, %v1351
      %v1482 = vadd.f32 %v998, %v1356
      %v1483 = vadd.f32 %v1003, %v1361
      %v1484 = vadd.f32 %v1008, %v1366
      %v1485 = vadd.f32 %v1013, %v1371
      %v1486 = vadd.f32 %v1018, %v1376
      %v1487 = vadd.f32 %v1023, %v1381
      %v1488 = vadd.f32 %v1028, %v1386
      %v1489 = vadd.f32 %v1033, %v1391
      %v1490 = vadd.f32 %v1038, %v1396
      %v1491 = vadd.f32 %v1043, %v1401
      %v1492 = vadd.f32 %v1048, %v1406
      %v1493 = vadd.f32 %v1053, %v1411
      %v1494 = vadd.f32 %v1058, %v1416
      %v1495 = vadd.f32 %v1063, %v1421
      %v1496 = vadd.f32 %v1068, %v1426
      %v1497 = vadd.f32 %v1073, %v1431
      %v1498 = vadd.f32 %v1078, %v1436
      %v1499 = vadd.f32 %v1083, %v1441
      %v1500 = vadd.f32 %v1088, %v1446
      %v1501 = vadd.f32 %v1093, %v1451
      %v1502 = vadd.f32 %v1098, %v1456
      %v1503 = vadd.f32 %v1103, %v1461
      %v1504 = vadd.f32 %v1108, %v1466
      %v1505 = vadd.f32 %v1113, %v1471
      %v1506 = vld [vmem:[%s367] sm:$0xff]
      %v1507 = vld [vmem:[%s367 + $0x8] sm:$0xff]
      %v1508 = vld [vmem:[%s367 + $0x18] sm:$0xff]
      %v1509 = vld [vmem:[%s367 + $0x20] sm:$0xff]
      %v1510 = vld [vmem:[%s367 + $0x30] sm:$0xff]
      %v1511 = vld [vmem:[%s367 + $0x38] sm:$0xff]
      %v1512 = vld [vmem:[%s367 + $0x48] sm:$0xff]
      %v1513 = vld [vmem:[%s367 + $0x50] sm:$0xff]
      %v1514 = vld [vmem:[%s367 + $0x60] sm:$0xff]
      %v1515 = vld [vmem:[%s367 + $0x68] sm:$0xff]
      %v1516 = vld [vmem:[%s367 + $0x78] sm:$0xff]
      %v1517 = vld [vmem:[%s367 + $0x80] sm:$0xff]
      %v1518 = vld [vmem:[%s367 + $0x90] sm:$0xff]
      %v1519 = vld [vmem:[%s367 + $0x98] sm:$0xff]
      %v1520 = vld [vmem:[%s367 + $0xa8] sm:$0xff]
      %v1521 = vld [vmem:[%s367 + $0xb0] sm:$0xff]
      %v1522 = vld [vmem:[%s367 + $0xc0] sm:$0xff]
      %v1523 = vld [vmem:[%s367 + $0xc8] sm:$0xff]
      %v1524 = vld [vmem:[%s367 + $0xd8] sm:$0xff]
      %v1525 = vld [vmem:[%s367 + $0xe0] sm:$0xff]
      %v1526 = vld [vmem:[%s367 + $0xf0] sm:$0xff]
      %v1527 = vld [vmem:[%s367 + $0xf8] sm:$0xff]
      %v1528 = vld [vmem:[%s367 + $0x108] sm:$0xff]
      %v1529 = vld [vmem:[%s367 + $0x110] sm:$0xff]
      %v1530 = vld [vmem:[%s367 + $0x120] sm:$0xff]
      %v1531 = vld [vmem:[%s367 + $0x128] sm:$0xff]
      %v1532 = vld [vmem:[%s367 + $0x138] sm:$0xff]
      %v1533 = vld [vmem:[%s367 + $0x140] sm:$0xff]
      %v1534 = vld [vmem:[%s367 + $0x150] sm:$0xff]
      %v1535 = vld [vmem:[%s367 + $0x158] sm:$0xff]
      %v1536 = vld [vmem:[%s367 + $0x168] sm:$0xff]
      %v1537 = vld [vmem:[%s367 + $0x170] sm:$0xff]
      %s1538 = scalar_lea.vmem %s1, 12
      %v1539 = vld [vmem:[%s1538] sm:$0xf]
      %v1541 = vsel %vm279, %v1506, 0
      %v1544 = vsel %vm279, %v1507, 0
      %v1547 = vsel %vm279, %v1508, 0
      %v1550 = vsel %vm279, %v1509, 0
      %v1553 = vsel %vm279, %v1510, 0
      %v1556 = vsel %vm279, %v1511, 0
      %v1559 = vsel %vm279, %v1512, 0
      %v1562 = vsel %vm279, %v1513, 0
      %v1565 = vsel %vm279, %v1514, 0
      %v1568 = vsel %vm279, %v1515, 0
      %v1571 = vsel %vm279, %v1516, 0
      %v1574 = vsel %vm279, %v1517, 0
      %v1577 = vsel %vm279, %v1518, 0
      %v1580 = vsel %vm279, %v1519, 0
      %v1583 = vsel %vm279, %v1520, 0
      %v1586 = vsel %vm279, %v1521, 0
      %v1589 = vsel %vm279, %v1522, 0
      %v1592 = vsel %vm279, %v1523, 0
      %v1595 = vsel %vm279, %v1524, 0
      %v1598 = vsel %vm279, %v1525, 0
      %v1601 = vsel %vm279, %v1526, 0
      %v1604 = vsel %vm279, %v1527, 0
      %v1607 = vsel %vm279, %v1528, 0
      %v1610 = vsel %vm279, %v1529, 0
      %v1613 = vsel %vm279, %v1530, 0
      %v1616 = vsel %vm279, %v1531, 0
      %v1619 = vsel %vm279, %v1532, 0
      %v1622 = vsel %vm279, %v1533, 0
      %v1625 = vsel %vm279, %v1534, 0
      %v1628 = vsel %vm279, %v1535, 0
      %v1631 = vsel %vm279, %v1536, 0
      %v1634 = vsel %vm279, %v1537, 0
      %v1637 = vsel %vm563, %v1539, 0
      %1639 = vmatprep.subr.mxu0 0.0
      %1640 = vmatpush1.msra.mxu0 0.0
      %1641 = vmatprep.subr.mxu0 0.0
      %1642 = vmatpush1.msra.mxu0 0.0
      %1643 = vmatprep.subr.mxu0 0.0
      %1644 = vmatpush1.msra.mxu0 0.0
      %1645 = vmatprep.subr.mxu0 0.0
      %1646 = vmatpush1.msra.mxu0 0.0
      %1647 = vmatprep.subr.mxu0 0.0
      %1648 = vmatpush1.msra.mxu0 0.0
      %1649 = vmatprep.subr.mxu0 0.0
      %1650 = vmatpush1.msra.mxu0 0.0
      %1651 = vmatprep.subr.mxu0 0.0
      %1652 = vmatpush1.msra.mxu0 0.0
      %1653 = vmatprep.subr.mxu0 0.0
      %1654 = vmatpush1.msra.mxu0 0.0
      %1655 = vmatprep.subr.mxu0 0.0
      %1656 = vmatpush1.msra.mxu0 0.0
      %1657 = vmatprep.subr.mxu0 0.0
      %1658 = vmatpush1.msra.mxu0 0.0
      %1659 = vmatprep.subr.mxu0 0.0
      %1660 = vmatpush1.msra.mxu0 0.0
      %1661 = vmatprep.subr.mxu0 0.0
      %1662 = vmatpush1.msra.mxu0 0.0
      %1663 = vmatprep.subr.mxu0 0.0
      %1664 = vmatpush1.msra.mxu0 0.0
      %1665 = vmatprep.subr.mxu0 0.0
      %1666 = vmatpush1.msra.mxu0 0.0
      %1667 = vmatprep.subr.mxu0 0.0
      %1668 = vmatpush1.msra.mxu0 0.0
      %1669 = vmatprep.subr.mxu0 0.0
      %1670 = vmatpush1.msra.mxu0 %v1637
      %1671 = vmatprep.subr.mxu0 0.0
      %1672 = vmatpush2.msra.mxu0 0.0
      %1673 = vmatprep.subr.mxu0 0.0
      %1674 = vmatpush2.msra.mxu0 0.0
      %1675 = vmatprep.subr.mxu0 0.0
      %1676 = vmatpush2.msra.mxu0 0.0
      %1677 = vmatprep.subr.mxu0 0.0
      %1678 = vmatpush2.msra.mxu0 0.0
      %1679 = vmatprep.subr.mxu0 0.0
      %1680 = vmatpush2.msra.mxu0 0.0
      %1681 = vmatprep.subr.mxu0 0.0
      %1682 = vmatpush2.msra.mxu0 0.0
      %1683 = vmatprep.subr.mxu0 0.0
      %1684 = vmatpush2.msra.mxu0 0.0
      %1685 = vmatprep.subr.mxu0 0.0
      %1686 = vmatpush2.msra.mxu0 0.0
      %1687 = vmatprep.subr.mxu0 0.0
      %1688 = vmatpush2.msra.mxu0 0.0
      %1689 = vmatprep.subr.mxu0 0.0
      %1690 = vmatpush2.msra.mxu0 0.0
      %1691 = vmatprep.subr.mxu0 0.0
      %1692 = vmatpush2.msra.mxu0 0.0
      %1693 = vmatprep.subr.mxu0 0.0
      %1694 = vmatpush2.msra.mxu0 0.0
      %1695 = vmatprep.subr.mxu0 0.0
      %1696 = vmatpush2.msra.mxu0 0.0
      %1697 = vmatprep.subr.mxu0 0.0
      %1698 = vmatpush2.msra.mxu0 0.0
      %1699 = vmatprep.subr.mxu0 0.0
      %1700 = vmatpush2.msra.mxu0 0.0
      %1701 = vmatprep.subr.mxu0 0.0
      %1702 = vmatpush2.msra.mxu0 0.0
      %1703 = vmatprep.mubr.f32.mxu0 0.0
      %1704 = vmatmul.mubr.f32.gmra.mxu0 %v1541
      %v1705 = vpop.f32.mrf.mxu0
      %v1706 = vadd.f32 0.0, %v1705
      %v1707 = vpop.f32.mrf.mxu0
      %1708 = vmatprep.mubr.f32.mxu0 0.0
      %1709 = vmatmul.mubr.f32.gmra.mxu0 %v1544
      %v1710 = vpop.f32.mrf.mxu0
      %v1711 = vadd.f32 0.0, %v1710
      %v1712 = vpop.f32.mrf.mxu0
      %1713 = vmatprep.mubr.f32.mxu0 0.0
      %1714 = vmatmul.mubr.f32.gmra.mxu0 %v1547
      %v1715 = vpop.f32.mrf.mxu0
      %v1716 = vadd.f32 0.0, %v1715
      %v1717 = vpop.f32.mrf.mxu0
      %1718 = vmatprep.mubr.f32.mxu0 0.0
      %1719 = vmatmul.mubr.f32.gmra.mxu0 %v1550
      %v1720 = vpop.f32.mrf.mxu0
      %v1721 = vadd.f32 0.0, %v1720
      %v1722 = vpop.f32.mrf.mxu0
      %1723 = vmatprep.mubr.f32.mxu0 0.0
      %1724 = vmatmul.mubr.f32.gmra.mxu0 %v1553
      %v1725 = vpop.f32.mrf.mxu0
      %v1726 = vadd.f32 0.0, %v1725
      %v1727 = vpop.f32.mrf.mxu0
      %1728 = vmatprep.mubr.f32.mxu0 0.0
      %1729 = vmatmul.mubr.f32.gmra.mxu0 %v1556
      %v1730 = vpop.f32.mrf.mxu0
      %v1731 = vadd.f32 0.0, %v1730
      %v1732 = vpop.f32.mrf.mxu0
      %1733 = vmatprep.mubr.f32.mxu0 0.0
      %1734 = vmatmul.mubr.f32.gmra.mxu0 %v1559
      %v1735 = vpop.f32.mrf.mxu0
      %v1736 = vadd.f32 0.0, %v1735
      %v1737 = vpop.f32.mrf.mxu0
      %1738 = vmatprep.mubr.f32.mxu0 0.0
      %1739 = vmatmul.mubr.f32.gmra.mxu0 %v1562
      %v1740 = vpop.f32.mrf.mxu0
      %v1741 = vadd.f32 0.0, %v1740
      %v1742 = vpop.f32.mrf.mxu0
      %1743 = vmatprep.mubr.f32.mxu0 0.0
      %1744 = vmatmul.mubr.f32.gmra.mxu0 %v1565
      %v1745 = vpop.f32.mrf.mxu0
      %v1746 = vadd.f32 0.0, %v1745
      %v1747 = vpop.f32.mrf.mxu0
      %1748 = vmatprep.mubr.f32.mxu0 0.0
      %1749 = vmatmul.mubr.f32.gmra.mxu0 %v1568
      %v1750 = vpop.f32.mrf.mxu0
      %v1751 = vadd.f32 0.0, %v1750
      %v1752 = vpop.f32.mrf.mxu0
      %1753 = vmatprep.mubr.f32.mxu0 0.0
      %1754 = vmatmul.mubr.f32.gmra.mxu0 %v1571
      %v1755 = vpop.f32.mrf.mxu0
      %v1756 = vadd.f32 0.0, %v1755
      %v1757 = vpop.f32.mrf.mxu0
      %1758 = vmatprep.mubr.f32.mxu0 0.0
      %1759 = vmatmul.mubr.f32.gmra.mxu0 %v1574
      %v1760 = vpop.f32.mrf.mxu0
      %v1761 = vadd.f32 0.0, %v1760
      %v1762 = vpop.f32.mrf.mxu0
      %1763 = vmatprep.mubr.f32.mxu0 0.0
      %1764 = vmatmul.mubr.f32.gmra.mxu0 %v1577
      %v1765 = vpop.f32.mrf.mxu0
      %v1766 = vadd.f32 0.0, %v1765
      %v1767 = vpop.f32.mrf.mxu0
      %1768 = vmatprep.mubr.f32.mxu0 0.0
      %1769 = vmatmul.mubr.f32.gmra.mxu0 %v1580
      %v1770 = vpop.f32.mrf.mxu0
      %v1771 = vadd.f32 0.0, %v1770
      %v1772 = vpop.f32.mrf.mxu0
      %1773 = vmatprep.mubr.f32.mxu0 0.0
      %1774 = vmatmul.mubr.f32.gmra.mxu0 %v1583
      %v1775 = vpop.f32.mrf.mxu0
      %v1776 = vadd.f32 0.0, %v1775
      %v1777 = vpop.f32.mrf.mxu0
      %1778 = vmatprep.mubr.f32.mxu0 0.0
      %1779 = vmatmul.mubr.f32.gmra.mxu0 %v1586
      %v1780 = vpop.f32.mrf.mxu0
      %v1781 = vadd.f32 0.0, %v1780
      %v1782 = vpop.f32.mrf.mxu0
      %1783 = vmatprep.mubr.f32.mxu0 0.0
      %1784 = vmatmul.mubr.f32.gmra.mxu0 %v1589
      %v1785 = vpop.f32.mrf.mxu0
      %v1786 = vadd.f32 0.0, %v1785
      %v1787 = vpop.f32.mrf.mxu0
      %1788 = vmatprep.mubr.f32.mxu0 0.0
      %1789 = vmatmul.mubr.f32.gmra.mxu0 %v1592
      %v1790 = vpop.f32.mrf.mxu0
      %v1791 = vadd.f32 0.0, %v1790
      %v1792 = vpop.f32.mrf.mxu0
      %1793 = vmatprep.mubr.f32.mxu0 0.0
      %1794 = vmatmul.mubr.f32.gmra.mxu0 %v1595
      %v1795 = vpop.f32.mrf.mxu0
      %v1796 = vadd.f32 0.0, %v1795
      %v1797 = vpop.f32.mrf.mxu0
      %1798 = vmatprep.mubr.f32.mxu0 0.0
      %1799 = vmatmul.mubr.f32.gmra.mxu0 %v1598
      %v1800 = vpop.f32.mrf.mxu0
      %v1801 = vadd.f32 0.0, %v1800
      %v1802 = vpop.f32.mrf.mxu0
      %1803 = vmatprep.mubr.f32.mxu0 0.0
      %1804 = vmatmul.mubr.f32.gmra.mxu0 %v1601
      %v1805 = vpop.f32.mrf.mxu0
      %v1806 = vadd.f32 0.0, %v1805
      %v1807 = vpop.f32.mrf.mxu0
      %1808 = vmatprep.mubr.f32.mxu0 0.0
      %1809 = vmatmul.mubr.f32.gmra.mxu0 %v1604
      %v1810 = vpop.f32.mrf.mxu0
      %v1811 = vadd.f32 0.0, %v1810
      %v1812 = vpop.f32.mrf.mxu0
      %1813 = vmatprep.mubr.f32.mxu0 0.0
      %1814 = vmatmul.mubr.f32.gmra.mxu0 %v1607
      %v1815 = vpop.f32.mrf.mxu0
      %v1816 = vadd.f32 0.0, %v1815
      %v1817 = vpop.f32.mrf.mxu0
      %1818 = vmatprep.mubr.f32.mxu0 0.0
      %1819 = vmatmul.mubr.f32.gmra.mxu0 %v1610
      %v1820 = vpop.f32.mrf.mxu0
      %v1821 = vadd.f32 0.0, %v1820
      %v1822 = vpop.f32.mrf.mxu0
      %1823 = vmatprep.mubr.f32.mxu0 0.0
      %1824 = vmatmul.mubr.f32.gmra.mxu0 %v1613
      %v1825 = vpop.f32.mrf.mxu0
      %v1826 = vadd.f32 0.0, %v1825
      %v1827 = vpop.f32.mrf.mxu0
      %1828 = vmatprep.mubr.f32.mxu0 0.0
      %1829 = vmatmul.mubr.f32.gmra.mxu0 %v1616
      %v1830 = vpop.f32.mrf.mxu0
      %v1831 = vadd.f32 0.0, %v1830
      %v1832 = vpop.f32.mrf.mxu0
      %1833 = vmatprep.mubr.f32.mxu0 0.0
      %1834 = vmatmul.mubr.f32.gmra.mxu0 %v1619
      %v1835 = vpop.f32.mrf.mxu0
      %v1836 = vadd.f32 0.0, %v1835
      %v1837 = vpop.f32.mrf.mxu0
      %1838 = vmatprep.mubr.f32.mxu0 0.0
      %1839 = vmatmul.mubr.f32.gmra.mxu0 %v1622
      %v1840 = vpop.f32.mrf.mxu0
      %v1841 = vadd.f32 0.0, %v1840
      %v1842 = vpop.f32.mrf.mxu0
      %1843 = vmatprep.mubr.f32.mxu0 0.0
      %1844 = vmatmul.mubr.f32.gmra.mxu0 %v1625
      %v1845 = vpop.f32.mrf.mxu0
      %v1846 = vadd.f32 0.0, %v1845
      %v1847 = vpop.f32.mrf.mxu0
      %1848 = vmatprep.mubr.f32.mxu0 0.0
      %1849 = vmatmul.mubr.f32.gmra.mxu0 %v1628
      %v1850 = vpop.f32.mrf.mxu0
      %v1851 = vadd.f32 0.0, %v1850
      %v1852 = vpop.f32.mrf.mxu0
      %1853 = vmatprep.mubr.f32.mxu0 0.0
      %1854 = vmatmul.mubr.f32.gmra.mxu0 %v1631
      %v1855 = vpop.f32.mrf.mxu0
      %v1856 = vadd.f32 0.0, %v1855
      %v1857 = vpop.f32.mrf.mxu0
      %1858 = vmatprep.mubr.f32.mxu0 0.0
      %1859 = vmatmul.mubr.f32.gmra.mxu0 %v1634
      %v1860 = vpop.f32.mrf.mxu0
      %v1861 = vadd.f32 0.0, %v1860
      %v1862 = vpop.f32.mrf.mxu0
      %1863 = vdwg.mxu0
      %v1864 = vadd.f32 %v1474, %v1706
      %v1865 = vadd.f32 %v1475, %v1711
      %v1866 = vadd.f32 %v1476, %v1716
      %v1867 = vadd.f32 %v1477, %v1721
      %v1868 = vadd.f32 %v1478, %v1726
      %v1869 = vadd.f32 %v1479, %v1731
      %v1870 = vadd.f32 %v1480, %v1736
      %v1871 = vadd.f32 %v1481, %v1741
      %v1872 = vadd.f32 %v1482, %v1746
      %v1873 = vadd.f32 %v1483, %v1751
      %v1874 = vadd.f32 %v1484, %v1756
      %v1875 = vadd.f32 %v1485, %v1761
      %v1876 = vadd.f32 %v1486, %v1766
      %v1877 = vadd.f32 %v1487, %v1771
      %v1878 = vadd.f32 %v1488, %v1776
      %v1879 = vadd.f32 %v1489, %v1781
      %v1880 = vadd.f32 %v1490, %v1786
      %v1881 = vadd.f32 %v1491, %v1791
      %v1882 = vadd.f32 %v1492, %v1796
      %v1883 = vadd.f32 %v1493, %v1801
      %v1884 = vadd.f32 %v1494, %v1806
      %v1885 = vadd.f32 %v1495, %v1811
      %v1886 = vadd.f32 %v1496, %v1816
      %v1887 = vadd.f32 %v1497, %v1821
      %v1888 = vadd.f32 %v1498, %v1826
      %v1889 = vadd.f32 %v1499, %v1831
      %v1890 = vadd.f32 %v1500, %v1836
      %v1891 = vadd.f32 %v1501, %v1841
      %v1892 = vadd.f32 %v1502, %v1846
      %v1893 = vadd.f32 %v1503, %v1851
      %v1894 = vadd.f32 %v1504, %v1856
      %v1895 = vadd.f32 %v1505, %v1861
      %v1896 = vld [vmem:[%s367 + $0x1] sm:$0xff]
      %v1897 = vld [vmem:[%s367 + $0x9] sm:$0xff]
      %v1898 = vld [vmem:[%s367 + $0x19] sm:$0xff]
      %v1899 = vld [vmem:[%s367 + $0x21] sm:$0xff]
      %v1900 = vld [vmem:[%s367 + $0x31] sm:$0xff]
      %v1901 = vld [vmem:[%s367 + $0x39] sm:$0xff]
      %v1902 = vld [vmem:[%s367 + $0x49] sm:$0xff]
      %v1903 = vld [vmem:[%s367 + $0x51] sm:$0xff]
      %v1904 = vld [vmem:[%s367 + $0x61] sm:$0xff]
      %v1905 = vld [vmem:[%s367 + $0x69] sm:$0xff]
      %v1906 = vld [vmem:[%s367 + $0x79] sm:$0xff]
      %v1907 = vld [vmem:[%s367 + $0x81] sm:$0xff]
      %v1908 = vld [vmem:[%s367 + $0x91] sm:$0xff]
      %v1909 = vld [vmem:[%s367 + $0x99] sm:$0xff]
      %v1910 = vld [vmem:[%s367 + $0xa9] sm:$0xff]
      %v1911 = vld [vmem:[%s367 + $0xb1] sm:$0xff]
      %v1912 = vld [vmem:[%s367 + $0xc1] sm:$0xff]
      %v1913 = vld [vmem:[%s367 + $0xc9] sm:$0xff]
      %v1914 = vld [vmem:[%s367 + $0xd9] sm:$0xff]
      %v1915 = vld [vmem:[%s367 + $0xe1] sm:$0xff]
      %v1916 = vld [vmem:[%s367 + $0xf1] sm:$0xff]
      %v1917 = vld [vmem:[%s367 + $0xf9] sm:$0xff]
      %v1918 = vld [vmem:[%s367 + $0x109] sm:$0xff]
      %v1919 = vld [vmem:[%s367 + $0x111] sm:$0xff]
      %v1920 = vld [vmem:[%s367 + $0x121] sm:$0xff]
      %v1921 = vld [vmem:[%s367 + $0x129] sm:$0xff]
      %v1922 = vld [vmem:[%s367 + $0x139] sm:$0xff]
      %v1923 = vld [vmem:[%s367 + $0x141] sm:$0xff]
      %v1924 = vld [vmem:[%s367 + $0x151] sm:$0xff]
      %v1925 = vld [vmem:[%s367 + $0x159] sm:$0xff]
      %v1926 = vld [vmem:[%s367 + $0x169] sm:$0xff]
      %v1927 = vld [vmem:[%s367 + $0x171] sm:$0xff]
      %s1928 = scalar_lea.vmem %s1, 16
      %v1929 = vld [vmem:[%s1928] sm:$0xf]
      %v1931 = vsel %vm279, %v1896, 0
      %v1934 = vsel %vm279, %v1897, 0
      %v1937 = vsel %vm279, %v1898, 0
      %v1940 = vsel %vm279, %v1899, 0
      %v1943 = vsel %vm279, %v1900, 0
      %v1946 = vsel %vm279, %v1901, 0
      %v1949 = vsel %vm279, %v1902, 0
      %v1952 = vsel %vm279, %v1903, 0
      %v1955 = vsel %vm279, %v1904, 0
      %v1958 = vsel %vm279, %v1905, 0
      %v1961 = vsel %vm279, %v1906, 0
      %v1964 = vsel %vm279, %v1907, 0
      %v1967 = vsel %vm279, %v1908, 0
      %v1970 = vsel %vm279, %v1909, 0
      %v1973 = vsel %vm279, %v1910, 0
      %v1976 = vsel %vm279, %v1911, 0
      %v1979 = vsel %vm279, %v1912, 0
      %v1982 = vsel %vm279, %v1913, 0
      %v1985 = vsel %vm279, %v1914, 0
      %v1988 = vsel %vm279, %v1915, 0
      %v1991 = vsel %vm279, %v1916, 0
      %v1994 = vsel %vm279, %v1917, 0
      %v1997 = vsel %vm279, %v1918, 0
      %v2000 = vsel %vm279, %v1919, 0
      %v2003 = vsel %vm279, %v1920, 0
      %v2006 = vsel %vm279, %v1921, 0
      %v2009 = vsel %vm279, %v1922, 0
      %v2012 = vsel %vm279, %v1923, 0
      %v2015 = vsel %vm279, %v1924, 0
      %v2018 = vsel %vm279, %v1925, 0
      %v2021 = vsel %vm279, %v1926, 0
      %v2024 = vsel %vm279, %v1927, 0
      %v2027 = vsel %vm563, %v1929, 0
      %2029 = vmatprep.subr.mxu0 0.0
      %2030 = vmatpush1.msra.mxu0 0.0
      %2031 = vmatprep.subr.mxu0 0.0
      %2032 = vmatpush1.msra.mxu0 0.0
      %2033 = vmatprep.subr.mxu0 0.0
      %2034 = vmatpush1.msra.mxu0 0.0
      %2035 = vmatprep.subr.mxu0 0.0
      %2036 = vmatpush1.msra.mxu0 0.0
      %2037 = vmatprep.subr.mxu0 0.0
      %2038 = vmatpush1.msra.mxu0 0.0
      %2039 = vmatprep.subr.mxu0 0.0
      %2040 = vmatpush1.msra.mxu0 0.0
      %2041 = vmatprep.subr.mxu0 0.0
      %2042 = vmatpush1.msra.mxu0 0.0
      %2043 = vmatprep.subr.mxu0 0.0
      %2044 = vmatpush1.msra.mxu0 0.0
      %2045 = vmatprep.subr.mxu0 0.0
      %2046 = vmatpush1.msra.mxu0 0.0
      %2047 = vmatprep.subr.mxu0 0.0
      %2048 = vmatpush1.msra.mxu0 0.0
      %2049 = vmatprep.subr.mxu0 0.0
      %2050 = vmatpush1.msra.mxu0 0.0
      %2051 = vmatprep.subr.mxu0 0.0
      %2052 = vmatpush1.msra.mxu0 0.0
      %2053 = vmatprep.subr.mxu0 0.0
      %2054 = vmatpush1.msra.mxu0 0.0
      %2055 = vmatprep.subr.mxu0 0.0
      %2056 = vmatpush1.msra.mxu0 0.0
      %2057 = vmatprep.subr.mxu0 0.0
      %2058 = vmatpush1.msra.mxu0 0.0
      %2059 = vmatprep.subr.mxu0 0.0
      %2060 = vmatpush1.msra.mxu0 %v2027
      %2061 = vmatprep.subr.mxu0 0.0
      %2062 = vmatpush2.msra.mxu0 0.0
      %2063 = vmatprep.subr.mxu0 0.0
      %2064 = vmatpush2.msra.mxu0 0.0
      %2065 = vmatprep.subr.mxu0 0.0
      %2066 = vmatpush2.msra.mxu0 0.0
      %2067 = vmatprep.subr.mxu0 0.0
      %2068 = vmatpush2.msra.mxu0 0.0
      %2069 = vmatprep.subr.mxu0 0.0
      %2070 = vmatpush2.msra.mxu0 0.0
      %2071 = vmatprep.subr.mxu0 0.0
      %2072 = vmatpush2.msra.mxu0 0.0
      %2073 = vmatprep.subr.mxu0 0.0
      %2074 = vmatpush2.msra.mxu0 0.0
      %2075 = vmatprep.subr.mxu0 0.0
      %2076 = vmatpush2.msra.mxu0 0.0
      %2077 = vmatprep.subr.mxu0 0.0
      %2078 = vmatpush2.msra.mxu0 0.0
      %2079 = vmatprep.subr.mxu0 0.0
      %2080 = vmatpush2.msra.mxu0 0.0
      %2081 = vmatprep.subr.mxu0 0.0
      %2082 = vmatpush2.msra.mxu0 0.0
      %2083 = vmatprep.subr.mxu0 0.0
      %2084 = vmatpush2.msra.mxu0 0.0
      %2085 = vmatprep.subr.mxu0 0.0
      %2086 = vmatpush2.msra.mxu0 0.0
      %2087 = vmatprep.subr.mxu0 0.0
      %2088 = vmatpush2.msra.mxu0 0.0
      %2089 = vmatprep.subr.mxu0 0.0
      %2090 = vmatpush2.msra.mxu0 0.0
      %2091 = vmatprep.subr.mxu0 0.0
      %2092 = vmatpush2.msra.mxu0 0.0
      %2093 = vmatprep.mubr.f32.mxu0 0.0
      %2094 = vmatmul.mubr.f32.gmra.mxu0 %v1931
      %v2095 = vpop.f32.mrf.mxu0
      %v2096 = vadd.f32 0.0, %v2095
      %v2097 = vpop.f32.mrf.mxu0
      %2098 = vmatprep.mubr.f32.mxu0 0.0
      %2099 = vmatmul.mubr.f32.gmra.mxu0 %v1934
      %v2100 = vpop.f32.mrf.mxu0
      %v2101 = vadd.f32 0.0, %v2100
      %v2102 = vpop.f32.mrf.mxu0
      %2103 = vmatprep.mubr.f32.mxu0 0.0
      %2104 = vmatmul.mubr.f32.gmra.mxu0 %v1937
      %v2105 = vpop.f32.mrf.mxu0
      %v2106 = vadd.f32 0.0, %v2105
      %v2107 = vpop.f32.mrf.mxu0
      %2108 = vmatprep.mubr.f32.mxu0 0.0
      %2109 = vmatmul.mubr.f32.gmra.mxu0 %v1940
      %v2110 = vpop.f32.mrf.mxu0
      %v2111 = vadd.f32 0.0, %v2110
      %v2112 = vpop.f32.mrf.mxu0
      %2113 = vmatprep.mubr.f32.mxu0 0.0
      %2114 = vmatmul.mubr.f32.gmra.mxu0 %v1943
      %v2115 = vpop.f32.mrf.mxu0
      %v2116 = vadd.f32 0.0, %v2115
      %v2117 = vpop.f32.mrf.mxu0
      %2118 = vmatprep.mubr.f32.mxu0 0.0
      %2119 = vmatmul.mubr.f32.gmra.mxu0 %v1946
      %v2120 = vpop.f32.mrf.mxu0
      %v2121 = vadd.f32 0.0, %v2120
      %v2122 = vpop.f32.mrf.mxu0
      %2123 = vmatprep.mubr.f32.mxu0 0.0
      %2124 = vmatmul.mubr.f32.gmra.mxu0 %v1949
      %v2125 = vpop.f32.mrf.mxu0
      %v2126 = vadd.f32 0.0, %v2125
      %v2127 = vpop.f32.mrf.mxu0
      %2128 = vmatprep.mubr.f32.mxu0 0.0
      %2129 = vmatmul.mubr.f32.gmra.mxu0 %v1952
      %v2130 = vpop.f32.mrf.mxu0
      %v2131 = vadd.f32 0.0, %v2130
      %v2132 = vpop.f32.mrf.mxu0
      %2133 = vmatprep.mubr.f32.mxu0 0.0
      %2134 = vmatmul.mubr.f32.gmra.mxu0 %v1955
      %v2135 = vpop.f32.mrf.mxu0
      %v2136 = vadd.f32 0.0, %v2135
      %v2137 = vpop.f32.mrf.mxu0
      %2138 = vmatprep.mubr.f32.mxu0 0.0
      %2139 = vmatmul.mubr.f32.gmra.mxu0 %v1958
      %v2140 = vpop.f32.mrf.mxu0
      %v2141 = vadd.f32 0.0, %v2140
      %v2142 = vpop.f32.mrf.mxu0
      %2143 = vmatprep.mubr.f32.mxu0 0.0
      %2144 = vmatmul.mubr.f32.gmra.mxu0 %v1961
      %v2145 = vpop.f32.mrf.mxu0
      %v2146 = vadd.f32 0.0, %v2145
      %v2147 = vpop.f32.mrf.mxu0
      %2148 = vmatprep.mubr.f32.mxu0 0.0
      %2149 = vmatmul.mubr.f32.gmra.mxu0 %v1964
      %v2150 = vpop.f32.mrf.mxu0
      %v2151 = vadd.f32 0.0, %v2150
      %v2152 = vpop.f32.mrf.mxu0
      %2153 = vmatprep.mubr.f32.mxu0 0.0
      %2154 = vmatmul.mubr.f32.gmra.mxu0 %v1967
      %v2155 = vpop.f32.mrf.mxu0
      %v2156 = vadd.f32 0.0, %v2155
      %v2157 = vpop.f32.mrf.mxu0
      %2158 = vmatprep.mubr.f32.mxu0 0.0
      %2159 = vmatmul.mubr.f32.gmra.mxu0 %v1970
      %v2160 = vpop.f32.mrf.mxu0
      %v2161 = vadd.f32 0.0, %v2160
      %v2162 = vpop.f32.mrf.mxu0
      %2163 = vmatprep.mubr.f32.mxu0 0.0
      %2164 = vmatmul.mubr.f32.gmra.mxu0 %v1973
      %v2165 = vpop.f32.mrf.mxu0
      %v2166 = vadd.f32 0.0, %v2165
      %v2167 = vpop.f32.mrf.mxu0
      %2168 = vmatprep.mubr.f32.mxu0 0.0
      %2169 = vmatmul.mubr.f32.gmra.mxu0 %v1976
      %v2170 = vpop.f32.mrf.mxu0
      %v2171 = vadd.f32 0.0, %v2170
      %v2172 = vpop.f32.mrf.mxu0
      %2173 = vmatprep.mubr.f32.mxu0 0.0
      %2174 = vmatmul.mubr.f32.gmra.mxu0 %v1979
      %v2175 = vpop.f32.mrf.mxu0
      %v2176 = vadd.f32 0.0, %v2175
      %v2177 = vpop.f32.mrf.mxu0
      %2178 = vmatprep.mubr.f32.mxu0 0.0
      %2179 = vmatmul.mubr.f32.gmra.mxu0 %v1982
      %v2180 = vpop.f32.mrf.mxu0
      %v2181 = vadd.f32 0.0, %v2180
      %v2182 = vpop.f32.mrf.mxu0
      %2183 = vmatprep.mubr.f32.mxu0 0.0
      %2184 = vmatmul.mubr.f32.gmra.mxu0 %v1985
      %v2185 = vpop.f32.mrf.mxu0
      %v2186 = vadd.f32 0.0, %v2185
      %v2187 = vpop.f32.mrf.mxu0
      %2188 = vmatprep.mubr.f32.mxu0 0.0
      %2189 = vmatmul.mubr.f32.gmra.mxu0 %v1988
      %v2190 = vpop.f32.mrf.mxu0
      %v2191 = vadd.f32 0.0, %v2190
      %v2192 = vpop.f32.mrf.mxu0
      %2193 = vmatprep.mubr.f32.mxu0 0.0
      %2194 = vmatmul.mubr.f32.gmra.mxu0 %v1991
      %v2195 = vpop.f32.mrf.mxu0
      %v2196 = vadd.f32 0.0, %v2195
      %v2197 = vpop.f32.mrf.mxu0
      %2198 = vmatprep.mubr.f32.mxu0 0.0
      %2199 = vmatmul.mubr.f32.gmra.mxu0 %v1994
      %v2200 = vpop.f32.mrf.mxu0
      %v2201 = vadd.f32 0.0, %v2200
      %v2202 = vpop.f32.mrf.mxu0
      %2203 = vmatprep.mubr.f32.mxu0 0.0
      %2204 = vmatmul.mubr.f32.gmra.mxu0 %v1997
      %v2205 = vpop.f32.mrf.mxu0
      %v2206 = vadd.f32 0.0, %v2205
      %v2207 = vpop.f32.mrf.mxu0
      %2208 = vmatprep.mubr.f32.mxu0 0.0
      %2209 = vmatmul.mubr.f32.gmra.mxu0 %v2000
      %v2210 = vpop.f32.mrf.mxu0
      %v2211 = vadd.f32 0.0, %v2210
      %v2212 = vpop.f32.mrf.mxu0
      %2213 = vmatprep.mubr.f32.mxu0 0.0
      %2214 = vmatmul.mubr.f32.gmra.mxu0 %v2003
      %v2215 = vpop.f32.mrf.mxu0
      %v2216 = vadd.f32 0.0, %v2215
      %v2217 = vpop.f32.mrf.mxu0
      %2218 = vmatprep.mubr.f32.mxu0 0.0
      %2219 = vmatmul.mubr.f32.gmra.mxu0 %v2006
      %v2220 = vpop.f32.mrf.mxu0
      %v2221 = vadd.f32 0.0, %v2220
      %v2222 = vpop.f32.mrf.mxu0
      %2223 = vmatprep.mubr.f32.mxu0 0.0
      %2224 = vmatmul.mubr.f32.gmra.mxu0 %v2009
      %v2225 = vpop.f32.mrf.mxu0
      %v2226 = vadd.f32 0.0, %v2225
      %v2227 = vpop.f32.mrf.mxu0
      %2228 = vmatprep.mubr.f32.mxu0 0.0
      %2229 = vmatmul.mubr.f32.gmra.mxu0 %v2012
      %v2230 = vpop.f32.mrf.mxu0
      %v2231 = vadd.f32 0.0, %v2230
      %v2232 = vpop.f32.mrf.mxu0
      %2233 = vmatprep.mubr.f32.mxu0 0.0
      %2234 = vmatmul.mubr.f32.gmra.mxu0 %v2015
      %v2235 = vpop.f32.mrf.mxu0
      %v2236 = vadd.f32 0.0, %v2235
      %v2237 = vpop.f32.mrf.mxu0
      %2238 = vmatprep.mubr.f32.mxu0 0.0
      %2239 = vmatmul.mubr.f32.gmra.mxu0 %v2018
      %v2240 = vpop.f32.mrf.mxu0
      %v2241 = vadd.f32 0.0, %v2240
      %v2242 = vpop.f32.mrf.mxu0
      %2243 = vmatprep.mubr.f32.mxu0 0.0
      %2244 = vmatmul.mubr.f32.gmra.mxu0 %v2021
      %v2245 = vpop.f32.mrf.mxu0
      %v2246 = vadd.f32 0.0, %v2245
      %v2247 = vpop.f32.mrf.mxu0
      %2248 = vmatprep.mubr.f32.mxu0 0.0
      %2249 = vmatmul.mubr.f32.gmra.mxu0 %v2024
      %v2250 = vpop.f32.mrf.mxu0
      %v2251 = vadd.f32 0.0, %v2250
      %v2252 = vpop.f32.mrf.mxu0
      %2253 = vdwg.mxu0
      %v2254 = vadd.f32 %v1864, %v2096
      %v2255 = vadd.f32 %v1865, %v2101
      %v2256 = vadd.f32 %v1866, %v2106
      %v2257 = vadd.f32 %v1867, %v2111
      %v2258 = vadd.f32 %v1868, %v2116
      %v2259 = vadd.f32 %v1869, %v2121
      %v2260 = vadd.f32 %v1870, %v2126
      %v2261 = vadd.f32 %v1871, %v2131
      %v2262 = vadd.f32 %v1872, %v2136
      %v2263 = vadd.f32 %v1873, %v2141
      %v2264 = vadd.f32 %v1874, %v2146
      %v2265 = vadd.f32 %v1875, %v2151
      %v2266 = vadd.f32 %v1876, %v2156
      %v2267 = vadd.f32 %v1877, %v2161
      %v2268 = vadd.f32 %v1878, %v2166
      %v2269 = vadd.f32 %v1879, %v2171
      %v2270 = vadd.f32 %v1880, %v2176
      %v2271 = vadd.f32 %v1881, %v2181
      %v2272 = vadd.f32 %v1882, %v2186
      %v2273 = vadd.f32 %v1883, %v2191
      %v2274 = vadd.f32 %v1884, %v2196
      %v2275 = vadd.f32 %v1885, %v2201
      %v2276 = vadd.f32 %v1886, %v2206
      %v2277 = vadd.f32 %v1887, %v2211
      %v2278 = vadd.f32 %v1888, %v2216
      %v2279 = vadd.f32 %v1889, %v2221
      %v2280 = vadd.f32 %v1890, %v2226
      %v2281 = vadd.f32 %v1891, %v2231
      %v2282 = vadd.f32 %v1892, %v2236
      %v2283 = vadd.f32 %v1893, %v2241
      %v2284 = vadd.f32 %v1894, %v2246
      %v2285 = vadd.f32 %v1895, %v2251
      %v2286 = vld [vmem:[%s367 + $0x2] sm:$0xff]
      %v2287 = vld [vmem:[%s367 + $0xa] sm:$0xff]
      %v2288 = vld [vmem:[%s367 + $0x1a] sm:$0xff]
      %v2289 = vld [vmem:[%s367 + $0x22] sm:$0xff]
      %v2290 = vld [vmem:[%s367 + $0x32] sm:$0xff]
      %v2291 = vld [vmem:[%s367 + $0x3a] sm:$0xff]
      %v2292 = vld [vmem:[%s367 + $0x4a] sm:$0xff]
      %v2293 = vld [vmem:[%s367 + $0x52] sm:$0xff]
      %v2294 = vld [vmem:[%s367 + $0x62] sm:$0xff]
      %v2295 = vld [vmem:[%s367 + $0x6a] sm:$0xff]
      %v2296 = vld [vmem:[%s367 + $0x7a] sm:$0xff]
      %v2297 = vld [vmem:[%s367 + $0x82] sm:$0xff]
      %v2298 = vld [vmem:[%s367 + $0x92] sm:$0xff]
      %v2299 = vld [vmem:[%s367 + $0x9a] sm:$0xff]
      %v2300 = vld [vmem:[%s367 + $0xaa] sm:$0xff]
      %v2301 = vld [vmem:[%s367 + $0xb2] sm:$0xff]
      %v2302 = vld [vmem:[%s367 + $0xc2] sm:$0xff]
      %v2303 = vld [vmem:[%s367 + $0xca] sm:$0xff]
      %v2304 = vld [vmem:[%s367 + $0xda] sm:$0xff]
      %v2305 = vld [vmem:[%s367 + $0xe2] sm:$0xff]
      %v2306 = vld [vmem:[%s367 + $0xf2] sm:$0xff]
      %v2307 = vld [vmem:[%s367 + $0xfa] sm:$0xff]
      %v2308 = vld [vmem:[%s367 + $0x10a] sm:$0xff]
      %v2309 = vld [vmem:[%s367 + $0x112] sm:$0xff]
      %v2310 = vld [vmem:[%s367 + $0x122] sm:$0xff]
      %v2311 = vld [vmem:[%s367 + $0x12a] sm:$0xff]
      %v2312 = vld [vmem:[%s367 + $0x13a] sm:$0xff]
      %v2313 = vld [vmem:[%s367 + $0x142] sm:$0xff]
      %v2314 = vld [vmem:[%s367 + $0x152] sm:$0xff]
      %v2315 = vld [vmem:[%s367 + $0x15a] sm:$0xff]
      %v2316 = vld [vmem:[%s367 + $0x16a] sm:$0xff]
      %v2317 = vld [vmem:[%s367 + $0x172] sm:$0xff]
      %s2318 = scalar_lea.vmem %s1, 20
      %v2319 = vld [vmem:[%s2318] sm:$0xf]
      %v2321 = vsel %vm279, %v2286, 0
      %v2324 = vsel %vm279, %v2287, 0
      %v2327 = vsel %vm279, %v2288, 0
      %v2330 = vsel %vm279, %v2289, 0
      %v2333 = vsel %vm279, %v2290, 0
      %v2336 = vsel %vm279, %v2291, 0
      %v2339 = vsel %vm279, %v2292, 0
      %v2342 = vsel %vm279, %v2293, 0
      %v2345 = vsel %vm279, %v2294, 0
      %v2348 = vsel %vm279, %v2295, 0
      %v2351 = vsel %vm279, %v2296, 0
      %v2354 = vsel %vm279, %v2297, 0
      %v2357 = vsel %vm279, %v2298, 0
      %v2360 = vsel %vm279, %v2299, 0
      %v2363 = vsel %vm279, %v2300, 0
      %v2366 = vsel %vm279, %v2301, 0
      %v2369 = vsel %vm279, %v2302, 0
      %v2372 = vsel %vm279, %v2303, 0
      %v2375 = vsel %vm279, %v2304, 0
      %v2378 = vsel %vm279, %v2305, 0
      %v2381 = vsel %vm279, %v2306, 0
      %v2384 = vsel %vm279, %v2307, 0
      %v2387 = vsel %vm279, %v2308, 0
      %v2390 = vsel %vm279, %v2309, 0
      %v2393 = vsel %vm279, %v2310, 0
      %v2396 = vsel %vm279, %v2311, 0
      %v2399 = vsel %vm279, %v2312, 0
      %v2402 = vsel %vm279, %v2313, 0
      %v2405 = vsel %vm279, %v2314, 0
      %v2408 = vsel %vm279, %v2315, 0
      %v2411 = vsel %vm279, %v2316, 0
      %v2414 = vsel %vm279, %v2317, 0
      %v2417 = vsel %vm563, %v2319, 0
      %2419 = vmatprep.subr.mxu0 0.0
      %2420 = vmatpush1.msra.mxu0 0.0
      %2421 = vmatprep.subr.mxu0 0.0
      %2422 = vmatpush1.msra.mxu0 0.0
      %2423 = vmatprep.subr.mxu0 0.0
      %2424 = vmatpush1.msra.mxu0 0.0
      %2425 = vmatprep.subr.mxu0 0.0
      %2426 = vmatpush1.msra.mxu0 0.0
      %2427 = vmatprep.subr.mxu0 0.0
      %2428 = vmatpush1.msra.mxu0 0.0
      %2429 = vmatprep.subr.mxu0 0.0
      %2430 = vmatpush1.msra.mxu0 0.0
      %2431 = vmatprep.subr.mxu0 0.0
      %2432 = vmatpush1.msra.mxu0 0.0
      %2433 = vmatprep.subr.mxu0 0.0
      %2434 = vmatpush1.msra.mxu0 0.0
      %2435 = vmatprep.subr.mxu0 0.0
      %2436 = vmatpush1.msra.mxu0 0.0
      %2437 = vmatprep.subr.mxu0 0.0
      %2438 = vmatpush1.msra.mxu0 0.0
      %2439 = vmatprep.subr.mxu0 0.0
      %2440 = vmatpush1.msra.mxu0 0.0
      %2441 = vmatprep.subr.mxu0 0.0
      %2442 = vmatpush1.msra.mxu0 0.0
      %2443 = vmatprep.subr.mxu0 0.0
      %2444 = vmatpush1.msra.mxu0 0.0
      %2445 = vmatprep.subr.mxu0 0.0
      %2446 = vmatpush1.msra.mxu0 0.0
      %2447 = vmatprep.subr.mxu0 0.0
      %2448 = vmatpush1.msra.mxu0 0.0
      %2449 = vmatprep.subr.mxu0 0.0
      %2450 = vmatpush1.msra.mxu0 %v2417
      %2451 = vmatprep.subr.mxu0 0.0
      %2452 = vmatpush2.msra.mxu0 0.0
      %2453 = vmatprep.subr.mxu0 0.0
      %2454 = vmatpush2.msra.mxu0 0.0
      %2455 = vmatprep.subr.mxu0 0.0
      %2456 = vmatpush2.msra.mxu0 0.0
      %2457 = vmatprep.subr.mxu0 0.0
      %2458 = vmatpush2.msra.mxu0 0.0
      %2459 = vmatprep.subr.mxu0 0.0
      %2460 = vmatpush2.msra.mxu0 0.0
      %2461 = vmatprep.subr.mxu0 0.0
      %2462 = vmatpush2.msra.mxu0 0.0
      %2463 = vmatprep.subr.mxu0 0.0
      %2464 = vmatpush2.msra.mxu0 0.0
      %2465 = vmatprep.subr.mxu0 0.0
      %2466 = vmatpush2.msra.mxu0 0.0
      %2467 = vmatprep.subr.mxu0 0.0
      %2468 = vmatpush2.msra.mxu0 0.0
      %2469 = vmatprep.subr.mxu0 0.0
      %2470 = vmatpush2.msra.mxu0 0.0
      %2471 = vmatprep.subr.mxu0 0.0
      %2472 = vmatpush2.msra.mxu0 0.0
      %2473 = vmatprep.subr.mxu0 0.0
      %2474 = vmatpush2.msra.mxu0 0.0
      %2475 = vmatprep.subr.mxu0 0.0
      %2476 = vmatpush2.msra.mxu0 0.0
      %2477 = vmatprep.subr.mxu0 0.0
      %2478 = vmatpush2.msra.mxu0 0.0
      %2479 = vmatprep.subr.mxu0 0.0
      %2480 = vmatpush2.msra.mxu0 0.0
      %2481 = vmatprep.subr.mxu0 0.0
      %2482 = vmatpush2.msra.mxu0 0.0
      %2483 = vmatprep.mubr.f32.mxu0 0.0
      %2484 = vmatmul.mubr.f32.gmra.mxu0 %v2321
      %v2485 = vpop.f32.mrf.mxu0
      %v2486 = vadd.f32 0.0, %v2485
      %v2487 = vpop.f32.mrf.mxu0
      %2488 = vmatprep.mubr.f32.mxu0 0.0
      %2489 = vmatmul.mubr.f32.gmra.mxu0 %v2324
      %v2490 = vpop.f32.mrf.mxu0
      %v2491 = vadd.f32 0.0, %v2490
      %v2492 = vpop.f32.mrf.mxu0
      %2493 = vmatprep.mubr.f32.mxu0 0.0
      %2494 = vmatmul.mubr.f32.gmra.mxu0 %v2327
      %v2495 = vpop.f32.mrf.mxu0
      %v2496 = vadd.f32 0.0, %v2495
      %v2497 = vpop.f32.mrf.mxu0
      %2498 = vmatprep.mubr.f32.mxu0 0.0
      %2499 = vmatmul.mubr.f32.gmra.mxu0 %v2330
      %v2500 = vpop.f32.mrf.mxu0
      %v2501 = vadd.f32 0.0, %v2500
      %v2502 = vpop.f32.mrf.mxu0
      %2503 = vmatprep.mubr.f32.mxu0 0.0
      %2504 = vmatmul.mubr.f32.gmra.mxu0 %v2333
      %v2505 = vpop.f32.mrf.mxu0
      %v2506 = vadd.f32 0.0, %v2505
      %v2507 = vpop.f32.mrf.mxu0
      %2508 = vmatprep.mubr.f32.mxu0 0.0
      %2509 = vmatmul.mubr.f32.gmra.mxu0 %v2336
      %v2510 = vpop.f32.mrf.mxu0
      %v2511 = vadd.f32 0.0, %v2510
      %v2512 = vpop.f32.mrf.mxu0
      %2513 = vmatprep.mubr.f32.mxu0 0.0
      %2514 = vmatmul.mubr.f32.gmra.mxu0 %v2339
      %v2515 = vpop.f32.mrf.mxu0
      %v2516 = vadd.f32 0.0, %v2515
      %v2517 = vpop.f32.mrf.mxu0
      %2518 = vmatprep.mubr.f32.mxu0 0.0
      %2519 = vmatmul.mubr.f32.gmra.mxu0 %v2342
      %v2520 = vpop.f32.mrf.mxu0
      %v2521 = vadd.f32 0.0, %v2520
      %v2522 = vpop.f32.mrf.mxu0
      %2523 = vmatprep.mubr.f32.mxu0 0.0
      %2524 = vmatmul.mubr.f32.gmra.mxu0 %v2345
      %v2525 = vpop.f32.mrf.mxu0
      %v2526 = vadd.f32 0.0, %v2525
      %v2527 = vpop.f32.mrf.mxu0
      %2528 = vmatprep.mubr.f32.mxu0 0.0
      %2529 = vmatmul.mubr.f32.gmra.mxu0 %v2348
      %v2530 = vpop.f32.mrf.mxu0
      %v2531 = vadd.f32 0.0, %v2530
      %v2532 = vpop.f32.mrf.mxu0
      %2533 = vmatprep.mubr.f32.mxu0 0.0
      %2534 = vmatmul.mubr.f32.gmra.mxu0 %v2351
      %v2535 = vpop.f32.mrf.mxu0
      %v2536 = vadd.f32 0.0, %v2535
      %v2537 = vpop.f32.mrf.mxu0
      %2538 = vmatprep.mubr.f32.mxu0 0.0
      %2539 = vmatmul.mubr.f32.gmra.mxu0 %v2354
      %v2540 = vpop.f32.mrf.mxu0
      %v2541 = vadd.f32 0.0, %v2540
      %v2542 = vpop.f32.mrf.mxu0
      %2543 = vmatprep.mubr.f32.mxu0 0.0
      %2544 = vmatmul.mubr.f32.gmra.mxu0 %v2357
      %v2545 = vpop.f32.mrf.mxu0
      %v2546 = vadd.f32 0.0, %v2545
      %v2547 = vpop.f32.mrf.mxu0
      %2548 = vmatprep.mubr.f32.mxu0 0.0
      %2549 = vmatmul.mubr.f32.gmra.mxu0 %v2360
      %v2550 = vpop.f32.mrf.mxu0
      %v2551 = vadd.f32 0.0, %v2550
      %v2552 = vpop.f32.mrf.mxu0
      %2553 = vmatprep.mubr.f32.mxu0 0.0
      %2554 = vmatmul.mubr.f32.gmra.mxu0 %v2363
      %v2555 = vpop.f32.mrf.mxu0
      %v2556 = vadd.f32 0.0, %v2555
      %v2557 = vpop.f32.mrf.mxu0
      %2558 = vmatprep.mubr.f32.mxu0 0.0
      %2559 = vmatmul.mubr.f32.gmra.mxu0 %v2366
      %v2560 = vpop.f32.mrf.mxu0
      %v2561 = vadd.f32 0.0, %v2560
      %v2562 = vpop.f32.mrf.mxu0
      %2563 = vmatprep.mubr.f32.mxu0 0.0
      %2564 = vmatmul.mubr.f32.gmra.mxu0 %v2369
      %v2565 = vpop.f32.mrf.mxu0
      %v2566 = vadd.f32 0.0, %v2565
      %v2567 = vpop.f32.mrf.mxu0
      %2568 = vmatprep.mubr.f32.mxu0 0.0
      %2569 = vmatmul.mubr.f32.gmra.mxu0 %v2372
      %v2570 = vpop.f32.mrf.mxu0
      %v2571 = vadd.f32 0.0, %v2570
      %v2572 = vpop.f32.mrf.mxu0
      %2573 = vmatprep.mubr.f32.mxu0 0.0
      %2574 = vmatmul.mubr.f32.gmra.mxu0 %v2375
      %v2575 = vpop.f32.mrf.mxu0
      %v2576 = vadd.f32 0.0, %v2575
      %v2577 = vpop.f32.mrf.mxu0
      %2578 = vmatprep.mubr.f32.mxu0 0.0
      %2579 = vmatmul.mubr.f32.gmra.mxu0 %v2378
      %v2580 = vpop.f32.mrf.mxu0
      %v2581 = vadd.f32 0.0, %v2580
      %v2582 = vpop.f32.mrf.mxu0
      %2583 = vmatprep.mubr.f32.mxu0 0.0
      %2584 = vmatmul.mubr.f32.gmra.mxu0 %v2381
      %v2585 = vpop.f32.mrf.mxu0
      %v2586 = vadd.f32 0.0, %v2585
      %v2587 = vpop.f32.mrf.mxu0
      %2588 = vmatprep.mubr.f32.mxu0 0.0
      %2589 = vmatmul.mubr.f32.gmra.mxu0 %v2384
      %v2590 = vpop.f32.mrf.mxu0
      %v2591 = vadd.f32 0.0, %v2590
      %v2592 = vpop.f32.mrf.mxu0
      %2593 = vmatprep.mubr.f32.mxu0 0.0
      %2594 = vmatmul.mubr.f32.gmra.mxu0 %v2387
      %v2595 = vpop.f32.mrf.mxu0
      %v2596 = vadd.f32 0.0, %v2595
      %v2597 = vpop.f32.mrf.mxu0
      %2598 = vmatprep.mubr.f32.mxu0 0.0
      %2599 = vmatmul.mubr.f32.gmra.mxu0 %v2390
      %v2600 = vpop.f32.mrf.mxu0
      %v2601 = vadd.f32 0.0, %v2600
      %v2602 = vpop.f32.mrf.mxu0
      %2603 = vmatprep.mubr.f32.mxu0 0.0
      %2604 = vmatmul.mubr.f32.gmra.mxu0 %v2393
      %v2605 = vpop.f32.mrf.mxu0
      %v2606 = vadd.f32 0.0, %v2605
      %v2607 = vpop.f32.mrf.mxu0
      %2608 = vmatprep.mubr.f32.mxu0 0.0
      %2609 = vmatmul.mubr.f32.gmra.mxu0 %v2396
      %v2610 = vpop.f32.mrf.mxu0
      %v2611 = vadd.f32 0.0, %v2610
      %v2612 = vpop.f32.mrf.mxu0
      %2613 = vmatprep.mubr.f32.mxu0 0.0
      %2614 = vmatmul.mubr.f32.gmra.mxu0 %v2399
      %v2615 = vpop.f32.mrf.mxu0
      %v2616 = vadd.f32 0.0, %v2615
      %v2617 = vpop.f32.mrf.mxu0
      %2618 = vmatprep.mubr.f32.mxu0 0.0
      %2619 = vmatmul.mubr.f32.gmra.mxu0 %v2402
      %v2620 = vpop.f32.mrf.mxu0
      %v2621 = vadd.f32 0.0, %v2620
      %v2622 = vpop.f32.mrf.mxu0
      %2623 = vmatprep.mubr.f32.mxu0 0.0
      %2624 = vmatmul.mubr.f32.gmra.mxu0 %v2405
      %v2625 = vpop.f32.mrf.mxu0
      %v2626 = vadd.f32 0.0, %v2625
      %v2627 = vpop.f32.mrf.mxu0
      %2628 = vmatprep.mubr.f32.mxu0 0.0
      %2629 = vmatmul.mubr.f32.gmra.mxu0 %v2408
      %v2630 = vpop.f32.mrf.mxu0
      %v2631 = vadd.f32 0.0, %v2630
      %v2632 = vpop.f32.mrf.mxu0
      %2633 = vmatprep.mubr.f32.mxu0 0.0
      %2634 = vmatmul.mubr.f32.gmra.mxu0 %v2411
      %v2635 = vpop.f32.mrf.mxu0
      %v2636 = vadd.f32 0.0, %v2635
      %v2637 = vpop.f32.mrf.mxu0
      %2638 = vmatprep.mubr.f32.mxu0 0.0
      %2639 = vmatmul.mubr.f32.gmra.mxu0 %v2414
      %v2640 = vpop.f32.mrf.mxu0
      %v2641 = vadd.f32 0.0, %v2640
      %v2642 = vpop.f32.mrf.mxu0
      %2643 = vdwg.mxu0
      %v2644 = vadd.f32 %v2254, %v2486
      %v2645 = vadd.f32 %v2255, %v2491
      %v2646 = vadd.f32 %v2256, %v2496
      %v2647 = vadd.f32 %v2257, %v2501
      %v2648 = vadd.f32 %v2258, %v2506
      %v2649 = vadd.f32 %v2259, %v2511
      %v2650 = vadd.f32 %v2260, %v2516
      %v2651 = vadd.f32 %v2261, %v2521
      %v2652 = vadd.f32 %v2262, %v2526
      %v2653 = vadd.f32 %v2263, %v2531
      %v2654 = vadd.f32 %v2264, %v2536
      %v2655 = vadd.f32 %v2265, %v2541
      %v2656 = vadd.f32 %v2266, %v2546
      %v2657 = vadd.f32 %v2267, %v2551
      %v2658 = vadd.f32 %v2268, %v2556
      %v2659 = vadd.f32 %v2269, %v2561
      %v2660 = vadd.f32 %v2270, %v2566
      %v2661 = vadd.f32 %v2271, %v2571
      %v2662 = vadd.f32 %v2272, %v2576
      %v2663 = vadd.f32 %v2273, %v2581
      %v2664 = vadd.f32 %v2274, %v2586
      %v2665 = vadd.f32 %v2275, %v2591
      %v2666 = vadd.f32 %v2276, %v2596
      %v2667 = vadd.f32 %v2277, %v2601
      %v2668 = vadd.f32 %v2278, %v2606
      %v2669 = vadd.f32 %v2279, %v2611
      %v2670 = vadd.f32 %v2280, %v2616
      %v2671 = vadd.f32 %v2281, %v2621
      %v2672 = vadd.f32 %v2282, %v2626
      %v2673 = vadd.f32 %v2283, %v2631
      %v2674 = vadd.f32 %v2284, %v2636
      %v2675 = vadd.f32 %v2285, %v2641
      %s2676 = scalar_lea.vmem [#allocation2], 48
      %v2677 = vld [vmem:[%s2676] sm:$0xff]
      %v2678 = vld [vmem:[%s2676 + $0x8] sm:$0xff]
      %v2679 = vld [vmem:[%s2676 + $0x18] sm:$0xff]
      %v2680 = vld [vmem:[%s2676 + $0x20] sm:$0xff]
      %v2681 = vld [vmem:[%s2676 + $0x30] sm:$0xff]
      %v2682 = vld [vmem:[%s2676 + $0x38] sm:$0xff]
      %v2683 = vld [vmem:[%s2676 + $0x48] sm:$0xff]
      %v2684 = vld [vmem:[%s2676 + $0x50] sm:$0xff]
      %v2685 = vld [vmem:[%s2676 + $0x60] sm:$0xff]
      %v2686 = vld [vmem:[%s2676 + $0x68] sm:$0xff]
      %v2687 = vld [vmem:[%s2676 + $0x78] sm:$0xff]
      %v2688 = vld [vmem:[%s2676 + $0x80] sm:$0xff]
      %v2689 = vld [vmem:[%s2676 + $0x90] sm:$0xff]
      %v2690 = vld [vmem:[%s2676 + $0x98] sm:$0xff]
      %v2691 = vld [vmem:[%s2676 + $0xa8] sm:$0xff]
      %v2692 = vld [vmem:[%s2676 + $0xb0] sm:$0xff]
      %v2693 = vld [vmem:[%s2676 + $0xc0] sm:$0xff]
      %v2694 = vld [vmem:[%s2676 + $0xc8] sm:$0xff]
      %v2695 = vld [vmem:[%s2676 + $0xd8] sm:$0xff]
      %v2696 = vld [vmem:[%s2676 + $0xe0] sm:$0xff]
      %v2697 = vld [vmem:[%s2676 + $0xf0] sm:$0xff]
      %v2698 = vld [vmem:[%s2676 + $0xf8] sm:$0xff]
      %v2699 = vld [vmem:[%s2676 + $0x108] sm:$0xff]
      %v2700 = vld [vmem:[%s2676 + $0x110] sm:$0xff]
      %v2701 = vld [vmem:[%s2676 + $0x120] sm:$0xff]
      %v2702 = vld [vmem:[%s2676 + $0x128] sm:$0xff]
      %v2703 = vld [vmem:[%s2676 + $0x138] sm:$0xff]
      %v2704 = vld [vmem:[%s2676 + $0x140] sm:$0xff]
      %v2705 = vld [vmem:[%s2676 + $0x150] sm:$0xff]
      %v2706 = vld [vmem:[%s2676 + $0x158] sm:$0xff]
      %v2707 = vld [vmem:[%s2676 + $0x168] sm:$0xff]
      %v2708 = vld [vmem:[%s2676 + $0x170] sm:$0xff]
      %s2709 = scalar_lea.vmem %s1, 24
      %v2710 = vld [vmem:[%s2709] sm:$0xf]
      %v2712 = vsel %vm279, %v2677, 0
      %v2715 = vsel %vm279, %v2678, 0
      %v2718 = vsel %vm279, %v2679, 0
      %v2721 = vsel %vm279, %v2680, 0
      %v2724 = vsel %vm279, %v2681, 0
      %v2727 = vsel %vm279, %v2682, 0
      %v2730 = vsel %vm279, %v2683, 0
      %v2733 = vsel %vm279, %v2684, 0
      %v2736 = vsel %vm279, %v2685, 0
      %v2739 = vsel %vm279, %v2686, 0
      %v2742 = vsel %vm279, %v2687, 0
      %v2745 = vsel %vm279, %v2688, 0
      %v2748 = vsel %vm279, %v2689, 0
      %v2751 = vsel %vm279, %v2690, 0
      %v2754 = vsel %vm279, %v2691, 0
      %v2757 = vsel %vm279, %v2692, 0
      %v2760 = vsel %vm279, %v2693, 0
      %v2763 = vsel %vm279, %v2694, 0
      %v2766 = vsel %vm279, %v2695, 0
      %v2769 = vsel %vm279, %v2696, 0
      %v2772 = vsel %vm279, %v2697, 0
      %v2775 = vsel %vm279, %v2698, 0
      %v2778 = vsel %vm279, %v2699, 0
      %v2781 = vsel %vm279, %v2700, 0
      %v2784 = vsel %vm279, %v2701, 0
      %v2787 = vsel %vm279, %v2702, 0
      %v2790 = vsel %vm279, %v2703, 0
      %v2793 = vsel %vm279, %v2704, 0
      %v2796 = vsel %vm279, %v2705, 0
      %v2799 = vsel %vm279, %v2706, 0
      %v2802 = vsel %vm279, %v2707, 0
      %v2805 = vsel %vm279, %v2708, 0
      %v2808 = vsel %vm563, %v2710, 0
      %2810 = vmatprep.subr.mxu0 0.0
      %2811 = vmatpush1.msra.mxu0 0.0
      %2812 = vmatprep.subr.mxu0 0.0
      %2813 = vmatpush1.msra.mxu0 0.0
      %2814 = vmatprep.subr.mxu0 0.0
      %2815 = vmatpush1.msra.mxu0 0.0
      %2816 = vmatprep.subr.mxu0 0.0
      %2817 = vmatpush1.msra.mxu0 0.0
      %2818 = vmatprep.subr.mxu0 0.0
      %2819 = vmatpush1.msra.mxu0 0.0
      %2820 = vmatprep.subr.mxu0 0.0
      %2821 = vmatpush1.msra.mxu0 0.0
      %2822 = vmatprep.subr.mxu0 0.0
      %2823 = vmatpush1.msra.mxu0 0.0
      %2824 = vmatprep.subr.mxu0 0.0
      %2825 = vmatpush1.msra.mxu0 0.0
      %2826 = vmatprep.subr.mxu0 0.0
      %2827 = vmatpush1.msra.mxu0 0.0
      %2828 = vmatprep.subr.mxu0 0.0
      %2829 = vmatpush1.msra.mxu0 0.0
      %2830 = vmatprep.subr.mxu0 0.0
      %2831 = vmatpush1.msra.mxu0 0.0
      %2832 = vmatprep.subr.mxu0 0.0
      %2833 = vmatpush1.msra.mxu0 0.0
      %2834 = vmatprep.subr.mxu0 0.0
      %2835 = vmatpush1.msra.mxu0 0.0
      %2836 = vmatprep.subr.mxu0 0.0
      %2837 = vmatpush1.msra.mxu0 0.0
      %2838 = vmatprep.subr.mxu0 0.0
      %2839 = vmatpush1.msra.mxu0 0.0
      %2840 = vmatprep.subr.mxu0 0.0
      %2841 = vmatpush1.msra.mxu0 %v2808
      %2842 = vmatprep.subr.mxu0 0.0
      %2843 = vmatpush2.msra.mxu0 0.0
      %2844 = vmatprep.subr.mxu0 0.0
      %2845 = vmatpush2.msra.mxu0 0.0
      %2846 = vmatprep.subr.mxu0 0.0
      %2847 = vmatpush2.msra.mxu0 0.0
      %2848 = vmatprep.subr.mxu0 0.0
      %2849 = vmatpush2.msra.mxu0 0.0
      %2850 = vmatprep.subr.mxu0 0.0
      %2851 = vmatpush2.msra.mxu0 0.0
      %2852 = vmatprep.subr.mxu0 0.0
      %2853 = vmatpush2.msra.mxu0 0.0
      %2854 = vmatprep.subr.mxu0 0.0
      %2855 = vmatpush2.msra.mxu0 0.0
      %2856 = vmatprep.subr.mxu0 0.0
      %2857 = vmatpush2.msra.mxu0 0.0
      %2858 = vmatprep.subr.mxu0 0.0
      %2859 = vmatpush2.msra.mxu0 0.0
      %2860 = vmatprep.subr.mxu0 0.0
      %2861 = vmatpush2.msra.mxu0 0.0
      %2862 = vmatprep.subr.mxu0 0.0
      %2863 = vmatpush2.msra.mxu0 0.0
      %2864 = vmatprep.subr.mxu0 0.0
      %2865 = vmatpush2.msra.mxu0 0.0
      %2866 = vmatprep.subr.mxu0 0.0
      %2867 = vmatpush2.msra.mxu0 0.0
      %2868 = vmatprep.subr.mxu0 0.0
      %2869 = vmatpush2.msra.mxu0 0.0
      %2870 = vmatprep.subr.mxu0 0.0
      %2871 = vmatpush2.msra.mxu0 0.0
      %2872 = vmatprep.subr.mxu0 0.0
      %2873 = vmatpush2.msra.mxu0 0.0
      %2874 = vmatprep.mubr.f32.mxu0 0.0
      %2875 = vmatmul.mubr.f32.gmra.mxu0 %v2712
      %v2876 = vpop.f32.mrf.mxu0
      %v2877 = vadd.f32 0.0, %v2876
      %v2878 = vpop.f32.mrf.mxu0
      %2879 = vmatprep.mubr.f32.mxu0 0.0
      %2880 = vmatmul.mubr.f32.gmra.mxu0 %v2715
      %v2881 = vpop.f32.mrf.mxu0
      %v2882 = vadd.f32 0.0, %v2881
      %v2883 = vpop.f32.mrf.mxu0
      %2884 = vmatprep.mubr.f32.mxu0 0.0
      %2885 = vmatmul.mubr.f32.gmra.mxu0 %v2718
      %v2886 = vpop.f32.mrf.mxu0
      %v2887 = vadd.f32 0.0, %v2886
      %v2888 = vpop.f32.mrf.mxu0
      %2889 = vmatprep.mubr.f32.mxu0 0.0
      %2890 = vmatmul.mubr.f32.gmra.mxu0 %v2721
      %v2891 = vpop.f32.mrf.mxu0
      %v2892 = vadd.f32 0.0, %v2891
      %v2893 = vpop.f32.mrf.mxu0
      %2894 = vmatprep.mubr.f32.mxu0 0.0
      %2895 = vmatmul.mubr.f32.gmra.mxu0 %v2724
      %v2896 = vpop.f32.mrf.mxu0
      %v2897 = vadd.f32 0.0, %v2896
      %v2898 = vpop.f32.mrf.mxu0
      %2899 = vmatprep.mubr.f32.mxu0 0.0
      %2900 = vmatmul.mubr.f32.gmra.mxu0 %v2727
      %v2901 = vpop.f32.mrf.mxu0
      %v2902 = vadd.f32 0.0, %v2901
      %v2903 = vpop.f32.mrf.mxu0
      %2904 = vmatprep.mubr.f32.mxu0 0.0
      %2905 = vmatmul.mubr.f32.gmra.mxu0 %v2730
      %v2906 = vpop.f32.mrf.mxu0
      %v2907 = vadd.f32 0.0, %v2906
      %v2908 = vpop.f32.mrf.mxu0
      %2909 = vmatprep.mubr.f32.mxu0 0.0
      %2910 = vmatmul.mubr.f32.gmra.mxu0 %v2733
      %v2911 = vpop.f32.mrf.mxu0
      %v2912 = vadd.f32 0.0, %v2911
      %v2913 = vpop.f32.mrf.mxu0
      %2914 = vmatprep.mubr.f32.mxu0 0.0
      %2915 = vmatmul.mubr.f32.gmra.mxu0 %v2736
      %v2916 = vpop.f32.mrf.mxu0
      %v2917 = vadd.f32 0.0, %v2916
      %v2918 = vpop.f32.mrf.mxu0
      %2919 = vmatprep.mubr.f32.mxu0 0.0
      %2920 = vmatmul.mubr.f32.gmra.mxu0 %v2739
      %v2921 = vpop.f32.mrf.mxu0
      %v2922 = vadd.f32 0.0, %v2921
      %v2923 = vpop.f32.mrf.mxu0
      %2924 = vmatprep.mubr.f32.mxu0 0.0
      %2925 = vmatmul.mubr.f32.gmra.mxu0 %v2742
      %v2926 = vpop.f32.mrf.mxu0
      %v2927 = vadd.f32 0.0, %v2926
      %v2928 = vpop.f32.mrf.mxu0
      %2929 = vmatprep.mubr.f32.mxu0 0.0
      %2930 = vmatmul.mubr.f32.gmra.mxu0 %v2745
      %v2931 = vpop.f32.mrf.mxu0
      %v2932 = vadd.f32 0.0, %v2931
      %v2933 = vpop.f32.mrf.mxu0
      %2934 = vmatprep.mubr.f32.mxu0 0.0
      %2935 = vmatmul.mubr.f32.gmra.mxu0 %v2748
      %v2936 = vpop.f32.mrf.mxu0
      %v2937 = vadd.f32 0.0, %v2936
      %v2938 = vpop.f32.mrf.mxu0
      %2939 = vmatprep.mubr.f32.mxu0 0.0
      %2940 = vmatmul.mubr.f32.gmra.mxu0 %v2751
      %v2941 = vpop.f32.mrf.mxu0
      %v2942 = vadd.f32 0.0, %v2941
      %v2943 = vpop.f32.mrf.mxu0
      %2944 = vmatprep.mubr.f32.mxu0 0.0
      %2945 = vmatmul.mubr.f32.gmra.mxu0 %v2754
      %v2946 = vpop.f32.mrf.mxu0
      %v2947 = vadd.f32 0.0, %v2946
      %v2948 = vpop.f32.mrf.mxu0
      %2949 = vmatprep.mubr.f32.mxu0 0.0
      %2950 = vmatmul.mubr.f32.gmra.mxu0 %v2757
      %v2951 = vpop.f32.mrf.mxu0
      %v2952 = vadd.f32 0.0, %v2951
      %v2953 = vpop.f32.mrf.mxu0
      %2954 = vmatprep.mubr.f32.mxu0 0.0
      %2955 = vmatmul.mubr.f32.gmra.mxu0 %v2760
      %v2956 = vpop.f32.mrf.mxu0
      %v2957 = vadd.f32 0.0, %v2956
      %v2958 = vpop.f32.mrf.mxu0
      %2959 = vmatprep.mubr.f32.mxu0 0.0
      %2960 = vmatmul.mubr.f32.gmra.mxu0 %v2763
      %v2961 = vpop.f32.mrf.mxu0
      %v2962 = vadd.f32 0.0, %v2961
      %v2963 = vpop.f32.mrf.mxu0
      %2964 = vmatprep.mubr.f32.mxu0 0.0
      %2965 = vmatmul.mubr.f32.gmra.mxu0 %v2766
      %v2966 = vpop.f32.mrf.mxu0
      %v2967 = vadd.f32 0.0, %v2966
      %v2968 = vpop.f32.mrf.mxu0
      %2969 = vmatprep.mubr.f32.mxu0 0.0
      %2970 = vmatmul.mubr.f32.gmra.mxu0 %v2769
      %v2971 = vpop.f32.mrf.mxu0
      %v2972 = vadd.f32 0.0, %v2971
      %v2973 = vpop.f32.mrf.mxu0
      %2974 = vmatprep.mubr.f32.mxu0 0.0
      %2975 = vmatmul.mubr.f32.gmra.mxu0 %v2772
      %v2976 = vpop.f32.mrf.mxu0
      %v2977 = vadd.f32 0.0, %v2976
      %v2978 = vpop.f32.mrf.mxu0
      %2979 = vmatprep.mubr.f32.mxu0 0.0
      %2980 = vmatmul.mubr.f32.gmra.mxu0 %v2775
      %v2981 = vpop.f32.mrf.mxu0
      %v2982 = vadd.f32 0.0, %v2981
      %v2983 = vpop.f32.mrf.mxu0
      %2984 = vmatprep.mubr.f32.mxu0 0.0
      %2985 = vmatmul.mubr.f32.gmra.mxu0 %v2778
      %v2986 = vpop.f32.mrf.mxu0
      %v2987 = vadd.f32 0.0, %v2986
      %v2988 = vpop.f32.mrf.mxu0
      %2989 = vmatprep.mubr.f32.mxu0 0.0
      %2990 = vmatmul.mubr.f32.gmra.mxu0 %v2781
      %v2991 = vpop.f32.mrf.mxu0
      %v2992 = vadd.f32 0.0, %v2991
      %v2993 = vpop.f32.mrf.mxu0
      %2994 = vmatprep.mubr.f32.mxu0 0.0
      %2995 = vmatmul.mubr.f32.gmra.mxu0 %v2784
      %v2996 = vpop.f32.mrf.mxu0
      %v2997 = vadd.f32 0.0, %v2996
      %v2998 = vpop.f32.mrf.mxu0
      %2999 = vmatprep.mubr.f32.mxu0 0.0
      %3000 = vmatmul.mubr.f32.gmra.mxu0 %v2787
      %v3001 = vpop.f32.mrf.mxu0
      %v3002 = vadd.f32 0.0, %v3001
      %v3003 = vpop.f32.mrf.mxu0
      %3004 = vmatprep.mubr.f32.mxu0 0.0
      %3005 = vmatmul.mubr.f32.gmra.mxu0 %v2790
      %v3006 = vpop.f32.mrf.mxu0
      %v3007 = vadd.f32 0.0, %v3006
      %v3008 = vpop.f32.mrf.mxu0
      %3009 = vmatprep.mubr.f32.mxu0 0.0
      %3010 = vmatmul.mubr.f32.gmra.mxu0 %v2793
      %v3011 = vpop.f32.mrf.mxu0
      %v3012 = vadd.f32 0.0, %v3011
      %v3013 = vpop.f32.mrf.mxu0
      %3014 = vmatprep.mubr.f32.mxu0 0.0
      %3015 = vmatmul.mubr.f32.gmra.mxu0 %v2796
      %v3016 = vpop.f32.mrf.mxu0
      %v3017 = vadd.f32 0.0, %v3016
      %v3018 = vpop.f32.mrf.mxu0
      %3019 = vmatprep.mubr.f32.mxu0 0.0
      %3020 = vmatmul.mubr.f32.gmra.mxu0 %v2799
      %v3021 = vpop.f32.mrf.mxu0
      %v3022 = vadd.f32 0.0, %v3021
      %v3023 = vpop.f32.mrf.mxu0
      %3024 = vmatprep.mubr.f32.mxu0 0.0
      %3025 = vmatmul.mubr.f32.gmra.mxu0 %v2802
      %v3026 = vpop.f32.mrf.mxu0
      %v3027 = vadd.f32 0.0, %v3026
      %v3028 = vpop.f32.mrf.mxu0
      %3029 = vmatprep.mubr.f32.mxu0 0.0
      %3030 = vmatmul.mubr.f32.gmra.mxu0 %v2805
      %v3031 = vpop.f32.mrf.mxu0
      %v3032 = vadd.f32 0.0, %v3031
      %v3033 = vpop.f32.mrf.mxu0
      %3034 = vdwg.mxu0
      %v3035 = vadd.f32 %v2644, %v2877
      %v3036 = vadd.f32 %v2645, %v2882
      %v3037 = vadd.f32 %v2646, %v2887
      %v3038 = vadd.f32 %v2647, %v2892
      %v3039 = vadd.f32 %v2648, %v2897
      %v3040 = vadd.f32 %v2649, %v2902
      %v3041 = vadd.f32 %v2650, %v2907
      %v3042 = vadd.f32 %v2651, %v2912
      %v3043 = vadd.f32 %v2652, %v2917
      %v3044 = vadd.f32 %v2653, %v2922
      %v3045 = vadd.f32 %v2654, %v2927
      %v3046 = vadd.f32 %v2655, %v2932
      %v3047 = vadd.f32 %v2656, %v2937
      %v3048 = vadd.f32 %v2657, %v2942
      %v3049 = vadd.f32 %v2658, %v2947
      %v3050 = vadd.f32 %v2659, %v2952
      %v3051 = vadd.f32 %v2660, %v2957
      %v3052 = vadd.f32 %v2661, %v2962
      %v3053 = vadd.f32 %v2662, %v2967
      %v3054 = vadd.f32 %v2663, %v2972
      %v3055 = vadd.f32 %v2664, %v2977
      %v3056 = vadd.f32 %v2665, %v2982
      %v3057 = vadd.f32 %v2666, %v2987
      %v3058 = vadd.f32 %v2667, %v2992
      %v3059 = vadd.f32 %v2668, %v2997
      %v3060 = vadd.f32 %v2669, %v3002
      %v3061 = vadd.f32 %v2670, %v3007
      %v3062 = vadd.f32 %v2671, %v3012
      %v3063 = vadd.f32 %v2672, %v3017
      %v3064 = vadd.f32 %v2673, %v3022
      %v3065 = vadd.f32 %v2674, %v3027
      %v3066 = vadd.f32 %v2675, %v3032
      %v3067 = vld [vmem:[%s2676 + $0x1] sm:$0xff]
      %v3068 = vld [vmem:[%s2676 + $0x9] sm:$0xff]
      %v3069 = vld [vmem:[%s2676 + $0x19] sm:$0xff]
      %v3070 = vld [vmem:[%s2676 + $0x21] sm:$0xff]
      %v3071 = vld [vmem:[%s2676 + $0x31] sm:$0xff]
      %v3072 = vld [vmem:[%s2676 + $0x39] sm:$0xff]
      %v3073 = vld [vmem:[%s2676 + $0x49] sm:$0xff]
      %v3074 = vld [vmem:[%s2676 + $0x51] sm:$0xff]
      %v3075 = vld [vmem:[%s2676 + $0x61] sm:$0xff]
      %v3076 = vld [vmem:[%s2676 + $0x69] sm:$0xff]
      %v3077 = vld [vmem:[%s2676 + $0x79] sm:$0xff]
      %v3078 = vld [vmem:[%s2676 + $0x81] sm:$0xff]
      %v3079 = vld [vmem:[%s2676 + $0x91] sm:$0xff]
      %v3080 = vld [vmem:[%s2676 + $0x99] sm:$0xff]
      %v3081 = vld [vmem:[%s2676 + $0xa9] sm:$0xff]
      %v3082 = vld [vmem:[%s2676 + $0xb1] sm:$0xff]
      %v3083 = vld [vmem:[%s2676 + $0xc1] sm:$0xff]
      %v3084 = vld [vmem:[%s2676 + $0xc9] sm:$0xff]
      %v3085 = vld [vmem:[%s2676 + $0xd9] sm:$0xff]
      %v3086 = vld [vmem:[%s2676 + $0xe1] sm:$0xff]
      %v3087 = vld [vmem:[%s2676 + $0xf1] sm:$0xff]
      %v3088 = vld [vmem:[%s2676 + $0xf9] sm:$0xff]
      %v3089 = vld [vmem:[%s2676 + $0x109] sm:$0xff]
      %v3090 = vld [vmem:[%s2676 + $0x111] sm:$0xff]
      %v3091 = vld [vmem:[%s2676 + $0x121] sm:$0xff]
      %v3092 = vld [vmem:[%s2676 + $0x129] sm:$0xff]
      %v3093 = vld [vmem:[%s2676 + $0x139] sm:$0xff]
      %v3094 = vld [vmem:[%s2676 + $0x141] sm:$0xff]
      %v3095 = vld [vmem:[%s2676 + $0x151] sm:$0xff]
      %v3096 = vld [vmem:[%s2676 + $0x159] sm:$0xff]
      %v3097 = vld [vmem:[%s2676 + $0x169] sm:$0xff]
      %v3098 = vld [vmem:[%s2676 + $0x171] sm:$0xff]
      %s3099 = scalar_lea.vmem %s1, 28
      %v3100 = vld [vmem:[%s3099] sm:$0xf]
      %v3102 = vsel %vm279, %v3067, 0
      %v3105 = vsel %vm279, %v3068, 0
      %v3108 = vsel %vm279, %v3069, 0
      %v3111 = vsel %vm279, %v3070, 0
      %v3114 = vsel %vm279, %v3071, 0
      %v3117 = vsel %vm279, %v3072, 0
      %v3120 = vsel %vm279, %v3073, 0
      %v3123 = vsel %vm279, %v3074, 0
      %v3126 = vsel %vm279, %v3075, 0
      %v3129 = vsel %vm279, %v3076, 0
      %v3132 = vsel %vm279, %v3077, 0
      %v3135 = vsel %vm279, %v3078, 0
      %v3138 = vsel %vm279, %v3079, 0
      %v3141 = vsel %vm279, %v3080, 0
      %v3144 = vsel %vm279, %v3081, 0
      %v3147 = vsel %vm279, %v3082, 0
      %v3150 = vsel %vm279, %v3083, 0
      %v3153 = vsel %vm279, %v3084, 0
      %v3156 = vsel %vm279, %v3085, 0
      %v3159 = vsel %vm279, %v3086, 0
      %v3162 = vsel %vm279, %v3087, 0
      %v3165 = vsel %vm279, %v3088, 0
      %v3168 = vsel %vm279, %v3089, 0
      %v3171 = vsel %vm279, %v3090, 0
      %v3174 = vsel %vm279, %v3091, 0
      %v3177 = vsel %vm279, %v3092, 0
      %v3180 = vsel %vm279, %v3093, 0
      %v3183 = vsel %vm279, %v3094, 0
      %v3186 = vsel %vm279, %v3095, 0
      %v3189 = vsel %vm279, %v3096, 0
      %v3192 = vsel %vm279, %v3097, 0
      %v3195 = vsel %vm279, %v3098, 0
      %v3198 = vsel %vm563, %v3100, 0
      %3200 = vmatprep.subr.mxu0 0.0
      %3201 = vmatpush1.msra.mxu0 0.0
      %3202 = vmatprep.subr.mxu0 0.0
      %3203 = vmatpush1.msra.mxu0 0.0
      %3204 = vmatprep.subr.mxu0 0.0
      %3205 = vmatpush1.msra.mxu0 0.0
      %3206 = vmatprep.subr.mxu0 0.0
      %3207 = vmatpush1.msra.mxu0 0.0
      %3208 = vmatprep.subr.mxu0 0.0
      %3209 = vmatpush1.msra.mxu0 0.0
      %3210 = vmatprep.subr.mxu0 0.0
      %3211 = vmatpush1.msra.mxu0 0.0
      %3212 = vmatprep.subr.mxu0 0.0
      %3213 = vmatpush1.msra.mxu0 0.0
      %3214 = vmatprep.subr.mxu0 0.0
      %3215 = vmatpush1.msra.mxu0 0.0
      %3216 = vmatprep.subr.mxu0 0.0
      %3217 = vmatpush1.msra.mxu0 0.0
      %3218 = vmatprep.subr.mxu0 0.0
      %3219 = vmatpush1.msra.mxu0 0.0
      %3220 = vmatprep.subr.mxu0 0.0
      %3221 = vmatpush1.msra.mxu0 0.0
      %3222 = vmatprep.subr.mxu0 0.0
      %3223 = vmatpush1.msra.mxu0 0.0
      %3224 = vmatprep.subr.mxu0 0.0
      %3225 = vmatpush1.msra.mxu0 0.0
      %3226 = vmatprep.subr.mxu0 0.0
      %3227 = vmatpush1.msra.mxu0 0.0
      %3228 = vmatprep.subr.mxu0 0.0
      %3229 = vmatpush1.msra.mxu0 0.0
      %3230 = vmatprep.subr.mxu0 0.0
      %3231 = vmatpush1.msra.mxu0 %v3198
      %3232 = vmatprep.subr.mxu0 0.0
      %3233 = vmatpush2.msra.mxu0 0.0
      %3234 = vmatprep.subr.mxu0 0.0
      %3235 = vmatpush2.msra.mxu0 0.0
      %3236 = vmatprep.subr.mxu0 0.0
      %3237 = vmatpush2.msra.mxu0 0.0
      %3238 = vmatprep.subr.mxu0 0.0
      %3239 = vmatpush2.msra.mxu0 0.0
      %3240 = vmatprep.subr.mxu0 0.0
      %3241 = vmatpush2.msra.mxu0 0.0
      %3242 = vmatprep.subr.mxu0 0.0
      %3243 = vmatpush2.msra.mxu0 0.0
      %3244 = vmatprep.subr.mxu0 0.0
      %3245 = vmatpush2.msra.mxu0 0.0
      %3246 = vmatprep.subr.mxu0 0.0
      %3247 = vmatpush2.msra.mxu0 0.0
      %3248 = vmatprep.subr.mxu0 0.0
      %3249 = vmatpush2.msra.mxu0 0.0
      %3250 = vmatprep.subr.mxu0 0.0
      %3251 = vmatpush2.msra.mxu0 0.0
      %3252 = vmatprep.subr.mxu0 0.0
      %3253 = vmatpush2.msra.mxu0 0.0
      %3254 = vmatprep.subr.mxu0 0.0
      %3255 = vmatpush2.msra.mxu0 0.0
      %3256 = vmatprep.subr.mxu0 0.0
      %3257 = vmatpush2.msra.mxu0 0.0
      %3258 = vmatprep.subr.mxu0 0.0
      %3259 = vmatpush2.msra.mxu0 0.0
      %3260 = vmatprep.subr.mxu0 0.0
      %3261 = vmatpush2.msra.mxu0 0.0
      %3262 = vmatprep.subr.mxu0 0.0
      %3263 = vmatpush2.msra.mxu0 0.0
      %3264 = vmatprep.mubr.f32.mxu0 0.0
      %3265 = vmatmul.mubr.f32.gmra.mxu0 %v3102
      %v3266 = vpop.f32.mrf.mxu0
      %v3267 = vadd.f32 0.0, %v3266
      %v3268 = vpop.f32.mrf.mxu0
      %3269 = vmatprep.mubr.f32.mxu0 0.0
      %3270 = vmatmul.mubr.f32.gmra.mxu0 %v3105
      %v3271 = vpop.f32.mrf.mxu0
      %v3272 = vadd.f32 0.0, %v3271
      %v3273 = vpop.f32.mrf.mxu0
      %3274 = vmatprep.mubr.f32.mxu0 0.0
      %3275 = vmatmul.mubr.f32.gmra.mxu0 %v3108
      %v3276 = vpop.f32.mrf.mxu0
      %v3277 = vadd.f32 0.0, %v3276
      %v3278 = vpop.f32.mrf.mxu0
      %3279 = vmatprep.mubr.f32.mxu0 0.0
      %3280 = vmatmul.mubr.f32.gmra.mxu0 %v3111
      %v3281 = vpop.f32.mrf.mxu0
      %v3282 = vadd.f32 0.0, %v3281
      %v3283 = vpop.f32.mrf.mxu0
      %3284 = vmatprep.mubr.f32.mxu0 0.0
      %3285 = vmatmul.mubr.f32.gmra.mxu0 %v3114
      %v3286 = vpop.f32.mrf.mxu0
      %v3287 = vadd.f32 0.0, %v3286
      %v3288 = vpop.f32.mrf.mxu0
      %3289 = vmatprep.mubr.f32.mxu0 0.0
      %3290 = vmatmul.mubr.f32.gmra.mxu0 %v3117
      %v3291 = vpop.f32.mrf.mxu0
      %v3292 = vadd.f32 0.0, %v3291
      %v3293 = vpop.f32.mrf.mxu0
      %3294 = vmatprep.mubr.f32.mxu0 0.0
      %3295 = vmatmul.mubr.f32.gmra.mxu0 %v3120
      %v3296 = vpop.f32.mrf.mxu0
      %v3297 = vadd.f32 0.0, %v3296
      %v3298 = vpop.f32.mrf.mxu0
      %3299 = vmatprep.mubr.f32.mxu0 0.0
      %3300 = vmatmul.mubr.f32.gmra.mxu0 %v3123
      %v3301 = vpop.f32.mrf.mxu0
      %v3302 = vadd.f32 0.0, %v3301
      %v3303 = vpop.f32.mrf.mxu0
      %3304 = vmatprep.mubr.f32.mxu0 0.0
      %3305 = vmatmul.mubr.f32.gmra.mxu0 %v3126
      %v3306 = vpop.f32.mrf.mxu0
      %v3307 = vadd.f32 0.0, %v3306
      %v3308 = vpop.f32.mrf.mxu0
      %3309 = vmatprep.mubr.f32.mxu0 0.0
      %3310 = vmatmul.mubr.f32.gmra.mxu0 %v3129
      %v3311 = vpop.f32.mrf.mxu0
      %v3312 = vadd.f32 0.0, %v3311
      %v3313 = vpop.f32.mrf.mxu0
      %3314 = vmatprep.mubr.f32.mxu0 0.0
      %3315 = vmatmul.mubr.f32.gmra.mxu0 %v3132
      %v3316 = vpop.f32.mrf.mxu0
      %v3317 = vadd.f32 0.0, %v3316
      %v3318 = vpop.f32.mrf.mxu0
      %3319 = vmatprep.mubr.f32.mxu0 0.0
      %3320 = vmatmul.mubr.f32.gmra.mxu0 %v3135
      %v3321 = vpop.f32.mrf.mxu0
      %v3322 = vadd.f32 0.0, %v3321
      %v3323 = vpop.f32.mrf.mxu0
      %3324 = vmatprep.mubr.f32.mxu0 0.0
      %3325 = vmatmul.mubr.f32.gmra.mxu0 %v3138
      %v3326 = vpop.f32.mrf.mxu0
      %v3327 = vadd.f32 0.0, %v3326
      %v3328 = vpop.f32.mrf.mxu0
      %3329 = vmatprep.mubr.f32.mxu0 0.0
      %3330 = vmatmul.mubr.f32.gmra.mxu0 %v3141
      %v3331 = vpop.f32.mrf.mxu0
      %v3332 = vadd.f32 0.0, %v3331
      %v3333 = vpop.f32.mrf.mxu0
      %3334 = vmatprep.mubr.f32.mxu0 0.0
      %3335 = vmatmul.mubr.f32.gmra.mxu0 %v3144
      %v3336 = vpop.f32.mrf.mxu0
      %v3337 = vadd.f32 0.0, %v3336
      %v3338 = vpop.f32.mrf.mxu0
      %3339 = vmatprep.mubr.f32.mxu0 0.0
      %3340 = vmatmul.mubr.f32.gmra.mxu0 %v3147
      %v3341 = vpop.f32.mrf.mxu0
      %v3342 = vadd.f32 0.0, %v3341
      %v3343 = vpop.f32.mrf.mxu0
      %3344 = vmatprep.mubr.f32.mxu0 0.0
      %3345 = vmatmul.mubr.f32.gmra.mxu0 %v3150
      %v3346 = vpop.f32.mrf.mxu0
      %v3347 = vadd.f32 0.0, %v3346
      %v3348 = vpop.f32.mrf.mxu0
      %3349 = vmatprep.mubr.f32.mxu0 0.0
      %3350 = vmatmul.mubr.f32.gmra.mxu0 %v3153
      %v3351 = vpop.f32.mrf.mxu0
      %v3352 = vadd.f32 0.0, %v3351
      %v3353 = vpop.f32.mrf.mxu0
      %3354 = vmatprep.mubr.f32.mxu0 0.0
      %3355 = vmatmul.mubr.f32.gmra.mxu0 %v3156
      %v3356 = vpop.f32.mrf.mxu0
      %v3357 = vadd.f32 0.0, %v3356
      %v3358 = vpop.f32.mrf.mxu0
      %3359 = vmatprep.mubr.f32.mxu0 0.0
      %3360 = vmatmul.mubr.f32.gmra.mxu0 %v3159
      %v3361 = vpop.f32.mrf.mxu0
      %v3362 = vadd.f32 0.0, %v3361
      %v3363 = vpop.f32.mrf.mxu0
      %3364 = vmatprep.mubr.f32.mxu0 0.0
      %3365 = vmatmul.mubr.f32.gmra.mxu0 %v3162
      %v3366 = vpop.f32.mrf.mxu0
      %v3367 = vadd.f32 0.0, %v3366
      %v3368 = vpop.f32.mrf.mxu0
      %3369 = vmatprep.mubr.f32.mxu0 0.0
      %3370 = vmatmul.mubr.f32.gmra.mxu0 %v3165
      %v3371 = vpop.f32.mrf.mxu0
      %v3372 = vadd.f32 0.0, %v3371
      %v3373 = vpop.f32.mrf.mxu0
      %3374 = vmatprep.mubr.f32.mxu0 0.0
      %3375 = vmatmul.mubr.f32.gmra.mxu0 %v3168
      %v3376 = vpop.f32.mrf.mxu0
      %v3377 = vadd.f32 0.0, %v3376
      %v3378 = vpop.f32.mrf.mxu0
      %3379 = vmatprep.mubr.f32.mxu0 0.0
      %3380 = vmatmul.mubr.f32.gmra.mxu0 %v3171
      %v3381 = vpop.f32.mrf.mxu0
      %v3382 = vadd.f32 0.0, %v3381
      %v3383 = vpop.f32.mrf.mxu0
      %3384 = vmatprep.mubr.f32.mxu0 0.0
      %3385 = vmatmul.mubr.f32.gmra.mxu0 %v3174
      %v3386 = vpop.f32.mrf.mxu0
      %v3387 = vadd.f32 0.0, %v3386
      %v3388 = vpop.f32.mrf.mxu0
      %3389 = vmatprep.mubr.f32.mxu0 0.0
      %3390 = vmatmul.mubr.f32.gmra.mxu0 %v3177
      %v3391 = vpop.f32.mrf.mxu0
      %v3392 = vadd.f32 0.0, %v3391
      %v3393 = vpop.f32.mrf.mxu0
      %3394 = vmatprep.mubr.f32.mxu0 0.0
      %3395 = vmatmul.mubr.f32.gmra.mxu0 %v3180
      %v3396 = vpop.f32.mrf.mxu0
      %v3397 = vadd.f32 0.0, %v3396
      %v3398 = vpop.f32.mrf.mxu0
      %3399 = vmatprep.mubr.f32.mxu0 0.0
      %3400 = vmatmul.mubr.f32.gmra.mxu0 %v3183
      %v3401 = vpop.f32.mrf.mxu0
      %v3402 = vadd.f32 0.0, %v3401
      %v3403 = vpop.f32.mrf.mxu0
      %3404 = vmatprep.mubr.f32.mxu0 0.0
      %3405 = vmatmul.mubr.f32.gmra.mxu0 %v3186
      %v3406 = vpop.f32.mrf.mxu0
      %v3407 = vadd.f32 0.0, %v3406
      %v3408 = vpop.f32.mrf.mxu0
      %3409 = vmatprep.mubr.f32.mxu0 0.0
      %3410 = vmatmul.mubr.f32.gmra.mxu0 %v3189
      %v3411 = vpop.f32.mrf.mxu0
      %v3412 = vadd.f32 0.0, %v3411
      %v3413 = vpop.f32.mrf.mxu0
      %3414 = vmatprep.mubr.f32.mxu0 0.0
      %3415 = vmatmul.mubr.f32.gmra.mxu0 %v3192
      %v3416 = vpop.f32.mrf.mxu0
      %v3417 = vadd.f32 0.0, %v3416
      %v3418 = vpop.f32.mrf.mxu0
      %3419 = vmatprep.mubr.f32.mxu0 0.0
      %3420 = vmatmul.mubr.f32.gmra.mxu0 %v3195
      %v3421 = vpop.f32.mrf.mxu0
      %v3422 = vadd.f32 0.0, %v3421
      %v3423 = vpop.f32.mrf.mxu0
      %3424 = vdwg.mxu0
      %v3425 = vadd.f32 %v3035, %v3267
      %v3426 = vadd.f32 %v3036, %v3272
      %v3427 = vadd.f32 %v3037, %v3277
      %v3428 = vadd.f32 %v3038, %v3282
      %v3429 = vadd.f32 %v3039, %v3287
      %v3430 = vadd.f32 %v3040, %v3292
      %v3431 = vadd.f32 %v3041, %v3297
      %v3432 = vadd.f32 %v3042, %v3302
      %v3433 = vadd.f32 %v3043, %v3307
      %v3434 = vadd.f32 %v3044, %v3312
      %v3435 = vadd.f32 %v3045, %v3317
      %v3436 = vadd.f32 %v3046, %v3322
      %v3437 = vadd.f32 %v3047, %v3327
      %v3438 = vadd.f32 %v3048, %v3332
      %v3439 = vadd.f32 %v3049, %v3337
      %v3440 = vadd.f32 %v3050, %v3342
      %v3441 = vadd.f32 %v3051, %v3347
      %v3442 = vadd.f32 %v3052, %v3352
      %v3443 = vadd.f32 %v3053, %v3357
      %v3444 = vadd.f32 %v3054, %v3362
      %v3445 = vadd.f32 %v3055, %v3367
      %v3446 = vadd.f32 %v3056, %v3372
      %v3447 = vadd.f32 %v3057, %v3377
      %v3448 = vadd.f32 %v3058, %v3382
      %v3449 = vadd.f32 %v3059, %v3387
      %v3450 = vadd.f32 %v3060, %v3392
      %v3451 = vadd.f32 %v3061, %v3397
      %v3452 = vadd.f32 %v3062, %v3402
      %v3453 = vadd.f32 %v3063, %v3407
      %v3454 = vadd.f32 %v3064, %v3412
      %v3455 = vadd.f32 %v3065, %v3417
      %v3456 = vadd.f32 %v3066, %v3422
      %v3457 = vld [vmem:[%s2676 + $0x2] sm:$0xff]
      %v3458 = vld [vmem:[%s2676 + $0xa] sm:$0xff]
      %v3459 = vld [vmem:[%s2676 + $0x1a] sm:$0xff]
      %v3460 = vld [vmem:[%s2676 + $0x22] sm:$0xff]
      %v3461 = vld [vmem:[%s2676 + $0x32] sm:$0xff]
      %v3462 = vld [vmem:[%s2676 + $0x3a] sm:$0xff]
      %v3463 = vld [vmem:[%s2676 + $0x4a] sm:$0xff]
      %v3464 = vld [vmem:[%s2676 + $0x52] sm:$0xff]
      %v3465 = vld [vmem:[%s2676 + $0x62] sm:$0xff]
      %v3466 = vld [vmem:[%s2676 + $0x6a] sm:$0xff]
      %v3467 = vld [vmem:[%s2676 + $0x7a] sm:$0xff]
      %v3468 = vld [vmem:[%s2676 + $0x82] sm:$0xff]
      %v3469 = vld [vmem:[%s2676 + $0x92] sm:$0xff]
      %v3470 = vld [vmem:[%s2676 + $0x9a] sm:$0xff]
      %v3471 = vld [vmem:[%s2676 + $0xaa] sm:$0xff]
      %v3472 = vld [vmem:[%s2676 + $0xb2] sm:$0xff]
      %v3473 = vld [vmem:[%s2676 + $0xc2] sm:$0xff]
      %v3474 = vld [vmem:[%s2676 + $0xca] sm:$0xff]
      %v3475 = vld [vmem:[%s2676 + $0xda] sm:$0xff]
      %v3476 = vld [vmem:[%s2676 + $0xe2] sm:$0xff]
      %v3477 = vld [vmem:[%s2676 + $0xf2] sm:$0xff]
      %v3478 = vld [vmem:[%s2676 + $0xfa] sm:$0xff]
      %v3479 = vld [vmem:[%s2676 + $0x10a] sm:$0xff]
      %v3480 = vld [vmem:[%s2676 + $0x112] sm:$0xff]
      %v3481 = vld [vmem:[%s2676 + $0x122] sm:$0xff]
      %v3482 = vld [vmem:[%s2676 + $0x12a] sm:$0xff]
      %v3483 = vld [vmem:[%s2676 + $0x13a] sm:$0xff]
      %v3484 = vld [vmem:[%s2676 + $0x142] sm:$0xff]
      %v3485 = vld [vmem:[%s2676 + $0x152] sm:$0xff]
      %v3486 = vld [vmem:[%s2676 + $0x15a] sm:$0xff]
      %v3487 = vld [vmem:[%s2676 + $0x16a] sm:$0xff]
      %v3488 = vld [vmem:[%s2676 + $0x172] sm:$0xff]
      %s3489 = scalar_lea.vmem %s1, 32
      %v3490 = vld [vmem:[%s3489] sm:$0xf]
      %v3492 = vsel %vm279, %v3457, 0
      %v3495 = vsel %vm279, %v3458, 0
      %v3498 = vsel %vm279, %v3459, 0
      %v3501 = vsel %vm279, %v3460, 0
      %v3504 = vsel %vm279, %v3461, 0
      %v3507 = vsel %vm279, %v3462, 0
      %v3510 = vsel %vm279, %v3463, 0
      %v3513 = vsel %vm279, %v3464, 0
      %v3516 = vsel %vm279, %v3465, 0
      %v3519 = vsel %vm279, %v3466, 0
      %v3522 = vsel %vm279, %v3467, 0
      %v3525 = vsel %vm279, %v3468, 0
      %v3528 = vsel %vm279, %v3469, 0
      %v3531 = vsel %vm279, %v3470, 0
      %v3534 = vsel %vm279, %v3471, 0
      %v3537 = vsel %vm279, %v3472, 0
      %v3540 = vsel %vm279, %v3473, 0
      %v3543 = vsel %vm279, %v3474, 0
      %v3546 = vsel %vm279, %v3475, 0
      %v3549 = vsel %vm279, %v3476, 0
      %v3552 = vsel %vm279, %v3477, 0
      %v3555 = vsel %vm279, %v3478, 0
      %v3558 = vsel %vm279, %v3479, 0
      %v3561 = vsel %vm279, %v3480, 0
      %v3564 = vsel %vm279, %v3481, 0
      %v3567 = vsel %vm279, %v3482, 0
      %v3570 = vsel %vm279, %v3483, 0
      %v3573 = vsel %vm279, %v3484, 0
      %v3576 = vsel %vm279, %v3485, 0
      %v3579 = vsel %vm279, %v3486, 0
      %v3582 = vsel %vm279, %v3487, 0
      %v3585 = vsel %vm279, %v3488, 0
      %v3588 = vsel %vm563, %v3490, 0
      %3590 = vmatprep.subr.mxu0 0.0
      %3591 = vmatpush1.msra.mxu0 0.0
      %3592 = vmatprep.subr.mxu0 0.0
      %3593 = vmatpush1.msra.mxu0 0.0
      %3594 = vmatprep.subr.mxu0 0.0
      %3595 = vmatpush1.msra.mxu0 0.0
      %3596 = vmatprep.subr.mxu0 0.0
      %3597 = vmatpush1.msra.mxu0 0.0
      %3598 = vmatprep.subr.mxu0 0.0
      %3599 = vmatpush1.msra.mxu0 0.0
      %3600 = vmatprep.subr.mxu0 0.0
      %3601 = vmatpush1.msra.mxu0 0.0
      %3602 = vmatprep.subr.mxu0 0.0
      %3603 = vmatpush1.msra.mxu0 0.0
      %3604 = vmatprep.subr.mxu0 0.0
      %3605 = vmatpush1.msra.mxu0 0.0
      %3606 = vmatprep.subr.mxu0 0.0
      %3607 = vmatpush1.msra.mxu0 0.0
      %3608 = vmatprep.subr.mxu0 0.0
      %3609 = vmatpush1.msra.mxu0 0.0
      %3610 = vmatprep.subr.mxu0 0.0
      %3611 = vmatpush1.msra.mxu0 0.0
      %3612 = vmatprep.subr.mxu0 0.0
      %3613 = vmatpush1.msra.mxu0 0.0
      %3614 = vmatprep.subr.mxu0 0.0
      %3615 = vmatpush1.msra.mxu0 0.0
      %3616 = vmatprep.subr.mxu0 0.0
      %3617 = vmatpush1.msra.mxu0 0.0
      %3618 = vmatprep.subr.mxu0 0.0
      %3619 = vmatpush1.msra.mxu0 0.0
      %3620 = vmatprep.subr.mxu0 0.0
      %3621 = vmatpush1.msra.mxu0 %v3588
      %3622 = vmatprep.subr.mxu0 0.0
      %3623 = vmatpush2.msra.mxu0 0.0
      %3624 = vmatprep.subr.mxu0 0.0
      %3625 = vmatpush2.msra.mxu0 0.0
      %3626 = vmatprep.subr.mxu0 0.0
      %3627 = vmatpush2.msra.mxu0 0.0
      %3628 = vmatprep.subr.mxu0 0.0
      %3629 = vmatpush2.msra.mxu0 0.0
      %3630 = vmatprep.subr.mxu0 0.0
      %3631 = vmatpush2.msra.mxu0 0.0
      %3632 = vmatprep.subr.mxu0 0.0
      %3633 = vmatpush2.msra.mxu0 0.0
      %3634 = vmatprep.subr.mxu0 0.0
      %3635 = vmatpush2.msra.mxu0 0.0
      %3636 = vmatprep.subr.mxu0 0.0
      %3637 = vmatpush2.msra.mxu0 0.0
      %3638 = vmatprep.subr.mxu0 0.0
      %3639 = vmatpush2.msra.mxu0 0.0
      %3640 = vmatprep.subr.mxu0 0.0
      %3641 = vmatpush2.msra.mxu0 0.0
      %3642 = vmatprep.subr.mxu0 0.0
      %3643 = vmatpush2.msra.mxu0 0.0
      %3644 = vmatprep.subr.mxu0 0.0
      %3645 = vmatpush2.msra.mxu0 0.0
      %3646 = vmatprep.subr.mxu0 0.0
      %3647 = vmatpush2.msra.mxu0 0.0
      %3648 = vmatprep.subr.mxu0 0.0
      %3649 = vmatpush2.msra.mxu0 0.0
      %3650 = vmatprep.subr.mxu0 0.0
      %3651 = vmatpush2.msra.mxu0 0.0
      %3652 = vmatprep.subr.mxu0 0.0
      %3653 = vmatpush2.msra.mxu0 0.0
      %3654 = vmatprep.mubr.f32.mxu0 0.0
      %3655 = vmatmul.mubr.f32.gmra.mxu0 %v3492
      %v3656 = vpop.f32.mrf.mxu0
      %v3657 = vadd.f32 0.0, %v3656
      %v3658 = vpop.f32.mrf.mxu0
      %3659 = vmatprep.mubr.f32.mxu0 0.0
      %3660 = vmatmul.mubr.f32.gmra.mxu0 %v3495
      %v3661 = vpop.f32.mrf.mxu0
      %v3662 = vadd.f32 0.0, %v3661
      %v3663 = vpop.f32.mrf.mxu0
      %3664 = vmatprep.mubr.f32.mxu0 0.0
      %3665 = vmatmul.mubr.f32.gmra.mxu0 %v3498
      %v3666 = vpop.f32.mrf.mxu0
      %v3667 = vadd.f32 0.0, %v3666
      %v3668 = vpop.f32.mrf.mxu0
      %3669 = vmatprep.mubr.f32.mxu0 0.0
      %3670 = vmatmul.mubr.f32.gmra.mxu0 %v3501
      %v3671 = vpop.f32.mrf.mxu0
      %v3672 = vadd.f32 0.0, %v3671
      %v3673 = vpop.f32.mrf.mxu0
      %3674 = vmatprep.mubr.f32.mxu0 0.0
      %3675 = vmatmul.mubr.f32.gmra.mxu0 %v3504
      %v3676 = vpop.f32.mrf.mxu0
      %v3677 = vadd.f32 0.0, %v3676
      %v3678 = vpop.f32.mrf.mxu0
      %3679 = vmatprep.mubr.f32.mxu0 0.0
      %3680 = vmatmul.mubr.f32.gmra.mxu0 %v3507
      %v3681 = vpop.f32.mrf.mxu0
      %v3682 = vadd.f32 0.0, %v3681
      %v3683 = vpop.f32.mrf.mxu0
      %3684 = vmatprep.mubr.f32.mxu0 0.0
      %3685 = vmatmul.mubr.f32.gmra.mxu0 %v3510
      %v3686 = vpop.f32.mrf.mxu0
      %v3687 = vadd.f32 0.0, %v3686
      %v3688 = vpop.f32.mrf.mxu0
      %3689 = vmatprep.mubr.f32.mxu0 0.0
      %3690 = vmatmul.mubr.f32.gmra.mxu0 %v3513
      %v3691 = vpop.f32.mrf.mxu0
      %v3692 = vadd.f32 0.0, %v3691
      %v3693 = vpop.f32.mrf.mxu0
      %3694 = vmatprep.mubr.f32.mxu0 0.0
      %3695 = vmatmul.mubr.f32.gmra.mxu0 %v3516
      %v3696 = vpop.f32.mrf.mxu0
      %v3697 = vadd.f32 0.0, %v3696
      %v3698 = vpop.f32.mrf.mxu0
      %3699 = vmatprep.mubr.f32.mxu0 0.0
      %3700 = vmatmul.mubr.f32.gmra.mxu0 %v3519
      %v3701 = vpop.f32.mrf.mxu0
      %v3702 = vadd.f32 0.0, %v3701
      %v3703 = vpop.f32.mrf.mxu0
      %3704 = vmatprep.mubr.f32.mxu0 0.0
      %3705 = vmatmul.mubr.f32.gmra.mxu0 %v3522
      %v3706 = vpop.f32.mrf.mxu0
      %v3707 = vadd.f32 0.0, %v3706
      %v3708 = vpop.f32.mrf.mxu0
      %3709 = vmatprep.mubr.f32.mxu0 0.0
      %3710 = vmatmul.mubr.f32.gmra.mxu0 %v3525
      %v3711 = vpop.f32.mrf.mxu0
      %v3712 = vadd.f32 0.0, %v3711
      %v3713 = vpop.f32.mrf.mxu0
      %3714 = vmatprep.mubr.f32.mxu0 0.0
      %3715 = vmatmul.mubr.f32.gmra.mxu0 %v3528
      %v3716 = vpop.f32.mrf.mxu0
      %v3717 = vadd.f32 0.0, %v3716
      %v3718 = vpop.f32.mrf.mxu0
      %3719 = vmatprep.mubr.f32.mxu0 0.0
      %3720 = vmatmul.mubr.f32.gmra.mxu0 %v3531
      %v3721 = vpop.f32.mrf.mxu0
      %v3722 = vadd.f32 0.0, %v3721
      %v3723 = vpop.f32.mrf.mxu0
      %3724 = vmatprep.mubr.f32.mxu0 0.0
      %3725 = vmatmul.mubr.f32.gmra.mxu0 %v3534
      %v3726 = vpop.f32.mrf.mxu0
      %v3727 = vadd.f32 0.0, %v3726
      %v3728 = vpop.f32.mrf.mxu0
      %3729 = vmatprep.mubr.f32.mxu0 0.0
      %3730 = vmatmul.mubr.f32.gmra.mxu0 %v3537
      %v3731 = vpop.f32.mrf.mxu0
      %v3732 = vadd.f32 0.0, %v3731
      %v3733 = vpop.f32.mrf.mxu0
      %3734 = vmatprep.mubr.f32.mxu0 0.0
      %3735 = vmatmul.mubr.f32.gmra.mxu0 %v3540
      %v3736 = vpop.f32.mrf.mxu0
      %v3737 = vadd.f32 0.0, %v3736
      %v3738 = vpop.f32.mrf.mxu0
      %3739 = vmatprep.mubr.f32.mxu0 0.0
      %3740 = vmatmul.mubr.f32.gmra.mxu0 %v3543
      %v3741 = vpop.f32.mrf.mxu0
      %v3742 = vadd.f32 0.0, %v3741
      %v3743 = vpop.f32.mrf.mxu0
      %3744 = vmatprep.mubr.f32.mxu0 0.0
      %3745 = vmatmul.mubr.f32.gmra.mxu0 %v3546
      %v3746 = vpop.f32.mrf.mxu0
      %v3747 = vadd.f32 0.0, %v3746
      %v3748 = vpop.f32.mrf.mxu0
      %3749 = vmatprep.mubr.f32.mxu0 0.0
      %3750 = vmatmul.mubr.f32.gmra.mxu0 %v3549
      %v3751 = vpop.f32.mrf.mxu0
      %v3752 = vadd.f32 0.0, %v3751
      %v3753 = vpop.f32.mrf.mxu0
      %3754 = vmatprep.mubr.f32.mxu0 0.0
      %3755 = vmatmul.mubr.f32.gmra.mxu0 %v3552
      %v3756 = vpop.f32.mrf.mxu0
      %v3757 = vadd.f32 0.0, %v3756
      %v3758 = vpop.f32.mrf.mxu0
      %3759 = vmatprep.mubr.f32.mxu0 0.0
      %3760 = vmatmul.mubr.f32.gmra.mxu0 %v3555
      %v3761 = vpop.f32.mrf.mxu0
      %v3762 = vadd.f32 0.0, %v3761
      %v3763 = vpop.f32.mrf.mxu0
      %3764 = vmatprep.mubr.f32.mxu0 0.0
      %3765 = vmatmul.mubr.f32.gmra.mxu0 %v3558
      %v3766 = vpop.f32.mrf.mxu0
      %v3767 = vadd.f32 0.0, %v3766
      %v3768 = vpop.f32.mrf.mxu0
      %3769 = vmatprep.mubr.f32.mxu0 0.0
      %3770 = vmatmul.mubr.f32.gmra.mxu0 %v3561
      %v3771 = vpop.f32.mrf.mxu0
      %v3772 = vadd.f32 0.0, %v3771
      %v3773 = vpop.f32.mrf.mxu0
      %3774 = vmatprep.mubr.f32.mxu0 0.0
      %3775 = vmatmul.mubr.f32.gmra.mxu0 %v3564
      %v3776 = vpop.f32.mrf.mxu0
      %v3777 = vadd.f32 0.0, %v3776
      %v3778 = vpop.f32.mrf.mxu0
      %3779 = vmatprep.mubr.f32.mxu0 0.0
      %3780 = vmatmul.mubr.f32.gmra.mxu0 %v3567
      %v3781 = vpop.f32.mrf.mxu0
      %v3782 = vadd.f32 0.0, %v3781
      %v3783 = vpop.f32.mrf.mxu0
      %3784 = vmatprep.mubr.f32.mxu0 0.0
      %3785 = vmatmul.mubr.f32.gmra.mxu0 %v3570
      %v3786 = vpop.f32.mrf.mxu0
      %v3787 = vadd.f32 0.0, %v3786
      %v3788 = vpop.f32.mrf.mxu0
      %3789 = vmatprep.mubr.f32.mxu0 0.0
      %3790 = vmatmul.mubr.f32.gmra.mxu0 %v3573
      %v3791 = vpop.f32.mrf.mxu0
      %v3792 = vadd.f32 0.0, %v3791
      %v3793 = vpop.f32.mrf.mxu0
      %3794 = vmatprep.mubr.f32.mxu0 0.0
      %3795 = vmatmul.mubr.f32.gmra.mxu0 %v3576
      %v3796 = vpop.f32.mrf.mxu0
      %v3797 = vadd.f32 0.0, %v3796
      %v3798 = vpop.f32.mrf.mxu0
      %3799 = vmatprep.mubr.f32.mxu0 0.0
      %3800 = vmatmul.mubr.f32.gmra.mxu0 %v3579
      %v3801 = vpop.f32.mrf.mxu0
      %v3802 = vadd.f32 0.0, %v3801
      %v3803 = vpop.f32.mrf.mxu0
      %3804 = vmatprep.mubr.f32.mxu0 0.0
      %3805 = vmatmul.mubr.f32.gmra.mxu0 %v3582
      %v3806 = vpop.f32.mrf.mxu0
      %v3807 = vadd.f32 0.0, %v3806
      %v3808 = vpop.f32.mrf.mxu0
      %3809 = vmatprep.mubr.f32.mxu0 0.0
      %3810 = vmatmul.mubr.f32.gmra.mxu0 %v3585
      %v3811 = vpop.f32.mrf.mxu0
      %v3812 = vadd.f32 0.0, %v3811
      %v3813 = vpop.f32.mrf.mxu0
      %3814 = vdwg.mxu0
      %v3815 = vadd.f32 %v3425, %v3657
      %v3816 = vadd.f32 %v3426, %v3662
      %v3817 = vadd.f32 %v3427, %v3667
      %v3818 = vadd.f32 %v3428, %v3672
      %v3819 = vadd.f32 %v3429, %v3677
      %v3820 = vadd.f32 %v3430, %v3682
      %v3821 = vadd.f32 %v3431, %v3687
      %v3822 = vadd.f32 %v3432, %v3692
      %v3823 = vadd.f32 %v3433, %v3697
      %v3824 = vadd.f32 %v3434, %v3702
      %v3825 = vadd.f32 %v3435, %v3707
      %v3826 = vadd.f32 %v3436, %v3712
      %v3827 = vadd.f32 %v3437, %v3717
      %v3828 = vadd.f32 %v3438, %v3722
      %v3829 = vadd.f32 %v3439, %v3727
      %v3830 = vadd.f32 %v3440, %v3732
      %v3831 = vadd.f32 %v3441, %v3737
      %v3832 = vadd.f32 %v3442, %v3742
      %v3833 = vadd.f32 %v3443, %v3747
      %v3834 = vadd.f32 %v3444, %v3752
      %v3835 = vadd.f32 %v3445, %v3757
      %v3836 = vadd.f32 %v3446, %v3762
      %v3837 = vadd.f32 %v3447, %v3767
      %v3838 = vadd.f32 %v3448, %v3772
      %v3839 = vadd.f32 %v3449, %v3777
      %v3840 = vadd.f32 %v3450, %v3782
      %v3841 = vadd.f32 %v3451, %v3787
      %v3842 = vadd.f32 %v3452, %v3792
      %v3843 = vadd.f32 %v3453, %v3797
      %v3844 = vadd.f32 %v3454, %v3802
      %v3845 = vadd.f32 %v3455, %v3807
      %v3846 = vadd.f32 %v3456, %v3812
      %v3847 = vld [vmem:[%s2] sm:$0x1]
      %v3849 = vlaneseq
      %v3850 = vshrl.u32 %v3849, 7
      %v3851 = vsub.s32 0, %v3850
      %v3852 = vrot.slane %v3847, %v3851
      %v3854 = vmul.f32 %v3815, %v3852
      %v3855 = vmul.f32 %v3816, %v3852
      %v3856 = vmul.f32 %v3817, %v3852
      %v3857 = vmul.f32 %v3818, %v3852
      %v3858 = vmul.f32 %v3819, %v3852
      %v3859 = vmul.f32 %v3820, %v3852
      %v3860 = vmul.f32 %v3821, %v3852
      %v3861 = vmul.f32 %v3822, %v3852
      %v3862 = vmul.f32 %v3823, %v3852
      %v3863 = vmul.f32 %v3824, %v3852
      %v3864 = vmul.f32 %v3825, %v3852
      %v3865 = vmul.f32 %v3826, %v3852
      %v3866 = vmul.f32 %v3827, %v3852
      %v3867 = vmul.f32 %v3828, %v3852
      %v3868 = vmul.f32 %v3829, %v3852
      %v3869 = vmul.f32 %v3830, %v3852
      %v3870 = vmul.f32 %v3831, %v3852
      %v3871 = vmul.f32 %v3832, %v3852
      %v3872 = vmul.f32 %v3833, %v3852
      %v3873 = vmul.f32 %v3834, %v3852
      %v3874 = vmul.f32 %v3835, %v3852
      %v3875 = vmul.f32 %v3836, %v3852
      %v3876 = vmul.f32 %v3837, %v3852
      %v3877 = vmul.f32 %v3838, %v3852
      %v3878 = vmul.f32 %v3839, %v3852
      %v3879 = vmul.f32 %v3840, %v3852
      %v3880 = vmul.f32 %v3841, %v3852
      %v3881 = vmul.f32 %v3842, %v3852
      %v3882 = vmul.f32 %v3843, %v3852
      %v3883 = vmul.f32 %v3844, %v3852
      %v3884 = vmul.f32 %v3845, %v3852
      %v3885 = vmul.f32 %v3846, %v3852
      %v3886 = vld [vmem:[%s3] sm:$0x1]
      %v3888 = vlaneseq
      %v3889 = vshrl.u32 %v3888, 7
      %v3890 = vsub.s32 0, %v3889
      %v3891 = vrot.slane %v3886, %v3890
      %v3893 = vadd.f32 %v3854, %v3891
      %v3894 = vadd.f32 %v3855, %v3891
      %v3895 = vadd.f32 %v3856, %v3891
      %v3896 = vadd.f32 %v3857, %v3891
      %v3897 = vadd.f32 %v3858, %v3891
      %v3898 = vadd.f32 %v3859, %v3891
      %v3899 = vadd.f32 %v3860, %v3891
      %v3900 = vadd.f32 %v3861, %v3891
      %v3901 = vadd.f32 %v3862, %v3891
      %v3902 = vadd.f32 %v3863, %v3891
      %v3903 = vadd.f32 %v3864, %v3891
      %v3904 = vadd.f32 %v3865, %v3891
      %v3905 = vadd.f32 %v3866, %v3891
      %v3906 = vadd.f32 %v3867, %v3891
      %v3907 = vadd.f32 %v3868, %v3891
      %v3908 = vadd.f32 %v3869, %v3891
      %v3909 = vadd.f32 %v3870, %v3891
      %v3910 = vadd.f32 %v3871, %v3891
      %v3911 = vadd.f32 %v3872, %v3891
      %v3912 = vadd.f32 %v3873, %v3891
      %v3913 = vadd.f32 %v3874, %v3891
      %v3914 = vadd.f32 %v3875, %v3891
      %v3915 = vadd.f32 %v3876, %v3891
      %v3916 = vadd.f32 %v3877, %v3891
      %v3917 = vadd.f32 %v3878, %v3891
      %v3918 = vadd.f32 %v3879, %v3891
      %v3919 = vadd.f32 %v3880, %v3891
      %v3920 = vadd.f32 %v3881, %v3891
      %v3921 = vadd.f32 %v3882, %v3891
      %v3922 = vadd.f32 %v3883, %v3891
      %v3923 = vadd.f32 %v3884, %v3891
      %v3924 = vadd.f32 %v3885, %v3891
      %v3925 = vmax.f32 %v3893, 0.0
      %v3926 = vmax.f32 %v3894, 0.0
      %v3927 = vmax.f32 %v3895, 0.0
      %v3928 = vmax.f32 %v3896, 0.0
      %v3929 = vmax.f32 %v3897, 0.0
      %v3930 = vmax.f32 %v3898, 0.0
      %v3931 = vmax.f32 %v3899, 0.0
      %v3932 = vmax.f32 %v3900, 0.0
      %v3933 = vmax.f32 %v3901, 0.0
      %v3934 = vmax.f32 %v3902, 0.0
      %v3935 = vmax.f32 %v3903, 0.0
      %v3936 = vmax.f32 %v3904, 0.0
      %v3937 = vmax.f32 %v3905, 0.0
      %v3938 = vmax.f32 %v3906, 0.0
      %v3939 = vmax.f32 %v3907, 0.0
      %v3940 = vmax.f32 %v3908, 0.0
      %v3941 = vmax.f32 %v3909, 0.0
      %v3942 = vmax.f32 %v3910, 0.0
      %v3943 = vmax.f32 %v3911, 0.0
      %v3944 = vmax.f32 %v3912, 0.0
      %v3945 = vmax.f32 %v3913, 0.0
      %v3946 = vmax.f32 %v3914, 0.0
      %v3947 = vmax.f32 %v3915, 0.0
      %v3948 = vmax.f32 %v3916, 0.0
      %v3949 = vmax.f32 %v3917, 0.0
      %v3950 = vmax.f32 %v3918, 0.0
      %v3951 = vmax.f32 %v3919, 0.0
      %v3952 = vmax.f32 %v3920, 0.0
      %v3953 = vmax.f32 %v3921, 0.0
      %v3954 = vmax.f32 %v3922, 0.0
      %v3955 = vmax.f32 %v3923, 0.0
      %v3956 = vmax.f32 %v3924, 0.0
      %vm3957 = vcmask 64512
      %3958 = vst.msk [vmem:[#allocation3] sm:$0xff] %vm3957, 0.0
      %3959 = vst.msk [vmem:[#allocation3 + $0x8] sm:$0xff] %vm3957, 0.0
      %vm3960 = vcmask 58368
      %3961 = vst.msk [vmem:[#allocation3 + $0x10] sm:$0x3] %vm3960, 0.0
      %3962 = vst.msk [vmem:[#allocation3 + $0x18] sm:$0xff] %vm3957, 0.0
      %3963 = vst.msk [vmem:[#allocation3 + $0x20] sm:$0xff] %vm3957, 0.0
      %3964 = vst.msk [vmem:[#allocation3 + $0x28] sm:$0x3] %vm3960, 0.0
      %3965 = vst.msk [vmem:[#allocation3 + $0x30] sm:$0xff] %vm3957, 0.0
      %3966 = vst.msk [vmem:[#allocation3 + $0x38] sm:$0xff] %vm3957, 0.0
      %3967 = vst.msk [vmem:[#allocation3 + $0x40] sm:$0x3] %vm3960, 0.0
      %3968 = vst.msk [vmem:[#allocation3 + $0x48] sm:$0xff] %vm3957, 0.0
      %3969 = vst.msk [vmem:[#allocation3 + $0x50] sm:$0xff] %vm3957, 0.0
      %3970 = vst.msk [vmem:[#allocation3 + $0x58] sm:$0x3] %vm3960, 0.0
      %3971 = vst.msk [vmem:[#allocation3 + $0x60] sm:$0xff] %vm3957, 0.0
      %3972 = vst.msk [vmem:[#allocation3 + $0x68] sm:$0xff] %vm3957, 0.0
      %3973 = vst.msk [vmem:[#allocation3 + $0x70] sm:$0x3] %vm3960, 0.0
      %3974 = vst.msk [vmem:[#allocation3 + $0x78] sm:$0xff] %vm3957, 0.0
      %3975 = vst.msk [vmem:[#allocation3 + $0x80] sm:$0xff] %vm3957, 0.0
      %3976 = vst.msk [vmem:[#allocation3 + $0x88] sm:$0x3] %vm3960, 0.0
      %3977 = vst.msk [vmem:[#allocation3 + $0x90] sm:$0xff] %vm3957, 0.0
      %3978 = vst.msk [vmem:[#allocation3 + $0x98] sm:$0xff] %vm3957, 0.0
      %3979 = vst.msk [vmem:[#allocation3 + $0xa0] sm:$0x3] %vm3960, 0.0
      %3980 = vst.msk [vmem:[#allocation3 + $0xa8] sm:$0xff] %vm3957, 0.0
      %3981 = vst.msk [vmem:[#allocation3 + $0xb0] sm:$0xff] %vm3957, 0.0
      %3982 = vst.msk [vmem:[#allocation3 + $0xb8] sm:$0x3] %vm3960, 0.0
      %3983 = vst.msk [vmem:[#allocation3 + $0xc0] sm:$0xff] %vm3957, 0.0
      %3984 = vst.msk [vmem:[#allocation3 + $0xc8] sm:$0xff] %vm3957, 0.0
      %3985 = vst.msk [vmem:[#allocation3 + $0xd0] sm:$0x3] %vm3960, 0.0
      %3986 = vst.msk [vmem:[#allocation3 + $0xd8] sm:$0xff] %vm3957, 0.0
      %3987 = vst.msk [vmem:[#allocation3 + $0xe0] sm:$0xff] %vm3957, 0.0
      %3988 = vst.msk [vmem:[#allocation3 + $0xe8] sm:$0x3] %vm3960, 0.0
      %3989 = vst.msk [vmem:[#allocation3 + $0xf0] sm:$0xff] %vm3957, 0.0
      %3990 = vst.msk [vmem:[#allocation3 + $0xf8] sm:$0xff] %vm3957, 0.0
      %3991 = vst.msk [vmem:[#allocation3 + $0x100] sm:$0x3] %vm3960, 0.0
      %3992 = vst.msk [vmem:[#allocation3 + $0x108] sm:$0xff] %vm3957, 0.0
      %3993 = vst.msk [vmem:[#allocation3 + $0x110] sm:$0xff] %vm3957, 0.0
      %3994 = vst.msk [vmem:[#allocation3 + $0x118] sm:$0x3] %vm3960, 0.0
      %3995 = vst.msk [vmem:[#allocation3 + $0x120] sm:$0xff] %vm3957, 0.0
      %3996 = vst.msk [vmem:[#allocation3 + $0x128] sm:$0xff] %vm3957, 0.0
      %3997 = vst.msk [vmem:[#allocation3 + $0x130] sm:$0x3] %vm3960, 0.0
      %3998 = vst.msk [vmem:[#allocation3 + $0x138] sm:$0xff] %vm3957, 0.0
      %3999 = vst.msk [vmem:[#allocation3 + $0x140] sm:$0xff] %vm3957, 0.0
      %4000 = vst.msk [vmem:[#allocation3 + $0x148] sm:$0x3] %vm3960, 0.0
      %4001 = vst.msk [vmem:[#allocation3 + $0x150] sm:$0xff] %vm3957, 0.0
      %4002 = vst.msk [vmem:[#allocation3 + $0x158] sm:$0xff] %vm3957, 0.0
      %4003 = vst.msk [vmem:[#allocation3 + $0x160] sm:$0x3] %vm3960, 0.0
      %4004 = vst.msk [vmem:[#allocation3 + $0x168] sm:$0xff] %vm3957, 0.0
      %4005 = vst.msk [vmem:[#allocation3 + $0x170] sm:$0xff] %vm3957, 0.0
      %4006 = vst.msk [vmem:[#allocation3 + $0x178] sm:$0x3] %vm3960, 0.0
      %4007 = vst.msk [vmem:[#allocation3 + $0x180] sm:$0xff] %vm3957, 0.0
      %4008 = vst.msk [vmem:[#allocation3 + $0x188] sm:$0xff] %vm3957, 0.0
      %4009 = vst.msk [vmem:[#allocation3 + $0x190] sm:$0x3] %vm3960, 0.0
      %4010 = vst.msk [vmem:[#allocation3 + $0x198] sm:$0xff] %vm3957, 0.0
      %4011 = vst.msk [vmem:[#allocation3 + $0x1a0] sm:$0xff] %vm3957, 0.0
      %4012 = vst.msk [vmem:[#allocation3 + $0x1a8] sm:$0x3] %vm3960, 0.0
      %s4013 = scalar_lea.vmem [#allocation3], 24
      %4014 = vst.msk [vmem:[%s4013 + $0x1] sm:$0xff] %vm3957, %v3925
      %4015 = vst.msk [vmem:[%s4013 + $0x9] sm:$0xff] %vm3957, %v3926
      %4016 = vst.msk [vmem:[%s4013 + $0x19] sm:$0xff] %vm3957, %v3927
      %4017 = vst.msk [vmem:[%s4013 + $0x21] sm:$0xff] %vm3957, %v3928
      %4018 = vst.msk [vmem:[%s4013 + $0x31] sm:$0xff] %vm3957, %v3929
      %4019 = vst.msk [vmem:[%s4013 + $0x39] sm:$0xff] %vm3957, %v3930
      %4020 = vst.msk [vmem:[%s4013 + $0x49] sm:$0xff] %vm3957, %v3931
      %4021 = vst.msk [vmem:[%s4013 + $0x51] sm:$0xff] %vm3957, %v3932
      %4022 = vst.msk [vmem:[%s4013 + $0x61] sm:$0xff] %vm3957, %v3933
      %4023 = vst.msk [vmem:[%s4013 + $0x69] sm:$0xff] %vm3957, %v3934
      %4024 = vst.msk [vmem:[%s4013 + $0x79] sm:$0xff] %vm3957, %v3935
      %4025 = vst.msk [vmem:[%s4013 + $0x81] sm:$0xff] %vm3957, %v3936
      %4026 = vst.msk [vmem:[%s4013 + $0x91] sm:$0xff] %vm3957, %v3937
      %4027 = vst.msk [vmem:[%s4013 + $0x99] sm:$0xff] %vm3957, %v3938
      %4028 = vst.msk [vmem:[%s4013 + $0xa9] sm:$0xff] %vm3957, %v3939
      %4029 = vst.msk [vmem:[%s4013 + $0xb1] sm:$0xff] %vm3957, %v3940
      %4030 = vst.msk [vmem:[%s4013 + $0xc1] sm:$0xff] %vm3957, %v3941
      %4031 = vst.msk [vmem:[%s4013 + $0xc9] sm:$0xff] %vm3957, %v3942
      %4032 = vst.msk [vmem:[%s4013 + $0xd9] sm:$0xff] %vm3957, %v3943
      %4033 = vst.msk [vmem:[%s4013 + $0xe1] sm:$0xff] %vm3957, %v3944
      %4034 = vst.msk [vmem:[%s4013 + $0xf1] sm:$0xff] %vm3957, %v3945
      %4035 = vst.msk [vmem:[%s4013 + $0xf9] sm:$0xff] %vm3957, %v3946
      %4036 = vst.msk [vmem:[%s4013 + $0x109] sm:$0xff] %vm3957, %v3947
      %4037 = vst.msk [vmem:[%s4013 + $0x111] sm:$0xff] %vm3957, %v3948
      %4038 = vst.msk [vmem:[%s4013 + $0x121] sm:$0xff] %vm3957, %v3949
      %4039 = vst.msk [vmem:[%s4013 + $0x129] sm:$0xff] %vm3957, %v3950
      %4040 = vst.msk [vmem:[%s4013 + $0x139] sm:$0xff] %vm3957, %v3951
      %4041 = vst.msk [vmem:[%s4013 + $0x141] sm:$0xff] %vm3957, %v3952
      %4042 = vst.msk [vmem:[%s4013 + $0x151] sm:$0xff] %vm3957, %v3953
      %4043 = vst.msk [vmem:[%s4013 + $0x159] sm:$0xff] %vm3957, %v3954
      %4044 = vst.msk [vmem:[%s4013 + $0x169] sm:$0xff] %vm3957, %v3955
      %4045 = vst.msk [vmem:[%s4013 + $0x171] sm:$0xff] %vm3957, %v3956
      %v4046 = vld [vmem:[#allocation3] sm:$0xff]
      %v4047 = vld [vmem:[#allocation3 + $0x8] sm:$0xff]
      %v4048 = vld [vmem:[#allocation3 + $0x18] sm:$0xff]
      %v4049 = vld [vmem:[#allocation3 + $0x20] sm:$0xff]
      %v4050 = vld [vmem:[#allocation3 + $0x30] sm:$0xff]
      %v4051 = vld [vmem:[#allocation3 + $0x38] sm:$0xff]
      %v4052 = vld [vmem:[#allocation3 + $0x48] sm:$0xff]
      %v4053 = vld [vmem:[#allocation3 + $0x50] sm:$0xff]
      %v4054 = vld [vmem:[#allocation3 + $0x60] sm:$0xff]
      %v4055 = vld [vmem:[#allocation3 + $0x68] sm:$0xff]
      %v4056 = vld [vmem:[#allocation3 + $0x78] sm:$0xff]
      %v4057 = vld [vmem:[#allocation3 + $0x80] sm:$0xff]
      %v4058 = vld [vmem:[#allocation3 + $0x90] sm:$0xff]
      %v4059 = vld [vmem:[#allocation3 + $0x98] sm:$0xff]
      %v4060 = vld [vmem:[#allocation3 + $0xa8] sm:$0xff]
      %v4061 = vld [vmem:[#allocation3 + $0xb0] sm:$0xff]
      %v4062 = vld [vmem:[#allocation3 + $0xc0] sm:$0xff]
      %v4063 = vld [vmem:[#allocation3 + $0xc8] sm:$0xff]
      %v4064 = vld [vmem:[#allocation3 + $0xd8] sm:$0xff]
      %v4065 = vld [vmem:[#allocation3 + $0xe0] sm:$0xff]
      %v4066 = vld [vmem:[#allocation3 + $0xf0] sm:$0xff]
      %v4067 = vld [vmem:[#allocation3 + $0xf8] sm:$0xff]
      %v4068 = vld [vmem:[#allocation3 + $0x108] sm:$0xff]
      %v4069 = vld [vmem:[#allocation3 + $0x110] sm:$0xff]
      %v4070 = vld [vmem:[#allocation3 + $0x120] sm:$0xff]
      %v4071 = vld [vmem:[#allocation3 + $0x128] sm:$0xff]
      %v4072 = vld [vmem:[#allocation3 + $0x138] sm:$0xff]
      %v4073 = vld [vmem:[#allocation3 + $0x140] sm:$0xff]
      %v4074 = vld [vmem:[#allocation3 + $0x150] sm:$0xff]
      %v4075 = vld [vmem:[#allocation3 + $0x158] sm:$0xff]
      %v4076 = vld [vmem:[#allocation3 + $0x168] sm:$0xff]
      %v4077 = vld [vmem:[#allocation3 + $0x170] sm:$0xff]
      %v4078 = vld [vmem:[%s4] sm:$0xff]
      %v4079 = vld [vmem:[#allocation3 + $0x1] sm:$0xff]
      %v4080 = vld [vmem:[#allocation3 + $0x9] sm:$0xff]
      %v4081 = vld [vmem:[#allocation3 + $0x19] sm:$0xff]
      %v4082 = vld [vmem:[#allocation3 + $0x21] sm:$0xff]
      %v4083 = vld [vmem:[#allocation3 + $0x31] sm:$0xff]
      %v4084 = vld [vmem:[#allocation3 + $0x39] sm:$0xff]
      %v4085 = vld [vmem:[#allocation3 + $0x49] sm:$0xff]
      %v4086 = vld [vmem:[#allocation3 + $0x51] sm:$0xff]
      %v4087 = vld [vmem:[#allocation3 + $0x61] sm:$0xff]
      %v4088 = vld [vmem:[#allocation3 + $0x69] sm:$0xff]
      %v4089 = vld [vmem:[#allocation3 + $0x79] sm:$0xff]
      %v4090 = vld [vmem:[#allocation3 + $0x81] sm:$0xff]
      %v4091 = vld [vmem:[#allocation3 + $0x91] sm:$0xff]
      %v4092 = vld [vmem:[#allocation3 + $0x99] sm:$0xff]
      %v4093 = vld [vmem:[#allocation3 + $0xa9] sm:$0xff]
      %v4094 = vld [vmem:[#allocation3 + $0xb1] sm:$0xff]
      %v4095 = vld [vmem:[#allocation3 + $0xc1] sm:$0xff]
      %v4096 = vld [vmem:[#allocation3 + $0xc9] sm:$0xff]
      %v4097 = vld [vmem:[#allocation3 + $0xd9] sm:$0xff]
      %v4098 = vld [vmem:[#allocation3 + $0xe1] sm:$0xff]
      %v4099 = vld [vmem:[#allocation3 + $0xf1] sm:$0xff]
      %v4100 = vld [vmem:[#allocation3 + $0xf9] sm:$0xff]
      %v4101 = vld [vmem:[#allocation3 + $0x109] sm:$0xff]
      %v4102 = vld [vmem:[#allocation3 + $0x111] sm:$0xff]
      %v4103 = vld [vmem:[#allocation3 + $0x121] sm:$0xff]
      %v4104 = vld [vmem:[#allocation3 + $0x129] sm:$0xff]
      %v4105 = vld [vmem:[#allocation3 + $0x139] sm:$0xff]
      %v4106 = vld [vmem:[#allocation3 + $0x141] sm:$0xff]
      %v4107 = vld [vmem:[#allocation3 + $0x151] sm:$0xff]
      %v4108 = vld [vmem:[#allocation3 + $0x159] sm:$0xff]
      %v4109 = vld [vmem:[#allocation3 + $0x169] sm:$0xff]
      %v4110 = vld [vmem:[#allocation3 + $0x171] sm:$0xff]
      %s4111 = scalar_lea.vmem %s4, 8
      %v4112 = vld [vmem:[%s4111] sm:$0xff]
      %v4114 = vsel %vm3957, %v4079, 0
      %v4117 = vsel %vm3957, %v4080, 0
      %v4120 = vsel %vm3957, %v4081, 0
      %v4123 = vsel %vm3957, %v4082, 0
      %v4126 = vsel %vm3957, %v4083, 0
      %v4129 = vsel %vm3957, %v4084, 0
      %v4132 = vsel %vm3957, %v4085, 0
      %v4135 = vsel %vm3957, %v4086, 0
      %v4138 = vsel %vm3957, %v4087, 0
      %v4141 = vsel %vm3957, %v4088, 0
      %v4144 = vsel %vm3957, %v4089, 0
      %v4147 = vsel %vm3957, %v4090, 0
      %v4150 = vsel %vm3957, %v4091, 0
      %v4153 = vsel %vm3957, %v4092, 0
      %v4156 = vsel %vm3957, %v4093, 0
      %v4159 = vsel %vm3957, %v4094, 0
      %v4162 = vsel %vm3957, %v4095, 0
      %v4165 = vsel %vm3957, %v4096, 0
      %v4168 = vsel %vm3957, %v4097, 0
      %v4171 = vsel %vm3957, %v4098, 0
      %v4174 = vsel %vm3957, %v4099, 0
      %v4177 = vsel %vm3957, %v4100, 0
      %v4180 = vsel %vm3957, %v4101, 0
      %v4183 = vsel %vm3957, %v4102, 0
      %v4186 = vsel %vm3957, %v4103, 0
      %v4189 = vsel %vm3957, %v4104, 0
      %v4192 = vsel %vm3957, %v4105, 0
      %v4195 = vsel %vm3957, %v4106, 0
      %v4198 = vsel %vm3957, %v4107, 0
      %v4201 = vsel %vm3957, %v4108, 0
      %v4204 = vsel %vm3957, %v4109, 0
      %v4207 = vsel %vm3957, %v4110, 0
      %4209 = vmatprep.subr.mxu0 0.0
      %4210 = vmatpush1.msra.mxu0 0.0
      %4211 = vmatprep.subr.mxu0 0.0
      %4212 = vmatpush1.msra.mxu0 0.0
      %4213 = vmatprep.subr.mxu0 0.0
      %4214 = vmatpush1.msra.mxu0 0.0
      %4215 = vmatprep.subr.mxu0 0.0
      %4216 = vmatpush1.msra.mxu0 0.0
      %4217 = vmatprep.subr.mxu0 0.0
      %4218 = vmatpush1.msra.mxu0 0.0
      %4219 = vmatprep.subr.mxu0 0.0
      %4220 = vmatpush1.msra.mxu0 0.0
      %4221 = vmatprep.subr.mxu0 0.0
      %4222 = vmatpush1.msra.mxu0 0.0
      %4223 = vmatprep.subr.mxu0 0.0
      %4224 = vmatpush1.msra.mxu0 0.0
      %4225 = vmatprep.subr.mxu0 0.0
      %4226 = vmatpush1.msra.mxu0 0.0
      %4227 = vmatprep.subr.mxu0 0.0
      %4228 = vmatpush1.msra.mxu0 0.0
      %4229 = vmatprep.subr.mxu0 0.0
      %4230 = vmatpush1.msra.mxu0 0.0
      %4231 = vmatprep.subr.mxu0 0.0
      %4232 = vmatpush1.msra.mxu0 0.0
      %4233 = vmatprep.subr.mxu0 0.0
      %4234 = vmatpush1.msra.mxu0 0.0
      %4235 = vmatprep.subr.mxu0 0.0
      %4236 = vmatpush1.msra.mxu0 0.0
      %4237 = vmatprep.subr.mxu0 0.0
      %4238 = vmatpush1.msra.mxu0 0.0
      %4239 = vmatprep.subr.mxu0 0.0
      %4240 = vmatpush1.msra.mxu0 %v4112
      %4241 = vmatprep.subr.mxu0 0.0
      %4242 = vmatpush2.msra.mxu0 0.0
      %4243 = vmatprep.subr.mxu0 0.0
      %4244 = vmatpush2.msra.mxu0 0.0
      %4245 = vmatprep.subr.mxu0 0.0
      %4246 = vmatpush2.msra.mxu0 0.0
      %4247 = vmatprep.subr.mxu0 0.0
      %4248 = vmatpush2.msra.mxu0 0.0
      %4249 = vmatprep.subr.mxu0 0.0
      %4250 = vmatpush2.msra.mxu0 0.0
      %4251 = vmatprep.subr.mxu0 0.0
      %4252 = vmatpush2.msra.mxu0 0.0
      %4253 = vmatprep.subr.mxu0 0.0
      %4254 = vmatpush2.msra.mxu0 0.0
      %4255 = vmatprep.subr.mxu0 0.0
      %4256 = vmatpush2.msra.mxu0 0.0
      %4257 = vmatprep.subr.mxu0 0.0
      %4258 = vmatpush2.msra.mxu0 0.0
      %4259 = vmatprep.subr.mxu0 0.0
      %4260 = vmatpush2.msra.mxu0 0.0
      %4261 = vmatprep.subr.mxu0 0.0
      %4262 = vmatpush2.msra.mxu0 0.0
      %4263 = vmatprep.subr.mxu0 0.0
      %4264 = vmatpush2.msra.mxu0 0.0
      %4265 = vmatprep.subr.mxu0 0.0
      %4266 = vmatpush2.msra.mxu0 0.0
      %4267 = vmatprep.subr.mxu0 0.0
      %4268 = vmatpush2.msra.mxu0 0.0
      %4269 = vmatprep.subr.mxu0 0.0
      %4270 = vmatpush2.msra.mxu0 0.0
      %4271 = vmatprep.subr.mxu0 0.0
      %4272 = vmatpush2.msra.mxu0 0.0
      %4273 = vmatprep.mubr.f32.mxu0 0.0
      %4274 = vmatmul.mubr.f32.gmra.mxu0 %v4114
      %v4275 = vpop.f32.mrf.mxu0
      %v4276 = vadd.f32 0.0, %v4275
      %v4277 = vpop.f32.mrf.mxu0
      %4278 = vmatprep.mubr.f32.mxu0 0.0
      %4279 = vmatmul.mubr.f32.gmra.mxu0 %v4117
      %v4280 = vpop.f32.mrf.mxu0
      %v4281 = vadd.f32 0.0, %v4280
      %v4282 = vpop.f32.mrf.mxu0
      %4283 = vmatprep.mubr.f32.mxu0 0.0
      %4284 = vmatmul.mubr.f32.gmra.mxu0 %v4120
      %v4285 = vpop.f32.mrf.mxu0
      %v4286 = vadd.f32 0.0, %v4285
      %v4287 = vpop.f32.mrf.mxu0
      %4288 = vmatprep.mubr.f32.mxu0 0.0
      %4289 = vmatmul.mubr.f32.gmra.mxu0 %v4123
      %v4290 = vpop.f32.mrf.mxu0
      %v4291 = vadd.f32 0.0, %v4290
      %v4292 = vpop.f32.mrf.mxu0
      %4293 = vmatprep.mubr.f32.mxu0 0.0
      %4294 = vmatmul.mubr.f32.gmra.mxu0 %v4126
      %v4295 = vpop.f32.mrf.mxu0
      %v4296 = vadd.f32 0.0, %v4295
      %v4297 = vpop.f32.mrf.mxu0
      %4298 = vmatprep.mubr.f32.mxu0 0.0
      %4299 = vmatmul.mubr.f32.gmra.mxu0 %v4129
      %v4300 = vpop.f32.mrf.mxu0
      %v4301 = vadd.f32 0.0, %v4300
      %v4302 = vpop.f32.mrf.mxu0
      %4303 = vmatprep.mubr.f32.mxu0 0.0
      %4304 = vmatmul.mubr.f32.gmra.mxu0 %v4132
      %v4305 = vpop.f32.mrf.mxu0
      %v4306 = vadd.f32 0.0, %v4305
      %v4307 = vpop.f32.mrf.mxu0
      %4308 = vmatprep.mubr.f32.mxu0 0.0
      %4309 = vmatmul.mubr.f32.gmra.mxu0 %v4135
      %v4310 = vpop.f32.mrf.mxu0
      %v4311 = vadd.f32 0.0, %v4310
      %v4312 = vpop.f32.mrf.mxu0
      %4313 = vmatprep.mubr.f32.mxu0 0.0
      %4314 = vmatmul.mubr.f32.gmra.mxu0 %v4138
      %v4315 = vpop.f32.mrf.mxu0
      %v4316 = vadd.f32 0.0, %v4315
      %v4317 = vpop.f32.mrf.mxu0
      %4318 = vmatprep.mubr.f32.mxu0 0.0
      %4319 = vmatmul.mubr.f32.gmra.mxu0 %v4141
      %v4320 = vpop.f32.mrf.mxu0
      %v4321 = vadd.f32 0.0, %v4320
      %v4322 = vpop.f32.mrf.mxu0
      %4323 = vmatprep.mubr.f32.mxu0 0.0
      %4324 = vmatmul.mubr.f32.gmra.mxu0 %v4144
      %v4325 = vpop.f32.mrf.mxu0
      %v4326 = vadd.f32 0.0, %v4325
      %v4327 = vpop.f32.mrf.mxu0
      %4328 = vmatprep.mubr.f32.mxu0 0.0
      %4329 = vmatmul.mubr.f32.gmra.mxu0 %v4147
      %v4330 = vpop.f32.mrf.mxu0
      %v4331 = vadd.f32 0.0, %v4330
      %v4332 = vpop.f32.mrf.mxu0
      %4333 = vmatprep.mubr.f32.mxu0 0.0
      %4334 = vmatmul.mubr.f32.gmra.mxu0 %v4150
      %v4335 = vpop.f32.mrf.mxu0
      %v4336 = vadd.f32 0.0, %v4335
      %v4337 = vpop.f32.mrf.mxu0
      %4338 = vmatprep.mubr.f32.mxu0 0.0
      %4339 = vmatmul.mubr.f32.gmra.mxu0 %v4153
      %v4340 = vpop.f32.mrf.mxu0
      %v4341 = vadd.f32 0.0, %v4340
      %v4342 = vpop.f32.mrf.mxu0
      %4343 = vmatprep.mubr.f32.mxu0 0.0
      %4344 = vmatmul.mubr.f32.gmra.mxu0 %v4156
      %v4345 = vpop.f32.mrf.mxu0
      %v4346 = vadd.f32 0.0, %v4345
      %v4347 = vpop.f32.mrf.mxu0
      %4348 = vmatprep.mubr.f32.mxu0 0.0
      %4349 = vmatmul.mubr.f32.gmra.mxu0 %v4159
      %v4350 = vpop.f32.mrf.mxu0
      %v4351 = vadd.f32 0.0, %v4350
      %v4352 = vpop.f32.mrf.mxu0
      %4353 = vmatprep.mubr.f32.mxu0 0.0
      %4354 = vmatmul.mubr.f32.gmra.mxu0 %v4162
      %v4355 = vpop.f32.mrf.mxu0
      %v4356 = vadd.f32 0.0, %v4355
      %v4357 = vpop.f32.mrf.mxu0
      %4358 = vmatprep.mubr.f32.mxu0 0.0
      %4359 = vmatmul.mubr.f32.gmra.mxu0 %v4165
      %v4360 = vpop.f32.mrf.mxu0
      %v4361 = vadd.f32 0.0, %v4360
      %v4362 = vpop.f32.mrf.mxu0
      %4363 = vmatprep.mubr.f32.mxu0 0.0
      %4364 = vmatmul.mubr.f32.gmra.mxu0 %v4168
      %v4365 = vpop.f32.mrf.mxu0
      %v4366 = vadd.f32 0.0, %v4365
      %v4367 = vpop.f32.mrf.mxu0
      %4368 = vmatprep.mubr.f32.mxu0 0.0
      %4369 = vmatmul.mubr.f32.gmra.mxu0 %v4171
      %v4370 = vpop.f32.mrf.mxu0
      %v4371 = vadd.f32 0.0, %v4370
      %v4372 = vpop.f32.mrf.mxu0
      %4373 = vmatprep.mubr.f32.mxu0 0.0
      %4374 = vmatmul.mubr.f32.gmra.mxu0 %v4174
      %v4375 = vpop.f32.mrf.mxu0
      %v4376 = vadd.f32 0.0, %v4375
      %v4377 = vpop.f32.mrf.mxu0
      %4378 = vmatprep.mubr.f32.mxu0 0.0
      %4379 = vmatmul.mubr.f32.gmra.mxu0 %v4177
      %v4380 = vpop.f32.mrf.mxu0
      %v4381 = vadd.f32 0.0, %v4380
      %v4382 = vpop.f32.mrf.mxu0
      %4383 = vmatprep.mubr.f32.mxu0 0.0
      %4384 = vmatmul.mubr.f32.gmra.mxu0 %v4180
      %v4385 = vpop.f32.mrf.mxu0
      %v4386 = vadd.f32 0.0, %v4385
      %v4387 = vpop.f32.mrf.mxu0
      %4388 = vmatprep.mubr.f32.mxu0 0.0
      %4389 = vmatmul.mubr.f32.gmra.mxu0 %v4183
      %v4390 = vpop.f32.mrf.mxu0
      %v4391 = vadd.f32 0.0, %v4390
      %v4392 = vpop.f32.mrf.mxu0
      %4393 = vmatprep.mubr.f32.mxu0 0.0
      %4394 = vmatmul.mubr.f32.gmra.mxu0 %v4186
      %v4395 = vpop.f32.mrf.mxu0
      %v4396 = vadd.f32 0.0, %v4395
      %v4397 = vpop.f32.mrf.mxu0
      %4398 = vmatprep.mubr.f32.mxu0 0.0
      %4399 = vmatmul.mubr.f32.gmra.mxu0 %v4189
      %v4400 = vpop.f32.mrf.mxu0
      %v4401 = vadd.f32 0.0, %v4400
      %v4402 = vpop.f32.mrf.mxu0
      %4403 = vmatprep.mubr.f32.mxu0 0.0
      %4404 = vmatmul.mubr.f32.gmra.mxu0 %v4192
      %v4405 = vpop.f32.mrf.mxu0
      %v4406 = vadd.f32 0.0, %v4405
      %v4407 = vpop.f32.mrf.mxu0
      %4408 = vmatprep.mubr.f32.mxu0 0.0
      %4409 = vmatmul.mubr.f32.gmra.mxu0 %v4195
      %v4410 = vpop.f32.mrf.mxu0
      %v4411 = vadd.f32 0.0, %v4410
      %v4412 = vpop.f32.mrf.mxu0
      %4413 = vmatprep.mubr.f32.mxu0 0.0
      %4414 = vmatmul.mubr.f32.gmra.mxu0 %v4198
      %v4415 = vpop.f32.mrf.mxu0
      %v4416 = vadd.f32 0.0, %v4415
      %v4417 = vpop.f32.mrf.mxu0
      %4418 = vmatprep.mubr.f32.mxu0 0.0
      %4419 = vmatmul.mubr.f32.gmra.mxu0 %v4201
      %v4420 = vpop.f32.mrf.mxu0
      %v4421 = vadd.f32 0.0, %v4420
      %v4422 = vpop.f32.mrf.mxu0
      %4423 = vmatprep.mubr.f32.mxu0 0.0
      %4424 = vmatmul.mubr.f32.gmra.mxu0 %v4204
      %v4425 = vpop.f32.mrf.mxu0
      %v4426 = vadd.f32 0.0, %v4425
      %v4427 = vpop.f32.mrf.mxu0
      %4428 = vmatprep.mubr.f32.mxu0 0.0
      %4429 = vmatmul.mubr.f32.gmra.mxu0 %v4207
      %v4430 = vpop.f32.mrf.mxu0
      %v4431 = vadd.f32 0.0, %v4430
      %v4432 = vpop.f32.mrf.mxu0
      %4433 = vdwg.mxu0
      %v4435 = vsel %vm3957, %v4046, 0
      %v4438 = vsel %vm3957, %v4047, 0
      %v4441 = vsel %vm3957, %v4048, 0
      %v4444 = vsel %vm3957, %v4049, 0
      %v4447 = vsel %vm3957, %v4050, 0
      %v4450 = vsel %vm3957, %v4051, 0
      %v4453 = vsel %vm3957, %v4052, 0
      %v4456 = vsel %vm3957, %v4053, 0
      %v4459 = vsel %vm3957, %v4054, 0
      %v4462 = vsel %vm3957, %v4055, 0
      %v4465 = vsel %vm3957, %v4056, 0
      %v4468 = vsel %vm3957, %v4057, 0
      %v4471 = vsel %vm3957, %v4058, 0
      %v4474 = vsel %vm3957, %v4059, 0
      %v4477 = vsel %vm3957, %v4060, 0
      %v4480 = vsel %vm3957, %v4061, 0
      %v4483 = vsel %vm3957, %v4062, 0
      %v4486 = vsel %vm3957, %v4063, 0
      %v4489 = vsel %vm3957, %v4064, 0
      %v4492 = vsel %vm3957, %v4065, 0
      %v4495 = vsel %vm3957, %v4066, 0
      %v4498 = vsel %vm3957, %v4067, 0
      %v4501 = vsel %vm3957, %v4068, 0
      %v4504 = vsel %vm3957, %v4069, 0
      %v4507 = vsel %vm3957, %v4070, 0
      %v4510 = vsel %vm3957, %v4071, 0
      %v4513 = vsel %vm3957, %v4072, 0
      %v4516 = vsel %vm3957, %v4073, 0
      %v4519 = vsel %vm3957, %v4074, 0
      %v4522 = vsel %vm3957, %v4075, 0
      %v4525 = vsel %vm3957, %v4076, 0
      %v4528 = vsel %vm3957, %v4077, 0
      %4530 = vmatprep.subr.mxu0 0.0
      %4531 = vmatpush1.msra.mxu0 0.0
      %4532 = vmatprep.subr.mxu0 0.0
      %4533 = vmatpush1.msra.mxu0 0.0
      %4534 = vmatprep.subr.mxu0 0.0
      %4535 = vmatpush1.msra.mxu0 0.0
      %4536 = vmatprep.subr.mxu0 0.0
      %4537 = vmatpush1.msra.mxu0 0.0
      %4538 = vmatprep.subr.mxu0 0.0
      %4539 = vmatpush1.msra.mxu0 0.0
      %4540 = vmatprep.subr.mxu0 0.0
      %4541 = vmatpush1.msra.mxu0 0.0
      %4542 = vmatprep.subr.mxu0 0.0
      %4543 = vmatpush1.msra.mxu0 0.0
      %4544 = vmatprep.subr.mxu0 0.0
      %4545 = vmatpush1.msra.mxu0 0.0
      %4546 = vmatprep.subr.mxu0 0.0
      %4547 = vmatpush1.msra.mxu0 0.0
      %4548 = vmatprep.subr.mxu0 0.0
      %4549 = vmatpush1.msra.mxu0 0.0
      %4550 = vmatprep.subr.mxu0 0.0
      %4551 = vmatpush1.msra.mxu0 0.0
      %4552 = vmatprep.subr.mxu0 0.0
      %4553 = vmatpush1.msra.mxu0 0.0
      %4554 = vmatprep.subr.mxu0 0.0
      %4555 = vmatpush1.msra.mxu0 0.0
      %4556 = vmatprep.subr.mxu0 0.0
      %4557 = vmatpush1.msra.mxu0 0.0
      %4558 = vmatprep.subr.mxu0 0.0
      %4559 = vmatpush1.msra.mxu0 0.0
      %4560 = vmatprep.subr.mxu0 0.0
      %4561 = vmatpush1.msra.mxu0 %v4078
      %4562 = vmatprep.subr.mxu0 0.0
      %4563 = vmatpush2.msra.mxu0 0.0
      %4564 = vmatprep.subr.mxu0 0.0
      %4565 = vmatpush2.msra.mxu0 0.0
      %4566 = vmatprep.subr.mxu0 0.0
      %4567 = vmatpush2.msra.mxu0 0.0
      %4568 = vmatprep.subr.mxu0 0.0
      %4569 = vmatpush2.msra.mxu0 0.0
      %4570 = vmatprep.subr.mxu0 0.0
      %4571 = vmatpush2.msra.mxu0 0.0
      %4572 = vmatprep.subr.mxu0 0.0
      %4573 = vmatpush2.msra.mxu0 0.0
      %4574 = vmatprep.subr.mxu0 0.0
      %4575 = vmatpush2.msra.mxu0 0.0
      %4576 = vmatprep.subr.mxu0 0.0
      %4577 = vmatpush2.msra.mxu0 0.0
      %4578 = vmatprep.subr.mxu0 0.0
      %4579 = vmatpush2.msra.mxu0 0.0
      %4580 = vmatprep.subr.mxu0 0.0
      %4581 = vmatpush2.msra.mxu0 0.0
      %4582 = vmatprep.subr.mxu0 0.0
      %4583 = vmatpush2.msra.mxu0 0.0
      %4584 = vmatprep.subr.mxu0 0.0
      %4585 = vmatpush2.msra.mxu0 0.0
      %4586 = vmatprep.subr.mxu0 0.0
      %4587 = vmatpush2.msra.mxu0 0.0
      %4588 = vmatprep.subr.mxu0 0.0
      %4589 = vmatpush2.msra.mxu0 0.0
      %4590 = vmatprep.subr.mxu0 0.0
      %4591 = vmatpush2.msra.mxu0 0.0
      %4592 = vmatprep.subr.mxu0 0.0
      %4593 = vmatpush2.msra.mxu0 0.0
      %4594 = vmatprep.mubr.f32.mxu0 0.0
      %4595 = vmatmul.mubr.f32.gmra.mxu0 %v4435
      %v4596 = vpop.f32.mrf.mxu0
      %v4597 = vadd.f32 %v4276, %v4596
      %v4598 = vpop.f32.mrf.mxu0
      %4599 = vmatprep.mubr.f32.mxu0 0.0
      %4600 = vmatmul.mubr.f32.gmra.mxu0 %v4438
      %v4601 = vpop.f32.mrf.mxu0
      %v4602 = vadd.f32 %v4281, %v4601
      %v4603 = vpop.f32.mrf.mxu0
      %4604 = vmatprep.mubr.f32.mxu0 0.0
      %4605 = vmatmul.mubr.f32.gmra.mxu0 %v4441
      %v4606 = vpop.f32.mrf.mxu0
      %v4607 = vadd.f32 %v4286, %v4606
      %v4608 = vpop.f32.mrf.mxu0
      %4609 = vmatprep.mubr.f32.mxu0 0.0
      %4610 = vmatmul.mubr.f32.gmra.mxu0 %v4444
      %v4611 = vpop.f32.mrf.mxu0
      %v4612 = vadd.f32 %v4291, %v4611
      %v4613 = vpop.f32.mrf.mxu0
      %4614 = vmatprep.mubr.f32.mxu0 0.0
      %4615 = vmatmul.mubr.f32.gmra.mxu0 %v4447
      %v4616 = vpop.f32.mrf.mxu0
      %v4617 = vadd.f32 %v4296, %v4616
      %v4618 = vpop.f32.mrf.mxu0
      %4619 = vmatprep.mubr.f32.mxu0 0.0
      %4620 = vmatmul.mubr.f32.gmra.mxu0 %v4450
      %v4621 = vpop.f32.mrf.mxu0
      %v4622 = vadd.f32 %v4301, %v4621
      %v4623 = vpop.f32.mrf.mxu0
      %4624 = vmatprep.mubr.f32.mxu0 0.0
      %4625 = vmatmul.mubr.f32.gmra.mxu0 %v4453
      %v4626 = vpop.f32.mrf.mxu0
      %v4627 = vadd.f32 %v4306, %v4626
      %v4628 = vpop.f32.mrf.mxu0
      %4629 = vmatprep.mubr.f32.mxu0 0.0
      %4630 = vmatmul.mubr.f32.gmra.mxu0 %v4456
      %v4631 = vpop.f32.mrf.mxu0
      %v4632 = vadd.f32 %v4311, %v4631
      %v4633 = vpop.f32.mrf.mxu0
      %4634 = vmatprep.mubr.f32.mxu0 0.0
      %4635 = vmatmul.mubr.f32.gmra.mxu0 %v4459
      %v4636 = vpop.f32.mrf.mxu0
      %v4637 = vadd.f32 %v4316, %v4636
      %v4638 = vpop.f32.mrf.mxu0
      %4639 = vmatprep.mubr.f32.mxu0 0.0
      %4640 = vmatmul.mubr.f32.gmra.mxu0 %v4462
      %v4641 = vpop.f32.mrf.mxu0
      %v4642 = vadd.f32 %v4321, %v4641
      %v4643 = vpop.f32.mrf.mxu0
      %4644 = vmatprep.mubr.f32.mxu0 0.0
      %4645 = vmatmul.mubr.f32.gmra.mxu0 %v4465
      %v4646 = vpop.f32.mrf.mxu0
      %v4647 = vadd.f32 %v4326, %v4646
      %v4648 = vpop.f32.mrf.mxu0
      %4649 = vmatprep.mubr.f32.mxu0 0.0
      %4650 = vmatmul.mubr.f32.gmra.mxu0 %v4468
      %v4651 = vpop.f32.mrf.mxu0
      %v4652 = vadd.f32 %v4331, %v4651
      %v4653 = vpop.f32.mrf.mxu0
      %4654 = vmatprep.mubr.f32.mxu0 0.0
      %4655 = vmatmul.mubr.f32.gmra.mxu0 %v4471
      %v4656 = vpop.f32.mrf.mxu0
      %v4657 = vadd.f32 %v4336, %v4656
      %v4658 = vpop.f32.mrf.mxu0
      %4659 = vmatprep.mubr.f32.mxu0 0.0
      %4660 = vmatmul.mubr.f32.gmra.mxu0 %v4474
      %v4661 = vpop.f32.mrf.mxu0
      %v4662 = vadd.f32 %v4341, %v4661
      %v4663 = vpop.f32.mrf.mxu0
      %4664 = vmatprep.mubr.f32.mxu0 0.0
      %4665 = vmatmul.mubr.f32.gmra.mxu0 %v4477
      %v4666 = vpop.f32.mrf.mxu0
      %v4667 = vadd.f32 %v4346, %v4666
      %v4668 = vpop.f32.mrf.mxu0
      %4669 = vmatprep.mubr.f32.mxu0 0.0
      %4670 = vmatmul.mubr.f32.gmra.mxu0 %v4480
      %v4671 = vpop.f32.mrf.mxu0
      %v4672 = vadd.f32 %v4351, %v4671
      %v4673 = vpop.f32.mrf.mxu0
      %4674 = vmatprep.mubr.f32.mxu0 0.0
      %4675 = vmatmul.mubr.f32.gmra.mxu0 %v4483
      %v4676 = vpop.f32.mrf.mxu0
      %v4677 = vadd.f32 %v4356, %v4676
      %v4678 = vpop.f32.mrf.mxu0
      %4679 = vmatprep.mubr.f32.mxu0 0.0
      %4680 = vmatmul.mubr.f32.gmra.mxu0 %v4486
      %v4681 = vpop.f32.mrf.mxu0
      %v4682 = vadd.f32 %v4361, %v4681
      %v4683 = vpop.f32.mrf.mxu0
      %4684 = vmatprep.mubr.f32.mxu0 0.0
      %4685 = vmatmul.mubr.f32.gmra.mxu0 %v4489
      %v4686 = vpop.f32.mrf.mxu0
      %v4687 = vadd.f32 %v4366, %v4686
      %v4688 = vpop.f32.mrf.mxu0
      %4689 = vmatprep.mubr.f32.mxu0 0.0
      %4690 = vmatmul.mubr.f32.gmra.mxu0 %v4492
      %v4691 = vpop.f32.mrf.mxu0
      %v4692 = vadd.f32 %v4371, %v4691
      %v4693 = vpop.f32.mrf.mxu0
      %4694 = vmatprep.mubr.f32.mxu0 0.0
      %4695 = vmatmul.mubr.f32.gmra.mxu0 %v4495
      %v4696 = vpop.f32.mrf.mxu0
      %v4697 = vadd.f32 %v4376, %v4696
      %v4698 = vpop.f32.mrf.mxu0
      %4699 = vmatprep.mubr.f32.mxu0 0.0
      %4700 = vmatmul.mubr.f32.gmra.mxu0 %v4498
      %v4701 = vpop.f32.mrf.mxu0
      %v4702 = vadd.f32 %v4381, %v4701
      %v4703 = vpop.f32.mrf.mxu0
      %4704 = vmatprep.mubr.f32.mxu0 0.0
      %4705 = vmatmul.mubr.f32.gmra.mxu0 %v4501
      %v4706 = vpop.f32.mrf.mxu0
      %v4707 = vadd.f32 %v4386, %v4706
      %v4708 = vpop.f32.mrf.mxu0
      %4709 = vmatprep.mubr.f32.mxu0 0.0
      %4710 = vmatmul.mubr.f32.gmra.mxu0 %v4504
      %v4711 = vpop.f32.mrf.mxu0
      %v4712 = vadd.f32 %v4391, %v4711
      %v4713 = vpop.f32.mrf.mxu0
      %4714 = vmatprep.mubr.f32.mxu0 0.0
      %4715 = vmatmul.mubr.f32.gmra.mxu0 %v4507
      %v4716 = vpop.f32.mrf.mxu0
      %v4717 = vadd.f32 %v4396, %v4716
      %v4718 = vpop.f32.mrf.mxu0
      %4719 = vmatprep.mubr.f32.mxu0 0.0
      %4720 = vmatmul.mubr.f32.gmra.mxu0 %v4510
      %v4721 = vpop.f32.mrf.mxu0
      %v4722 = vadd.f32 %v4401, %v4721
      %v4723 = vpop.f32.mrf.mxu0
      %4724 = vmatprep.mubr.f32.mxu0 0.0
      %4725 = vmatmul.mubr.f32.gmra.mxu0 %v4513
      %v4726 = vpop.f32.mrf.mxu0
      %v4727 = vadd.f32 %v4406, %v4726
      %v4728 = vpop.f32.mrf.mxu0
      %4729 = vmatprep.mubr.f32.mxu0 0.0
      %4730 = vmatmul.mubr.f32.gmra.mxu0 %v4516
      %v4731 = vpop.f32.mrf.mxu0
      %v4732 = vadd.f32 %v4411, %v4731
      %v4733 = vpop.f32.mrf.mxu0
      %4734 = vmatprep.mubr.f32.mxu0 0.0
      %4735 = vmatmul.mubr.f32.gmra.mxu0 %v4519
      %v4736 = vpop.f32.mrf.mxu0
      %v4737 = vadd.f32 %v4416, %v4736
      %v4738 = vpop.f32.mrf.mxu0
      %4739 = vmatprep.mubr.f32.mxu0 0.0
      %4740 = vmatmul.mubr.f32.gmra.mxu0 %v4522
      %v4741 = vpop.f32.mrf.mxu0
      %v4742 = vadd.f32 %v4421, %v4741
      %v4743 = vpop.f32.mrf.mxu0
      %4744 = vmatprep.mubr.f32.mxu0 0.0
      %4745 = vmatmul.mubr.f32.gmra.mxu0 %v4525
      %v4746 = vpop.f32.mrf.mxu0
      %v4747 = vadd.f32 %v4426, %v4746
      %v4748 = vpop.f32.mrf.mxu0
      %4749 = vmatprep.mubr.f32.mxu0 0.0
      %4750 = vmatmul.mubr.f32.gmra.mxu0 %v4528
      %v4751 = vpop.f32.mrf.mxu0
      %v4752 = vadd.f32 %v4431, %v4751
      %v4753 = vpop.f32.mrf.mxu0
      %4754 = vdwg.mxu0
      %v4755 = vld [vmem:[#allocation3 + $0x2] sm:$0xff]
      %v4756 = vld [vmem:[#allocation3 + $0xa] sm:$0xff]
      %v4757 = vld [vmem:[#allocation3 + $0x1a] sm:$0xff]
      %v4758 = vld [vmem:[#allocation3 + $0x22] sm:$0xff]
      %v4759 = vld [vmem:[#allocation3 + $0x32] sm:$0xff]
      %v4760 = vld [vmem:[#allocation3 + $0x3a] sm:$0xff]
      %v4761 = vld [vmem:[#allocation3 + $0x4a] sm:$0xff]
      %v4762 = vld [vmem:[#allocation3 + $0x52] sm:$0xff]
      %v4763 = vld [vmem:[#allocation3 + $0x62] sm:$0xff]
      %v4764 = vld [vmem:[#allocation3 + $0x6a] sm:$0xff]
      %v4765 = vld [vmem:[#allocation3 + $0x7a] sm:$0xff]
      %v4766 = vld [vmem:[#allocation3 + $0x82] sm:$0xff]
      %v4767 = vld [vmem:[#allocation3 + $0x92] sm:$0xff]
      %v4768 = vld [vmem:[#allocation3 + $0x9a] sm:$0xff]
      %v4769 = vld [vmem:[#allocation3 + $0xaa] sm:$0xff]
      %v4770 = vld [vmem:[#allocation3 + $0xb2] sm:$0xff]
      %v4771 = vld [vmem:[#allocation3 + $0xc2] sm:$0xff]
      %v4772 = vld [vmem:[#allocation3 + $0xca] sm:$0xff]
      %v4773 = vld [vmem:[#allocation3 + $0xda] sm:$0xff]
      %v4774 = vld [vmem:[#allocation3 + $0xe2] sm:$0xff]
      %v4775 = vld [vmem:[#allocation3 + $0xf2] sm:$0xff]
      %v4776 = vld [vmem:[#allocation3 + $0xfa] sm:$0xff]
      %v4777 = vld [vmem:[#allocation3 + $0x10a] sm:$0xff]
      %v4778 = vld [vmem:[#allocation3 + $0x112] sm:$0xff]
      %v4779 = vld [vmem:[#allocation3 + $0x122] sm:$0xff]
      %v4780 = vld [vmem:[#allocation3 + $0x12a] sm:$0xff]
      %v4781 = vld [vmem:[#allocation3 + $0x13a] sm:$0xff]
      %v4782 = vld [vmem:[#allocation3 + $0x142] sm:$0xff]
      %v4783 = vld [vmem:[#allocation3 + $0x152] sm:$0xff]
      %v4784 = vld [vmem:[#allocation3 + $0x15a] sm:$0xff]
      %v4785 = vld [vmem:[#allocation3 + $0x16a] sm:$0xff]
      %v4786 = vld [vmem:[#allocation3 + $0x172] sm:$0xff]
      %s4787 = scalar_lea.vmem %s4, 16
      %v4788 = vld [vmem:[%s4787] sm:$0xff]
      %v4790 = vsel %vm3957, %v4755, 0
      %v4793 = vsel %vm3957, %v4756, 0
      %v4796 = vsel %vm3957, %v4757, 0
      %v4799 = vsel %vm3957, %v4758, 0
      %v4802 = vsel %vm3957, %v4759, 0
      %v4805 = vsel %vm3957, %v4760, 0
      %v4808 = vsel %vm3957, %v4761, 0
      %v4811 = vsel %vm3957, %v4762, 0
      %v4814 = vsel %vm3957, %v4763, 0
      %v4817 = vsel %vm3957, %v4764, 0
      %v4820 = vsel %vm3957, %v4765, 0
      %v4823 = vsel %vm3957, %v4766, 0
      %v4826 = vsel %vm3957, %v4767, 0
      %v4829 = vsel %vm3957, %v4768, 0
      %v4832 = vsel %vm3957, %v4769, 0
      %v4835 = vsel %vm3957, %v4770, 0
      %v4838 = vsel %vm3957, %v4771, 0
      %v4841 = vsel %vm3957, %v4772, 0
      %v4844 = vsel %vm3957, %v4773, 0
      %v4847 = vsel %vm3957, %v4774, 0
      %v4850 = vsel %vm3957, %v4775, 0
      %v4853 = vsel %vm3957, %v4776, 0
      %v4856 = vsel %vm3957, %v4777, 0
      %v4859 = vsel %vm3957, %v4778, 0
      %v4862 = vsel %vm3957, %v4779, 0
      %v4865 = vsel %vm3957, %v4780, 0
      %v4868 = vsel %vm3957, %v4781, 0
      %v4871 = vsel %vm3957, %v4782, 0
      %v4874 = vsel %vm3957, %v4783, 0
      %v4877 = vsel %vm3957, %v4784, 0
      %v4880 = vsel %vm3957, %v4785, 0
      %v4883 = vsel %vm3957, %v4786, 0
      %4885 = vmatprep.subr.mxu0 0.0
      %4886 = vmatpush1.msra.mxu0 0.0
      %4887 = vmatprep.subr.mxu0 0.0
      %4888 = vmatpush1.msra.mxu0 0.0
      %4889 = vmatprep.subr.mxu0 0.0
      %4890 = vmatpush1.msra.mxu0 0.0
      %4891 = vmatprep.subr.mxu0 0.0
      %4892 = vmatpush1.msra.mxu0 0.0
      %4893 = vmatprep.subr.mxu0 0.0
      %4894 = vmatpush1.msra.mxu0 0.0
      %4895 = vmatprep.subr.mxu0 0.0
      %4896 = vmatpush1.msra.mxu0 0.0
      %4897 = vmatprep.subr.mxu0 0.0
      %4898 = vmatpush1.msra.mxu0 0.0
      %4899 = vmatprep.subr.mxu0 0.0
      %4900 = vmatpush1.msra.mxu0 0.0
      %4901 = vmatprep.subr.mxu0 0.0
      %4902 = vmatpush1.msra.mxu0 0.0
      %4903 = vmatprep.subr.mxu0 0.0
      %4904 = vmatpush1.msra.mxu0 0.0
      %4905 = vmatprep.subr.mxu0 0.0
      %4906 = vmatpush1.msra.mxu0 0.0
      %4907 = vmatprep.subr.mxu0 0.0
      %4908 = vmatpush1.msra.mxu0 0.0
      %4909 = vmatprep.subr.mxu0 0.0
      %4910 = vmatpush1.msra.mxu0 0.0
      %4911 = vmatprep.subr.mxu0 0.0
      %4912 = vmatpush1.msra.mxu0 0.0
      %4913 = vmatprep.subr.mxu0 0.0
      %4914 = vmatpush1.msra.mxu0 0.0
      %4915 = vmatprep.subr.mxu0 0.0
      %4916 = vmatpush1.msra.mxu0 %v4788
      %4917 = vmatprep.subr.mxu0 0.0
      %4918 = vmatpush2.msra.mxu0 0.0
      %4919 = vmatprep.subr.mxu0 0.0
      %4920 = vmatpush2.msra.mxu0 0.0
      %4921 = vmatprep.subr.mxu0 0.0
      %4922 = vmatpush2.msra.mxu0 0.0
      %4923 = vmatprep.subr.mxu0 0.0
      %4924 = vmatpush2.msra.mxu0 0.0
      %4925 = vmatprep.subr.mxu0 0.0
      %4926 = vmatpush2.msra.mxu0 0.0
      %4927 = vmatprep.subr.mxu0 0.0
      %4928 = vmatpush2.msra.mxu0 0.0
      %4929 = vmatprep.subr.mxu0 0.0
      %4930 = vmatpush2.msra.mxu0 0.0
      %4931 = vmatprep.subr.mxu0 0.0
      %4932 = vmatpush2.msra.mxu0 0.0
      %4933 = vmatprep.subr.mxu0 0.0
      %4934 = vmatpush2.msra.mxu0 0.0
      %4935 = vmatprep.subr.mxu0 0.0
      %4936 = vmatpush2.msra.mxu0 0.0
      %4937 = vmatprep.subr.mxu0 0.0
      %4938 = vmatpush2.msra.mxu0 0.0
      %4939 = vmatprep.subr.mxu0 0.0
      %4940 = vmatpush2.msra.mxu0 0.0
      %4941 = vmatprep.subr.mxu0 0.0
      %4942 = vmatpush2.msra.mxu0 0.0
      %4943 = vmatprep.subr.mxu0 0.0
      %4944 = vmatpush2.msra.mxu0 0.0
      %4945 = vmatprep.subr.mxu0 0.0
      %4946 = vmatpush2.msra.mxu0 0.0
      %4947 = vmatprep.subr.mxu0 0.0
      %4948 = vmatpush2.msra.mxu0 0.0
      %4949 = vmatprep.mubr.f32.mxu0 0.0
      %4950 = vmatmul.mubr.f32.gmra.mxu0 %v4790
      %v4951 = vpop.f32.mrf.mxu0
      %v4952 = vadd.f32 0.0, %v4951
      %v4953 = vpop.f32.mrf.mxu0
      %4954 = vmatprep.mubr.f32.mxu0 0.0
      %4955 = vmatmul.mubr.f32.gmra.mxu0 %v4793
      %v4956 = vpop.f32.mrf.mxu0
      %v4957 = vadd.f32 0.0, %v4956
      %v4958 = vpop.f32.mrf.mxu0
      %4959 = vmatprep.mubr.f32.mxu0 0.0
      %4960 = vmatmul.mubr.f32.gmra.mxu0 %v4796
      %v4961 = vpop.f32.mrf.mxu0
      %v4962 = vadd.f32 0.0, %v4961
      %v4963 = vpop.f32.mrf.mxu0
      %4964 = vmatprep.mubr.f32.mxu0 0.0
      %4965 = vmatmul.mubr.f32.gmra.mxu0 %v4799
      %v4966 = vpop.f32.mrf.mxu0
      %v4967 = vadd.f32 0.0, %v4966
      %v4968 = vpop.f32.mrf.mxu0
      %4969 = vmatprep.mubr.f32.mxu0 0.0
      %4970 = vmatmul.mubr.f32.gmra.mxu0 %v4802
      %v4971 = vpop.f32.mrf.mxu0
      %v4972 = vadd.f32 0.0, %v4971
      %v4973 = vpop.f32.mrf.mxu0
      %4974 = vmatprep.mubr.f32.mxu0 0.0
      %4975 = vmatmul.mubr.f32.gmra.mxu0 %v4805
      %v4976 = vpop.f32.mrf.mxu0
      %v4977 = vadd.f32 0.0, %v4976
      %v4978 = vpop.f32.mrf.mxu0
      %4979 = vmatprep.mubr.f32.mxu0 0.0
      %4980 = vmatmul.mubr.f32.gmra.mxu0 %v4808
      %v4981 = vpop.f32.mrf.mxu0
      %v4982 = vadd.f32 0.0, %v4981
      %v4983 = vpop.f32.mrf.mxu0
      %4984 = vmatprep.mubr.f32.mxu0 0.0
      %4985 = vmatmul.mubr.f32.gmra.mxu0 %v4811
      %v4986 = vpop.f32.mrf.mxu0
      %v4987 = vadd.f32 0.0, %v4986
      %v4988 = vpop.f32.mrf.mxu0
      %4989 = vmatprep.mubr.f32.mxu0 0.0
      %4990 = vmatmul.mubr.f32.gmra.mxu0 %v4814
      %v4991 = vpop.f32.mrf.mxu0
      %v4992 = vadd.f32 0.0, %v4991
      %v4993 = vpop.f32.mrf.mxu0
      %4994 = vmatprep.mubr.f32.mxu0 0.0
      %4995 = vmatmul.mubr.f32.gmra.mxu0 %v4817
      %v4996 = vpop.f32.mrf.mxu0
      %v4997 = vadd.f32 0.0, %v4996
      %v4998 = vpop.f32.mrf.mxu0
      %4999 = vmatprep.mubr.f32.mxu0 0.0
      %5000 = vmatmul.mubr.f32.gmra.mxu0 %v4820
      %v5001 = vpop.f32.mrf.mxu0
      %v5002 = vadd.f32 0.0, %v5001
      %v5003 = vpop.f32.mrf.mxu0
      %5004 = vmatprep.mubr.f32.mxu0 0.0
      %5005 = vmatmul.mubr.f32.gmra.mxu0 %v4823
      %v5006 = vpop.f32.mrf.mxu0
      %v5007 = vadd.f32 0.0, %v5006
      %v5008 = vpop.f32.mrf.mxu0
      %5009 = vmatprep.mubr.f32.mxu0 0.0
      %5010 = vmatmul.mubr.f32.gmra.mxu0 %v4826
      %v5011 = vpop.f32.mrf.mxu0
      %v5012 = vadd.f32 0.0, %v5011
      %v5013 = vpop.f32.mrf.mxu0
      %5014 = vmatprep.mubr.f32.mxu0 0.0
      %5015 = vmatmul.mubr.f32.gmra.mxu0 %v4829
      %v5016 = vpop.f32.mrf.mxu0
      %v5017 = vadd.f32 0.0, %v5016
      %v5018 = vpop.f32.mrf.mxu0
      %5019 = vmatprep.mubr.f32.mxu0 0.0
      %5020 = vmatmul.mubr.f32.gmra.mxu0 %v4832
      %v5021 = vpop.f32.mrf.mxu0
      %v5022 = vadd.f32 0.0, %v5021
      %v5023 = vpop.f32.mrf.mxu0
      %5024 = vmatprep.mubr.f32.mxu0 0.0
      %5025 = vmatmul.mubr.f32.gmra.mxu0 %v4835
      %v5026 = vpop.f32.mrf.mxu0
      %v5027 = vadd.f32 0.0, %v5026
      %v5028 = vpop.f32.mrf.mxu0
      %5029 = vmatprep.mubr.f32.mxu0 0.0
      %5030 = vmatmul.mubr.f32.gmra.mxu0 %v4838
      %v5031 = vpop.f32.mrf.mxu0
      %v5032 = vadd.f32 0.0, %v5031
      %v5033 = vpop.f32.mrf.mxu0
      %5034 = vmatprep.mubr.f32.mxu0 0.0
      %5035 = vmatmul.mubr.f32.gmra.mxu0 %v4841
      %v5036 = vpop.f32.mrf.mxu0
      %v5037 = vadd.f32 0.0, %v5036
      %v5038 = vpop.f32.mrf.mxu0
      %5039 = vmatprep.mubr.f32.mxu0 0.0
      %5040 = vmatmul.mubr.f32.gmra.mxu0 %v4844
      %v5041 = vpop.f32.mrf.mxu0
      %v5042 = vadd.f32 0.0, %v5041
      %v5043 = vpop.f32.mrf.mxu0
      %5044 = vmatprep.mubr.f32.mxu0 0.0
      %5045 = vmatmul.mubr.f32.gmra.mxu0 %v4847
      %v5046 = vpop.f32.mrf.mxu0
      %v5047 = vadd.f32 0.0, %v5046
      %v5048 = vpop.f32.mrf.mxu0
      %5049 = vmatprep.mubr.f32.mxu0 0.0
      %5050 = vmatmul.mubr.f32.gmra.mxu0 %v4850
      %v5051 = vpop.f32.mrf.mxu0
      %v5052 = vadd.f32 0.0, %v5051
      %v5053 = vpop.f32.mrf.mxu0
      %5054 = vmatprep.mubr.f32.mxu0 0.0
      %5055 = vmatmul.mubr.f32.gmra.mxu0 %v4853
      %v5056 = vpop.f32.mrf.mxu0
      %v5057 = vadd.f32 0.0, %v5056
      %v5058 = vpop.f32.mrf.mxu0
      %5059 = vmatprep.mubr.f32.mxu0 0.0
      %5060 = vmatmul.mubr.f32.gmra.mxu0 %v4856
      %v5061 = vpop.f32.mrf.mxu0
      %v5062 = vadd.f32 0.0, %v5061
      %v5063 = vpop.f32.mrf.mxu0
      %5064 = vmatprep.mubr.f32.mxu0 0.0
      %5065 = vmatmul.mubr.f32.gmra.mxu0 %v4859
      %v5066 = vpop.f32.mrf.mxu0
      %v5067 = vadd.f32 0.0, %v5066
      %v5068 = vpop.f32.mrf.mxu0
      %5069 = vmatprep.mubr.f32.mxu0 0.0
      %5070 = vmatmul.mubr.f32.gmra.mxu0 %v4862
      %v5071 = vpop.f32.mrf.mxu0
      %v5072 = vadd.f32 0.0, %v5071
      %v5073 = vpop.f32.mrf.mxu0
      %5074 = vmatprep.mubr.f32.mxu0 0.0
      %5075 = vmatmul.mubr.f32.gmra.mxu0 %v4865
      %v5076 = vpop.f32.mrf.mxu0
      %v5077 = vadd.f32 0.0, %v5076
      %v5078 = vpop.f32.mrf.mxu0
      %5079 = vmatprep.mubr.f32.mxu0 0.0
      %5080 = vmatmul.mubr.f32.gmra.mxu0 %v4868
      %v5081 = vpop.f32.mrf.mxu0
      %v5082 = vadd.f32 0.0, %v5081
      %v5083 = vpop.f32.mrf.mxu0
      %5084 = vmatprep.mubr.f32.mxu0 0.0
      %5085 = vmatmul.mubr.f32.gmra.mxu0 %v4871
      %v5086 = vpop.f32.mrf.mxu0
      %v5087 = vadd.f32 0.0, %v5086
      %v5088 = vpop.f32.mrf.mxu0
      %5089 = vmatprep.mubr.f32.mxu0 0.0
      %5090 = vmatmul.mubr.f32.gmra.mxu0 %v4874
      %v5091 = vpop.f32.mrf.mxu0
      %v5092 = vadd.f32 0.0, %v5091
      %v5093 = vpop.f32.mrf.mxu0
      %5094 = vmatprep.mubr.f32.mxu0 0.0
      %5095 = vmatmul.mubr.f32.gmra.mxu0 %v4877
      %v5096 = vpop.f32.mrf.mxu0
      %v5097 = vadd.f32 0.0, %v5096
      %v5098 = vpop.f32.mrf.mxu0
      %5099 = vmatprep.mubr.f32.mxu0 0.0
      %5100 = vmatmul.mubr.f32.gmra.mxu0 %v4880
      %v5101 = vpop.f32.mrf.mxu0
      %v5102 = vadd.f32 0.0, %v5101
      %v5103 = vpop.f32.mrf.mxu0
      %5104 = vmatprep.mubr.f32.mxu0 0.0
      %5105 = vmatmul.mubr.f32.gmra.mxu0 %v4883
      %v5106 = vpop.f32.mrf.mxu0
      %v5107 = vadd.f32 0.0, %v5106
      %v5108 = vpop.f32.mrf.mxu0
      %5109 = vdwg.mxu0
      %v5110 = vadd.f32 %v4597, %v4952
      %v5111 = vadd.f32 %v4602, %v4957
      %v5112 = vadd.f32 %v4607, %v4962
      %v5113 = vadd.f32 %v4612, %v4967
      %v5114 = vadd.f32 %v4617, %v4972
      %v5115 = vadd.f32 %v4622, %v4977
      %v5116 = vadd.f32 %v4627, %v4982
      %v5117 = vadd.f32 %v4632, %v4987
      %v5118 = vadd.f32 %v4637, %v4992
      %v5119 = vadd.f32 %v4642, %v4997
      %v5120 = vadd.f32 %v4647, %v5002
      %v5121 = vadd.f32 %v4652, %v5007
      %v5122 = vadd.f32 %v4657, %v5012
      %v5123 = vadd.f32 %v4662, %v5017
      %v5124 = vadd.f32 %v4667, %v5022
      %v5125 = vadd.f32 %v4672, %v5027
      %v5126 = vadd.f32 %v4677, %v5032
      %v5127 = vadd.f32 %v4682, %v5037
      %v5128 = vadd.f32 %v4687, %v5042
      %v5129 = vadd.f32 %v4692, %v5047
      %v5130 = vadd.f32 %v4697, %v5052
      %v5131 = vadd.f32 %v4702, %v5057
      %v5132 = vadd.f32 %v4707, %v5062
      %v5133 = vadd.f32 %v4712, %v5067
      %v5134 = vadd.f32 %v4717, %v5072
      %v5135 = vadd.f32 %v4722, %v5077
      %v5136 = vadd.f32 %v4727, %v5082
      %v5137 = vadd.f32 %v4732, %v5087
      %v5138 = vadd.f32 %v4737, %v5092
      %v5139 = vadd.f32 %v4742, %v5097
      %v5140 = vadd.f32 %v4747, %v5102
      %v5141 = vadd.f32 %v4752, %v5107
      %v5142 = vld [vmem:[%s4013] sm:$0xff]
      %v5143 = vld [vmem:[%s4013 + $0x8] sm:$0xff]
      %v5144 = vld [vmem:[%s4013 + $0x18] sm:$0xff]
      %v5145 = vld [vmem:[%s4013 + $0x20] sm:$0xff]
      %v5146 = vld [vmem:[%s4013 + $0x30] sm:$0xff]
      %v5147 = vld [vmem:[%s4013 + $0x38] sm:$0xff]
      %v5148 = vld [vmem:[%s4013 + $0x48] sm:$0xff]
      %v5149 = vld [vmem:[%s4013 + $0x50] sm:$0xff]
      %v5150 = vld [vmem:[%s4013 + $0x60] sm:$0xff]
      %v5151 = vld [vmem:[%s4013 + $0x68] sm:$0xff]
      %v5152 = vld [vmem:[%s4013 + $0x78] sm:$0xff]
      %v5153 = vld [vmem:[%s4013 + $0x80] sm:$0xff]
      %v5154 = vld [vmem:[%s4013 + $0x90] sm:$0xff]
      %v5155 = vld [vmem:[%s4013 + $0x98] sm:$0xff]
      %v5156 = vld [vmem:[%s4013 + $0xa8] sm:$0xff]
      %v5157 = vld [vmem:[%s4013 + $0xb0] sm:$0xff]
      %v5158 = vld [vmem:[%s4013 + $0xc0] sm:$0xff]
      %v5159 = vld [vmem:[%s4013 + $0xc8] sm:$0xff]
      %v5160 = vld [vmem:[%s4013 + $0xd8] sm:$0xff]
      %v5161 = vld [vmem:[%s4013 + $0xe0] sm:$0xff]
      %v5162 = vld [vmem:[%s4013 + $0xf0] sm:$0xff]
      %v5163 = vld [vmem:[%s4013 + $0xf8] sm:$0xff]
      %v5164 = vld [vmem:[%s4013 + $0x108] sm:$0xff]
      %v5165 = vld [vmem:[%s4013 + $0x110] sm:$0xff]
      %v5166 = vld [vmem:[%s4013 + $0x120] sm:$0xff]
      %v5167 = vld [vmem:[%s4013 + $0x128] sm:$0xff]
      %v5168 = vld [vmem:[%s4013 + $0x138] sm:$0xff]
      %v5169 = vld [vmem:[%s4013 + $0x140] sm:$0xff]
      %v5170 = vld [vmem:[%s4013 + $0x150] sm:$0xff]
      %v5171 = vld [vmem:[%s4013 + $0x158] sm:$0xff]
      %v5172 = vld [vmem:[%s4013 + $0x168] sm:$0xff]
      %v5173 = vld [vmem:[%s4013 + $0x170] sm:$0xff]
      %s5174 = scalar_lea.vmem %s4, 24
      %v5175 = vld [vmem:[%s5174] sm:$0xff]
      %v5177 = vsel %vm3957, %v5142, 0
      %v5180 = vsel %vm3957, %v5143, 0
      %v5183 = vsel %vm3957, %v5144, 0
      %v5186 = vsel %vm3957, %v5145, 0
      %v5189 = vsel %vm3957, %v5146, 0
      %v5192 = vsel %vm3957, %v5147, 0
      %v5195 = vsel %vm3957, %v5148, 0
      %v5198 = vsel %vm3957, %v5149, 0
      %v5201 = vsel %vm3957, %v5150, 0
      %v5204 = vsel %vm3957, %v5151, 0
      %v5207 = vsel %vm3957, %v5152, 0
      %v5210 = vsel %vm3957, %v5153, 0
      %v5213 = vsel %vm3957, %v5154, 0
      %v5216 = vsel %vm3957, %v5155, 0
      %v5219 = vsel %vm3957, %v5156, 0
      %v5222 = vsel %vm3957, %v5157, 0
      %v5225 = vsel %vm3957, %v5158, 0
      %v5228 = vsel %vm3957, %v5159, 0
      %v5231 = vsel %vm3957, %v5160, 0
      %v5234 = vsel %vm3957, %v5161, 0
      %v5237 = vsel %vm3957, %v5162, 0
      %v5240 = vsel %vm3957, %v5163, 0
      %v5243 = vsel %vm3957, %v5164, 0
      %v5246 = vsel %vm3957, %v5165, 0
      %v5249 = vsel %vm3957, %v5166, 0
      %v5252 = vsel %vm3957, %v5167, 0
      %v5255 = vsel %vm3957, %v5168, 0
      %v5258 = vsel %vm3957, %v5169, 0
      %v5261 = vsel %vm3957, %v5170, 0
      %v5264 = vsel %vm3957, %v5171, 0
      %v5267 = vsel %vm3957, %v5172, 0
      %v5270 = vsel %vm3957, %v5173, 0
      %5272 = vmatprep.subr.mxu0 0.0
      %5273 = vmatpush1.msra.mxu0 0.0
      %5274 = vmatprep.subr.mxu0 0.0
      %5275 = vmatpush1.msra.mxu0 0.0
      %5276 = vmatprep.subr.mxu0 0.0
      %5277 = vmatpush1.msra.mxu0 0.0
      %5278 = vmatprep.subr.mxu0 0.0
      %5279 = vmatpush1.msra.mxu0 0.0
      %5280 = vmatprep.subr.mxu0 0.0
      %5281 = vmatpush1.msra.mxu0 0.0
      %5282 = vmatprep.subr.mxu0 0.0
      %5283 = vmatpush1.msra.mxu0 0.0
      %5284 = vmatprep.subr.mxu0 0.0
      %5285 = vmatpush1.msra.mxu0 0.0
      %5286 = vmatprep.subr.mxu0 0.0
      %5287 = vmatpush1.msra.mxu0 0.0
      %5288 = vmatprep.subr.mxu0 0.0
      %5289 = vmatpush1.msra.mxu0 0.0
      %5290 = vmatprep.subr.mxu0 0.0
      %5291 = vmatpush1.msra.mxu0 0.0
      %5292 = vmatprep.subr.mxu0 0.0
      %5293 = vmatpush1.msra.mxu0 0.0
      %5294 = vmatprep.subr.mxu0 0.0
      %5295 = vmatpush1.msra.mxu0 0.0
      %5296 = vmatprep.subr.mxu0 0.0
      %5297 = vmatpush1.msra.mxu0 0.0
      %5298 = vmatprep.subr.mxu0 0.0
      %5299 = vmatpush1.msra.mxu0 0.0
      %5300 = vmatprep.subr.mxu0 0.0
      %5301 = vmatpush1.msra.mxu0 0.0
      %5302 = vmatprep.subr.mxu0 0.0
      %5303 = vmatpush1.msra.mxu0 %v5175
      %5304 = vmatprep.subr.mxu0 0.0
      %5305 = vmatpush2.msra.mxu0 0.0
      %5306 = vmatprep.subr.mxu0 0.0
      %5307 = vmatpush2.msra.mxu0 0.0
      %5308 = vmatprep.subr.mxu0 0.0
      %5309 = vmatpush2.msra.mxu0 0.0
      %5310 = vmatprep.subr.mxu0 0.0
      %5311 = vmatpush2.msra.mxu0 0.0
      %5312 = vmatprep.subr.mxu0 0.0
      %5313 = vmatpush2.msra.mxu0 0.0
      %5314 = vmatprep.subr.mxu0 0.0
      %5315 = vmatpush2.msra.mxu0 0.0
      %5316 = vmatprep.subr.mxu0 0.0
      %5317 = vmatpush2.msra.mxu0 0.0
      %5318 = vmatprep.subr.mxu0 0.0
      %5319 = vmatpush2.msra.mxu0 0.0
      %5320 = vmatprep.subr.mxu0 0.0
      %5321 = vmatpush2.msra.mxu0 0.0
      %5322 = vmatprep.subr.mxu0 0.0
      %5323 = vmatpush2.msra.mxu0 0.0
      %5324 = vmatprep.subr.mxu0 0.0
      %5325 = vmatpush2.msra.mxu0 0.0
      %5326 = vmatprep.subr.mxu0 0.0
      %5327 = vmatpush2.msra.mxu0 0.0
      %5328 = vmatprep.subr.mxu0 0.0
      %5329 = vmatpush2.msra.mxu0 0.0
      %5330 = vmatprep.subr.mxu0 0.0
      %5331 = vmatpush2.msra.mxu0 0.0
      %5332 = vmatprep.subr.mxu0 0.0
      %5333 = vmatpush2.msra.mxu0 0.0
      %5334 = vmatprep.subr.mxu0 0.0
      %5335 = vmatpush2.msra.mxu0 0.0
      %5336 = vmatprep.mubr.f32.mxu0 0.0
      %5337 = vmatmul.mubr.f32.gmra.mxu0 %v5177
      %v5338 = vpop.f32.mrf.mxu0
      %v5339 = vadd.f32 0.0, %v5338
      %v5340 = vpop.f32.mrf.mxu0
      %5341 = vmatprep.mubr.f32.mxu0 0.0
      %5342 = vmatmul.mubr.f32.gmra.mxu0 %v5180
      %v5343 = vpop.f32.mrf.mxu0
      %v5344 = vadd.f32 0.0, %v5343
      %v5345 = vpop.f32.mrf.mxu0
      %5346 = vmatprep.mubr.f32.mxu0 0.0
      %5347 = vmatmul.mubr.f32.gmra.mxu0 %v5183
      %v5348 = vpop.f32.mrf.mxu0
      %v5349 = vadd.f32 0.0, %v5348
      %v5350 = vpop.f32.mrf.mxu0
      %5351 = vmatprep.mubr.f32.mxu0 0.0
      %5352 = vmatmul.mubr.f32.gmra.mxu0 %v5186
      %v5353 = vpop.f32.mrf.mxu0
      %v5354 = vadd.f32 0.0, %v5353
      %v5355 = vpop.f32.mrf.mxu0
      %5356 = vmatprep.mubr.f32.mxu0 0.0
      %5357 = vmatmul.mubr.f32.gmra.mxu0 %v5189
      %v5358 = vpop.f32.mrf.mxu0
      %v5359 = vadd.f32 0.0, %v5358
      %v5360 = vpop.f32.mrf.mxu0
      %5361 = vmatprep.mubr.f32.mxu0 0.0
      %5362 = vmatmul.mubr.f32.gmra.mxu0 %v5192
      %v5363 = vpop.f32.mrf.mxu0
      %v5364 = vadd.f32 0.0, %v5363
      %v5365 = vpop.f32.mrf.mxu0
      %5366 = vmatprep.mubr.f32.mxu0 0.0
      %5367 = vmatmul.mubr.f32.gmra.mxu0 %v5195
      %v5368 = vpop.f32.mrf.mxu0
      %v5369 = vadd.f32 0.0, %v5368
      %v5370 = vpop.f32.mrf.mxu0
      %5371 = vmatprep.mubr.f32.mxu0 0.0
      %5372 = vmatmul.mubr.f32.gmra.mxu0 %v5198
      %v5373 = vpop.f32.mrf.mxu0
      %v5374 = vadd.f32 0.0, %v5373
      %v5375 = vpop.f32.mrf.mxu0
      %5376 = vmatprep.mubr.f32.mxu0 0.0
      %5377 = vmatmul.mubr.f32.gmra.mxu0 %v5201
      %v5378 = vpop.f32.mrf.mxu0
      %v5379 = vadd.f32 0.0, %v5378
      %v5380 = vpop.f32.mrf.mxu0
      %5381 = vmatprep.mubr.f32.mxu0 0.0
      %5382 = vmatmul.mubr.f32.gmra.mxu0 %v5204
      %v5383 = vpop.f32.mrf.mxu0
      %v5384 = vadd.f32 0.0, %v5383
      %v5385 = vpop.f32.mrf.mxu0
      %5386 = vmatprep.mubr.f32.mxu0 0.0
      %5387 = vmatmul.mubr.f32.gmra.mxu0 %v5207
      %v5388 = vpop.f32.mrf.mxu0
      %v5389 = vadd.f32 0.0, %v5388
      %v5390 = vpop.f32.mrf.mxu0
      %5391 = vmatprep.mubr.f32.mxu0 0.0
      %5392 = vmatmul.mubr.f32.gmra.mxu0 %v5210
      %v5393 = vpop.f32.mrf.mxu0
      %v5394 = vadd.f32 0.0, %v5393
      %v5395 = vpop.f32.mrf.mxu0
      %5396 = vmatprep.mubr.f32.mxu0 0.0
      %5397 = vmatmul.mubr.f32.gmra.mxu0 %v5213
      %v5398 = vpop.f32.mrf.mxu0
      %v5399 = vadd.f32 0.0, %v5398
      %v5400 = vpop.f32.mrf.mxu0
      %5401 = vmatprep.mubr.f32.mxu0 0.0
      %5402 = vmatmul.mubr.f32.gmra.mxu0 %v5216
      %v5403 = vpop.f32.mrf.mxu0
      %v5404 = vadd.f32 0.0, %v5403
      %v5405 = vpop.f32.mrf.mxu0
      %5406 = vmatprep.mubr.f32.mxu0 0.0
      %5407 = vmatmul.mubr.f32.gmra.mxu0 %v5219
      %v5408 = vpop.f32.mrf.mxu0
      %v5409 = vadd.f32 0.0, %v5408
      %v5410 = vpop.f32.mrf.mxu0
      %5411 = vmatprep.mubr.f32.mxu0 0.0
      %5412 = vmatmul.mubr.f32.gmra.mxu0 %v5222
      %v5413 = vpop.f32.mrf.mxu0
      %v5414 = vadd.f32 0.0, %v5413
      %v5415 = vpop.f32.mrf.mxu0
      %5416 = vmatprep.mubr.f32.mxu0 0.0
      %5417 = vmatmul.mubr.f32.gmra.mxu0 %v5225
      %v5418 = vpop.f32.mrf.mxu0
      %v5419 = vadd.f32 0.0, %v5418
      %v5420 = vpop.f32.mrf.mxu0
      %5421 = vmatprep.mubr.f32.mxu0 0.0
      %5422 = vmatmul.mubr.f32.gmra.mxu0 %v5228
      %v5423 = vpop.f32.mrf.mxu0
      %v5424 = vadd.f32 0.0, %v5423
      %v5425 = vpop.f32.mrf.mxu0
      %5426 = vmatprep.mubr.f32.mxu0 0.0
      %5427 = vmatmul.mubr.f32.gmra.mxu0 %v5231
      %v5428 = vpop.f32.mrf.mxu0
      %v5429 = vadd.f32 0.0, %v5428
      %v5430 = vpop.f32.mrf.mxu0
      %5431 = vmatprep.mubr.f32.mxu0 0.0
      %5432 = vmatmul.mubr.f32.gmra.mxu0 %v5234
      %v5433 = vpop.f32.mrf.mxu0
      %v5434 = vadd.f32 0.0, %v5433
      %v5435 = vpop.f32.mrf.mxu0
      %5436 = vmatprep.mubr.f32.mxu0 0.0
      %5437 = vmatmul.mubr.f32.gmra.mxu0 %v5237
      %v5438 = vpop.f32.mrf.mxu0
      %v5439 = vadd.f32 0.0, %v5438
      %v5440 = vpop.f32.mrf.mxu0
      %5441 = vmatprep.mubr.f32.mxu0 0.0
      %5442 = vmatmul.mubr.f32.gmra.mxu0 %v5240
      %v5443 = vpop.f32.mrf.mxu0
      %v5444 = vadd.f32 0.0, %v5443
      %v5445 = vpop.f32.mrf.mxu0
      %5446 = vmatprep.mubr.f32.mxu0 0.0
      %5447 = vmatmul.mubr.f32.gmra.mxu0 %v5243
      %v5448 = vpop.f32.mrf.mxu0
      %v5449 = vadd.f32 0.0, %v5448
      %v5450 = vpop.f32.mrf.mxu0
      %5451 = vmatprep.mubr.f32.mxu0 0.0
      %5452 = vmatmul.mubr.f32.gmra.mxu0 %v5246
      %v5453 = vpop.f32.mrf.mxu0
      %v5454 = vadd.f32 0.0, %v5453
      %v5455 = vpop.f32.mrf.mxu0
      %5456 = vmatprep.mubr.f32.mxu0 0.0
      %5457 = vmatmul.mubr.f32.gmra.mxu0 %v5249
      %v5458 = vpop.f32.mrf.mxu0
      %v5459 = vadd.f32 0.0, %v5458
      %v5460 = vpop.f32.mrf.mxu0
      %5461 = vmatprep.mubr.f32.mxu0 0.0
      %5462 = vmatmul.mubr.f32.gmra.mxu0 %v5252
      %v5463 = vpop.f32.mrf.mxu0
      %v5464 = vadd.f32 0.0, %v5463
      %v5465 = vpop.f32.mrf.mxu0
      %5466 = vmatprep.mubr.f32.mxu0 0.0
      %5467 = vmatmul.mubr.f32.gmra.mxu0 %v5255
      %v5468 = vpop.f32.mrf.mxu0
      %v5469 = vadd.f32 0.0, %v5468
      %v5470 = vpop.f32.mrf.mxu0
      %5471 = vmatprep.mubr.f32.mxu0 0.0
      %5472 = vmatmul.mubr.f32.gmra.mxu0 %v5258
      %v5473 = vpop.f32.mrf.mxu0
      %v5474 = vadd.f32 0.0, %v5473
      %v5475 = vpop.f32.mrf.mxu0
      %5476 = vmatprep.mubr.f32.mxu0 0.0
      %5477 = vmatmul.mubr.f32.gmra.mxu0 %v5261
      %v5478 = vpop.f32.mrf.mxu0
      %v5479 = vadd.f32 0.0, %v5478
      %v5480 = vpop.f32.mrf.mxu0
      %5481 = vmatprep.mubr.f32.mxu0 0.0
      %5482 = vmatmul.mubr.f32.gmra.mxu0 %v5264
      %v5483 = vpop.f32.mrf.mxu0
      %v5484 = vadd.f32 0.0, %v5483
      %v5485 = vpop.f32.mrf.mxu0
      %5486 = vmatprep.mubr.f32.mxu0 0.0
      %5487 = vmatmul.mubr.f32.gmra.mxu0 %v5267
      %v5488 = vpop.f32.mrf.mxu0
      %v5489 = vadd.f32 0.0, %v5488
      %v5490 = vpop.f32.mrf.mxu0
      %5491 = vmatprep.mubr.f32.mxu0 0.0
      %5492 = vmatmul.mubr.f32.gmra.mxu0 %v5270
      %v5493 = vpop.f32.mrf.mxu0
      %v5494 = vadd.f32 0.0, %v5493
      %v5495 = vpop.f32.mrf.mxu0
      %5496 = vdwg.mxu0
      %v5497 = vadd.f32 %v5110, %v5339
      %v5498 = vadd.f32 %v5111, %v5344
      %v5499 = vadd.f32 %v5112, %v5349
      %v5500 = vadd.f32 %v5113, %v5354
      %v5501 = vadd.f32 %v5114, %v5359
      %v5502 = vadd.f32 %v5115, %v5364
      %v5503 = vadd.f32 %v5116, %v5369
      %v5504 = vadd.f32 %v5117, %v5374
      %v5505 = vadd.f32 %v5118, %v5379
      %v5506 = vadd.f32 %v5119, %v5384
      %v5507 = vadd.f32 %v5120, %v5389
      %v5508 = vadd.f32 %v5121, %v5394
      %v5509 = vadd.f32 %v5122, %v5399
      %v5510 = vadd.f32 %v5123, %v5404
      %v5511 = vadd.f32 %v5124, %v5409
      %v5512 = vadd.f32 %v5125, %v5414
      %v5513 = vadd.f32 %v5126, %v5419
      %v5514 = vadd.f32 %v5127, %v5424
      %v5515 = vadd.f32 %v5128, %v5429
      %v5516 = vadd.f32 %v5129, %v5434
      %v5517 = vadd.f32 %v5130, %v5439
      %v5518 = vadd.f32 %v5131, %v5444
      %v5519 = vadd.f32 %v5132, %v5449
      %v5520 = vadd.f32 %v5133, %v5454
      %v5521 = vadd.f32 %v5134, %v5459
      %v5522 = vadd.f32 %v5135, %v5464
      %v5523 = vadd.f32 %v5136, %v5469
      %v5524 = vadd.f32 %v5137, %v5474
      %v5525 = vadd.f32 %v5138, %v5479
      %v5526 = vadd.f32 %v5139, %v5484
      %v5527 = vadd.f32 %v5140, %v5489
      %v5528 = vadd.f32 %v5141, %v5494
      %v5529 = vld [vmem:[%s4013 + $0x1] sm:$0xff]
      %v5530 = vld [vmem:[%s4013 + $0x9] sm:$0xff]
      %v5531 = vld [vmem:[%s4013 + $0x19] sm:$0xff]
      %v5532 = vld [vmem:[%s4013 + $0x21] sm:$0xff]
      %v5533 = vld [vmem:[%s4013 + $0x31] sm:$0xff]
      %v5534 = vld [vmem:[%s4013 + $0x39] sm:$0xff]
      %v5535 = vld [vmem:[%s4013 + $0x49] sm:$0xff]
      %v5536 = vld [vmem:[%s4013 + $0x51] sm:$0xff]
      %v5537 = vld [vmem:[%s4013 + $0x61] sm:$0xff]
      %v5538 = vld [vmem:[%s4013 + $0x69] sm:$0xff]
      %v5539 = vld [vmem:[%s4013 + $0x79] sm:$0xff]
      %v5540 = vld [vmem:[%s4013 + $0x81] sm:$0xff]
      %v5541 = vld [vmem:[%s4013 + $0x91] sm:$0xff]
      %v5542 = vld [vmem:[%s4013 + $0x99] sm:$0xff]
      %v5543 = vld [vmem:[%s4013 + $0xa9] sm:$0xff]
      %v5544 = vld [vmem:[%s4013 + $0xb1] sm:$0xff]
      %v5545 = vld [vmem:[%s4013 + $0xc1] sm:$0xff]
      %v5546 = vld [vmem:[%s4013 + $0xc9] sm:$0xff]
      %v5547 = vld [vmem:[%s4013 + $0xd9] sm:$0xff]
      %v5548 = vld [vmem:[%s4013 + $0xe1] sm:$0xff]
      %v5549 = vld [vmem:[%s4013 + $0xf1] sm:$0xff]
      %v5550 = vld [vmem:[%s4013 + $0xf9] sm:$0xff]
      %v5551 = vld [vmem:[%s4013 + $0x109] sm:$0xff]
      %v5552 = vld [vmem:[%s4013 + $0x111] sm:$0xff]
      %v5553 = vld [vmem:[%s4013 + $0x121] sm:$0xff]
      %v5554 = vld [vmem:[%s4013 + $0x129] sm:$0xff]
      %v5555 = vld [vmem:[%s4013 + $0x139] sm:$0xff]
      %v5556 = vld [vmem:[%s4013 + $0x141] sm:$0xff]
      %v5557 = vld [vmem:[%s4013 + $0x151] sm:$0xff]
      %v5558 = vld [vmem:[%s4013 + $0x159] sm:$0xff]
      %v5559 = vld [vmem:[%s4013 + $0x169] sm:$0xff]
      %v5560 = vld [vmem:[%s4013 + $0x171] sm:$0xff]
      %s5561 = scalar_lea.vmem %s4, 32
      %v5562 = vld [vmem:[%s5561] sm:$0xff]
      %v5564 = vsel %vm3957, %v5529, 0
      %v5567 = vsel %vm3957, %v5530, 0
      %v5570 = vsel %vm3957, %v5531, 0
      %v5573 = vsel %vm3957, %v5532, 0
      %v5576 = vsel %vm3957, %v5533, 0
      %v5579 = vsel %vm3957, %v5534, 0
      %v5582 = vsel %vm3957, %v5535, 0
      %v5585 = vsel %vm3957, %v5536, 0
      %v5588 = vsel %vm3957, %v5537, 0
      %v5591 = vsel %vm3957, %v5538, 0
      %v5594 = vsel %vm3957, %v5539, 0
      %v5597 = vsel %vm3957, %v5540, 0
      %v5600 = vsel %vm3957, %v5541, 0
      %v5603 = vsel %vm3957, %v5542, 0
      %v5606 = vsel %vm3957, %v5543, 0
      %v5609 = vsel %vm3957, %v5544, 0
      %v5612 = vsel %vm3957, %v5545, 0
      %v5615 = vsel %vm3957, %v5546, 0
      %v5618 = vsel %vm3957, %v5547, 0
      %v5621 = vsel %vm3957, %v5548, 0
      %v5624 = vsel %vm3957, %v5549, 0
      %v5627 = vsel %vm3957, %v5550, 0
      %v5630 = vsel %vm3957, %v5551, 0
      %v5633 = vsel %vm3957, %v5552, 0
      %v5636 = vsel %vm3957, %v5553, 0
      %v5639 = vsel %vm3957, %v5554, 0
      %v5642 = vsel %vm3957, %v5555, 0
      %v5645 = vsel %vm3957, %v5556, 0
      %v5648 = vsel %vm3957, %v5557, 0
      %v5651 = vsel %vm3957, %v5558, 0
      %v5654 = vsel %vm3957, %v5559, 0
      %v5657 = vsel %vm3957, %v5560, 0
      %5659 = vmatprep.subr.mxu0 0.0
      %5660 = vmatpush1.msra.mxu0 0.0
      %5661 = vmatprep.subr.mxu0 0.0
      %5662 = vmatpush1.msra.mxu0 0.0
      %5663 = vmatprep.subr.mxu0 0.0
      %5664 = vmatpush1.msra.mxu0 0.0
      %5665 = vmatprep.subr.mxu0 0.0
      %5666 = vmatpush1.msra.mxu0 0.0
      %5667 = vmatprep.subr.mxu0 0.0
      %5668 = vmatpush1.msra.mxu0 0.0
      %5669 = vmatprep.subr.mxu0 0.0
      %5670 = vmatpush1.msra.mxu0 0.0
      %5671 = vmatprep.subr.mxu0 0.0
      %5672 = vmatpush1.msra.mxu0 0.0
      %5673 = vmatprep.subr.mxu0 0.0
      %5674 = vmatpush1.msra.mxu0 0.0
      %5675 = vmatprep.subr.mxu0 0.0
      %5676 = vmatpush1.msra.mxu0 0.0
      %5677 = vmatprep.subr.mxu0 0.0
      %5678 = vmatpush1.msra.mxu0 0.0
      %5679 = vmatprep.subr.mxu0 0.0
      %5680 = vmatpush1.msra.mxu0 0.0
      %5681 = vmatprep.subr.mxu0 0.0
      %5682 = vmatpush1.msra.mxu0 0.0
      %5683 = vmatprep.subr.mxu0 0.0
      %5684 = vmatpush1.msra.mxu0 0.0
      %5685 = vmatprep.subr.mxu0 0.0
      %5686 = vmatpush1.msra.mxu0 0.0
      %5687 = vmatprep.subr.mxu0 0.0
      %5688 = vmatpush1.msra.mxu0 0.0
      %5689 = vmatprep.subr.mxu0 0.0
      %5690 = vmatpush1.msra.mxu0 %v5562
      %5691 = vmatprep.subr.mxu0 0.0
      %5692 = vmatpush2.msra.mxu0 0.0
      %5693 = vmatprep.subr.mxu0 0.0
      %5694 = vmatpush2.msra.mxu0 0.0
      %5695 = vmatprep.subr.mxu0 0.0
      %5696 = vmatpush2.msra.mxu0 0.0
      %5697 = vmatprep.subr.mxu0 0.0
      %5698 = vmatpush2.msra.mxu0 0.0
      %5699 = vmatprep.subr.mxu0 0.0
      %5700 = vmatpush2.msra.mxu0 0.0
      %5701 = vmatprep.subr.mxu0 0.0
      %5702 = vmatpush2.msra.mxu0 0.0
      %5703 = vmatprep.subr.mxu0 0.0
      %5704 = vmatpush2.msra.mxu0 0.0
      %5705 = vmatprep.subr.mxu0 0.0
      %5706 = vmatpush2.msra.mxu0 0.0
      %5707 = vmatprep.subr.mxu0 0.0
      %5708 = vmatpush2.msra.mxu0 0.0
      %5709 = vmatprep.subr.mxu0 0.0
      %5710 = vmatpush2.msra.mxu0 0.0
      %5711 = vmatprep.subr.mxu0 0.0
      %5712 = vmatpush2.msra.mxu0 0.0
      %5713 = vmatprep.subr.mxu0 0.0
      %5714 = vmatpush2.msra.mxu0 0.0
      %5715 = vmatprep.subr.mxu0 0.0
      %5716 = vmatpush2.msra.mxu0 0.0
      %5717 = vmatprep.subr.mxu0 0.0
      %5718 = vmatpush2.msra.mxu0 0.0
      %5719 = vmatprep.subr.mxu0 0.0
      %5720 = vmatpush2.msra.mxu0 0.0
      %5721 = vmatprep.subr.mxu0 0.0
      %5722 = vmatpush2.msra.mxu0 0.0
      %5723 = vmatprep.mubr.f32.mxu0 0.0
      %5724 = vmatmul.mubr.f32.gmra.mxu0 %v5564
      %v5725 = vpop.f32.mrf.mxu0
      %v5726 = vadd.f32 0.0, %v5725
      %v5727 = vpop.f32.mrf.mxu0
      %5728 = vmatprep.mubr.f32.mxu0 0.0
      %5729 = vmatmul.mubr.f32.gmra.mxu0 %v5567
      %v5730 = vpop.f32.mrf.mxu0
      %v5731 = vadd.f32 0.0, %v5730
      %v5732 = vpop.f32.mrf.mxu0
      %5733 = vmatprep.mubr.f32.mxu0 0.0
      %5734 = vmatmul.mubr.f32.gmra.mxu0 %v5570
      %v5735 = vpop.f32.mrf.mxu0
      %v5736 = vadd.f32 0.0, %v5735
      %v5737 = vpop.f32.mrf.mxu0
      %5738 = vmatprep.mubr.f32.mxu0 0.0
      %5739 = vmatmul.mubr.f32.gmra.mxu0 %v5573
      %v5740 = vpop.f32.mrf.mxu0
      %v5741 = vadd.f32 0.0, %v5740
      %v5742 = vpop.f32.mrf.mxu0
      %5743 = vmatprep.mubr.f32.mxu0 0.0
      %5744 = vmatmul.mubr.f32.gmra.mxu0 %v5576
      %v5745 = vpop.f32.mrf.mxu0
      %v5746 = vadd.f32 0.0, %v5745
      %v5747 = vpop.f32.mrf.mxu0
      %5748 = vmatprep.mubr.f32.mxu0 0.0
      %5749 = vmatmul.mubr.f32.gmra.mxu0 %v5579
      %v5750 = vpop.f32.mrf.mxu0
      %v5751 = vadd.f32 0.0, %v5750
      %v5752 = vpop.f32.mrf.mxu0
      %5753 = vmatprep.mubr.f32.mxu0 0.0
      %5754 = vmatmul.mubr.f32.gmra.mxu0 %v5582
      %v5755 = vpop.f32.mrf.mxu0
      %v5756 = vadd.f32 0.0, %v5755
      %v5757 = vpop.f32.mrf.mxu0
      %5758 = vmatprep.mubr.f32.mxu0 0.0
      %5759 = vmatmul.mubr.f32.gmra.mxu0 %v5585
      %v5760 = vpop.f32.mrf.mxu0
      %v5761 = vadd.f32 0.0, %v5760
      %v5762 = vpop.f32.mrf.mxu0
      %5763 = vmatprep.mubr.f32.mxu0 0.0
      %5764 = vmatmul.mubr.f32.gmra.mxu0 %v5588
      %v5765 = vpop.f32.mrf.mxu0
      %v5766 = vadd.f32 0.0, %v5765
      %v5767 = vpop.f32.mrf.mxu0
      %5768 = vmatprep.mubr.f32.mxu0 0.0
      %5769 = vmatmul.mubr.f32.gmra.mxu0 %v5591
      %v5770 = vpop.f32.mrf.mxu0
      %v5771 = vadd.f32 0.0, %v5770
      %v5772 = vpop.f32.mrf.mxu0
      %5773 = vmatprep.mubr.f32.mxu0 0.0
      %5774 = vmatmul.mubr.f32.gmra.mxu0 %v5594
      %v5775 = vpop.f32.mrf.mxu0
      %v5776 = vadd.f32 0.0, %v5775
      %v5777 = vpop.f32.mrf.mxu0
      %5778 = vmatprep.mubr.f32.mxu0 0.0
      %5779 = vmatmul.mubr.f32.gmra.mxu0 %v5597
      %v5780 = vpop.f32.mrf.mxu0
      %v5781 = vadd.f32 0.0, %v5780
      %v5782 = vpop.f32.mrf.mxu0
      %5783 = vmatprep.mubr.f32.mxu0 0.0
      %5784 = vmatmul.mubr.f32.gmra.mxu0 %v5600
      %v5785 = vpop.f32.mrf.mxu0
      %v5786 = vadd.f32 0.0, %v5785
      %v5787 = vpop.f32.mrf.mxu0
      %5788 = vmatprep.mubr.f32.mxu0 0.0
      %5789 = vmatmul.mubr.f32.gmra.mxu0 %v5603
      %v5790 = vpop.f32.mrf.mxu0
      %v5791 = vadd.f32 0.0, %v5790
      %v5792 = vpop.f32.mrf.mxu0
      %5793 = vmatprep.mubr.f32.mxu0 0.0
      %5794 = vmatmul.mubr.f32.gmra.mxu0 %v5606
      %v5795 = vpop.f32.mrf.mxu0
      %v5796 = vadd.f32 0.0, %v5795
      %v5797 = vpop.f32.mrf.mxu0
      %5798 = vmatprep.mubr.f32.mxu0 0.0
      %5799 = vmatmul.mubr.f32.gmra.mxu0 %v5609
      %v5800 = vpop.f32.mrf.mxu0
      %v5801 = vadd.f32 0.0, %v5800
      %v5802 = vpop.f32.mrf.mxu0
      %5803 = vmatprep.mubr.f32.mxu0 0.0
      %5804 = vmatmul.mubr.f32.gmra.mxu0 %v5612
      %v5805 = vpop.f32.mrf.mxu0
      %v5806 = vadd.f32 0.0, %v5805
      %v5807 = vpop.f32.mrf.mxu0
      %5808 = vmatprep.mubr.f32.mxu0 0.0
      %5809 = vmatmul.mubr.f32.gmra.mxu0 %v5615
      %v5810 = vpop.f32.mrf.mxu0
      %v5811 = vadd.f32 0.0, %v5810
      %v5812 = vpop.f32.mrf.mxu0
      %5813 = vmatprep.mubr.f32.mxu0 0.0
      %5814 = vmatmul.mubr.f32.gmra.mxu0 %v5618
      %v5815 = vpop.f32.mrf.mxu0
      %v5816 = vadd.f32 0.0, %v5815
      %v5817 = vpop.f32.mrf.mxu0
      %5818 = vmatprep.mubr.f32.mxu0 0.0
      %5819 = vmatmul.mubr.f32.gmra.mxu0 %v5621
      %v5820 = vpop.f32.mrf.mxu0
      %v5821 = vadd.f32 0.0, %v5820
      %v5822 = vpop.f32.mrf.mxu0
      %5823 = vmatprep.mubr.f32.mxu0 0.0
      %5824 = vmatmul.mubr.f32.gmra.mxu0 %v5624
      %v5825 = vpop.f32.mrf.mxu0
      %v5826 = vadd.f32 0.0, %v5825
      %v5827 = vpop.f32.mrf.mxu0
      %5828 = vmatprep.mubr.f32.mxu0 0.0
      %5829 = vmatmul.mubr.f32.gmra.mxu0 %v5627
      %v5830 = vpop.f32.mrf.mxu0
      %v5831 = vadd.f32 0.0, %v5830
      %v5832 = vpop.f32.mrf.mxu0
      %5833 = vmatprep.mubr.f32.mxu0 0.0
      %5834 = vmatmul.mubr.f32.gmra.mxu0 %v5630
      %v5835 = vpop.f32.mrf.mxu0
      %v5836 = vadd.f32 0.0, %v5835
      %v5837 = vpop.f32.mrf.mxu0
      %5838 = vmatprep.mubr.f32.mxu0 0.0
      %5839 = vmatmul.mubr.f32.gmra.mxu0 %v5633
      %v5840 = vpop.f32.mrf.mxu0
      %v5841 = vadd.f32 0.0, %v5840
      %v5842 = vpop.f32.mrf.mxu0
      %5843 = vmatprep.mubr.f32.mxu0 0.0
      %5844 = vmatmul.mubr.f32.gmra.mxu0 %v5636
      %v5845 = vpop.f32.mrf.mxu0
      %v5846 = vadd.f32 0.0, %v5845
      %v5847 = vpop.f32.mrf.mxu0
      %5848 = vmatprep.mubr.f32.mxu0 0.0
      %5849 = vmatmul.mubr.f32.gmra.mxu0 %v5639
      %v5850 = vpop.f32.mrf.mxu0
      %v5851 = vadd.f32 0.0, %v5850
      %v5852 = vpop.f32.mrf.mxu0
      %5853 = vmatprep.mubr.f32.mxu0 0.0
      %5854 = vmatmul.mubr.f32.gmra.mxu0 %v5642
      %v5855 = vpop.f32.mrf.mxu0
      %v5856 = vadd.f32 0.0, %v5855
      %v5857 = vpop.f32.mrf.mxu0
      %5858 = vmatprep.mubr.f32.mxu0 0.0
      %5859 = vmatmul.mubr.f32.gmra.mxu0 %v5645
      %v5860 = vpop.f32.mrf.mxu0
      %v5861 = vadd.f32 0.0, %v5860
      %v5862 = vpop.f32.mrf.mxu0
      %5863 = vmatprep.mubr.f32.mxu0 0.0
      %5864 = vmatmul.mubr.f32.gmra.mxu0 %v5648
      %v5865 = vpop.f32.mrf.mxu0
      %v5866 = vadd.f32 0.0, %v5865
      %v5867 = vpop.f32.mrf.mxu0
      %5868 = vmatprep.mubr.f32.mxu0 0.0
      %5869 = vmatmul.mubr.f32.gmra.mxu0 %v5651
      %v5870 = vpop.f32.mrf.mxu0
      %v5871 = vadd.f32 0.0, %v5870
      %v5872 = vpop.f32.mrf.mxu0
      %5873 = vmatprep.mubr.f32.mxu0 0.0
      %5874 = vmatmul.mubr.f32.gmra.mxu0 %v5654
      %v5875 = vpop.f32.mrf.mxu0
      %v5876 = vadd.f32 0.0, %v5875
      %v5877 = vpop.f32.mrf.mxu0
      %5878 = vmatprep.mubr.f32.mxu0 0.0
      %5879 = vmatmul.mubr.f32.gmra.mxu0 %v5657
      %v5880 = vpop.f32.mrf.mxu0
      %v5881 = vadd.f32 0.0, %v5880
      %v5882 = vpop.f32.mrf.mxu0
      %5883 = vdwg.mxu0
      %v5884 = vadd.f32 %v5497, %v5726
      %v5885 = vadd.f32 %v5498, %v5731
      %v5886 = vadd.f32 %v5499, %v5736
      %v5887 = vadd.f32 %v5500, %v5741
      %v5888 = vadd.f32 %v5501, %v5746
      %v5889 = vadd.f32 %v5502, %v5751
      %v5890 = vadd.f32 %v5503, %v5756
      %v5891 = vadd.f32 %v5504, %v5761
      %v5892 = vadd.f32 %v5505, %v5766
      %v5893 = vadd.f32 %v5506, %v5771
      %v5894 = vadd.f32 %v5507, %v5776
      %v5895 = vadd.f32 %v5508, %v5781
      %v5896 = vadd.f32 %v5509, %v5786
      %v5897 = vadd.f32 %v5510, %v5791
      %v5898 = vadd.f32 %v5511, %v5796
      %v5899 = vadd.f32 %v5512, %v5801
      %v5900 = vadd.f32 %v5513, %v5806
      %v5901 = vadd.f32 %v5514, %v5811
      %v5902 = vadd.f32 %v5515, %v5816
      %v5903 = vadd.f32 %v5516, %v5821
      %v5904 = vadd.f32 %v5517, %v5826
      %v5905 = vadd.f32 %v5518, %v5831
      %v5906 = vadd.f32 %v5519, %v5836
      %v5907 = vadd.f32 %v5520, %v5841
      %v5908 = vadd.f32 %v5521, %v5846
      %v5909 = vadd.f32 %v5522, %v5851
      %v5910 = vadd.f32 %v5523, %v5856
      %v5911 = vadd.f32 %v5524, %v5861
      %v5912 = vadd.f32 %v5525, %v5866
      %v5913 = vadd.f32 %v5526, %v5871
      %v5914 = vadd.f32 %v5527, %v5876
      %v5915 = vadd.f32 %v5528, %v5881
      %v5916 = vld [vmem:[%s4013 + $0x2] sm:$0xff]
      %v5917 = vld [vmem:[%s4013 + $0xa] sm:$0xff]
      %v5918 = vld [vmem:[%s4013 + $0x1a] sm:$0xff]
      %v5919 = vld [vmem:[%s4013 + $0x22] sm:$0xff]
      %v5920 = vld [vmem:[%s4013 + $0x32] sm:$0xff]
      %v5921 = vld [vmem:[%s4013 + $0x3a] sm:$0xff]
      %v5922 = vld [vmem:[%s4013 + $0x4a] sm:$0xff]
      %v5923 = vld [vmem:[%s4013 + $0x52] sm:$0xff]
      %v5924 = vld [vmem:[%s4013 + $0x62] sm:$0xff]
      %v5925 = vld [vmem:[%s4013 + $0x6a] sm:$0xff]
      %v5926 = vld [vmem:[%s4013 + $0x7a] sm:$0xff]
      %v5927 = vld [vmem:[%s4013 + $0x82] sm:$0xff]
      %v5928 = vld [vmem:[%s4013 + $0x92] sm:$0xff]
      %v5929 = vld [vmem:[%s4013 + $0x9a] sm:$0xff]
      %v5930 = vld [vmem:[%s4013 + $0xaa] sm:$0xff]
      %v5931 = vld [vmem:[%s4013 + $0xb2] sm:$0xff]
      %v5932 = vld [vmem:[%s4013 + $0xc2] sm:$0xff]
      %v5933 = vld [vmem:[%s4013 + $0xca] sm:$0xff]
      %v5934 = vld [vmem:[%s4013 + $0xda] sm:$0xff]
      %v5935 = vld [vmem:[%s4013 + $0xe2] sm:$0xff]
      %v5936 = vld [vmem:[%s4013 + $0xf2] sm:$0xff]
      %v5937 = vld [vmem:[%s4013 + $0xfa] sm:$0xff]
      %v5938 = vld [vmem:[%s4013 + $0x10a] sm:$0xff]
      %v5939 = vld [vmem:[%s4013 + $0x112] sm:$0xff]
      %v5940 = vld [vmem:[%s4013 + $0x122] sm:$0xff]
      %v5941 = vld [vmem:[%s4013 + $0x12a] sm:$0xff]
      %v5942 = vld [vmem:[%s4013 + $0x13a] sm:$0xff]
      %v5943 = vld [vmem:[%s4013 + $0x142] sm:$0xff]
      %v5944 = vld [vmem:[%s4013 + $0x152] sm:$0xff]
      %v5945 = vld [vmem:[%s4013 + $0x15a] sm:$0xff]
      %v5946 = vld [vmem:[%s4013 + $0x16a] sm:$0xff]
      %v5947 = vld [vmem:[%s4013 + $0x172] sm:$0xff]
      %s5948 = scalar_lea.vmem %s4, 40
      %v5949 = vld [vmem:[%s5948] sm:$0xff]
      %v5951 = vsel %vm3957, %v5916, 0
      %v5954 = vsel %vm3957, %v5917, 0
      %v5957 = vsel %vm3957, %v5918, 0
      %v5960 = vsel %vm3957, %v5919, 0
      %v5963 = vsel %vm3957, %v5920, 0
      %v5966 = vsel %vm3957, %v5921, 0
      %v5969 = vsel %vm3957, %v5922, 0
      %v5972 = vsel %vm3957, %v5923, 0
      %v5975 = vsel %vm3957, %v5924, 0
      %v5978 = vsel %vm3957, %v5925, 0
      %v5981 = vsel %vm3957, %v5926, 0
      %v5984 = vsel %vm3957, %v5927, 0
      %v5987 = vsel %vm3957, %v5928, 0
      %v5990 = vsel %vm3957, %v5929, 0
      %v5993 = vsel %vm3957, %v5930, 0
      %v5996 = vsel %vm3957, %v5931, 0
      %v5999 = vsel %vm3957, %v5932, 0
      %v6002 = vsel %vm3957, %v5933, 0
      %v6005 = vsel %vm3957, %v5934, 0
      %v6008 = vsel %vm3957, %v5935, 0
      %v6011 = vsel %vm3957, %v5936, 0
      %v6014 = vsel %vm3957, %v5937, 0
      %v6017 = vsel %vm3957, %v5938, 0
      %v6020 = vsel %vm3957, %v5939, 0
      %v6023 = vsel %vm3957, %v5940, 0
      %v6026 = vsel %vm3957, %v5941, 0
      %v6029 = vsel %vm3957, %v5942, 0
      %v6032 = vsel %vm3957, %v5943, 0
      %v6035 = vsel %vm3957, %v5944, 0
      %v6038 = vsel %vm3957, %v5945, 0
      %v6041 = vsel %vm3957, %v5946, 0
      %v6044 = vsel %vm3957, %v5947, 0
      %6046 = vmatprep.subr.mxu0 0.0
      %6047 = vmatpush1.msra.mxu0 0.0
      %6048 = vmatprep.subr.mxu0 0.0
      %6049 = vmatpush1.msra.mxu0 0.0
      %6050 = vmatprep.subr.mxu0 0.0
      %6051 = vmatpush1.msra.mxu0 0.0
      %6052 = vmatprep.subr.mxu0 0.0
      %6053 = vmatpush1.msra.mxu0 0.0
      %6054 = vmatprep.subr.mxu0 0.0
      %6055 = vmatpush1.msra.mxu0 0.0
      %6056 = vmatprep.subr.mxu0 0.0
      %6057 = vmatpush1.msra.mxu0 0.0
      %6058 = vmatprep.subr.mxu0 0.0
      %6059 = vmatpush1.msra.mxu0 0.0
      %6060 = vmatprep.subr.mxu0 0.0
      %6061 = vmatpush1.msra.mxu0 0.0
      %6062 = vmatprep.subr.mxu0 0.0
      %6063 = vmatpush1.msra.mxu0 0.0
      %6064 = vmatprep.subr.mxu0 0.0
      %6065 = vmatpush1.msra.mxu0 0.0
      %6066 = vmatprep.subr.mxu0 0.0
      %6067 = vmatpush1.msra.mxu0 0.0
      %6068 = vmatprep.subr.mxu0 0.0
      %6069 = vmatpush1.msra.mxu0 0.0
      %6070 = vmatprep.subr.mxu0 0.0
      %6071 = vmatpush1.msra.mxu0 0.0
      %6072 = vmatprep.subr.mxu0 0.0
      %6073 = vmatpush1.msra.mxu0 0.0
      %6074 = vmatprep.subr.mxu0 0.0
      %6075 = vmatpush1.msra.mxu0 0.0
      %6076 = vmatprep.subr.mxu0 0.0
      %6077 = vmatpush1.msra.mxu0 %v5949
      %6078 = vmatprep.subr.mxu0 0.0
      %6079 = vmatpush2.msra.mxu0 0.0
      %6080 = vmatprep.subr.mxu0 0.0
      %6081 = vmatpush2.msra.mxu0 0.0
      %6082 = vmatprep.subr.mxu0 0.0
      %6083 = vmatpush2.msra.mxu0 0.0
      %6084 = vmatprep.subr.mxu0 0.0
      %6085 = vmatpush2.msra.mxu0 0.0
      %6086 = vmatprep.subr.mxu0 0.0
      %6087 = vmatpush2.msra.mxu0 0.0
      %6088 = vmatprep.subr.mxu0 0.0
      %6089 = vmatpush2.msra.mxu0 0.0
      %6090 = vmatprep.subr.mxu0 0.0
      %6091 = vmatpush2.msra.mxu0 0.0
      %6092 = vmatprep.subr.mxu0 0.0
      %6093 = vmatpush2.msra.mxu0 0.0
      %6094 = vmatprep.subr.mxu0 0.0
      %6095 = vmatpush2.msra.mxu0 0.0
      %6096 = vmatprep.subr.mxu0 0.0
      %6097 = vmatpush2.msra.mxu0 0.0
      %6098 = vmatprep.subr.mxu0 0.0
      %6099 = vmatpush2.msra.mxu0 0.0
      %6100 = vmatprep.subr.mxu0 0.0
      %6101 = vmatpush2.msra.mxu0 0.0
      %6102 = vmatprep.subr.mxu0 0.0
      %6103 = vmatpush2.msra.mxu0 0.0
      %6104 = vmatprep.subr.mxu0 0.0
      %6105 = vmatpush2.msra.mxu0 0.0
      %6106 = vmatprep.subr.mxu0 0.0
      %6107 = vmatpush2.msra.mxu0 0.0
      %6108 = vmatprep.subr.mxu0 0.0
      %6109 = vmatpush2.msra.mxu0 0.0
      %6110 = vmatprep.mubr.f32.mxu0 0.0
      %6111 = vmatmul.mubr.f32.gmra.mxu0 %v5951
      %v6112 = vpop.f32.mrf.mxu0
      %v6113 = vadd.f32 0.0, %v6112
      %v6114 = vpop.f32.mrf.mxu0
      %6115 = vmatprep.mubr.f32.mxu0 0.0
      %6116 = vmatmul.mubr.f32.gmra.mxu0 %v5954
      %v6117 = vpop.f32.mrf.mxu0
      %v6118 = vadd.f32 0.0, %v6117
      %v6119 = vpop.f32.mrf.mxu0
      %6120 = vmatprep.mubr.f32.mxu0 0.0
      %6121 = vmatmul.mubr.f32.gmra.mxu0 %v5957
      %v6122 = vpop.f32.mrf.mxu0
      %v6123 = vadd.f32 0.0, %v6122
      %v6124 = vpop.f32.mrf.mxu0
      %6125 = vmatprep.mubr.f32.mxu0 0.0
      %6126 = vmatmul.mubr.f32.gmra.mxu0 %v5960
      %v6127 = vpop.f32.mrf.mxu0
      %v6128 = vadd.f32 0.0, %v6127
      %v6129 = vpop.f32.mrf.mxu0
      %6130 = vmatprep.mubr.f32.mxu0 0.0
      %6131 = vmatmul.mubr.f32.gmra.mxu0 %v5963
      %v6132 = vpop.f32.mrf.mxu0
      %v6133 = vadd.f32 0.0, %v6132
      %v6134 = vpop.f32.mrf.mxu0
      %6135 = vmatprep.mubr.f32.mxu0 0.0
      %6136 = vmatmul.mubr.f32.gmra.mxu0 %v5966
      %v6137 = vpop.f32.mrf.mxu0
      %v6138 = vadd.f32 0.0, %v6137
      %v6139 = vpop.f32.mrf.mxu0
      %6140 = vmatprep.mubr.f32.mxu0 0.0
      %6141 = vmatmul.mubr.f32.gmra.mxu0 %v5969
      %v6142 = vpop.f32.mrf.mxu0
      %v6143 = vadd.f32 0.0, %v6142
      %v6144 = vpop.f32.mrf.mxu0
      %6145 = vmatprep.mubr.f32.mxu0 0.0
      %6146 = vmatmul.mubr.f32.gmra.mxu0 %v5972
      %v6147 = vpop.f32.mrf.mxu0
      %v6148 = vadd.f32 0.0, %v6147
      %v6149 = vpop.f32.mrf.mxu0
      %6150 = vmatprep.mubr.f32.mxu0 0.0
      %6151 = vmatmul.mubr.f32.gmra.mxu0 %v5975
      %v6152 = vpop.f32.mrf.mxu0
      %v6153 = vadd.f32 0.0, %v6152
      %v6154 = vpop.f32.mrf.mxu0
      %6155 = vmatprep.mubr.f32.mxu0 0.0
      %6156 = vmatmul.mubr.f32.gmra.mxu0 %v5978
      %v6157 = vpop.f32.mrf.mxu0
      %v6158 = vadd.f32 0.0, %v6157
      %v6159 = vpop.f32.mrf.mxu0
      %6160 = vmatprep.mubr.f32.mxu0 0.0
      %6161 = vmatmul.mubr.f32.gmra.mxu0 %v5981
      %v6162 = vpop.f32.mrf.mxu0
      %v6163 = vadd.f32 0.0, %v6162
      %v6164 = vpop.f32.mrf.mxu0
      %6165 = vmatprep.mubr.f32.mxu0 0.0
      %6166 = vmatmul.mubr.f32.gmra.mxu0 %v5984
      %v6167 = vpop.f32.mrf.mxu0
      %v6168 = vadd.f32 0.0, %v6167
      %v6169 = vpop.f32.mrf.mxu0
      %6170 = vmatprep.mubr.f32.mxu0 0.0
      %6171 = vmatmul.mubr.f32.gmra.mxu0 %v5987
      %v6172 = vpop.f32.mrf.mxu0
      %v6173 = vadd.f32 0.0, %v6172
      %v6174 = vpop.f32.mrf.mxu0
      %6175 = vmatprep.mubr.f32.mxu0 0.0
      %6176 = vmatmul.mubr.f32.gmra.mxu0 %v5990
      %v6177 = vpop.f32.mrf.mxu0
      %v6178 = vadd.f32 0.0, %v6177
      %v6179 = vpop.f32.mrf.mxu0
      %6180 = vmatprep.mubr.f32.mxu0 0.0
      %6181 = vmatmul.mubr.f32.gmra.mxu0 %v5993
      %v6182 = vpop.f32.mrf.mxu0
      %v6183 = vadd.f32 0.0, %v6182
      %v6184 = vpop.f32.mrf.mxu0
      %6185 = vmatprep.mubr.f32.mxu0 0.0
      %6186 = vmatmul.mubr.f32.gmra.mxu0 %v5996
      %v6187 = vpop.f32.mrf.mxu0
      %v6188 = vadd.f32 0.0, %v6187
      %v6189 = vpop.f32.mrf.mxu0
      %6190 = vmatprep.mubr.f32.mxu0 0.0
      %6191 = vmatmul.mubr.f32.gmra.mxu0 %v5999
      %v6192 = vpop.f32.mrf.mxu0
      %v6193 = vadd.f32 0.0, %v6192
      %v6194 = vpop.f32.mrf.mxu0
      %6195 = vmatprep.mubr.f32.mxu0 0.0
      %6196 = vmatmul.mubr.f32.gmra.mxu0 %v6002
      %v6197 = vpop.f32.mrf.mxu0
      %v6198 = vadd.f32 0.0, %v6197
      %v6199 = vpop.f32.mrf.mxu0
      %6200 = vmatprep.mubr.f32.mxu0 0.0
      %6201 = vmatmul.mubr.f32.gmra.mxu0 %v6005
      %v6202 = vpop.f32.mrf.mxu0
      %v6203 = vadd.f32 0.0, %v6202
      %v6204 = vpop.f32.mrf.mxu0
      %6205 = vmatprep.mubr.f32.mxu0 0.0
      %6206 = vmatmul.mubr.f32.gmra.mxu0 %v6008
      %v6207 = vpop.f32.mrf.mxu0
      %v6208 = vadd.f32 0.0, %v6207
      %v6209 = vpop.f32.mrf.mxu0
      %6210 = vmatprep.mubr.f32.mxu0 0.0
      %6211 = vmatmul.mubr.f32.gmra.mxu0 %v6011
      %v6212 = vpop.f32.mrf.mxu0
      %v6213 = vadd.f32 0.0, %v6212
      %v6214 = vpop.f32.mrf.mxu0
      %6215 = vmatprep.mubr.f32.mxu0 0.0
      %6216 = vmatmul.mubr.f32.gmra.mxu0 %v6014
      %v6217 = vpop.f32.mrf.mxu0
      %v6218 = vadd.f32 0.0, %v6217
      %v6219 = vpop.f32.mrf.mxu0
      %6220 = vmatprep.mubr.f32.mxu0 0.0
      %6221 = vmatmul.mubr.f32.gmra.mxu0 %v6017
      %v6222 = vpop.f32.mrf.mxu0
      %v6223 = vadd.f32 0.0, %v6222
      %v6224 = vpop.f32.mrf.mxu0
      %6225 = vmatprep.mubr.f32.mxu0 0.0
      %6226 = vmatmul.mubr.f32.gmra.mxu0 %v6020
      %v6227 = vpop.f32.mrf.mxu0
      %v6228 = vadd.f32 0.0, %v6227
      %v6229 = vpop.f32.mrf.mxu0
      %6230 = vmatprep.mubr.f32.mxu0 0.0
      %6231 = vmatmul.mubr.f32.gmra.mxu0 %v6023
      %v6232 = vpop.f32.mrf.mxu0
      %v6233 = vadd.f32 0.0, %v6232
      %v6234 = vpop.f32.mrf.mxu0
      %6235 = vmatprep.mubr.f32.mxu0 0.0
      %6236 = vmatmul.mubr.f32.gmra.mxu0 %v6026
      %v6237 = vpop.f32.mrf.mxu0
      %v6238 = vadd.f32 0.0, %v6237
      %v6239 = vpop.f32.mrf.mxu0
      %6240 = vmatprep.mubr.f32.mxu0 0.0
      %6241 = vmatmul.mubr.f32.gmra.mxu0 %v6029
      %v6242 = vpop.f32.mrf.mxu0
      %v6243 = vadd.f32 0.0, %v6242
      %v6244 = vpop.f32.mrf.mxu0
      %6245 = vmatprep.mubr.f32.mxu0 0.0
      %6246 = vmatmul.mubr.f32.gmra.mxu0 %v6032
      %v6247 = vpop.f32.mrf.mxu0
      %v6248 = vadd.f32 0.0, %v6247
      %v6249 = vpop.f32.mrf.mxu0
      %6250 = vmatprep.mubr.f32.mxu0 0.0
      %6251 = vmatmul.mubr.f32.gmra.mxu0 %v6035
      %v6252 = vpop.f32.mrf.mxu0
      %v6253 = vadd.f32 0.0, %v6252
      %v6254 = vpop.f32.mrf.mxu0
      %6255 = vmatprep.mubr.f32.mxu0 0.0
      %6256 = vmatmul.mubr.f32.gmra.mxu0 %v6038
      %v6257 = vpop.f32.mrf.mxu0
      %v6258 = vadd.f32 0.0, %v6257
      %v6259 = vpop.f32.mrf.mxu0
      %6260 = vmatprep.mubr.f32.mxu0 0.0
      %6261 = vmatmul.mubr.f32.gmra.mxu0 %v6041
      %v6262 = vpop.f32.mrf.mxu0
      %v6263 = vadd.f32 0.0, %v6262
      %v6264 = vpop.f32.mrf.mxu0
      %6265 = vmatprep.mubr.f32.mxu0 0.0
      %6266 = vmatmul.mubr.f32.gmra.mxu0 %v6044
      %v6267 = vpop.f32.mrf.mxu0
      %v6268 = vadd.f32 0.0, %v6267
      %v6269 = vpop.f32.mrf.mxu0
      %6270 = vdwg.mxu0
      %v6271 = vadd.f32 %v5884, %v6113
      %v6272 = vadd.f32 %v5885, %v6118
      %v6273 = vadd.f32 %v5886, %v6123
      %v6274 = vadd.f32 %v5887, %v6128
      %v6275 = vadd.f32 %v5888, %v6133
      %v6276 = vadd.f32 %v5889, %v6138
      %v6277 = vadd.f32 %v5890, %v6143
      %v6278 = vadd.f32 %v5891, %v6148
      %v6279 = vadd.f32 %v5892, %v6153
      %v6280 = vadd.f32 %v5893, %v6158
      %v6281 = vadd.f32 %v5894, %v6163
      %v6282 = vadd.f32 %v5895, %v6168
      %v6283 = vadd.f32 %v5896, %v6173
      %v6284 = vadd.f32 %v5897, %v6178
      %v6285 = vadd.f32 %v5898, %v6183
      %v6286 = vadd.f32 %v5899, %v6188
      %v6287 = vadd.f32 %v5900, %v6193
      %v6288 = vadd.f32 %v5901, %v6198
      %v6289 = vadd.f32 %v5902, %v6203
      %v6290 = vadd.f32 %v5903, %v6208
      %v6291 = vadd.f32 %v5904, %v6213
      %v6292 = vadd.f32 %v5905, %v6218
      %v6293 = vadd.f32 %v5906, %v6223
      %v6294 = vadd.f32 %v5907, %v6228
      %v6295 = vadd.f32 %v5908, %v6233
      %v6296 = vadd.f32 %v5909, %v6238
      %v6297 = vadd.f32 %v5910, %v6243
      %v6298 = vadd.f32 %v5911, %v6248
      %v6299 = vadd.f32 %v5912, %v6253
      %v6300 = vadd.f32 %v5913, %v6258
      %v6301 = vadd.f32 %v5914, %v6263
      %v6302 = vadd.f32 %v5915, %v6268
      %s6303 = scalar_lea.vmem [#allocation3], 48
      %v6304 = vld [vmem:[%s6303] sm:$0xff]
      %v6305 = vld [vmem:[%s6303 + $0x8] sm:$0xff]
      %v6306 = vld [vmem:[%s6303 + $0x18] sm:$0xff]
      %v6307 = vld [vmem:[%s6303 + $0x20] sm:$0xff]
      %v6308 = vld [vmem:[%s6303 + $0x30] sm:$0xff]
      %v6309 = vld [vmem:[%s6303 + $0x38] sm:$0xff]
      %v6310 = vld [vmem:[%s6303 + $0x48] sm:$0xff]
      %v6311 = vld [vmem:[%s6303 + $0x50] sm:$0xff]
      %v6312 = vld [vmem:[%s6303 + $0x60] sm:$0xff]
      %v6313 = vld [vmem:[%s6303 + $0x68] sm:$0xff]
      %v6314 = vld [vmem:[%s6303 + $0x78] sm:$0xff]
      %v6315 = vld [vmem:[%s6303 + $0x80] sm:$0xff]
      %v6316 = vld [vmem:[%s6303 + $0x90] sm:$0xff]
      %v6317 = vld [vmem:[%s6303 + $0x98] sm:$0xff]
      %v6318 = vld [vmem:[%s6303 + $0xa8] sm:$0xff]
      %v6319 = vld [vmem:[%s6303 + $0xb0] sm:$0xff]
      %v6320 = vld [vmem:[%s6303 + $0xc0] sm:$0xff]
      %v6321 = vld [vmem:[%s6303 + $0xc8] sm:$0xff]
      %v6322 = vld [vmem:[%s6303 + $0xd8] sm:$0xff]
      %v6323 = vld [vmem:[%s6303 + $0xe0] sm:$0xff]
      %v6324 = vld [vmem:[%s6303 + $0xf0] sm:$0xff]
      %v6325 = vld [vmem:[%s6303 + $0xf8] sm:$0xff]
      %v6326 = vld [vmem:[%s6303 + $0x108] sm:$0xff]
      %v6327 = vld [vmem:[%s6303 + $0x110] sm:$0xff]
      %v6328 = vld [vmem:[%s6303 + $0x120] sm:$0xff]
      %v6329 = vld [vmem:[%s6303 + $0x128] sm:$0xff]
      %v6330 = vld [vmem:[%s6303 + $0x138] sm:$0xff]
      %v6331 = vld [vmem:[%s6303 + $0x140] sm:$0xff]
      %v6332 = vld [vmem:[%s6303 + $0x150] sm:$0xff]
      %v6333 = vld [vmem:[%s6303 + $0x158] sm:$0xff]
      %v6334 = vld [vmem:[%s6303 + $0x168] sm:$0xff]
      %v6335 = vld [vmem:[%s6303 + $0x170] sm:$0xff]
      %s6336 = scalar_lea.vmem %s4, 48
      %v6337 = vld [vmem:[%s6336] sm:$0xff]
      %v6339 = vsel %vm3957, %v6304, 0
      %v6342 = vsel %vm3957, %v6305, 0
      %v6345 = vsel %vm3957, %v6306, 0
      %v6348 = vsel %vm3957, %v6307, 0
      %v6351 = vsel %vm3957, %v6308, 0
      %v6354 = vsel %vm3957, %v6309, 0
      %v6357 = vsel %vm3957, %v6310, 0
      %v6360 = vsel %vm3957, %v6311, 0
      %v6363 = vsel %vm3957, %v6312, 0
      %v6366 = vsel %vm3957, %v6313, 0
      %v6369 = vsel %vm3957, %v6314, 0
      %v6372 = vsel %vm3957, %v6315, 0
      %v6375 = vsel %vm3957, %v6316, 0
      %v6378 = vsel %vm3957, %v6317, 0
      %v6381 = vsel %vm3957, %v6318, 0
      %v6384 = vsel %vm3957, %v6319, 0
      %v6387 = vsel %vm3957, %v6320, 0
      %v6390 = vsel %vm3957, %v6321, 0
      %v6393 = vsel %vm3957, %v6322, 0
      %v6396 = vsel %vm3957, %v6323, 0
      %v6399 = vsel %vm3957, %v6324, 0
      %v6402 = vsel %vm3957, %v6325, 0
      %v6405 = vsel %vm3957, %v6326, 0
      %v6408 = vsel %vm3957, %v6327, 0
      %v6411 = vsel %vm3957, %v6328, 0
      %v6414 = vsel %vm3957, %v6329, 0
      %v6417 = vsel %vm3957, %v6330, 0
      %v6420 = vsel %vm3957, %v6331, 0
      %v6423 = vsel %vm3957, %v6332, 0
      %v6426 = vsel %vm3957, %v6333, 0
      %v6429 = vsel %vm3957, %v6334, 0
      %v6432 = vsel %vm3957, %v6335, 0
      %6434 = vmatprep.subr.mxu0 0.0
      %6435 = vmatpush1.msra.mxu0 0.0
      %6436 = vmatprep.subr.mxu0 0.0
      %6437 = vmatpush1.msra.mxu0 0.0
      %6438 = vmatprep.subr.mxu0 0.0
      %6439 = vmatpush1.msra.mxu0 0.0
      %6440 = vmatprep.subr.mxu0 0.0
      %6441 = vmatpush1.msra.mxu0 0.0
      %6442 = vmatprep.subr.mxu0 0.0
      %6443 = vmatpush1.msra.mxu0 0.0
      %6444 = vmatprep.subr.mxu0 0.0
      %6445 = vmatpush1.msra.mxu0 0.0
      %6446 = vmatprep.subr.mxu0 0.0
      %6447 = vmatpush1.msra.mxu0 0.0
      %6448 = vmatprep.subr.mxu0 0.0
      %6449 = vmatpush1.msra.mxu0 0.0
      %6450 = vmatprep.subr.mxu0 0.0
      %6451 = vmatpush1.msra.mxu0 0.0
      %6452 = vmatprep.subr.mxu0 0.0
      %6453 = vmatpush1.msra.mxu0 0.0
      %6454 = vmatprep.subr.mxu0 0.0
      %6455 = vmatpush1.msra.mxu0 0.0
      %6456 = vmatprep.subr.mxu0 0.0
      %6457 = vmatpush1.msra.mxu0 0.0
      %6458 = vmatprep.subr.mxu0 0.0
      %6459 = vmatpush1.msra.mxu0 0.0
      %6460 = vmatprep.subr.mxu0 0.0
      %6461 = vmatpush1.msra.mxu0 0.0
      %6462 = vmatprep.subr.mxu0 0.0
      %6463 = vmatpush1.msra.mxu0 0.0
      %6464 = vmatprep.subr.mxu0 0.0
      %6465 = vmatpush1.msra.mxu0 %v6337
      %6466 = vmatprep.subr.mxu0 0.0
      %6467 = vmatpush2.msra.mxu0 0.0
      %6468 = vmatprep.subr.mxu0 0.0
      %6469 = vmatpush2.msra.mxu0 0.0
      %6470 = vmatprep.subr.mxu0 0.0
      %6471 = vmatpush2.msra.mxu0 0.0
      %6472 = vmatprep.subr.mxu0 0.0
      %6473 = vmatpush2.msra.mxu0 0.0
      %6474 = vmatprep.subr.mxu0 0.0
      %6475 = vmatpush2.msra.mxu0 0.0
      %6476 = vmatprep.subr.mxu0 0.0
      %6477 = vmatpush2.msra.mxu0 0.0
      %6478 = vmatprep.subr.mxu0 0.0
      %6479 = vmatpush2.msra.mxu0 0.0
      %6480 = vmatprep.subr.mxu0 0.0
      %6481 = vmatpush2.msra.mxu0 0.0
      %6482 = vmatprep.subr.mxu0 0.0
      %6483 = vmatpush2.msra.mxu0 0.0
      %6484 = vmatprep.subr.mxu0 0.0
      %6485 = vmatpush2.msra.mxu0 0.0
      %6486 = vmatprep.subr.mxu0 0.0
      %6487 = vmatpush2.msra.mxu0 0.0
      %6488 = vmatprep.subr.mxu0 0.0
      %6489 = vmatpush2.msra.mxu0 0.0
      %6490 = vmatprep.subr.mxu0 0.0
      %6491 = vmatpush2.msra.mxu0 0.0
      %6492 = vmatprep.subr.mxu0 0.0
      %6493 = vmatpush2.msra.mxu0 0.0
      %6494 = vmatprep.subr.mxu0 0.0
      %6495 = vmatpush2.msra.mxu0 0.0
      %6496 = vmatprep.subr.mxu0 0.0
      %6497 = vmatpush2.msra.mxu0 0.0
      %6498 = vmatprep.mubr.f32.mxu0 0.0
      %6499 = vmatmul.mubr.f32.gmra.mxu0 %v6339
      %v6500 = vpop.f32.mrf.mxu0
      %v6501 = vadd.f32 0.0, %v6500
      %v6502 = vpop.f32.mrf.mxu0
      %6503 = vmatprep.mubr.f32.mxu0 0.0
      %6504 = vmatmul.mubr.f32.gmra.mxu0 %v6342
      %v6505 = vpop.f32.mrf.mxu0
      %v6506 = vadd.f32 0.0, %v6505
      %v6507 = vpop.f32.mrf.mxu0
      %6508 = vmatprep.mubr.f32.mxu0 0.0
      %6509 = vmatmul.mubr.f32.gmra.mxu0 %v6345
      %v6510 = vpop.f32.mrf.mxu0
      %v6511 = vadd.f32 0.0, %v6510
      %v6512 = vpop.f32.mrf.mxu0
      %6513 = vmatprep.mubr.f32.mxu0 0.0
      %6514 = vmatmul.mubr.f32.gmra.mxu0 %v6348
      %v6515 = vpop.f32.mrf.mxu0
      %v6516 = vadd.f32 0.0, %v6515
      %v6517 = vpop.f32.mrf.mxu0
      %6518 = vmatprep.mubr.f32.mxu0 0.0
      %6519 = vmatmul.mubr.f32.gmra.mxu0 %v6351
      %v6520 = vpop.f32.mrf.mxu0
      %v6521 = vadd.f32 0.0, %v6520
      %v6522 = vpop.f32.mrf.mxu0
      %6523 = vmatprep.mubr.f32.mxu0 0.0
      %6524 = vmatmul.mubr.f32.gmra.mxu0 %v6354
      %v6525 = vpop.f32.mrf.mxu0
      %v6526 = vadd.f32 0.0, %v6525
      %v6527 = vpop.f32.mrf.mxu0
      %6528 = vmatprep.mubr.f32.mxu0 0.0
      %6529 = vmatmul.mubr.f32.gmra.mxu0 %v6357
      %v6530 = vpop.f32.mrf.mxu0
      %v6531 = vadd.f32 0.0, %v6530
      %v6532 = vpop.f32.mrf.mxu0
      %6533 = vmatprep.mubr.f32.mxu0 0.0
      %6534 = vmatmul.mubr.f32.gmra.mxu0 %v6360
      %v6535 = vpop.f32.mrf.mxu0
      %v6536 = vadd.f32 0.0, %v6535
      %v6537 = vpop.f32.mrf.mxu0
      %6538 = vmatprep.mubr.f32.mxu0 0.0
      %6539 = vmatmul.mubr.f32.gmra.mxu0 %v6363
      %v6540 = vpop.f32.mrf.mxu0
      %v6541 = vadd.f32 0.0, %v6540
      %v6542 = vpop.f32.mrf.mxu0
      %6543 = vmatprep.mubr.f32.mxu0 0.0
      %6544 = vmatmul.mubr.f32.gmra.mxu0 %v6366
      %v6545 = vpop.f32.mrf.mxu0
      %v6546 = vadd.f32 0.0, %v6545
      %v6547 = vpop.f32.mrf.mxu0
      %6548 = vmatprep.mubr.f32.mxu0 0.0
      %6549 = vmatmul.mubr.f32.gmra.mxu0 %v6369
      %v6550 = vpop.f32.mrf.mxu0
      %v6551 = vadd.f32 0.0, %v6550
      %v6552 = vpop.f32.mrf.mxu0
      %6553 = vmatprep.mubr.f32.mxu0 0.0
      %6554 = vmatmul.mubr.f32.gmra.mxu0 %v6372
      %v6555 = vpop.f32.mrf.mxu0
      %v6556 = vadd.f32 0.0, %v6555
      %v6557 = vpop.f32.mrf.mxu0
      %6558 = vmatprep.mubr.f32.mxu0 0.0
      %6559 = vmatmul.mubr.f32.gmra.mxu0 %v6375
      %v6560 = vpop.f32.mrf.mxu0
      %v6561 = vadd.f32 0.0, %v6560
      %v6562 = vpop.f32.mrf.mxu0
      %6563 = vmatprep.mubr.f32.mxu0 0.0
      %6564 = vmatmul.mubr.f32.gmra.mxu0 %v6378
      %v6565 = vpop.f32.mrf.mxu0
      %v6566 = vadd.f32 0.0, %v6565
      %v6567 = vpop.f32.mrf.mxu0
      %6568 = vmatprep.mubr.f32.mxu0 0.0
      %6569 = vmatmul.mubr.f32.gmra.mxu0 %v6381
      %v6570 = vpop.f32.mrf.mxu0
      %v6571 = vadd.f32 0.0, %v6570
      %v6572 = vpop.f32.mrf.mxu0
      %6573 = vmatprep.mubr.f32.mxu0 0.0
      %6574 = vmatmul.mubr.f32.gmra.mxu0 %v6384
      %v6575 = vpop.f32.mrf.mxu0
      %v6576 = vadd.f32 0.0, %v6575
      %v6577 = vpop.f32.mrf.mxu0
      %6578 = vmatprep.mubr.f32.mxu0 0.0
      %6579 = vmatmul.mubr.f32.gmra.mxu0 %v6387
      %v6580 = vpop.f32.mrf.mxu0
      %v6581 = vadd.f32 0.0, %v6580
      %v6582 = vpop.f32.mrf.mxu0
      %6583 = vmatprep.mubr.f32.mxu0 0.0
      %6584 = vmatmul.mubr.f32.gmra.mxu0 %v6390
      %v6585 = vpop.f32.mrf.mxu0
      %v6586 = vadd.f32 0.0, %v6585
      %v6587 = vpop.f32.mrf.mxu0
      %6588 = vmatprep.mubr.f32.mxu0 0.0
      %6589 = vmatmul.mubr.f32.gmra.mxu0 %v6393
      %v6590 = vpop.f32.mrf.mxu0
      %v6591 = vadd.f32 0.0, %v6590
      %v6592 = vpop.f32.mrf.mxu0
      %6593 = vmatprep.mubr.f32.mxu0 0.0
      %6594 = vmatmul.mubr.f32.gmra.mxu0 %v6396
      %v6595 = vpop.f32.mrf.mxu0
      %v6596 = vadd.f32 0.0, %v6595
      %v6597 = vpop.f32.mrf.mxu0
      %6598 = vmatprep.mubr.f32.mxu0 0.0
      %6599 = vmatmul.mubr.f32.gmra.mxu0 %v6399
      %v6600 = vpop.f32.mrf.mxu0
      %v6601 = vadd.f32 0.0, %v6600
      %v6602 = vpop.f32.mrf.mxu0
      %6603 = vmatprep.mubr.f32.mxu0 0.0
      %6604 = vmatmul.mubr.f32.gmra.mxu0 %v6402
      %v6605 = vpop.f32.mrf.mxu0
      %v6606 = vadd.f32 0.0, %v6605
      %v6607 = vpop.f32.mrf.mxu0
      %6608 = vmatprep.mubr.f32.mxu0 0.0
      %6609 = vmatmul.mubr.f32.gmra.mxu0 %v6405
      %v6610 = vpop.f32.mrf.mxu0
      %v6611 = vadd.f32 0.0, %v6610
      %v6612 = vpop.f32.mrf.mxu0
      %6613 = vmatprep.mubr.f32.mxu0 0.0
      %6614 = vmatmul.mubr.f32.gmra.mxu0 %v6408
      %v6615 = vpop.f32.mrf.mxu0
      %v6616 = vadd.f32 0.0, %v6615
      %v6617 = vpop.f32.mrf.mxu0
      %6618 = vmatprep.mubr.f32.mxu0 0.0
      %6619 = vmatmul.mubr.f32.gmra.mxu0 %v6411
      %v6620 = vpop.f32.mrf.mxu0
      %v6621 = vadd.f32 0.0, %v6620
      %v6622 = vpop.f32.mrf.mxu0
      %6623 = vmatprep.mubr.f32.mxu0 0.0
      %6624 = vmatmul.mubr.f32.gmra.mxu0 %v6414
      %v6625 = vpop.f32.mrf.mxu0
      %v6626 = vadd.f32 0.0, %v6625
      %v6627 = vpop.f32.mrf.mxu0
      %6628 = vmatprep.mubr.f32.mxu0 0.0
      %6629 = vmatmul.mubr.f32.gmra.mxu0 %v6417
      %v6630 = vpop.f32.mrf.mxu0
      %v6631 = vadd.f32 0.0, %v6630
      %v6632 = vpop.f32.mrf.mxu0
      %6633 = vmatprep.mubr.f32.mxu0 0.0
      %6634 = vmatmul.mubr.f32.gmra.mxu0 %v6420
      %v6635 = vpop.f32.mrf.mxu0
      %v6636 = vadd.f32 0.0, %v6635
      %v6637 = vpop.f32.mrf.mxu0
      %6638 = vmatprep.mubr.f32.mxu0 0.0
      %6639 = vmatmul.mubr.f32.gmra.mxu0 %v6423
      %v6640 = vpop.f32.mrf.mxu0
      %v6641 = vadd.f32 0.0, %v6640
      %v6642 = vpop.f32.mrf.mxu0
      %6643 = vmatprep.mubr.f32.mxu0 0.0
      %6644 = vmatmul.mubr.f32.gmra.mxu0 %v6426
      %v6645 = vpop.f32.mrf.mxu0
      %v6646 = vadd.f32 0.0, %v6645
      %v6647 = vpop.f32.mrf.mxu0
      %6648 = vmatprep.mubr.f32.mxu0 0.0
      %6649 = vmatmul.mubr.f32.gmra.mxu0 %v6429
      %v6650 = vpop.f32.mrf.mxu0
      %v6651 = vadd.f32 0.0, %v6650
      %v6652 = vpop.f32.mrf.mxu0
      %6653 = vmatprep.mubr.f32.mxu0 0.0
      %6654 = vmatmul.mubr.f32.gmra.mxu0 %v6432
      %v6655 = vpop.f32.mrf.mxu0
      %v6656 = vadd.f32 0.0, %v6655
      %v6657 = vpop.f32.mrf.mxu0
      %6658 = vdwg.mxu0
      %v6659 = vadd.f32 %v6271, %v6501
      %v6660 = vadd.f32 %v6272, %v6506
      %v6661 = vadd.f32 %v6273, %v6511
      %v6662 = vadd.f32 %v6274, %v6516
      %v6663 = vadd.f32 %v6275, %v6521
      %v6664 = vadd.f32 %v6276, %v6526
      %v6665 = vadd.f32 %v6277, %v6531
      %v6666 = vadd.f32 %v6278, %v6536
      %v6667 = vadd.f32 %v6279, %v6541
      %v6668 = vadd.f32 %v6280, %v6546
      %v6669 = vadd.f32 %v6281, %v6551
      %v6670 = vadd.f32 %v6282, %v6556
      %v6671 = vadd.f32 %v6283, %v6561
      %v6672 = vadd.f32 %v6284, %v6566
      %v6673 = vadd.f32 %v6285, %v6571
      %v6674 = vadd.f32 %v6286, %v6576
      %v6675 = vadd.f32 %v6287, %v6581
      %v6676 = vadd.f32 %v6288, %v6586
      %v6677 = vadd.f32 %v6289, %v6591
      %v6678 = vadd.f32 %v6290, %v6596
      %v6679 = vadd.f32 %v6291, %v6601
      %v6680 = vadd.f32 %v6292, %v6606
      %v6681 = vadd.f32 %v6293, %v6611
      %v6682 = vadd.f32 %v6294, %v6616
      %v6683 = vadd.f32 %v6295, %v6621
      %v6684 = vadd.f32 %v6296, %v6626
      %v6685 = vadd.f32 %v6297, %v6631
      %v6686 = vadd.f32 %v6298, %v6636
      %v6687 = vadd.f32 %v6299, %v6641
      %v6688 = vadd.f32 %v6300, %v6646
      %v6689 = vadd.f32 %v6301, %v6651
      %v6690 = vadd.f32 %v6302, %v6656
      %v6691 = vld [vmem:[%s6303 + $0x1] sm:$0xff]
      %v6692 = vld [vmem:[%s6303 + $0x9] sm:$0xff]
      %v6693 = vld [vmem:[%s6303 + $0x19] sm:$0xff]
      %v6694 = vld [vmem:[%s6303 + $0x21] sm:$0xff]
      %v6695 = vld [vmem:[%s6303 + $0x31] sm:$0xff]
      %v6696 = vld [vmem:[%s6303 + $0x39] sm:$0xff]
      %v6697 = vld [vmem:[%s6303 + $0x49] sm:$0xff]
      %v6698 = vld [vmem:[%s6303 + $0x51] sm:$0xff]
      %v6699 = vld [vmem:[%s6303 + $0x61] sm:$0xff]
      %v6700 = vld [vmem:[%s6303 + $0x69] sm:$0xff]
      %v6701 = vld [vmem:[%s6303 + $0x79] sm:$0xff]
      %v6702 = vld [vmem:[%s6303 + $0x81] sm:$0xff]
      %v6703 = vld [vmem:[%s6303 + $0x91] sm:$0xff]
      %v6704 = vld [vmem:[%s6303 + $0x99] sm:$0xff]
      %v6705 = vld [vmem:[%s6303 + $0xa9] sm:$0xff]
      %v6706 = vld [vmem:[%s6303 + $0xb1] sm:$0xff]
      %v6707 = vld [vmem:[%s6303 + $0xc1] sm:$0xff]
      %v6708 = vld [vmem:[%s6303 + $0xc9] sm:$0xff]
      %v6709 = vld [vmem:[%s6303 + $0xd9] sm:$0xff]
      %v6710 = vld [vmem:[%s6303 + $0xe1] sm:$0xff]
      %v6711 = vld [vmem:[%s6303 + $0xf1] sm:$0xff]
      %v6712 = vld [vmem:[%s6303 + $0xf9] sm:$0xff]
      %v6713 = vld [vmem:[%s6303 + $0x109] sm:$0xff]
      %v6714 = vld [vmem:[%s6303 + $0x111] sm:$0xff]
      %v6715 = vld [vmem:[%s6303 + $0x121] sm:$0xff]
      %v6716 = vld [vmem:[%s6303 + $0x129] sm:$0xff]
      %v6717 = vld [vmem:[%s6303 + $0x139] sm:$0xff]
      %v6718 = vld [vmem:[%s6303 + $0x141] sm:$0xff]
      %v6719 = vld [vmem:[%s6303 + $0x151] sm:$0xff]
      %v6720 = vld [vmem:[%s6303 + $0x159] sm:$0xff]
      %v6721 = vld [vmem:[%s6303 + $0x169] sm:$0xff]
      %v6722 = vld [vmem:[%s6303 + $0x171] sm:$0xff]
      %s6723 = scalar_lea.vmem %s4, 56
      %v6724 = vld [vmem:[%s6723] sm:$0xff]
      %v6726 = vsel %vm3957, %v6691, 0
      %v6729 = vsel %vm3957, %v6692, 0
      %v6732 = vsel %vm3957, %v6693, 0
      %v6735 = vsel %vm3957, %v6694, 0
      %v6738 = vsel %vm3957, %v6695, 0
      %v6741 = vsel %vm3957, %v6696, 0
      %v6744 = vsel %vm3957, %v6697, 0
      %v6747 = vsel %vm3957, %v6698, 0
      %v6750 = vsel %vm3957, %v6699, 0
      %v6753 = vsel %vm3957, %v6700, 0
      %v6756 = vsel %vm3957, %v6701, 0
      %v6759 = vsel %vm3957, %v6702, 0
      %v6762 = vsel %vm3957, %v6703, 0
      %v6765 = vsel %vm3957, %v6704, 0
      %v6768 = vsel %vm3957, %v6705, 0
      %v6771 = vsel %vm3957, %v6706, 0
      %v6774 = vsel %vm3957, %v6707, 0
      %v6777 = vsel %vm3957, %v6708, 0
      %v6780 = vsel %vm3957, %v6709, 0
      %v6783 = vsel %vm3957, %v6710, 0
      %v6786 = vsel %vm3957, %v6711, 0
      %v6789 = vsel %vm3957, %v6712, 0
      %v6792 = vsel %vm3957, %v6713, 0
      %v6795 = vsel %vm3957, %v6714, 0
      %v6798 = vsel %vm3957, %v6715, 0
      %v6801 = vsel %vm3957, %v6716, 0
      %v6804 = vsel %vm3957, %v6717, 0
      %v6807 = vsel %vm3957, %v6718, 0
      %v6810 = vsel %vm3957, %v6719, 0
      %v6813 = vsel %vm3957, %v6720, 0
      %v6816 = vsel %vm3957, %v6721, 0
      %v6819 = vsel %vm3957, %v6722, 0
      %6821 = vmatprep.subr.mxu0 0.0
      %6822 = vmatpush1.msra.mxu0 0.0
      %6823 = vmatprep.subr.mxu0 0.0
      %6824 = vmatpush1.msra.mxu0 0.0
      %6825 = vmatprep.subr.mxu0 0.0
      %6826 = vmatpush1.msra.mxu0 0.0
      %6827 = vmatprep.subr.mxu0 0.0
      %6828 = vmatpush1.msra.mxu0 0.0
      %6829 = vmatprep.subr.mxu0 0.0
      %6830 = vmatpush1.msra.mxu0 0.0
      %6831 = vmatprep.subr.mxu0 0.0
      %6832 = vmatpush1.msra.mxu0 0.0
      %6833 = vmatprep.subr.mxu0 0.0
      %6834 = vmatpush1.msra.mxu0 0.0
      %6835 = vmatprep.subr.mxu0 0.0
      %6836 = vmatpush1.msra.mxu0 0.0
      %6837 = vmatprep.subr.mxu0 0.0
      %6838 = vmatpush1.msra.mxu0 0.0
      %6839 = vmatprep.subr.mxu0 0.0
      %6840 = vmatpush1.msra.mxu0 0.0
      %6841 = vmatprep.subr.mxu0 0.0
      %6842 = vmatpush1.msra.mxu0 0.0
      %6843 = vmatprep.subr.mxu0 0.0
      %6844 = vmatpush1.msra.mxu0 0.0
      %6845 = vmatprep.subr.mxu0 0.0
      %6846 = vmatpush1.msra.mxu0 0.0
      %6847 = vmatprep.subr.mxu0 0.0
      %6848 = vmatpush1.msra.mxu0 0.0
      %6849 = vmatprep.subr.mxu0 0.0
      %6850 = vmatpush1.msra.mxu0 0.0
      %6851 = vmatprep.subr.mxu0 0.0
      %6852 = vmatpush1.msra.mxu0 %v6724
      %6853 = vmatprep.subr.mxu0 0.0
      %6854 = vmatpush2.msra.mxu0 0.0
      %6855 = vmatprep.subr.mxu0 0.0
      %6856 = vmatpush2.msra.mxu0 0.0
      %6857 = vmatprep.subr.mxu0 0.0
      %6858 = vmatpush2.msra.mxu0 0.0
      %6859 = vmatprep.subr.mxu0 0.0
      %6860 = vmatpush2.msra.mxu0 0.0
      %6861 = vmatprep.subr.mxu0 0.0
      %6862 = vmatpush2.msra.mxu0 0.0
      %6863 = vmatprep.subr.mxu0 0.0
      %6864 = vmatpush2.msra.mxu0 0.0
      %6865 = vmatprep.subr.mxu0 0.0
      %6866 = vmatpush2.msra.mxu0 0.0
      %6867 = vmatprep.subr.mxu0 0.0
      %6868 = vmatpush2.msra.mxu0 0.0
      %6869 = vmatprep.subr.mxu0 0.0
      %6870 = vmatpush2.msra.mxu0 0.0
      %6871 = vmatprep.subr.mxu0 0.0
      %6872 = vmatpush2.msra.mxu0 0.0
      %6873 = vmatprep.subr.mxu0 0.0
      %6874 = vmatpush2.msra.mxu0 0.0
      %6875 = vmatprep.subr.mxu0 0.0
      %6876 = vmatpush2.msra.mxu0 0.0
      %6877 = vmatprep.subr.mxu0 0.0
      %6878 = vmatpush2.msra.mxu0 0.0
      %6879 = vmatprep.subr.mxu0 0.0
      %6880 = vmatpush2.msra.mxu0 0.0
      %6881 = vmatprep.subr.mxu0 0.0
      %6882 = vmatpush2.msra.mxu0 0.0
      %6883 = vmatprep.subr.mxu0 0.0
      %6884 = vmatpush2.msra.mxu0 0.0
      %6885 = vmatprep.mubr.f32.mxu0 0.0
      %6886 = vmatmul.mubr.f32.gmra.mxu0 %v6726
      %v6887 = vpop.f32.mrf.mxu0
      %v6888 = vadd.f32 0.0, %v6887
      %v6889 = vpop.f32.mrf.mxu0
      %6890 = vmatprep.mubr.f32.mxu0 0.0
      %6891 = vmatmul.mubr.f32.gmra.mxu0 %v6729
      %v6892 = vpop.f32.mrf.mxu0
      %v6893 = vadd.f32 0.0, %v6892
      %v6894 = vpop.f32.mrf.mxu0
      %6895 = vmatprep.mubr.f32.mxu0 0.0
      %6896 = vmatmul.mubr.f32.gmra.mxu0 %v6732
      %v6897 = vpop.f32.mrf.mxu0
      %v6898 = vadd.f32 0.0, %v6897
      %v6899 = vpop.f32.mrf.mxu0
      %6900 = vmatprep.mubr.f32.mxu0 0.0
      %6901 = vmatmul.mubr.f32.gmra.mxu0 %v6735
      %v6902 = vpop.f32.mrf.mxu0
      %v6903 = vadd.f32 0.0, %v6902
      %v6904 = vpop.f32.mrf.mxu0
      %6905 = vmatprep.mubr.f32.mxu0 0.0
      %6906 = vmatmul.mubr.f32.gmra.mxu0 %v6738
      %v6907 = vpop.f32.mrf.mxu0
      %v6908 = vadd.f32 0.0, %v6907
      %v6909 = vpop.f32.mrf.mxu0
      %6910 = vmatprep.mubr.f32.mxu0 0.0
      %6911 = vmatmul.mubr.f32.gmra.mxu0 %v6741
      %v6912 = vpop.f32.mrf.mxu0
      %v6913 = vadd.f32 0.0, %v6912
      %v6914 = vpop.f32.mrf.mxu0
      %6915 = vmatprep.mubr.f32.mxu0 0.0
      %6916 = vmatmul.mubr.f32.gmra.mxu0 %v6744
      %v6917 = vpop.f32.mrf.mxu0
      %v6918 = vadd.f32 0.0, %v6917
      %v6919 = vpop.f32.mrf.mxu0
      %6920 = vmatprep.mubr.f32.mxu0 0.0
      %6921 = vmatmul.mubr.f32.gmra.mxu0 %v6747
      %v6922 = vpop.f32.mrf.mxu0
      %v6923 = vadd.f32 0.0, %v6922
      %v6924 = vpop.f32.mrf.mxu0
      %6925 = vmatprep.mubr.f32.mxu0 0.0
      %6926 = vmatmul.mubr.f32.gmra.mxu0 %v6750
      %v6927 = vpop.f32.mrf.mxu0
      %v6928 = vadd.f32 0.0, %v6927
      %v6929 = vpop.f32.mrf.mxu0
      %6930 = vmatprep.mubr.f32.mxu0 0.0
      %6931 = vmatmul.mubr.f32.gmra.mxu0 %v6753
      %v6932 = vpop.f32.mrf.mxu0
      %v6933 = vadd.f32 0.0, %v6932
      %v6934 = vpop.f32.mrf.mxu0
      %6935 = vmatprep.mubr.f32.mxu0 0.0
      %6936 = vmatmul.mubr.f32.gmra.mxu0 %v6756
      %v6937 = vpop.f32.mrf.mxu0
      %v6938 = vadd.f32 0.0, %v6937
      %v6939 = vpop.f32.mrf.mxu0
      %6940 = vmatprep.mubr.f32.mxu0 0.0
      %6941 = vmatmul.mubr.f32.gmra.mxu0 %v6759
      %v6942 = vpop.f32.mrf.mxu0
      %v6943 = vadd.f32 0.0, %v6942
      %v6944 = vpop.f32.mrf.mxu0
      %6945 = vmatprep.mubr.f32.mxu0 0.0
      %6946 = vmatmul.mubr.f32.gmra.mxu0 %v6762
      %v6947 = vpop.f32.mrf.mxu0
      %v6948 = vadd.f32 0.0, %v6947
      %v6949 = vpop.f32.mrf.mxu0
      %6950 = vmatprep.mubr.f32.mxu0 0.0
      %6951 = vmatmul.mubr.f32.gmra.mxu0 %v6765
      %v6952 = vpop.f32.mrf.mxu0
      %v6953 = vadd.f32 0.0, %v6952
      %v6954 = vpop.f32.mrf.mxu0
      %6955 = vmatprep.mubr.f32.mxu0 0.0
      %6956 = vmatmul.mubr.f32.gmra.mxu0 %v6768
      %v6957 = vpop.f32.mrf.mxu0
      %v6958 = vadd.f32 0.0, %v6957
      %v6959 = vpop.f32.mrf.mxu0
      %6960 = vmatprep.mubr.f32.mxu0 0.0
      %6961 = vmatmul.mubr.f32.gmra.mxu0 %v6771
      %v6962 = vpop.f32.mrf.mxu0
      %v6963 = vadd.f32 0.0, %v6962
      %v6964 = vpop.f32.mrf.mxu0
      %6965 = vmatprep.mubr.f32.mxu0 0.0
      %6966 = vmatmul.mubr.f32.gmra.mxu0 %v6774
      %v6967 = vpop.f32.mrf.mxu0
      %v6968 = vadd.f32 0.0, %v6967
      %v6969 = vpop.f32.mrf.mxu0
      %6970 = vmatprep.mubr.f32.mxu0 0.0
      %6971 = vmatmul.mubr.f32.gmra.mxu0 %v6777
      %v6972 = vpop.f32.mrf.mxu0
      %v6973 = vadd.f32 0.0, %v6972
      %v6974 = vpop.f32.mrf.mxu0
      %6975 = vmatprep.mubr.f32.mxu0 0.0
      %6976 = vmatmul.mubr.f32.gmra.mxu0 %v6780
      %v6977 = vpop.f32.mrf.mxu0
      %v6978 = vadd.f32 0.0, %v6977
      %v6979 = vpop.f32.mrf.mxu0
      %6980 = vmatprep.mubr.f32.mxu0 0.0
      %6981 = vmatmul.mubr.f32.gmra.mxu0 %v6783
      %v6982 = vpop.f32.mrf.mxu0
      %v6983 = vadd.f32 0.0, %v6982
      %v6984 = vpop.f32.mrf.mxu0
      %6985 = vmatprep.mubr.f32.mxu0 0.0
      %6986 = vmatmul.mubr.f32.gmra.mxu0 %v6786
      %v6987 = vpop.f32.mrf.mxu0
      %v6988 = vadd.f32 0.0, %v6987
      %v6989 = vpop.f32.mrf.mxu0
      %6990 = vmatprep.mubr.f32.mxu0 0.0
      %6991 = vmatmul.mubr.f32.gmra.mxu0 %v6789
      %v6992 = vpop.f32.mrf.mxu0
      %v6993 = vadd.f32 0.0, %v6992
      %v6994 = vpop.f32.mrf.mxu0
      %6995 = vmatprep.mubr.f32.mxu0 0.0
      %6996 = vmatmul.mubr.f32.gmra.mxu0 %v6792
      %v6997 = vpop.f32.mrf.mxu0
      %v6998 = vadd.f32 0.0, %v6997
      %v6999 = vpop.f32.mrf.mxu0
      %7000 = vmatprep.mubr.f32.mxu0 0.0
      %7001 = vmatmul.mubr.f32.gmra.mxu0 %v6795
      %v7002 = vpop.f32.mrf.mxu0
      %v7003 = vadd.f32 0.0, %v7002
      %v7004 = vpop.f32.mrf.mxu0
      %7005 = vmatprep.mubr.f32.mxu0 0.0
      %7006 = vmatmul.mubr.f32.gmra.mxu0 %v6798
      %v7007 = vpop.f32.mrf.mxu0
      %v7008 = vadd.f32 0.0, %v7007
      %v7009 = vpop.f32.mrf.mxu0
      %7010 = vmatprep.mubr.f32.mxu0 0.0
      %7011 = vmatmul.mubr.f32.gmra.mxu0 %v6801
      %v7012 = vpop.f32.mrf.mxu0
      %v7013 = vadd.f32 0.0, %v7012
      %v7014 = vpop.f32.mrf.mxu0
      %7015 = vmatprep.mubr.f32.mxu0 0.0
      %7016 = vmatmul.mubr.f32.gmra.mxu0 %v6804
      %v7017 = vpop.f32.mrf.mxu0
      %v7018 = vadd.f32 0.0, %v7017
      %v7019 = vpop.f32.mrf.mxu0
      %7020 = vmatprep.mubr.f32.mxu0 0.0
      %7021 = vmatmul.mubr.f32.gmra.mxu0 %v6807
      %v7022 = vpop.f32.mrf.mxu0
      %v7023 = vadd.f32 0.0, %v7022
      %v7024 = vpop.f32.mrf.mxu0
      %7025 = vmatprep.mubr.f32.mxu0 0.0
      %7026 = vmatmul.mubr.f32.gmra.mxu0 %v6810
      %v7027 = vpop.f32.mrf.mxu0
      %v7028 = vadd.f32 0.0, %v7027
      %v7029 = vpop.f32.mrf.mxu0
      %7030 = vmatprep.mubr.f32.mxu0 0.0
      %7031 = vmatmul.mubr.f32.gmra.mxu0 %v6813
      %v7032 = vpop.f32.mrf.mxu0
      %v7033 = vadd.f32 0.0, %v7032
      %v7034 = vpop.f32.mrf.mxu0
      %7035 = vmatprep.mubr.f32.mxu0 0.0
      %7036 = vmatmul.mubr.f32.gmra.mxu0 %v6816
      %v7037 = vpop.f32.mrf.mxu0
      %v7038 = vadd.f32 0.0, %v7037
      %v7039 = vpop.f32.mrf.mxu0
      %7040 = vmatprep.mubr.f32.mxu0 0.0
      %7041 = vmatmul.mubr.f32.gmra.mxu0 %v6819
      %v7042 = vpop.f32.mrf.mxu0
      %v7043 = vadd.f32 0.0, %v7042
      %v7044 = vpop.f32.mrf.mxu0
      %7045 = vdwg.mxu0
      %v7046 = vadd.f32 %v6659, %v6888
      %v7047 = vadd.f32 %v6660, %v6893
      %v7048 = vadd.f32 %v6661, %v6898
      %v7049 = vadd.f32 %v6662, %v6903
      %v7050 = vadd.f32 %v6663, %v6908
      %v7051 = vadd.f32 %v6664, %v6913
      %v7052 = vadd.f32 %v6665, %v6918
      %v7053 = vadd.f32 %v6666, %v6923
      %v7054 = vadd.f32 %v6667, %v6928
      %v7055 = vadd.f32 %v6668, %v6933
      %v7056 = vadd.f32 %v6669, %v6938
      %v7057 = vadd.f32 %v6670, %v6943
      %v7058 = vadd.f32 %v6671, %v6948
      %v7059 = vadd.f32 %v6672, %v6953
      %v7060 = vadd.f32 %v6673, %v6958
      %v7061 = vadd.f32 %v6674, %v6963
      %v7062 = vadd.f32 %v6675, %v6968
      %v7063 = vadd.f32 %v6676, %v6973
      %v7064 = vadd.f32 %v6677, %v6978
      %v7065 = vadd.f32 %v6678, %v6983
      %v7066 = vadd.f32 %v6679, %v6988
      %v7067 = vadd.f32 %v6680, %v6993
      %v7068 = vadd.f32 %v6681, %v6998
      %v7069 = vadd.f32 %v6682, %v7003
      %v7070 = vadd.f32 %v6683, %v7008
      %v7071 = vadd.f32 %v6684, %v7013
      %v7072 = vadd.f32 %v6685, %v7018
      %v7073 = vadd.f32 %v6686, %v7023
      %v7074 = vadd.f32 %v6687, %v7028
      %v7075 = vadd.f32 %v6688, %v7033
      %v7076 = vadd.f32 %v6689, %v7038
      %v7077 = vadd.f32 %v6690, %v7043
      %v7078 = vld [vmem:[%s6303 + $0x2] sm:$0xff]
      %v7079 = vld [vmem:[%s6303 + $0xa] sm:$0xff]
      %v7080 = vld [vmem:[%s6303 + $0x1a] sm:$0xff]
      %v7081 = vld [vmem:[%s6303 + $0x22] sm:$0xff]
      %v7082 = vld [vmem:[%s6303 + $0x32] sm:$0xff]
      %v7083 = vld [vmem:[%s6303 + $0x3a] sm:$0xff]
      %v7084 = vld [vmem:[%s6303 + $0x4a] sm:$0xff]
      %v7085 = vld [vmem:[%s6303 + $0x52] sm:$0xff]
      %v7086 = vld [vmem:[%s6303 + $0x62] sm:$0xff]
      %v7087 = vld [vmem:[%s6303 + $0x6a] sm:$0xff]
      %v7088 = vld [vmem:[%s6303 + $0x7a] sm:$0xff]
      %v7089 = vld [vmem:[%s6303 + $0x82] sm:$0xff]
      %v7090 = vld [vmem:[%s6303 + $0x92] sm:$0xff]
      %v7091 = vld [vmem:[%s6303 + $0x9a] sm:$0xff]
      %v7092 = vld [vmem:[%s6303 + $0xaa] sm:$0xff]
      %v7093 = vld [vmem:[%s6303 + $0xb2] sm:$0xff]
      %v7094 = vld [vmem:[%s6303 + $0xc2] sm:$0xff]
      %v7095 = vld [vmem:[%s6303 + $0xca] sm:$0xff]
      %v7096 = vld [vmem:[%s6303 + $0xda] sm:$0xff]
      %v7097 = vld [vmem:[%s6303 + $0xe2] sm:$0xff]
      %v7098 = vld [vmem:[%s6303 + $0xf2] sm:$0xff]
      %v7099 = vld [vmem:[%s6303 + $0xfa] sm:$0xff]
      %v7100 = vld [vmem:[%s6303 + $0x10a] sm:$0xff]
      %v7101 = vld [vmem:[%s6303 + $0x112] sm:$0xff]
      %v7102 = vld [vmem:[%s6303 + $0x122] sm:$0xff]
      %v7103 = vld [vmem:[%s6303 + $0x12a] sm:$0xff]
      %v7104 = vld [vmem:[%s6303 + $0x13a] sm:$0xff]
      %v7105 = vld [vmem:[%s6303 + $0x142] sm:$0xff]
      %v7106 = vld [vmem:[%s6303 + $0x152] sm:$0xff]
      %v7107 = vld [vmem:[%s6303 + $0x15a] sm:$0xff]
      %v7108 = vld [vmem:[%s6303 + $0x16a] sm:$0xff]
      %v7109 = vld [vmem:[%s6303 + $0x172] sm:$0xff]
      %s7110 = scalar_lea.vmem %s4, 64
      %v7111 = vld [vmem:[%s7110] sm:$0xff]
      %v7113 = vsel %vm3957, %v7078, 0
      %v7116 = vsel %vm3957, %v7079, 0
      %v7119 = vsel %vm3957, %v7080, 0
      %v7122 = vsel %vm3957, %v7081, 0
      %v7125 = vsel %vm3957, %v7082, 0
      %v7128 = vsel %vm3957, %v7083, 0
      %v7131 = vsel %vm3957, %v7084, 0
      %v7134 = vsel %vm3957, %v7085, 0
      %v7137 = vsel %vm3957, %v7086, 0
      %v7140 = vsel %vm3957, %v7087, 0
      %v7143 = vsel %vm3957, %v7088, 0
      %v7146 = vsel %vm3957, %v7089, 0
      %v7149 = vsel %vm3957, %v7090, 0
      %v7152 = vsel %vm3957, %v7091, 0
      %v7155 = vsel %vm3957, %v7092, 0
      %v7158 = vsel %vm3957, %v7093, 0
      %v7161 = vsel %vm3957, %v7094, 0
      %v7164 = vsel %vm3957, %v7095, 0
      %v7167 = vsel %vm3957, %v7096, 0
      %v7170 = vsel %vm3957, %v7097, 0
      %v7173 = vsel %vm3957, %v7098, 0
      %v7176 = vsel %vm3957, %v7099, 0
      %v7179 = vsel %vm3957, %v7100, 0
      %v7182 = vsel %vm3957, %v7101, 0
      %v7185 = vsel %vm3957, %v7102, 0
      %v7188 = vsel %vm3957, %v7103, 0
      %v7191 = vsel %vm3957, %v7104, 0
      %v7194 = vsel %vm3957, %v7105, 0
      %v7197 = vsel %vm3957, %v7106, 0
      %v7200 = vsel %vm3957, %v7107, 0
      %v7203 = vsel %vm3957, %v7108, 0
      %v7206 = vsel %vm3957, %v7109, 0
      %7208 = vmatprep.subr.mxu0 0.0
      %7209 = vmatpush1.msra.mxu0 0.0
      %7210 = vmatprep.subr.mxu0 0.0
      %7211 = vmatpush1.msra.mxu0 0.0
      %7212 = vmatprep.subr.mxu0 0.0
      %7213 = vmatpush1.msra.mxu0 0.0
      %7214 = vmatprep.subr.mxu0 0.0
      %7215 = vmatpush1.msra.mxu0 0.0
      %7216 = vmatprep.subr.mxu0 0.0
      %7217 = vmatpush1.msra.mxu0 0.0
      %7218 = vmatprep.subr.mxu0 0.0
      %7219 = vmatpush1.msra.mxu0 0.0
      %7220 = vmatprep.subr.mxu0 0.0
      %7221 = vmatpush1.msra.mxu0 0.0
      %7222 = vmatprep.subr.mxu0 0.0
      %7223 = vmatpush1.msra.mxu0 0.0
      %7224 = vmatprep.subr.mxu0 0.0
      %7225 = vmatpush1.msra.mxu0 0.0
      %7226 = vmatprep.subr.mxu0 0.0
      %7227 = vmatpush1.msra.mxu0 0.0
      %7228 = vmatprep.subr.mxu0 0.0
      %7229 = vmatpush1.msra.mxu0 0.0
      %7230 = vmatprep.subr.mxu0 0.0
      %7231 = vmatpush1.msra.mxu0 0.0
      %7232 = vmatprep.subr.mxu0 0.0
      %7233 = vmatpush1.msra.mxu0 0.0
      %7234 = vmatprep.subr.mxu0 0.0
      %7235 = vmatpush1.msra.mxu0 0.0
      %7236 = vmatprep.subr.mxu0 0.0
      %7237 = vmatpush1.msra.mxu0 0.0
      %7238 = vmatprep.subr.mxu0 0.0
      %7239 = vmatpush1.msra.mxu0 %v7111
      %7240 = vmatprep.subr.mxu0 0.0
      %7241 = vmatpush2.msra.mxu0 0.0
      %7242 = vmatprep.subr.mxu0 0.0
      %7243 = vmatpush2.msra.mxu0 0.0
      %7244 = vmatprep.subr.mxu0 0.0
      %7245 = vmatpush2.msra.mxu0 0.0
      %7246 = vmatprep.subr.mxu0 0.0
      %7247 = vmatpush2.msra.mxu0 0.0
      %7248 = vmatprep.subr.mxu0 0.0
      %7249 = vmatpush2.msra.mxu0 0.0
      %7250 = vmatprep.subr.mxu0 0.0
      %7251 = vmatpush2.msra.mxu0 0.0
      %7252 = vmatprep.subr.mxu0 0.0
      %7253 = vmatpush2.msra.mxu0 0.0
      %7254 = vmatprep.subr.mxu0 0.0
      %7255 = vmatpush2.msra.mxu0 0.0
      %7256 = vmatprep.subr.mxu0 0.0
      %7257 = vmatpush2.msra.mxu0 0.0
      %7258 = vmatprep.subr.mxu0 0.0
      %7259 = vmatpush2.msra.mxu0 0.0
      %7260 = vmatprep.subr.mxu0 0.0
      %7261 = vmatpush2.msra.mxu0 0.0
      %7262 = vmatprep.subr.mxu0 0.0
      %7263 = vmatpush2.msra.mxu0 0.0
      %7264 = vmatprep.subr.mxu0 0.0
      %7265 = vmatpush2.msra.mxu0 0.0
      %7266 = vmatprep.subr.mxu0 0.0
      %7267 = vmatpush2.msra.mxu0 0.0
      %7268 = vmatprep.subr.mxu0 0.0
      %7269 = vmatpush2.msra.mxu0 0.0
      %7270 = vmatprep.subr.mxu0 0.0
      %7271 = vmatpush2.msra.mxu0 0.0
      %7272 = vmatprep.mubr.f32.mxu0 0.0
      %7273 = vmatmul.mubr.f32.gmra.mxu0 %v7113
      %v7274 = vpop.f32.mrf.mxu0
      %v7275 = vadd.f32 0.0, %v7274
      %v7276 = vpop.f32.mrf.mxu0
      %7277 = vmatprep.mubr.f32.mxu0 0.0
      %7278 = vmatmul.mubr.f32.gmra.mxu0 %v7116
      %v7279 = vpop.f32.mrf.mxu0
      %v7280 = vadd.f32 0.0, %v7279
      %v7281 = vpop.f32.mrf.mxu0
      %7282 = vmatprep.mubr.f32.mxu0 0.0
      %7283 = vmatmul.mubr.f32.gmra.mxu0 %v7119
      %v7284 = vpop.f32.mrf.mxu0
      %v7285 = vadd.f32 0.0, %v7284
      %v7286 = vpop.f32.mrf.mxu0
      %7287 = vmatprep.mubr.f32.mxu0 0.0
      %7288 = vmatmul.mubr.f32.gmra.mxu0 %v7122
      %v7289 = vpop.f32.mrf.mxu0
      %v7290 = vadd.f32 0.0, %v7289
      %v7291 = vpop.f32.mrf.mxu0
      %7292 = vmatprep.mubr.f32.mxu0 0.0
      %7293 = vmatmul.mubr.f32.gmra.mxu0 %v7125
      %v7294 = vpop.f32.mrf.mxu0
      %v7295 = vadd.f32 0.0, %v7294
      %v7296 = vpop.f32.mrf.mxu0
      %7297 = vmatprep.mubr.f32.mxu0 0.0
      %7298 = vmatmul.mubr.f32.gmra.mxu0 %v7128
      %v7299 = vpop.f32.mrf.mxu0
      %v7300 = vadd.f32 0.0, %v7299
      %v7301 = vpop.f32.mrf.mxu0
      %7302 = vmatprep.mubr.f32.mxu0 0.0
      %7303 = vmatmul.mubr.f32.gmra.mxu0 %v7131
      %v7304 = vpop.f32.mrf.mxu0
      %v7305 = vadd.f32 0.0, %v7304
      %v7306 = vpop.f32.mrf.mxu0
      %7307 = vmatprep.mubr.f32.mxu0 0.0
      %7308 = vmatmul.mubr.f32.gmra.mxu0 %v7134
      %v7309 = vpop.f32.mrf.mxu0
      %v7310 = vadd.f32 0.0, %v7309
      %v7311 = vpop.f32.mrf.mxu0
      %7312 = vmatprep.mubr.f32.mxu0 0.0
      %7313 = vmatmul.mubr.f32.gmra.mxu0 %v7137
      %v7314 = vpop.f32.mrf.mxu0
      %v7315 = vadd.f32 0.0, %v7314
      %v7316 = vpop.f32.mrf.mxu0
      %7317 = vmatprep.mubr.f32.mxu0 0.0
      %7318 = vmatmul.mubr.f32.gmra.mxu0 %v7140
      %v7319 = vpop.f32.mrf.mxu0
      %v7320 = vadd.f32 0.0, %v7319
      %v7321 = vpop.f32.mrf.mxu0
      %7322 = vmatprep.mubr.f32.mxu0 0.0
      %7323 = vmatmul.mubr.f32.gmra.mxu0 %v7143
      %v7324 = vpop.f32.mrf.mxu0
      %v7325 = vadd.f32 0.0, %v7324
      %v7326 = vpop.f32.mrf.mxu0
      %7327 = vmatprep.mubr.f32.mxu0 0.0
      %7328 = vmatmul.mubr.f32.gmra.mxu0 %v7146
      %v7329 = vpop.f32.mrf.mxu0
      %v7330 = vadd.f32 0.0, %v7329
      %v7331 = vpop.f32.mrf.mxu0
      %7332 = vmatprep.mubr.f32.mxu0 0.0
      %7333 = vmatmul.mubr.f32.gmra.mxu0 %v7149
      %v7334 = vpop.f32.mrf.mxu0
      %v7335 = vadd.f32 0.0, %v7334
      %v7336 = vpop.f32.mrf.mxu0
      %7337 = vmatprep.mubr.f32.mxu0 0.0
      %7338 = vmatmul.mubr.f32.gmra.mxu0 %v7152
      %v7339 = vpop.f32.mrf.mxu0
      %v7340 = vadd.f32 0.0, %v7339
      %v7341 = vpop.f32.mrf.mxu0
      %7342 = vmatprep.mubr.f32.mxu0 0.0
      %7343 = vmatmul.mubr.f32.gmra.mxu0 %v7155
      %v7344 = vpop.f32.mrf.mxu0
      %v7345 = vadd.f32 0.0, %v7344
      %v7346 = vpop.f32.mrf.mxu0
      %7347 = vmatprep.mubr.f32.mxu0 0.0
      %7348 = vmatmul.mubr.f32.gmra.mxu0 %v7158
      %v7349 = vpop.f32.mrf.mxu0
      %v7350 = vadd.f32 0.0, %v7349
      %v7351 = vpop.f32.mrf.mxu0
      %7352 = vmatprep.mubr.f32.mxu0 0.0
      %7353 = vmatmul.mubr.f32.gmra.mxu0 %v7161
      %v7354 = vpop.f32.mrf.mxu0
      %v7355 = vadd.f32 0.0, %v7354
      %v7356 = vpop.f32.mrf.mxu0
      %7357 = vmatprep.mubr.f32.mxu0 0.0
      %7358 = vmatmul.mubr.f32.gmra.mxu0 %v7164
      %v7359 = vpop.f32.mrf.mxu0
      %v7360 = vadd.f32 0.0, %v7359
      %v7361 = vpop.f32.mrf.mxu0
      %7362 = vmatprep.mubr.f32.mxu0 0.0
      %7363 = vmatmul.mubr.f32.gmra.mxu0 %v7167
      %v7364 = vpop.f32.mrf.mxu0
      %v7365 = vadd.f32 0.0, %v7364
      %v7366 = vpop.f32.mrf.mxu0
      %7367 = vmatprep.mubr.f32.mxu0 0.0
      %7368 = vmatmul.mubr.f32.gmra.mxu0 %v7170
      %v7369 = vpop.f32.mrf.mxu0
      %v7370 = vadd.f32 0.0, %v7369
      %v7371 = vpop.f32.mrf.mxu0
      %7372 = vmatprep.mubr.f32.mxu0 0.0
      %7373 = vmatmul.mubr.f32.gmra.mxu0 %v7173
      %v7374 = vpop.f32.mrf.mxu0
      %v7375 = vadd.f32 0.0, %v7374
      %v7376 = vpop.f32.mrf.mxu0
      %7377 = vmatprep.mubr.f32.mxu0 0.0
      %7378 = vmatmul.mubr.f32.gmra.mxu0 %v7176
      %v7379 = vpop.f32.mrf.mxu0
      %v7380 = vadd.f32 0.0, %v7379
      %v7381 = vpop.f32.mrf.mxu0
      %7382 = vmatprep.mubr.f32.mxu0 0.0
      %7383 = vmatmul.mubr.f32.gmra.mxu0 %v7179
      %v7384 = vpop.f32.mrf.mxu0
      %v7385 = vadd.f32 0.0, %v7384
      %v7386 = vpop.f32.mrf.mxu0
      %7387 = vmatprep.mubr.f32.mxu0 0.0
      %7388 = vmatmul.mubr.f32.gmra.mxu0 %v7182
      %v7389 = vpop.f32.mrf.mxu0
      %v7390 = vadd.f32 0.0, %v7389
      %v7391 = vpop.f32.mrf.mxu0
      %7392 = vmatprep.mubr.f32.mxu0 0.0
      %7393 = vmatmul.mubr.f32.gmra.mxu0 %v7185
      %v7394 = vpop.f32.mrf.mxu0
      %v7395 = vadd.f32 0.0, %v7394
      %v7396 = vpop.f32.mrf.mxu0
      %7397 = vmatprep.mubr.f32.mxu0 0.0
      %7398 = vmatmul.mubr.f32.gmra.mxu0 %v7188
      %v7399 = vpop.f32.mrf.mxu0
      %v7400 = vadd.f32 0.0, %v7399
      %v7401 = vpop.f32.mrf.mxu0
      %7402 = vmatprep.mubr.f32.mxu0 0.0
      %7403 = vmatmul.mubr.f32.gmra.mxu0 %v7191
      %v7404 = vpop.f32.mrf.mxu0
      %v7405 = vadd.f32 0.0, %v7404
      %v7406 = vpop.f32.mrf.mxu0
      %7407 = vmatprep.mubr.f32.mxu0 0.0
      %7408 = vmatmul.mubr.f32.gmra.mxu0 %v7194
      %v7409 = vpop.f32.mrf.mxu0
      %v7410 = vadd.f32 0.0, %v7409
      %v7411 = vpop.f32.mrf.mxu0
      %7412 = vmatprep.mubr.f32.mxu0 0.0
      %7413 = vmatmul.mubr.f32.gmra.mxu0 %v7197
      %v7414 = vpop.f32.mrf.mxu0
      %v7415 = vadd.f32 0.0, %v7414
      %v7416 = vpop.f32.mrf.mxu0
      %7417 = vmatprep.mubr.f32.mxu0 0.0
      %7418 = vmatmul.mubr.f32.gmra.mxu0 %v7200
      %v7419 = vpop.f32.mrf.mxu0
      %v7420 = vadd.f32 0.0, %v7419
      %v7421 = vpop.f32.mrf.mxu0
      %7422 = vmatprep.mubr.f32.mxu0 0.0
      %7423 = vmatmul.mubr.f32.gmra.mxu0 %v7203
      %v7424 = vpop.f32.mrf.mxu0
      %v7425 = vadd.f32 0.0, %v7424
      %v7426 = vpop.f32.mrf.mxu0
      %7427 = vmatprep.mubr.f32.mxu0 0.0
      %7428 = vmatmul.mubr.f32.gmra.mxu0 %v7206
      %v7429 = vpop.f32.mrf.mxu0
      %v7430 = vadd.f32 0.0, %v7429
      %v7431 = vpop.f32.mrf.mxu0
      %7432 = vdwg.mxu0
      %v7433 = vadd.f32 %v7046, %v7275
      %v7434 = vadd.f32 %v7047, %v7280
      %v7435 = vadd.f32 %v7048, %v7285
      %v7436 = vadd.f32 %v7049, %v7290
      %v7437 = vadd.f32 %v7050, %v7295
      %v7438 = vadd.f32 %v7051, %v7300
      %v7439 = vadd.f32 %v7052, %v7305
      %v7440 = vadd.f32 %v7053, %v7310
      %v7441 = vadd.f32 %v7054, %v7315
      %v7442 = vadd.f32 %v7055, %v7320
      %v7443 = vadd.f32 %v7056, %v7325
      %v7444 = vadd.f32 %v7057, %v7330
      %v7445 = vadd.f32 %v7058, %v7335
      %v7446 = vadd.f32 %v7059, %v7340
      %v7447 = vadd.f32 %v7060, %v7345
      %v7448 = vadd.f32 %v7061, %v7350
      %v7449 = vadd.f32 %v7062, %v7355
      %v7450 = vadd.f32 %v7063, %v7360
      %v7451 = vadd.f32 %v7064, %v7365
      %v7452 = vadd.f32 %v7065, %v7370
      %v7453 = vadd.f32 %v7066, %v7375
      %v7454 = vadd.f32 %v7067, %v7380
      %v7455 = vadd.f32 %v7068, %v7385
      %v7456 = vadd.f32 %v7069, %v7390
      %v7457 = vadd.f32 %v7070, %v7395
      %v7458 = vadd.f32 %v7071, %v7400
      %v7459 = vadd.f32 %v7072, %v7405
      %v7460 = vadd.f32 %v7073, %v7410
      %v7461 = vadd.f32 %v7074, %v7415
      %v7462 = vadd.f32 %v7075, %v7420
      %v7463 = vadd.f32 %v7076, %v7425
      %v7464 = vadd.f32 %v7077, %v7430
      %7465 = vxpose.xlu0.b32.start [1/16] %v7433, 128
      %7466 = vxpose.xlu0.b32.cont [2/16] %v7434, 128
      %7467 = vxpose.xlu0.b32.cont [3/16] %v7435, 128
      %7468 = vxpose.xlu0.b32.cont [4/16] %v7436, 128
      %7469 = vxpose.xlu0.b32.cont [5/16] %v7437, 128
      %7470 = vxpose.xlu0.b32.cont [6/16] %v7438, 128
      %7471 = vxpose.xlu0.b32.cont [7/16] %v7439, 128
      %7472 = vxpose.xlu0.b32.cont [8/16] %v7440, 128
      %7473 = vxpose.xlu0.b32.cont [9/16] %v7441, 128
      %7474 = vxpose.xlu0.b32.cont [10/16] %v7442, 128
      %7475 = vxpose.xlu0.b32.cont [11/16] %v7443, 128
      %7476 = vxpose.xlu0.b32.cont [12/16] %v7444, 128
      %7477 = vxpose.xlu0.b32.cont [13/16] %v7445, 128
      %7478 = vxpose.xlu0.b32.cont [14/16] %v7446, 128
      %7479 = vxpose.xlu0.b32.cont [15/16] %v7447, 128
      %7480 = vxpose.xlu0.b32.end [16/16] %v7448, 128
      %v7481 = vpop.trf.xlu0
      %v7482 = vpop.trf.xlu0
      %v7483 = vpop.trf.xlu0
      %v7484 = vpop.trf.xlu0
      %v7485 = vpop.trf.xlu0
      %v7486 = vpop.trf.xlu0
      %v7487 = vpop.trf.xlu0
      %v7488 = vpop.trf.xlu0
      %v7489 = vpop.trf.xlu0
      %v7490 = vpop.trf.xlu0
      %v7491 = vpop.trf.xlu0
      %v7492 = vpop.trf.xlu0
      %v7493 = vpop.trf.xlu0
      %v7494 = vpop.trf.xlu0
      %v7495 = vpop.trf.xlu0
      %v7496 = vpop.trf.xlu0
      %7497 = vxpose.xlu0.b32.start [1/16] %v7449, 128
      %7498 = vxpose.xlu0.b32.cont [2/16] %v7450, 128
      %7499 = vxpose.xlu0.b32.cont [3/16] %v7451, 128
      %7500 = vxpose.xlu0.b32.cont [4/16] %v7452, 128
      %7501 = vxpose.xlu0.b32.cont [5/16] %v7453, 128
      %7502 = vxpose.xlu0.b32.cont [6/16] %v7454, 128
      %7503 = vxpose.xlu0.b32.cont [7/16] %v7455, 128
      %7504 = vxpose.xlu0.b32.cont [8/16] %v7456, 128
      %7505 = vxpose.xlu0.b32.cont [9/16] %v7457, 128
      %7506 = vxpose.xlu0.b32.cont [10/16] %v7458, 128
      %7507 = vxpose.xlu0.b32.cont [11/16] %v7459, 128
      %7508 = vxpose.xlu0.b32.cont [12/16] %v7460, 128
      %7509 = vxpose.xlu0.b32.cont [13/16] %v7461, 128
      %7510 = vxpose.xlu0.b32.cont [14/16] %v7462, 128
      %7511 = vxpose.xlu0.b32.cont [15/16] %v7463, 128
      %7512 = vxpose.xlu0.b32.end [16/16] %v7464, 128
      %v7513 = vpop.trf.xlu0
      %v7514 = vpop.trf.xlu0
      %v7515 = vpop.trf.xlu0
      %v7516 = vpop.trf.xlu0
      %v7517 = vpop.trf.xlu0
      %v7518 = vpop.trf.xlu0
      %v7519 = vpop.trf.xlu0
      %v7520 = vpop.trf.xlu0
      %v7521 = vpop.trf.xlu0
      %v7522 = vpop.trf.xlu0
      %v7523 = vpop.trf.xlu0
      %v7524 = vpop.trf.xlu0
      %v7525 = vpop.trf.xlu0
      %v7526 = vpop.trf.xlu0
      %v7527 = vpop.trf.xlu0
      %v7528 = vpop.trf.xlu0
      %v7529 = vld [vmem:[%s5] sm:$0xff]
      %7531 = vset.pattern.permute.xlu0 0
      %7532 = vperm.xlu0 %7531, %v7529
      %v7533 = vpop.permute.xlu0 %7532
      %v7535 = vmul.f32 %v7481, %v7533
      %v7536 = vmul.f32 %v7513, %v7533
      %v7537 = vld [vmem:[%s6] sm:$0xff]
      %7539 = vset.pattern.permute.xlu0 0
      %7540 = vperm.xlu0 %7539, %v7537
      %v7541 = vpop.permute.xlu0 %7540
      %v7543 = vadd.f32 %v7535, %v7541
      %v7544 = vadd.f32 %v7536, %v7541
      %v7545 = vmax.f32 %v7543, 0.0
      %v7546 = vmax.f32 %v7544, 0.0
      %7547 = vst [vmem:[%s278] sm:$0xff] %v7545
      %7548 = vst [vmem:[%s278 + $0x8] sm:$0xff] %v7546
      %p7549 = scmp.lt.s32.totalorder %s18, 1
      %s7550 = scalar_select %p7549, %s18, 1
      %s7551 = smul.addr %s7550, 2
      %s7552 = smul.addr %s7551, 8
      %s7553 = scalar_lea.vmem %s7, %s7552
      // Predicated region
      $region49: #{conv_block_forward.1} parent=47 // pred_check
        %p7554 = pneg %p188
      $region50: #{conv_block_forward.1} parent=47 // pred_check_branch
        %7556 = sbr.rel (%p7554) target = $region52
      $region51: #{conv_block_forward.1} parent=47 // pred_region
        _
      $region52: #{conv_block_forward.1} parent=47 // pred_fallthru
        _
    $region48: #{conv_block_forward.1} parent=5 // pred_fallthru
      _
    %p7557 = scmp.le.s32.totalorder 2, %s13
    // Predicated region
    $region53: #{conv_block_forward.1} parent=5 // pred_check
      %p7558 = pneg %p7557
    $region54: #{conv_block_forward.1} parent=5 // pred_check_branch
      %7560 = sbr.rel (%p7558) target = $region56
    $region55: #{conv_block_forward.1} parent=5 // pred_region
      %s7561 = ssub.s32 %s13, 2
      // Predicated region
      $region57: #{conv_block_forward.1} parent=55 // pred_check
        %p7562 = pneg %p194
      $region58: #{conv_block_forward.1} parent=55 // pred_check_branch
        %7564 = sbr.rel (%p7562) target = $region60
      $region59: #{conv_block_forward.1} parent=55 // pred_region
        %p7565 = scmp.lt.s32.totalorder %s19, 1
        %s7566 = scalar_select %p7565, %s19, 1
        %s7567 = smul.addr %s7566, 2
        %s7568 = smul.addr %s7567, 8
        %s7569 = scalar_lea.vmem %s7, %s7568
      $region60: #{conv_block_forward.1} parent=55 // pred_fallthru
        _
    $region56: #{conv_block_forward.1} parent=5 // pred_fallthru
      _
  $region6: #{conv_block_forward.1} parent=0 // loop_footer
    %s17 = sadd.s32 1, %s13
  $region7: #{conv_block_forward.1} parent=0 // loop_footer_branch
    %12 = sbr.rel target = $region3
  $region8: #{conv_block_forward.1} parent=0 // loop_exit
    _

</llo_original>
